<compile_context>
chip_gen: v5e
topology: v5e:2x2
jax: 0.10.0
libtpu: 0.0.40
codegen_flags: <defaults>
</compile_context>

<pallas_src>
import math

import jax
import jax.numpy as jnp
from jax.experimental import pallas as pl
from jax.experimental.pallas import tpu as pltpu

# ---------------- small LlamaConfig-equivalent ----------------
VOCAB = 256
HIDDEN = 32
N_HEADS = 4                 # attention heads
HEAD_DIM = HIDDEN // N_HEADS
INTER = 64                  # intermediate_size
N_LAYERS = 4                # num_hidden_layers
TREE_HEADS = 2              # TreeNetLlama "heads"
BLOCKS_IN_HEAD = 2
SHARED = N_LAYERS - BLOCKS_IN_HEAD
RMS_EPS = 1e-6
ROPE_THETA = 10000.0
BATCH = 2
SEQ = 8
BS = BATCH * SEQ
ATTN_SCALE = 1.0 / math.sqrt(HEAD_DIM)


# ---------------- in-kernel building blocks (register-level) ----------------
def _rms(x, w):
    # x: (BS, D), w: (1, D)
    var = jnp.mean(x * x, axis=-1, keepdims=True)
    return x * jax.lax.rsqrt(var + RMS_EPS) * w


def _causal_allow():
    row = jax.lax.broadcasted_iota(jnp.int32, (SEQ, SEQ), 0)
    col = jax.lax.broadcasted_iota(jnp.int32, (SEQ, SEQ), 1)
    return col <= row          # bool (SEQ, SEQ), True where attention allowed


def _decoder_layer(x, wqkv, wo, wgu, wd, ln1, ln2, cos, sin, rot, allow):
    """One fused LLaMA decoder layer on a (B*S, D) activation slab."""
    h = _rms(x, ln1)
    # fused QKV projection: (BS, D) @ (D, 3D) -> (BS, 3D)
    qkv = jnp.dot(h, wqkv, preferred_element_type=jnp.float32)
    # fold 1/sqrt(head_dim) into q once (RoPE rotation is linear, so it commutes)
    q = qkv[:, 0 * HIDDEN:1 * HIDDEN] * ATTN_SCALE
    k = qkv[:, 1 * HIDDEN:2 * HIDDEN]
    v = qkv[:, 2 * HIDDEN:3 * HIDDEN]

    # RoPE: per-head rotate_half == x @ rot (block-diagonal signed permutation)
    q = q * cos + jnp.dot(q, rot, preferred_element_type=jnp.float32) * sin
    k = k * cos + jnp.dot(k, rot, preferred_element_type=jnp.float32) * sin

    rows = []
    for b in range(BATCH):                       # static unrolled, tiny tiles
        qb = q[b * SEQ:(b + 1) * SEQ, :]
        kb = k[b * SEQ:(b + 1) * SEQ, :]
        vb = v[b * SEQ:(b + 1) * SEQ, :]
        head_outs = []
        for hh in range(N_HEADS):
            sl = slice(hh * HEAD_DIM, (hh + 1) * HEAD_DIM)
            qh, kh, vh = qb[:, sl], kb[:, sl], vb[:, sl]
            s = jax.lax.dot_general(qh, kh, (((1,), (1,)), ((), ())),
                                    preferred_element_type=jnp.float32)
            s = jnp.where(allow, s, -1e30)                 # causal mask
            s = s - jnp.max(s, axis=-1, keepdims=True)     # stable softmax
            p = jnp.exp(s)
            p = p * pl.reciprocal(jnp.sum(p, axis=-1, keepdims=True), approx=True)
            head_outs.append(jnp.dot(p, vh, preferred_element_type=jnp.float32))
        rows.append(jnp.concatenate(head_outs, axis=-1))   # (SEQ, D)
    attn = jnp.concatenate(rows, axis=0)                   # (BS, D)

    x = x + jnp.dot(attn, wo, preferred_element_type=jnp.float32)

    # fused SwiGLU MLP: one (D, 2*INTER) matmul, split in-register
    h2 = _rms(x, ln2)
    gu = jnp.dot(h2, wgu, preferred_element_type=jnp.float32)   # (BS, 2*INTER)
    g = gu[:, :INTER]
    u = gu[:, INTER:]
    a = (g * jax.nn.sigmoid(g)) * u
    x = x + jnp.dot(a, wd, preferred_element_type=jnp.float32)
    return x


# ---------------- the single fused Pallas kernel ----------------
def _treenet_kernel(ids_ref, embed_ref,
                    bqkv_ref, bwo_ref, bwgu_ref, bwd_ref, bln1_ref, bln2_ref,
                    hqkv_ref, hwo_ref, hwgu_ref, hwd_ref, hln1_ref, hln2_ref,
                    hnorm_ref, hlm_ref, cos_ref, sin_ref, rot_ref,
                    out_ref):
    # Token embedding as a one-hot matmul (keeps the whole forward in-kernel).
    ids = ids_ref[...]                                            # (BS, 1) int32
    col = jax.lax.broadcasted_iota(jnp.int32, (BS, VOCAB), 1)
    onehot = (col == ids).astype(jnp.float32)                     # (BS, VOCAB)
    x = jnp.dot(onehot, embed_ref[...], preferred_element_type=jnp.float32)

    cos, sin, rot = cos_ref[...], sin_ref[...], rot_ref[...]      # hoisted
    allow = _causal_allow()                                       # hoisted

    # ---- shared backbone layers (backbone model.norm is nn.Identity()) ----
    for l in range(SHARED):                                       # static unroll
        x = _decoder_layer(x, bqkv_ref[l], bwo_ref[l], bwgu_ref[l], bwd_ref[l],
                           bln1_ref[l], bln2_ref[l], cos, sin, rot, allow)

    # ---- per-tree-head layers + double final norm + lm_head ----
    for t in range(TREE_HEADS):                                   # static unroll
        xt = x
        for l in range(BLOCKS_IN_HEAD):
            li = t * BLOCKS_IN_HEAD + l        # flat static index into packed weights
            xt = _decoder_layer(xt, hqkv_ref[li], hwo_ref[li], hwgu_ref[li],
                                hwd_ref[li], hln1_ref[li], hln2_ref[li],
                                cos, sin, rot, allow)
        w = hnorm_ref[t]                                          # (1, D)
        xt = _rms(xt, w)    # LlamaModel applies final norm internally
        xt = _rms(xt, w)    # reference forward applies hm.model.norm again
        out_ref[t] = jnp.dot(xt, hlm_ref[t], preferred_element_type=jnp.float32)


# ---------------- wrappers ----------------
def rope_tables_full(seq, dh, n_heads, batch):
    inv_freq = 1.0 / (ROPE_THETA ** (jnp.arange(0, dh, 2, dtype=jnp.float32) / dh))
    pos = jnp.arange(seq, dtype=jnp.float32)
    freqs = pos[:, None] * inv_freq[None, :]
    emb = jnp.concatenate([freqs, freqs], axis=-1)                # (S, Dh)
    cos = jnp.cos(emb)
    sin = jnp.sin(emb)
    # tile across attention heads (lane axis) and batch (sublane axis)
    cos_full = jnp.tile(jnp.tile(cos, (1, n_heads)), (batch, 1))  # (B*S, D)
    sin_full = jnp.tile(jnp.tile(sin, (1, n_heads)), (batch, 1))
    # per-head rotate_half as a signed permutation; block-diag over heads
    half = dh // 2
    rot_h = jnp.zeros((dh, dh), jnp.float32)
    rot_h = rot_h.at[jnp.arange(half) + half, jnp.arange(half)].set(-1.0)
    rot_h = rot_h.at[jnp.arange(half), jnp.arange(half) + half].set(1.0)
    rot_full = jnp.kron(jnp.eye(n_heads, dtype=jnp.float32), rot_h)  # (D, D)
    return cos_full, sin_full, rot_full


def treenet_forward(params, input_ids):
    B, S = input_ids.shape
    cos, sin, rot = rope_tables_full(S, HEAD_DIM, N_HEADS, B)
    ids2d = input_ids.reshape(B * S, 1).astype(jnp.int32)
    bb, hd = params["backbone"], params["heads"]

    # Single pallas_call: grid=(), every operand whole-array resident in VMEM
    # (total footprint < 0.5 MiB, far under the scoped VMEM limit).
    logits = pl.pallas_call(
        _treenet_kernel,
        out_shape=jax.ShapeDtypeStruct((TREE_HEADS, B * S, VOCAB), jnp.float32),
    )(ids2d, params["embed"],
      bb["wqkv"], bb["wo"], bb["wgu"], bb["wd"], bb["ln1"], bb["ln2"],
      hd["wqkv"], hd["wo"], hd["wgu"], hd["wd"], hd["ln1"], hd["ln2"],
      hd["norm"], hd["lm_head"], cos, sin, rot)

    return [logits[t].reshape(B, S, VOCAB) for t in range(TREE_HEADS)]


# ---------------- parameter init / packing ----------------
def init_layer(key):
    ks = jax.random.split(key, 7)
    std = 0.02
    n = lambda k, shp: std * jax.random.normal(k, shp, jnp.float32)
    return dict(
        wq=n(ks[0], (HIDDEN, HIDDEN)),
        wk=n(ks[1], (HIDDEN, HIDDEN)),
        wv=n(ks[2], (HIDDEN, HIDDEN)),
        wo=n(ks[3], (HIDDEN, HIDDEN)),
        wg=n(ks[4], (HIDDEN, INTER)),
        wu=n(ks[5], (HIDDEN, INTER)),
        wd=n(ks[6], (INTER, HIDDEN)),
        ln1=jnp.ones((HIDDEN,), jnp.float32),
        ln2=jnp.ones((HIDDEN,), jnp.float32),
    )


def _pack_layers(layers):
    return dict(
        wqkv=jnp.stack([jnp.concatenate([p["wq"], p["wk"], p["wv"]], axis=1) for p in layers]),
        wo=jnp.stack([p["wo"] for p in layers]),
        wgu=jnp.stack([jnp.concatenate([p["wg"], p["wu"]], axis=1) for p in layers]),
        wd=jnp.stack([p["wd"] for p in layers]),
        ln1=jnp.stack([p["ln1"].reshape(1, HIDDEN) for p in layers]),
        ln2=jnp.stack([p["ln2"].reshape(1, HIDDEN) for p in layers]),
    )


def init_params(key):
    keys = jax.random.split(key, 2 + TREE_HEADS)
    embed = 0.02 * jax.random.normal(keys[0], (VOCAB, HIDDEN), jnp.float32)
    backbone = _pack_layers([init_layer(k) for k in jax.random.split(keys[1], SHARED)])

    # Head layer weights packed on ONE flat leading axis: (TREE_HEADS*BLOCKS_IN_HEAD, ...)
    head_layers, head_norms, head_lm = [], [], []
    for i in range(TREE_HEADS):
        hk = jax.random.split(keys[2 + i], BLOCKS_IN_HEAD + 1)
        head_layers += [init_layer(k) for k in hk[:BLOCKS_IN_HEAD]]
        head_norms.append(jnp.ones((1, HIDDEN), jnp.float32))
        head_lm.append(0.02 * jax.random.normal(hk[-1], (HIDDEN, VOCAB), jnp.float32))

    heads = _pack_layers(head_layers)
    heads["norm"] = jnp.stack(head_norms)      # (TREE_HEADS, 1, HIDDEN)
    heads["lm_head"] = jnp.stack(head_lm)      # (TREE_HEADS, HIDDEN, VOCAB)
    return dict(embed=embed, backbone=backbone, heads=heads)


if __name__ == "__main__":
    key = jax.random.PRNGKey(0)
    pkey, dkey = jax.random.split(key)
    params = init_params(pkey)
    input_ids = jax.random.randint(dkey, (BATCH, SEQ), 0, VOCAB, dtype=jnp.int32)

    logits_list = jax.jit(treenet_forward)(params, input_ids)
    for lg in logits_list:
        jax.block_until_ready(lg)
        assert lg.shape == (BATCH, SEQ, VOCAB)
        assert bool(jnp.all(jnp.isfinite(lg)))
    print("KERNEL_OK")
</pallas_src>

<mosaic_0001>
module attributes {stable_mosaic.version = 11 : i64} {
  func.func @_treenet_kernel(%arg0: memref<16x1xi32, #tpu.memory_space<vmem>>, %arg1: memref<256x32xf32, #tpu.memory_space<vmem>>, %arg2: memref<2x32x96xf32, #tpu.memory_space<vmem>>, %arg3: memref<2x32x32xf32, #tpu.memory_space<vmem>>, %arg4: memref<2x32x128xf32, #tpu.memory_space<vmem>>, %arg5: memref<2x64x32xf32, #tpu.memory_space<vmem>>, %arg6: memref<2x1x32xf32, #tpu.memory_space<vmem>>, %arg7: memref<2x1x32xf32, #tpu.memory_space<vmem>>, %arg8: memref<4x32x96xf32, #tpu.memory_space<vmem>>, %arg9: memref<4x32x32xf32, #tpu.memory_space<vmem>>, %arg10: memref<4x32x128xf32, #tpu.memory_space<vmem>>, %arg11: memref<4x64x32xf32, #tpu.memory_space<vmem>>, %arg12: memref<4x1x32xf32, #tpu.memory_space<vmem>>, %arg13: memref<4x1x32xf32, #tpu.memory_space<vmem>>, %arg14: memref<2x1x32xf32, #tpu.memory_space<vmem>>, %arg15: memref<2x32x256xf32, #tpu.memory_space<vmem>>, %arg16: memref<16x32xf32, #tpu.memory_space<vmem>>, %arg17: memref<16x32xf32, #tpu.memory_space<vmem>>, %arg18: memref<32x32xf32, #tpu.memory_space<vmem>>, %arg19: memref<2x16x256xf32, #tpu.memory_space<vmem>>) attributes {dimension_semantics = [], scalar_prefetch = 0 : i64, scratch_operands = 0 : i64, tpu.core_type = #tpu.core_type<tc>} {
    %c0 = arith.constant 0 : index
    %c0_0 = arith.constant 0 : index
    %0 = vector.load %arg0[%c0, %c0_0] : memref<16x1xi32, #tpu.memory_space<vmem>>, vector<16x1xi32>
    %1 = tpu.iota {dimensions = array<i32: 1>} : vector<16x256xi32>
    %2 = vector.broadcast %0 : vector<16x1xi32> to vector<16x256xi32>
    %3 = arith.cmpi eq, %1, %2 : vector<16x256xi32>
    %4 = arith.extui %3 : vector<16x256xi1> to vector<16x256xi32>
    %5 = arith.sitofp %4 : vector<16x256xi32> to vector<16x256xf32>
    %c0_1 = arith.constant 0 : index
    %c0_2 = arith.constant 0 : index
    %6 = vector.load %arg1[%c0_1, %c0_2] : memref<256x32xf32, #tpu.memory_space<vmem>>, vector<256x32xf32>
    %cst = arith.constant dense<0.000000e+00> : vector<16x32xf32>
    %7 = tpu.matmul %5, %6, %cst {dimension_numbers = #tpu.dot_dimension_numbers<[1], [0], [0], [1], [0, 0, 1, 1], [], []>} : vector<16x256xf32>, vector<256x32xf32>, vector<16x32xf32> -> vector<16x32xf32>
    %c0_3 = arith.constant 0 : index
    %c0_4 = arith.constant 0 : index
    %8 = vector.load %arg16[%c0_3, %c0_4] : memref<16x32xf32, #tpu.memory_space<vmem>>, vector<16x32xf32>
    %c0_5 = arith.constant 0 : index
    %c0_6 = arith.constant 0 : index
    %9 = vector.load %arg17[%c0_5, %c0_6] : memref<16x32xf32, #tpu.memory_space<vmem>>, vector<16x32xf32>
    %c0_7 = arith.constant 0 : index
    %c0_8 = arith.constant 0 : index
    %10 = vector.load %arg18[%c0_7, %c0_8] : memref<32x32xf32, #tpu.memory_space<vmem>>, vector<32x32xf32>
    %11 = tpu.iota {dimensions = array<i32: 0>} : vector<8x8xi32>
    %12 = tpu.iota {dimensions = array<i32: 1>} : vector<8x8xi32>
    %13 = arith.cmpi sle, %12, %11 : vector<8x8xi32>
    %c0_9 = arith.constant 0 : index
    %c0_10 = arith.constant 0 : index
    %c0_11 = arith.constant 0 : index
    %14 = vector.load %arg2[%c0_9, %c0_10, %c0_11] : memref<2x32x96xf32, #tpu.memory_space<vmem>>, vector<1x32x96xf32>
    %15 = vector.shape_cast %14 : vector<1x32x96xf32> to vector<32x96xf32>
    %c0_12 = arith.constant 0 : index
    %c0_13 = arith.constant 0 : index
    %c0_14 = arith.constant 0 : index
    %16 = vector.load %arg3[%c0_12, %c0_13, %c0_14] : memref<2x32x32xf32, #tpu.memory_space<vmem>>, vector<1x32x32xf32>
    %17 = vector.shape_cast %16 : vector<1x32x32xf32> to vector<32x32xf32>
    %c0_15 = arith.constant 0 : index
    %c0_16 = arith.constant 0 : index
    %c0_17 = arith.constant 0 : index
    %18 = vector.load %arg4[%c0_15, %c0_16, %c0_17] : memref<2x32x128xf32, #tpu.memory_space<vmem>>, vector<1x32x128xf32>
    %19 = vector.shape_cast %18 : vector<1x32x128xf32> to vector<32x128xf32>
    %c0_18 = arith.constant 0 : index
    %c0_19 = arith.constant 0 : index
    %c0_20 = arith.constant 0 : index
    %20 = vector.load %arg5[%c0_18, %c0_19, %c0_20] : memref<2x64x32xf32, #tpu.memory_space<vmem>>, vector<1x64x32xf32>
    %21 = vector.shape_cast %20 : vector<1x64x32xf32> to vector<64x32xf32>
    %c0_21 = arith.constant 0 : index
    %c0_22 = arith.constant 0 : index
    %c0_23 = arith.constant 0 : index
    %22 = vector.load %arg6[%c0_21, %c0_22, %c0_23] : memref<2x1x32xf32, #tpu.memory_space<vmem>>, vector<1x1x32xf32>
    %23 = vector.shape_cast %22 : vector<1x1x32xf32> to vector<1x32xf32>
    %c0_24 = arith.constant 0 : index
    %c0_25 = arith.constant 0 : index
    %c0_26 = arith.constant 0 : index
    %24 = vector.load %arg7[%c0_24, %c0_25, %c0_26] : memref<2x1x32xf32, #tpu.memory_space<vmem>>, vector<1x1x32xf32>
    %25 = vector.shape_cast %24 : vector<1x1x32xf32> to vector<1x32xf32>
    %26 = arith.mulf %7, %7 : vector<16x32xf32>
    %cst_27 = arith.constant dense<0.000000e+00> : vector<16xf32>
    %27 = vector.multi_reduction <add>, %26, %cst_27 [1] : vector<16x32xf32> to vector<16xf32>
    %28 = vector.shape_cast %27 : vector<16xf32> to vector<16x1xf32>
    %cst_28 = arith.constant 3.200000e+01 : f32
    %29 = vector.broadcast %cst_28 : f32 to vector<16x1xf32>
    %30 = arith.divf %28, %29 : vector<16x1xf32>
    %cst_29 = arith.constant 9.99999997E-7 : f32
    %31 = vector.broadcast %cst_29 : f32 to vector<16x1xf32>
    %32 = arith.addf %30, %31 : vector<16x1xf32>
    %33 = math.rsqrt %32 : vector<16x1xf32>
    %34 = vector.broadcast %33 : vector<16x1xf32> to vector<16x32xf32>
    %35 = arith.mulf %7, %34 : vector<16x32xf32>
    %36 = vector.broadcast %23 : vector<1x32xf32> to vector<16x32xf32>
    %37 = arith.mulf %35, %36 : vector<16x32xf32>
    %cst_30 = arith.constant dense<0.000000e+00> : vector<16x96xf32>
    %38 = tpu.matmul %37, %15, %cst_30 {dimension_numbers = #tpu.dot_dimension_numbers<[1], [0], [0], [1], [0, 0, 1, 1], [], []>} : vector<16x32xf32>, vector<32x96xf32>, vector<16x96xf32> -> vector<16x96xf32>
    %39 = vector.extract_strided_slice %38 {offsets = [0, 0], sizes = [16, 32], strides = [1, 1]} : vector<16x96xf32> to vector<16x32xf32>
    %cst_31 = arith.constant 0.353553385 : f32
    %40 = vector.broadcast %cst_31 : f32 to vector<16x32xf32>
    %41 = arith.mulf %39, %40 : vector<16x32xf32>
    %42 = vector.extract_strided_slice %38 {offsets = [0, 32], sizes = [16, 32], strides = [1, 1]} : vector<16x96xf32> to vector<16x32xf32>
    %43 = vector.extract_strided_slice %38 {offsets = [0, 64], sizes = [16, 32], strides = [1, 1]} : vector<16x96xf32> to vector<16x32xf32>
    %44 = arith.mulf %41, %8 : vector<16x32xf32>
    %cst_32 = arith.constant dense<0.000000e+00> : vector<16x32xf32>
    %45 = tpu.matmul %41, %10, %cst_32 {dimension_numbers = #tpu.dot_dimension_numbers<[1], [0], [0], [1], [0, 0, 1, 1], [], []>} : vector<16x32xf32>, vector<32x32xf32>, vector<16x32xf32> -> vector<16x32xf32>
    %46 = arith.mulf %45, %9 : vector<16x32xf32>
    %47 = arith.addf %44, %46 : vector<16x32xf32>
    %48 = arith.mulf %42, %8 : vector<16x32xf32>
    %cst_33 = arith.constant dense<0.000000e+00> : vector<16x32xf32>
    %49 = tpu.matmul %42, %10, %cst_33 {dimension_numbers = #tpu.dot_dimension_numbers<[1], [0], [0], [1], [0, 0, 1, 1], [], []>} : vector<16x32xf32>, vector<32x32xf32>, vector<16x32xf32> -> vector<16x32xf32>
    %50 = arith.mulf %49, %9 : vector<16x32xf32>
    %51 = arith.addf %48, %50 : vector<16x32xf32>
    %52 = vector.extract_strided_slice %47 {offsets = [0, 0], sizes = [8, 32], strides = [1, 1]} : vector<16x32xf32> to vector<8x32xf32>
    %53 = vector.extract_strided_slice %51 {offsets = [0, 0], sizes = [8, 32], strides = [1, 1]} : vector<16x32xf32> to vector<8x32xf32>
    %54 = vector.extract_strided_slice %43 {offsets = [0, 0], sizes = [8, 32], strides = [1, 1]} : vector<16x32xf32> to vector<8x32xf32>
    %55 = vector.extract_strided_slice %52 {offsets = [0, 0], sizes = [8, 8], strides = [1, 1]} : vector<8x32xf32> to vector<8x8xf32>
    %56 = vector.extract_strided_slice %53 {offsets = [0, 0], sizes = [8, 8], strides = [1, 1]} : vector<8x32xf32> to vector<8x8xf32>
    %57 = vector.extract_strided_slice %54 {offsets = [0, 0], sizes = [8, 8], strides = [1, 1]} : vector<8x32xf32> to vector<8x8xf32>
    %cst_34 = arith.constant dense<0.000000e+00> : vector<8x8xf32>
    %58 = tpu.matmul %55, %56, %cst_34 {dimension_numbers = #tpu.dot_dimension_numbers<[1], [1], [0], [0], [0, 0, 1, 0], [], []>} : vector<8x8xf32>, vector<8x8xf32>, vector<8x8xf32> -> vector<8x8xf32>
    %cst_35 = arith.constant -1.000000e+30 : f32
    %59 = vector.broadcast %cst_35 : f32 to vector<8x8xf32>
    %60 = arith.select %13, %58, %59 : vector<8x8xi1>, vector<8x8xf32>
    %cst_36 = arith.constant dense<0xFF800000> : vector<8xf32>
    %61 = vector.multi_reduction <maximumf>, %60, %cst_36 [1] : vector<8x8xf32> to vector<8xf32>
    %62 = vector.shape_cast %61 : vector<8xf32> to vector<8x1xf32>
    %63 = vector.broadcast %62 : vector<8x1xf32> to vector<8x8xf32>
    %64 = arith.subf %60, %63 : vector<8x8xf32>
    %65 = math.exp %64 : vector<8x8xf32>
    %cst_37 = arith.constant dense<0.000000e+00> : vector<8xf32>
    %66 = vector.multi_reduction <add>, %65, %cst_37 [1] : vector<8x8xf32> to vector<8xf32>
    %67 = vector.shape_cast %66 : vector<8xf32> to vector<8x1xf32>
    %68 = tpu.reciprocal %67 {approx = true} : vector<8x1xf32> -> vector<8x1xf32>
    %69 = vector.broadcast %68 : vector<8x1xf32> to vector<8x8xf32>
    %70 = arith.mulf %65, %69 : vector<8x8xf32>
    %cst_38 = arith.constant dense<0.000000e+00> : vector<8x8xf32>
    %71 = tpu.matmul %70, %57, %cst_38 {dimension_numbers = #tpu.dot_dimension_numbers<[1], [0], [0], [1], [0, 0, 1, 1], [], []>} : vector<8x8xf32>, vector<8x8xf32>, vector<8x8xf32> -> vector<8x8xf32>
    %72 = vector.extract_strided_slice %52 {offsets = [0, 8], sizes = [8, 8], strides = [1, 1]} : vector<8x32xf32> to vector<8x8xf32>
    %73 = vector.extract_strided_slice %53 {offsets = [0, 8], sizes = [8, 8], strides = [1, 1]} : vector<8x32xf32> to vector<8x8xf32>
    %74 = vector.extract_strided_slice %54 {offsets = [0, 8], sizes = [8, 8], strides = [1, 1]} : vector<8x32xf32> to vector<8x8xf32>
    %cst_39 = arith.constant dense<0.000000e+00> : vector<8x8xf32>
    %75 = tpu.matmul %72, %73, %cst_39 {dimension_numbers = #tpu.dot_dimension_numbers<[1], [1], [0], [0], [0, 0, 1, 0], [], []>} : vector<8x8xf32>, vector<8x8xf32>, vector<8x8xf32> -> vector<8x8xf32>
    %cst_40 = arith.constant -1.000000e+30 : f32
    %76 = vector.broadcast %cst_40 : f32 to vector<8x8xf32>
    %77 = arith.select %13, %75, %76 : vector<8x8xi1>, vector<8x8xf32>
    %cst_41 = arith.constant dense<0xFF800000> : vector<8xf32>
    %78 = vector.multi_reduction <maximumf>, %77, %cst_41 [1] : vector<8x8xf32> to vector<8xf32>
    %79 = vector.shape_cast %78 : vector<8xf32> to vector<8x1xf32>
    %80 = vector.broadcast %79 : vector<8x1xf32> to vector<8x8xf32>
    %81 = arith.subf %77, %80 : vector<8x8xf32>
    %82 = math.exp %81 : vector<8x8xf32>
    %cst_42 = arith.constant dense<0.000000e+00> : vector<8xf32>
    %83 = vector.multi_reduction <add>, %82, %cst_42 [1] : vector<8x8xf32> to vector<8xf32>
    %84 = vector.shape_cast %83 : vector<8xf32> to vector<8x1xf32>
    %85 = tpu.reciprocal %84 {approx = true} : vector<8x1xf32> -> vector<8x1xf32>
    %86 = vector.broadcast %85 : vector<8x1xf32> to vector<8x8xf32>
    %87 = arith.mulf %82, %86 : vector<8x8xf32>
    %cst_43 = arith.constant dense<0.000000e+00> : vector<8x8xf32>
    %88 = tpu.matmul %87, %74, %cst_43 {dimension_numbers = #tpu.dot_dimension_numbers<[1], [0], [0], [1], [0, 0, 1, 1], [], []>} : vector<8x8xf32>, vector<8x8xf32>, vector<8x8xf32> -> vector<8x8xf32>
    %89 = vector.extract_strided_slice %52 {offsets = [0, 16], sizes = [8, 8], strides = [1, 1]} : vector<8x32xf32> to vector<8x8xf32>
    %90 = vector.extract_strided_slice %53 {offsets = [0, 16], sizes = [8, 8], strides = [1, 1]} : vector<8x32xf32> to vector<8x8xf32>
    %91 = vector.extract_strided_slice %54 {offsets = [0, 16], sizes = [8, 8], strides = [1, 1]} : vector<8x32xf32> to vector<8x8xf32>
    %cst_44 = arith.constant dense<0.000000e+00> : vector<8x8xf32>
    %92 = tpu.matmul %89, %90, %cst_44 {dimension_numbers = #tpu.dot_dimension_numbers<[1], [1], [0], [0], [0, 0, 1, 0], [], []>} : vector<8x8xf32>, vector<8x8xf32>, vector<8x8xf32> -> vector<8x8xf32>
    %cst_45 = arith.constant -1.000000e+30 : f32
    %93 = vector.broadcast %cst_45 : f32 to vector<8x8xf32>
    %94 = arith.select %13, %92, %93 : vector<8x8xi1>, vector<8x8xf32>
    %cst_46 = arith.constant dense<0xFF800000> : vector<8xf32>
    %95 = vector.multi_reduction <maximumf>, %94, %cst_46 [1] : vector<8x8xf32> to vector<8xf32>
    %96 = vector.shape_cast %95 : vector<8xf32> to vector<8x1xf32>
    %97 = vector.broadcast %96 : vector<8x1xf32> to vector<8x8xf32>
    %98 = arith.subf %94, %97 : vector<8x8xf32>
    %99 = math.exp %98 : vector<8x8xf32>
    %cst_47 = arith.constant dense<0.000000e+00> : vector<8xf32>
    %100 = vector.multi_reduction <add>, %99, %cst_47 [1] : vector<8x8xf32> to vector<8xf32>
    %101 = vector.shape_cast %100 : vector<8xf32> to vector<8x1xf32>
    %102 = tpu.reciprocal %101 {approx = true} : vector<8x1xf32> -> vector<8x1xf32>
    %103 = vector.broadcast %102 : vector<8x1xf32> to vector<8x8xf32>
    %104 = arith.mulf %99, %103 : vector<8x8xf32>
    %cst_48 = arith.constant dense<0.000000e+00> : vector<8x8xf32>
    %105 = tpu.matmul %104, %91, %cst_48 {dimension_numbers = #tpu.dot_dimension_numbers<[1], [0], [0], [1], [0, 0, 1, 1], [], []>} : vector<8x8xf32>, vector<8x8xf32>, vector<8x8xf32> -> vector<8x8xf32>
    %106 = vector.extract_strided_slice %52 {offsets = [0, 24], sizes = [8, 8], strides = [1, 1]} : vector<8x32xf32> to vector<8x8xf32>
    %107 = vector.extract_strided_slice %53 {offsets = [0, 24], sizes = [8, 8], strides = [1, 1]} : vector<8x32xf32> to vector<8x8xf32>
    %108 = vector.extract_strided_slice %54 {offsets = [0, 24], sizes = [8, 8], strides = [1, 1]} : vector<8x32xf32> to vector<8x8xf32>
    %cst_49 = arith.constant dense<0.000000e+00> : vector<8x8xf32>
    %109 = tpu.matmul %106, %107, %cst_49 {dimension_numbers = #tpu.dot_dimension_numbers<[1], [1], [0], [0], [0, 0, 1, 0], [], []>} : vector<8x8xf32>, vector<8x8xf32>, vector<8x8xf32> -> vector<8x8xf32>
    %cst_50 = arith.constant -1.000000e+30 : f32
    %110 = vector.broadcast %cst_50 : f32 to vector<8x8xf32>
    %111 = arith.select %13, %109, %110 : vector<8x8xi1>, vector<8x8xf32>
    %cst_51 = arith.constant dense<0xFF800000> : vector<8xf32>
    %112 = vector.multi_reduction <maximumf>, %111, %cst_51 [1] : vector<8x8xf32> to vector<8xf32>
    %113 = vector.shape_cast %112 : vector<8xf32> to vector<8x1xf32>
    %114 = vector.broadcast %113 : vector<8x1xf32> to vector<8x8xf32>
    %115 = arith.subf %111, %114 : vector<8x8xf32>
    %116 = math.exp %115 : vector<8x8xf32>
    %cst_52 = arith.constant dense<0.000000e+00> : vector<8xf32>
    %117 = vector.multi_reduction <add>, %116, %cst_52 [1] : vector<8x8xf32> to vector<8xf32>
    %118 = vector.shape_cast %117 : vector<8xf32> to vector<8x1xf32>
    %119 = tpu.reciprocal %118 {approx = true} : vector<8x1xf32> -> vector<8x1xf32>
    %120 = vector.broadcast %119 : vector<8x1xf32> to vector<8x8xf32>
    %121 = arith.mulf %116, %120 : vector<8x8xf32>
    %cst_53 = arith.constant dense<0.000000e+00> : vector<8x8xf32>
    %122 = tpu.matmul %121, %108, %cst_53 {dimension_numbers = #tpu.dot_dimension_numbers<[1], [0], [0], [1], [0, 0, 1, 1], [], []>} : vector<8x8xf32>, vector<8x8xf32>, vector<8x8xf32> -> vector<8x8xf32>
    %123 = tpu.concatenate %71, %88, %105, %122 in 1 : vector<8x8xf32>, vector<8x8xf32>, vector<8x8xf32>, vector<8x8xf32> -> vector<8x32xf32>
    %124 = vector.extract_strided_slice %47 {offsets = [8, 0], sizes = [8, 32], strides = [1, 1]} : vector<16x32xf32> to vector<8x32xf32>
    %125 = vector.extract_strided_slice %51 {offsets = [8, 0], sizes = [8, 32], strides = [1, 1]} : vector<16x32xf32> to vector<8x32xf32>
    %126 = vector.extract_strided_slice %43 {offsets = [8, 0], sizes = [8, 32], strides = [1, 1]} : vector<16x32xf32> to vector<8x32xf32>
    %127 = vector.extract_strided_slice %124 {offsets = [0, 0], sizes = [8, 8], strides = [1, 1]} : vector<8x32xf32> to vector<8x8xf32>
    %128 = vector.extract_strided_slice %125 {offsets = [0, 0], sizes = [8, 8], strides = [1, 1]} : vector<8x32xf32> to vector<8x8xf32>
    %129 = vector.extract_strided_slice %126 {offsets = [0, 0], sizes = [8, 8], strides = [1, 1]} : vector<8x32xf32> to vector<8x8xf32>
    %cst_54 = arith.constant dense<0.000000e+00> : vector<8x8xf32>
    %130 = tpu.matmul %127, %128, %cst_54 {dimension_numbers = #tpu.dot_dimension_numbers<[1], [1], [0], [0], [0, 0, 1, 0], [], []>} : vector<8x8xf32>, vector<8x8xf32>, vector<8x8xf32> -> vector<8x8xf32>
    %cst_55 = arith.constant -1.000000e+30 : f32
    %131 = vector.broadcast %cst_55 : f32 to vector<8x8xf32>
    %132 = arith.select %13, %130, %131 : vector<8x8xi1>, vector<8x8xf32>
    %cst_56 = arith.constant dense<0xFF800000> : vector<8xf32>
    %133 = vector.multi_reduction <maximumf>, %132, %cst_56 [1] : vector<8x8xf32> to vector<8xf32>
    %134 = vector.shape_cast %133 : vector<8xf32> to vector<8x1xf32>
    %135 = vector.broadcast %134 : vector<8x1xf32> to vector<8x8xf32>
    %136 = arith.subf %132, %135 : vector<8x8xf32>
    %137 = math.exp %136 : vector<8x8xf32>
    %cst_57 = arith.constant dense<0.000000e+00> : vector<8xf32>
    %138 = vector.multi_reduction <add>, %137, %cst_57 [1] : vector<8x8xf32> to vector<8xf32>
    %139 = vector.shape_cast %138 : vector<8xf32> to vector<8x1xf32>
    %140 = tpu.reciprocal %139 {approx = true} : vector<8x1xf32> -> vector<8x1xf32>
    %141 = vector.broadcast %140 : vector<8x1xf32> to vector<8x8xf32>
    %142 = arith.mulf %137, %141 : vector<8x8xf32>
    %cst_58 = arith.constant dense<0.000000e+00> : vector<8x8xf32>
    %143 = tpu.matmul %142, %129, %cst_58 {dimension_numbers = #tpu.dot_dimension_numbers<[1], [0], [0], [1], [0, 0, 1, 1], [], []>} : vector<8x8xf32>, vector<8x8xf32>, vector<8x8xf32> -> vector<8x8xf32>
    %144 = vector.extract_strided_slice %124 {offsets = [0, 8], sizes = [8, 8], strides = [1, 1]} : vector<8x32xf32> to vector<8x8xf32>
    %145 = vector.extract_strided_slice %125 {offsets = [0, 8], sizes = [8, 8], strides = [1, 1]} : vector<8x32xf32> to vector<8x8xf32>
    %146 = vector.extract_strided_slice %126 {offsets = [0, 8], sizes = [8, 8], strides = [1, 1]} : vector<8x32xf32> to vector<8x8xf32>
    %cst_59 = arith.constant dense<0.000000e+00> : vector<8x8xf32>
    %147 = tpu.matmul %144, %145, %cst_59 {dimension_numbers = #tpu.dot_dimension_numbers<[1], [1], [0], [0], [0, 0, 1, 0], [], []>} : vector<8x8xf32>, vector<8x8xf32>, vector<8x8xf32> -> vector<8x8xf32>
    %cst_60 = arith.constant -1.000000e+30 : f32
    %148 = vector.broadcast %cst_60 : f32 to vector<8x8xf32>
    %149 = arith.select %13, %147, %148 : vector<8x8xi1>, vector<8x8xf32>
    %cst_61 = arith.constant dense<0xFF800000> : vector<8xf32>
    %150 = vector.multi_reduction <maximumf>, %149, %cst_61 [1] : vector<8x8xf32> to vector<8xf32>
    %151 = vector.shape_cast %150 : vector<8xf32> to vector<8x1xf32>
    %152 = vector.broadcast %151 : vector<8x1xf32> to vector<8x8xf32>
    %153 = arith.subf %149, %152 : vector<8x8xf32>
    %154 = math.exp %153 : vector<8x8xf32>
    %cst_62 = arith.constant dense<0.000000e+00> : vector<8xf32>
    %155 = vector.multi_reduction <add>, %154, %cst_62 [1] : vector<8x8xf32> to vector<8xf32>
    %156 = vector.shape_cast %155 : vector<8xf32> to vector<8x1xf32>
    %157 = tpu.reciprocal %156 {approx = true} : vector<8x1xf32> -> vector<8x1xf32>
    %158 = vector.broadcast %157 : vector<8x1xf32> to vector<8x8xf32>
    %159 = arith.mulf %154, %158 : vector<8x8xf32>
    %cst_63 = arith.constant dense<0.000000e+00> : vector<8x8xf32>
    %160 = tpu.matmul %159, %146, %cst_63 {dimension_numbers = #tpu.dot_dimension_numbers<[1], [0], [0], [1], [0, 0, 1, 1], [], []>} : vector<8x8xf32>, vector<8x8xf32>, vector<8x8xf32> -> vector<8x8xf32>
    %161 = vector.extract_strided_slice %124 {offsets = [0, 16], sizes = [8, 8], strides = [1, 1]} : vector<8x32xf32> to vector<8x8xf32>
    %162 = vector.extract_strided_slice %125 {offsets = [0, 16], sizes = [8, 8], strides = [1, 1]} : vector<8x32xf32> to vector<8x8xf32>
    %163 = vector.extract_strided_slice %126 {offsets = [0, 16], sizes = [8, 8], strides = [1, 1]} : vector<8x32xf32> to vector<8x8xf32>
    %cst_64 = arith.constant dense<0.000000e+00> : vector<8x8xf32>
    %164 = tpu.matmul %161, %162, %cst_64 {dimension_numbers = #tpu.dot_dimension_numbers<[1], [1], [0], [0], [0, 0, 1, 0], [], []>} : vector<8x8xf32>, vector<8x8xf32>, vector<8x8xf32> -> vector<8x8xf32>
    %cst_65 = arith.constant -1.000000e+30 : f32
    %165 = vector.broadcast %cst_65 : f32 to vector<8x8xf32>
    %166 = arith.select %13, %164, %165 : vector<8x8xi1>, vector<8x8xf32>
    %cst_66 = arith.constant dense<0xFF800000> : vector<8xf32>
    %167 = vector.multi_reduction <maximumf>, %166, %cst_66 [1] : vector<8x8xf32> to vector<8xf32>
    %168 = vector.shape_cast %167 : vector<8xf32> to vector<8x1xf32>
    %169 = vector.broadcast %168 : vector<8x1xf32> to vector<8x8xf32>
    %170 = arith.subf %166, %169 : vector<8x8xf32>
    %171 = math.exp %170 : vector<8x8xf32>
    %cst_67 = arith.constant dense<0.000000e+00> : vector<8xf32>
    %172 = vector.multi_reduction <add>, %171, %cst_67 [1] : vector<8x8xf32> to vector<8xf32>
    %173 = vector.shape_cast %172 : vector<8xf32> to vector<8x1xf32>
    %174 = tpu.reciprocal %173 {approx = true} : vector<8x1xf32> -> vector<8x1xf32>
    %175 = vector.broadcast %174 : vector<8x1xf32> to vector<8x8xf32>
    %176 = arith.mulf %171, %175 : vector<8x8xf32>
    %cst_68 = arith.constant dense<0.000000e+00> : vector<8x8xf32>
    %177 = tpu.matmul %176, %163, %cst_68 {dimension_numbers = #tpu.dot_dimension_numbers<[1], [0], [0], [1], [0, 0, 1, 1], [], []>} : vector<8x8xf32>, vector<8x8xf32>, vector<8x8xf32> -> vector<8x8xf32>
    %178 = vector.extract_strided_slice %124 {offsets = [0, 24], sizes = [8, 8], strides = [1, 1]} : vector<8x32xf32> to vector<8x8xf32>
    %179 = vector.extract_strided_slice %125 {offsets = [0, 24], sizes = [8, 8], strides = [1, 1]} : vector<8x32xf32> to vector<8x8xf32>
    %180 = vector.extract_strided_slice %126 {offsets = [0, 24], sizes = [8, 8], strides = [1, 1]} : vector<8x32xf32> to vector<8x8xf32>
    %cst_69 = arith.constant dense<0.000000e+00> : vector<8x8xf32>
    %181 = tpu.matmul %178, %179, %cst_69 {dimension_numbers = #tpu.dot_dimension_numbers<[1], [1], [0], [0], [0, 0, 1, 0], [], []>} : vector<8x8xf32>, vector<8x8xf32>, vector<8x8xf32> -> vector<8x8xf32>
    %cst_70 = arith.constant -1.000000e+30 : f32
    %182 = vector.broadcast %cst_70 : f32 to vector<8x8xf32>
    %183 = arith.select %13, %181, %182 : vector<8x8xi1>, vector<8x8xf32>
    %cst_71 = arith.constant dense<0xFF800000> : vector<8xf32>
    %184 = vector.multi_reduction <maximumf>, %183, %cst_71 [1] : vector<8x8xf32> to vector<8xf32>
    %185 = vector.shape_cast %184 : vector<8xf32> to vector<8x1xf32>
    %186 = vector.broadcast %185 : vector<8x1xf32> to vector<8x8xf32>
    %187 = arith.subf %183, %186 : vector<8x8xf32>
    %188 = math.exp %187 : vector<8x8xf32>
    %cst_72 = arith.constant dense<0.000000e+00> : vector<8xf32>
    %189 = vector.multi_reduction <add>, %188, %cst_72 [1] : vector<8x8xf32> to vector<8xf32>
    %190 = vector.shape_cast %189 : vector<8xf32> to vector<8x1xf32>
    %191 = tpu.reciprocal %190 {approx = true} : vector<8x1xf32> -> vector<8x1xf32>
    %192 = vector.broadcast %191 : vector<8x1xf32> to vector<8x8xf32>
    %193 = arith.mulf %188, %192 : vector<8x8xf32>
    %cst_73 = arith.constant dense<0.000000e+00> : vector<8x8xf32>
    %194 = tpu.matmul %193, %180, %cst_73 {dimension_numbers = #tpu.dot_dimension_numbers<[1], [0], [0], [1], [0, 0, 1, 1], [], []>} : vector<8x8xf32>, vector<8x8xf32>, vector<8x8xf32> -> vector<8x8xf32>
    %195 = tpu.concatenate %143, %160, %177, %194 in 1 : vector<8x8xf32>, vector<8x8xf32>, vector<8x8xf32>, vector<8x8xf32> -> vector<8x32xf32>
    %196 = tpu.concatenate %123, %195 in 0 : vector<8x32xf32>, vector<8x32xf32> -> vector<16x32xf32>
    %cst_74 = arith.constant dense<0.000000e+00> : vector<16x32xf32>
    %197 = tpu.matmul %196, %17, %cst_74 {dimension_numbers = #tpu.dot_dimension_numbers<[1], [0], [0], [1], [0, 0, 1, 1], [], []>} : vector<16x32xf32>, vector<32x32xf32>, vector<16x32xf32> -> vector<16x32xf32>
    %198 = arith.addf %7, %197 : vector<16x32xf32>
    %199 = arith.mulf %198, %198 : vector<16x32xf32>
    %cst_75 = arith.constant dense<0.000000e+00> : vector<16xf32>
    %200 = vector.multi_reduction <add>, %199, %cst_75 [1] : vector<16x32xf32> to vector<16xf32>
    %201 = vector.shape_cast %200 : vector<16xf32> to vector<16x1xf32>
    %cst_76 = arith.constant 3.200000e+01 : f32
    %202 = vector.broadcast %cst_76 : f32 to vector<16x1xf32>
    %203 = arith.divf %201, %202 : vector<16x1xf32>
    %cst_77 = arith.constant 9.99999997E-7 : f32
    %204 = vector.broadcast %cst_77 : f32 to vector<16x1xf32>
    %205 = arith.addf %203, %204 : vector<16x1xf32>
    %206 = math.rsqrt %205 : vector<16x1xf32>
    %207 = vector.broadcast %206 : vector<16x1xf32> to vector<16x32xf32>
    %208 = arith.mulf %198, %207 : vector<16x32xf32>
    %209 = vector.broadcast %25 : vector<1x32xf32> to vector<16x32xf32>
    %210 = arith.mulf %208, %209 : vector<16x32xf32>
    %cst_78 = arith.constant dense<0.000000e+00> : vector<16x128xf32>
    %211 = tpu.matmul %210, %19, %cst_78 {dimension_numbers = #tpu.dot_dimension_numbers<[1], [0], [0], [1], [0, 0, 1, 1], [], []>} : vector<16x32xf32>, vector<32x128xf32>, vector<16x128xf32> -> vector<16x128xf32>
    %212 = vector.extract_strided_slice %211 {offsets = [0, 0], sizes = [16, 64], strides = [1, 1]} : vector<16x128xf32> to vector<16x64xf32>
    %213 = vector.extract_strided_slice %211 {offsets = [0, 64], sizes = [16, 64], strides = [1, 1]} : vector<16x128xf32> to vector<16x64xf32>
    %214 = arith.negf %212 : vector<16x64xf32>
    %215 = math.exp %214 : vector<16x64xf32>
    %cst_79 = arith.constant 1.000000e+00 : f32
    %216 = vector.broadcast %cst_79 : f32 to vector<16x64xf32>
    %217 = arith.addf %216, %215 : vector<16x64xf32>
    %218 = arith.divf %216, %217 : vector<16x64xf32>
    %219 = arith.mulf %212, %218 : vector<16x64xf32>
    %220 = arith.mulf %219, %213 : vector<16x64xf32>
    %cst_80 = arith.constant dense<0.000000e+00> : vector<16x32xf32>
    %221 = tpu.matmul %220, %21, %cst_80 {dimension_numbers = #tpu.dot_dimension_numbers<[1], [0], [0], [1], [0, 0, 1, 1], [], []>} : vector<16x64xf32>, vector<64x32xf32>, vector<16x32xf32> -> vector<16x32xf32>
    %222 = arith.addf %198, %221 : vector<16x32xf32>
    %c1 = arith.constant 1 : index
    %c0_81 = arith.constant 0 : index
    %c0_82 = arith.constant 0 : index
    %223 = vector.load %arg2[%c1, %c0_81, %c0_82] : memref<2x32x96xf32, #tpu.memory_space<vmem>>, vector<1x32x96xf32>
    %224 = vector.shape_cast %223 : vector<1x32x96xf32> to vector<32x96xf32>
    %c1_83 = arith.constant 1 : index
    %c0_84 = arith.constant 0 : index
    %c0_85 = arith.constant 0 : index
    %225 = vector.load %arg3[%c1_83, %c0_84, %c0_85] : memref<2x32x32xf32, #tpu.memory_space<vmem>>, vector<1x32x32xf32>
    %226 = vector.shape_cast %225 : vector<1x32x32xf32> to vector<32x32xf32>
    %c1_86 = arith.constant 1 : index
    %c0_87 = arith.constant 0 : index
    %c0_88 = arith.constant 0 : index
    %227 = vector.load %arg4[%c1_86, %c0_87, %c0_88] : memref<2x32x128xf32, #tpu.memory_space<vmem>>, vector<1x32x128xf32>
    %228 = vector.shape_cast %227 : vector<1x32x128xf32> to vector<32x128xf32>
    %c1_89 = arith.constant 1 : index
    %c0_90 = arith.constant 0 : index
    %c0_91 = arith.constant 0 : index
    %229 = vector.load %arg5[%c1_89, %c0_90, %c0_91] : memref<2x64x32xf32, #tpu.memory_space<vmem>>, vector<1x64x32xf32>
    %230 = vector.shape_cast %229 : vector<1x64x32xf32> to vector<64x32xf32>
    %c1_92 = arith.constant 1 : index
    %c0_93 = arith.constant 0 : index
    %c0_94 = arith.constant 0 : index
    %231 = vector.load %arg6[%c1_92, %c0_93, %c0_94] : memref<2x1x32xf32, #tpu.memory_space<vmem>>, vector<1x1x32xf32>
    %232 = vector.shape_cast %231 : vector<1x1x32xf32> to vector<1x32xf32>
    %c1_95 = arith.constant 1 : index
    %c0_96 = arith.constant 0 : index
    %c0_97 = arith.constant 0 : index
    %233 = vector.load %arg7[%c1_95, %c0_96, %c0_97] : memref<2x1x32xf32, #tpu.memory_space<vmem>>, vector<1x1x32xf32>
    %234 = vector.shape_cast %233 : vector<1x1x32xf32> to vector<1x32xf32>
    %235 = arith.mulf %222, %222 : vector<16x32xf32>
    %cst_98 = arith.constant dense<0.000000e+00> : vector<16xf32>
    %236 = vector.multi_reduction <add>, %235, %cst_98 [1] : vector<16x32xf32> to vector<16xf32>
    %237 = vector.shape_cast %236 : vector<16xf32> to vector<16x1xf32>
    %cst_99 = arith.constant 3.200000e+01 : f32
    %238 = vector.broadcast %cst_99 : f32 to vector<16x1xf32>
    %239 = arith.divf %237, %238 : vector<16x1xf32>
    %cst_100 = arith.constant 9.99999997E-7 : f32
    %240 = vector.broadcast %cst_100 : f32 to vector<16x1xf32>
    %241 = arith.addf %239, %240 : vector<16x1xf32>
    %242 = math.rsqrt %241 : vector<16x1xf32>
    %243 = vector.broadcast %242 : vector<16x1xf32> to vector<16x32xf32>
    %244 = arith.mulf %222, %243 : vector<16x32xf32>
    %245 = vector.broadcast %232 : vector<1x32xf32> to vector<16x32xf32>
    %246 = arith.mulf %244, %245 : vector<16x32xf32>
    %cst_101 = arith.constant dense<0.000000e+00> : vector<16x96xf32>
    %247 = tpu.matmul %246, %224, %cst_101 {dimension_numbers = #tpu.dot_dimension_numbers<[1], [0], [0], [1], [0, 0, 1, 1], [], []>} : vector<16x32xf32>, vector<32x96xf32>, vector<16x96xf32> -> vector<16x96xf32>
    %248 = vector.extract_strided_slice %247 {offsets = [0, 0], sizes = [16, 32], strides = [1, 1]} : vector<16x96xf32> to vector<16x32xf32>
    %cst_102 = arith.constant 0.353553385 : f32
    %249 = vector.broadcast %cst_102 : f32 to vector<16x32xf32>
    %250 = arith.mulf %248, %249 : vector<16x32xf32>
    %251 = vector.extract_strided_slice %247 {offsets = [0, 32], sizes = [16, 32], strides = [1, 1]} : vector<16x96xf32> to vector<16x32xf32>
    %252 = vector.extract_strided_slice %247 {offsets = [0, 64], sizes = [16, 32], strides = [1, 1]} : vector<16x96xf32> to vector<16x32xf32>
    %253 = arith.mulf %250, %8 : vector<16x32xf32>
    %cst_103 = arith.constant dense<0.000000e+00> : vector<16x32xf32>
    %254 = tpu.matmul %250, %10, %cst_103 {dimension_numbers = #tpu.dot_dimension_numbers<[1], [0], [0], [1], [0, 0, 1, 1], [], []>} : vector<16x32xf32>, vector<32x32xf32>, vector<16x32xf32> -> vector<16x32xf32>
    %255 = arith.mulf %254, %9 : vector<16x32xf32>
    %256 = arith.addf %253, %255 : vector<16x32xf32>
    %257 = arith.mulf %251, %8 : vector<16x32xf32>
    %cst_104 = arith.constant dense<0.000000e+00> : vector<16x32xf32>
    %258 = tpu.matmul %251, %10, %cst_104 {dimension_numbers = #tpu.dot_dimension_numbers<[1], [0], [0], [1], [0, 0, 1, 1], [], []>} : vector<16x32xf32>, vector<32x32xf32>, vector<16x32xf32> -> vector<16x32xf32>
    %259 = arith.mulf %258, %9 : vector<16x32xf32>
    %260 = arith.addf %257, %259 : vector<16x32xf32>
    %261 = vector.extract_strided_slice %256 {offsets = [0, 0], sizes = [8, 32], strides = [1, 1]} : vector<16x32xf32> to vector<8x32xf32>
    %262 = vector.extract_strided_slice %260 {offsets = [0, 0], sizes = [8, 32], strides = [1, 1]} : vector<16x32xf32> to vector<8x32xf32>
    %263 = vector.extract_strided_slice %252 {offsets = [0, 0], sizes = [8, 32], strides = [1, 1]} : vector<16x32xf32> to vector<8x32xf32>
    %264 = vector.extract_strided_slice %261 {offsets = [0, 0], sizes = [8, 8], strides = [1, 1]} : vector<8x32xf32> to vector<8x8xf32>
    %265 = vector.extract_strided_slice %262 {offsets = [0, 0], sizes = [8, 8], strides = [1, 1]} : vector<8x32xf32> to vector<8x8xf32>
    %266 = vector.extract_strided_slice %263 {offsets = [0, 0], sizes = [8, 8], strides = [1, 1]} : vector<8x32xf32> to vector<8x8xf32>
    %cst_105 = arith.constant dense<0.000000e+00> : vector<8x8xf32>
    %267 = tpu.matmul %264, %265, %cst_105 {dimension_numbers = #tpu.dot_dimension_numbers<[1], [1], [0], [0], [0, 0, 1, 0], [], []>} : vector<8x8xf32>, vector<8x8xf32>, vector<8x8xf32> -> vector<8x8xf32>
    %cst_106 = arith.constant -1.000000e+30 : f32
    %268 = vector.broadcast %cst_106 : f32 to vector<8x8xf32>
    %269 = arith.select %13, %267, %268 : vector<8x8xi1>, vector<8x8xf32>
    %cst_107 = arith.constant dense<0xFF800000> : vector<8xf32>
    %270 = vector.multi_reduction <maximumf>, %269, %cst_107 [1] : vector<8x8xf32> to vector<8xf32>
    %271 = vector.shape_cast %270 : vector<8xf32> to vector<8x1xf32>
    %272 = vector.broadcast %271 : vector<8x1xf32> to vector<8x8xf32>
    %273 = arith.subf %269, %272 : vector<8x8xf32>
    %274 = math.exp %273 : vector<8x8xf32>
    %cst_108 = arith.constant dense<0.000000e+00> : vector<8xf32>
    %275 = vector.multi_reduction <add>, %274, %cst_108 [1] : vector<8x8xf32> to vector<8xf32>
    %276 = vector.shape_cast %275 : vector<8xf32> to vector<8x1xf32>
    %277 = tpu.reciprocal %276 {approx = true} : vector<8x1xf32> -> vector<8x1xf32>
    %278 = vector.broadcast %277 : vector<8x1xf32> to vector<8x8xf32>
    %279 = arith.mulf %274, %278 : vector<8x8xf32>
    %cst_109 = arith.constant dense<0.000000e+00> : vector<8x8xf32>
    %280 = tpu.matmul %279, %266, %cst_109 {dimension_numbers = #tpu.dot_dimension_numbers<[1], [0], [0], [1], [0, 0, 1, 1], [], []>} : vector<8x8xf32>, vector<8x8xf32>, vector<8x8xf32> -> vector<8x8xf32>
    %281 = vector.extract_strided_slice %261 {offsets = [0, 8], sizes = [8, 8], strides = [1, 1]} : vector<8x32xf32> to vector<8x8xf32>
    %282 = vector.extract_strided_slice %262 {offsets = [0, 8], sizes = [8, 8], strides = [1, 1]} : vector<8x32xf32> to vector<8x8xf32>
    %283 = vector.extract_strided_slice %263 {offsets = [0, 8], sizes = [8, 8], strides = [1, 1]} : vector<8x32xf32> to vector<8x8xf32>
    %cst_110 = arith.constant dense<0.000000e+00> : vector<8x8xf32>
    %284 = tpu.matmul %281, %282, %cst_110 {dimension_numbers = #tpu.dot_dimension_numbers<[1], [1], [0], [0], [0, 0, 1, 0], [], []>} : vector<8x8xf32>, vector<8x8xf32>, vector<8x8xf32> -> vector<8x8xf32>
    %cst_111 = arith.constant -1.000000e+30 : f32
    %285 = vector.broadcast %cst_111 : f32 to vector<8x8xf32>
    %286 = arith.select %13, %284, %285 : vector<8x8xi1>, vector<8x8xf32>
    %cst_112 = arith.constant dense<0xFF800000> : vector<8xf32>
    %287 = vector.multi_reduction <maximumf>, %286, %cst_112 [1] : vector<8x8xf32> to vector<8xf32>
    %288 = vector.shape_cast %287 : vector<8xf32> to vector<8x1xf32>
    %289 = vector.broadcast %288 : vector<8x1xf32> to vector<8x8xf32>
    %290 = arith.subf %286, %289 : vector<8x8xf32>
    %291 = math.exp %290 : vector<8x8xf32>
    %cst_113 = arith.constant dense<0.000000e+00> : vector<8xf32>
    %292 = vector.multi_reduction <add>, %291, %cst_113 [1] : vector<8x8xf32> to vector<8xf32>
    %293 = vector.shape_cast %292 : vector<8xf32> to vector<8x1xf32>
    %294 = tpu.reciprocal %293 {approx = true} : vector<8x1xf32> -> vector<8x1xf32>
    %295 = vector.broadcast %294 : vector<8x1xf32> to vector<8x8xf32>
    %296 = arith.mulf %291, %295 : vector<8x8xf32>
    %cst_114 = arith.constant dense<0.000000e+00> : vector<8x8xf32>
    %297 = tpu.matmul %296, %283, %cst_114 {dimension_numbers = #tpu.dot_dimension_numbers<[1], [0], [0], [1], [0, 0, 1, 1], [], []>} : vector<8x8xf32>, vector<8x8xf32>, vector<8x8xf32> -> vector<8x8xf32>
    %298 = vector.extract_strided_slice %261 {offsets = [0, 16], sizes = [8, 8], strides = [1, 1]} : vector<8x32xf32> to vector<8x8xf32>
    %299 = vector.extract_strided_slice %262 {offsets = [0, 16], sizes = [8, 8], strides = [1, 1]} : vector<8x32xf32> to vector<8x8xf32>
    %300 = vector.extract_strided_slice %263 {offsets = [0, 16], sizes = [8, 8], strides = [1, 1]} : vector<8x32xf32> to vector<8x8xf32>
    %cst_115 = arith.constant dense<0.000000e+00> : vector<8x8xf32>
    %301 = tpu.matmul %298, %299, %cst_115 {dimension_numbers = #tpu.dot_dimension_numbers<[1], [1], [0], [0], [0, 0, 1, 0], [], []>} : vector<8x8xf32>, vector<8x8xf32>, vector<8x8xf32> -> vector<8x8xf32>
    %cst_116 = arith.constant -1.000000e+30 : f32
    %302 = vector.broadcast %cst_116 : f32 to vector<8x8xf32>
    %303 = arith.select %13, %301, %302 : vector<8x8xi1>, vector<8x8xf32>
    %cst_117 = arith.constant dense<0xFF800000> : vector<8xf32>
    %304 = vector.multi_reduction <maximumf>, %303, %cst_117 [1] : vector<8x8xf32> to vector<8xf32>
    %305 = vector.shape_cast %304 : vector<8xf32> to vector<8x1xf32>
    %306 = vector.broadcast %305 : vector<8x1xf32> to vector<8x8xf32>
    %307 = arith.subf %303, %306 : vector<8x8xf32>
    %308 = math.exp %307 : vector<8x8xf32>
    %cst_118 = arith.constant dense<0.000000e+00> : vector<8xf32>
    %309 = vector.multi_reduction <add>, %308, %cst_118 [1] : vector<8x8xf32> to vector<8xf32>
    %310 = vector.shape_cast %309 : vector<8xf32> to vector<8x1xf32>
    %311 = tpu.reciprocal %310 {approx = true} : vector<8x1xf32> -> vector<8x1xf32>
    %312 = vector.broadcast %311 : vector<8x1xf32> to vector<8x8xf32>
    %313 = arith.mulf %308, %312 : vector<8x8xf32>
    %cst_119 = arith.constant dense<0.000000e+00> : vector<8x8xf32>
    %314 = tpu.matmul %313, %300, %cst_119 {dimension_numbers = #tpu.dot_dimension_numbers<[1], [0], [0], [1], [0, 0, 1, 1], [], []>} : vector<8x8xf32>, vector<8x8xf32>, vector<8x8xf32> -> vector<8x8xf32>
    %315 = vector.extract_strided_slice %261 {offsets = [0, 24], sizes = [8, 8], strides = [1, 1]} : vector<8x32xf32> to vector<8x8xf32>
    %316 = vector.extract_strided_slice %262 {offsets = [0, 24], sizes = [8, 8], strides = [1, 1]} : vector<8x32xf32> to vector<8x8xf32>
    %317 = vector.extract_strided_slice %263 {offsets = [0, 24], sizes = [8, 8], strides = [1, 1]} : vector<8x32xf32> to vector<8x8xf32>
    %cst_120 = arith.constant dense<0.000000e+00> : vector<8x8xf32>
    %318 = tpu.matmul %315, %316, %cst_120 {dimension_numbers = #tpu.dot_dimension_numbers<[1], [1], [0], [0], [0, 0, 1, 0], [], []>} : vector<8x8xf32>, vector<8x8xf32>, vector<8x8xf32> -> vector<8x8xf32>
    %cst_121 = arith.constant -1.000000e+30 : f32
    %319 = vector.broadcast %cst_121 : f32 to vector<8x8xf32>
    %320 = arith.select %13, %318, %319 : vector<8x8xi1>, vector<8x8xf32>
    %cst_122 = arith.constant dense<0xFF800000> : vector<8xf32>
    %321 = vector.multi_reduction <maximumf>, %320, %cst_122 [1] : vector<8x8xf32> to vector<8xf32>
    %322 = vector.shape_cast %321 : vector<8xf32> to vector<8x1xf32>
    %323 = vector.broadcast %322 : vector<8x1xf32> to vector<8x8xf32>
    %324 = arith.subf %320, %323 : vector<8x8xf32>
    %325 = math.exp %324 : vector<8x8xf32>
    %cst_123 = arith.constant dense<0.000000e+00> : vector<8xf32>
    %326 = vector.multi_reduction <add>, %325, %cst_123 [1] : vector<8x8xf32> to vector<8xf32>
    %327 = vector.shape_cast %326 : vector<8xf32> to vector<8x1xf32>
    %328 = tpu.reciprocal %327 {approx = true} : vector<8x1xf32> -> vector<8x1xf32>
    %329 = vector.broadcast %328 : vector<8x1xf32> to vector<8x8xf32>
    %330 = arith.mulf %325, %329 : vector<8x8xf32>
    %cst_124 = arith.constant dense<0.000000e+00> : vector<8x8xf32>
    %331 = tpu.matmul %330, %317, %cst_124 {dimension_numbers = #tpu.dot_dimension_numbers<[1], [0], [0], [1], [0, 0, 1, 1], [], []>} : vector<8x8xf32>, vector<8x8xf32>, vector<8x8xf32> -> vector<8x8xf32>
    %332 = tpu.concatenate %280, %297, %314, %331 in 1 : vector<8x8xf32>, vector<8x8xf32>, vector<8x8xf32>, vector<8x8xf32> -> vector<8x32xf32>
    %333 = vector.extract_strided_slice %256 {offsets = [8, 0], sizes = [8, 32], strides = [1, 1]} : vector<16x32xf32> to vector<8x32xf32>
    %334 = vector.extract_strided_slice %260 {offsets = [8, 0], sizes = [8, 32], strides = [1, 1]} : vector<16x32xf32> to vector<8x32xf32>
    %335 = vector.extract_strided_slice %252 {offsets = [8, 0], sizes = [8, 32], strides = [1, 1]} : vector<16x32xf32> to vector<8x32xf32>
    %336 = vector.extract_strided_slice %333 {offsets = [0, 0], sizes = [8, 8], strides = [1, 1]} : vector<8x32xf32> to vector<8x8xf32>
    %337 = vector.extract_strided_slice %334 {offsets = [0, 0], sizes = [8, 8], strides = [1, 1]} : vector<8x32xf32> to vector<8x8xf32>
    %338 = vector.extract_strided_slice %335 {offsets = [0, 0], sizes = [8, 8], strides = [1, 1]} : vector<8x32xf32> to vector<8x8xf32>
    %cst_125 = arith.constant dense<0.000000e+00> : vector<8x8xf32>
    %339 = tpu.matmul %336, %337, %cst_125 {dimension_numbers = #tpu.dot_dimension_numbers<[1], [1], [0], [0], [0, 0, 1, 0], [], []>} : vector<8x8xf32>, vector<8x8xf32>, vector<8x8xf32> -> vector<8x8xf32>
    %cst_126 = arith.constant -1.000000e+30 : f32
    %340 = vector.broadcast %cst_126 : f32 to vector<8x8xf32>
    %341 = arith.select %13, %339, %340 : vector<8x8xi1>, vector<8x8xf32>
    %cst_127 = arith.constant dense<0xFF800000> : vector<8xf32>
    %342 = vector.multi_reduction <maximumf>, %341, %cst_127 [1] : vector<8x8xf32> to vector<8xf32>
    %343 = vector.shape_cast %342 : vector<8xf32> to vector<8x1xf32>
    %344 = vector.broadcast %343 : vector<8x1xf32> to vector<8x8xf32>
    %345 = arith.subf %341, %344 : vector<8x8xf32>
    %346 = math.exp %345 : vector<8x8xf32>
    %cst_128 = arith.constant dense<0.000000e+00> : vector<8xf32>
    %347 = vector.multi_reduction <add>, %346, %cst_128 [1] : vector<8x8xf32> to vector<8xf32>
    %348 = vector.shape_cast %347 : vector<8xf32> to vector<8x1xf32>
    %349 = tpu.reciprocal %348 {approx = true} : vector<8x1xf32> -> vector<8x1xf32>
    %350 = vector.broadcast %349 : vector<8x1xf32> to vector<8x8xf32>
    %351 = arith.mulf %346, %350 : vector<8x8xf32>
    %cst_129 = arith.constant dense<0.000000e+00> : vector<8x8xf32>
    %352 = tpu.matmul %351, %338, %cst_129 {dimension_numbers = #tpu.dot_dimension_numbers<[1], [0], [0], [1], [0, 0, 1, 1], [], []>} : vector<8x8xf32>, vector<8x8xf32>, vector<8x8xf32> -> vector<8x8xf32>
    %353 = vector.extract_strided_slice %333 {offsets = [0, 8], sizes = [8, 8], strides = [1, 1]} : vector<8x32xf32> to vector<8x8xf32>
    %354 = vector.extract_strided_slice %334 {offsets = [0, 8], sizes = [8, 8], strides = [1, 1]} : vector<8x32xf32> to vector<8x8xf32>
    %355 = vector.extract_strided_slice %335 {offsets = [0, 8], sizes = [8, 8], strides = [1, 1]} : vector<8x32xf32> to vector<8x8xf32>
    %cst_130 = arith.constant dense<0.000000e+00> : vector<8x8xf32>
    %356 = tpu.matmul %353, %354, %cst_130 {dimension_numbers = #tpu.dot_dimension_numbers<[1], [1], [0], [0], [0, 0, 1, 0], [], []>} : vector<8x8xf32>, vector<8x8xf32>, vector<8x8xf32> -> vector<8x8xf32>
    %cst_131 = arith.constant -1.000000e+30 : f32
    %357 = vector.broadcast %cst_131 : f32 to vector<8x8xf32>
    %358 = arith.select %13, %356, %357 : vector<8x8xi1>, vector<8x8xf32>
    %cst_132 = arith.constant dense<0xFF800000> : vector<8xf32>
    %359 = vector.multi_reduction <maximumf>, %358, %cst_132 [1] : vector<8x8xf32> to vector<8xf32>
    %360 = vector.shape_cast %359 : vector<8xf32> to vector<8x1xf32>
    %361 = vector.broadcast %360 : vector<8x1xf32> to vector<8x8xf32>
    %362 = arith.subf %358, %361 : vector<8x8xf32>
    %363 = math.exp %362 : vector<8x8xf32>
    %cst_133 = arith.constant dense<0.000000e+00> : vector<8xf32>
    %364 = vector.multi_reduction <add>, %363, %cst_133 [1] : vector<8x8xf32> to vector<8xf32>
    %365 = vector.shape_cast %364 : vector<8xf32> to vector<8x1xf32>
    %366 = tpu.reciprocal %365 {approx = true} : vector<8x1xf32> -> vector<8x1xf32>
    %367 = vector.broadcast %366 : vector<8x1xf32> to vector<8x8xf32>
    %368 = arith.mulf %363, %367 : vector<8x8xf32>
    %cst_134 = arith.constant dense<0.000000e+00> : vector<8x8xf32>
    %369 = tpu.matmul %368, %355, %cst_134 {dimension_numbers = #tpu.dot_dimension_numbers<[1], [0], [0], [1], [0, 0, 1, 1], [], []>} : vector<8x8xf32>, vector<8x8xf32>, vector<8x8xf32> -> vector<8x8xf32>
    %370 = vector.extract_strided_slice %333 {offsets = [0, 16], sizes = [8, 8], strides = [1, 1]} : vector<8x32xf32> to vector<8x8xf32>
    %371 = vector.extract_strided_slice %334 {offsets = [0, 16], sizes = [8, 8], strides = [1, 1]} : vector<8x32xf32> to vector<8x8xf32>
    %372 = vector.extract_strided_slice %335 {offsets = [0, 16], sizes = [8, 8], strides = [1, 1]} : vector<8x32xf32> to vector<8x8xf32>
    %cst_135 = arith.constant dense<0.000000e+00> : vector<8x8xf32>
    %373 = tpu.matmul %370, %371, %cst_135 {dimension_numbers = #tpu.dot_dimension_numbers<[1], [1], [0], [0], [0, 0, 1, 0], [], []>} : vector<8x8xf32>, vector<8x8xf32>, vector<8x8xf32> -> vector<8x8xf32>
    %cst_136 = arith.constant -1.000000e+30 : f32
    %374 = vector.broadcast %cst_136 : f32 to vector<8x8xf32>
    %375 = arith.select %13, %373, %374 : vector<8x8xi1>, vector<8x8xf32>
    %cst_137 = arith.constant dense<0xFF800000> : vector<8xf32>
    %376 = vector.multi_reduction <maximumf>, %375, %cst_137 [1] : vector<8x8xf32> to vector<8xf32>
    %377 = vector.shape_cast %376 : vector<8xf32> to vector<8x1xf32>
    %378 = vector.broadcast %377 : vector<8x1xf32> to vector<8x8xf32>
    %379 = arith.subf %375, %378 : vector<8x8xf32>
    %380 = math.exp %379 : vector<8x8xf32>
    %cst_138 = arith.constant dense<0.000000e+00> : vector<8xf32>
    %381 = vector.multi_reduction <add>, %380, %cst_138 [1] : vector<8x8xf32> to vector<8xf32>
    %382 = vector.shape_cast %381 : vector<8xf32> to vector<8x1xf32>
    %383 = tpu.reciprocal %382 {approx = true} : vector<8x1xf32> -> vector<8x1xf32>
    %384 = vector.broadcast %383 : vector<8x1xf32> to vector<8x8xf32>
    %385 = arith.mulf %380, %384 : vector<8x8xf32>
    %cst_139 = arith.constant dense<0.000000e+00> : vector<8x8xf32>
    %386 = tpu.matmul %385, %372, %cst_139 {dimension_numbers = #tpu.dot_dimension_numbers<[1], [0], [0], [1], [0, 0, 1, 1], [], []>} : vector<8x8xf32>, vector<8x8xf32>, vector<8x8xf32> -> vector<8x8xf32>
    %387 = vector.extract_strided_slice %333 {offsets = [0, 24], sizes = [8, 8], strides = [1, 1]} : vector<8x32xf32> to vector<8x8xf32>
    %388 = vector.extract_strided_slice %334 {offsets = [0, 24], sizes = [8, 8], strides = [1, 1]} : vector<8x32xf32> to vector<8x8xf32>
    %389 = vector.extract_strided_slice %335 {offsets = [0, 24], sizes = [8, 8], strides = [1, 1]} : vector<8x32xf32> to vector<8x8xf32>
    %cst_140 = arith.constant dense<0.000000e+00> : vector<8x8xf32>
    %390 = tpu.matmul %387, %388, %cst_140 {dimension_numbers = #tpu.dot_dimension_numbers<[1], [1], [0], [0], [0, 0, 1, 0], [], []>} : vector<8x8xf32>, vector<8x8xf32>, vector<8x8xf32> -> vector<8x8xf32>
    %cst_141 = arith.constant -1.000000e+30 : f32
    %391 = vector.broadcast %cst_141 : f32 to vector<8x8xf32>
    %392 = arith.select %13, %390, %391 : vector<8x8xi1>, vector<8x8xf32>
    %cst_142 = arith.constant dense<0xFF800000> : vector<8xf32>
    %393 = vector.multi_reduction <maximumf>, %392, %cst_142 [1] : vector<8x8xf32> to vector<8xf32>
    %394 = vector.shape_cast %393 : vector<8xf32> to vector<8x1xf32>
    %395 = vector.broadcast %394 : vector<8x1xf32> to vector<8x8xf32>
    %396 = arith.subf %392, %395 : vector<8x8xf32>
    %397 = math.exp %396 : vector<8x8xf32>
    %cst_143 = arith.constant dense<0.000000e+00> : vector<8xf32>
    %398 = vector.multi_reduction <add>, %397, %cst_143 [1] : vector<8x8xf32> to vector<8xf32>
    %399 = vector.shape_cast %398 : vector<8xf32> to vector<8x1xf32>
    %400 = tpu.reciprocal %399 {approx = true} : vector<8x1xf32> -> vector<8x1xf32>
    %401 = vector.broadcast %400 : vector<8x1xf32> to vector<8x8xf32>
    %402 = arith.mulf %397, %401 : vector<8x8xf32>
    %cst_144 = arith.constant dense<0.000000e+00> : vector<8x8xf32>
    %403 = tpu.matmul %402, %389, %cst_144 {dimension_numbers = #tpu.dot_dimension_numbers<[1], [0], [0], [1], [0, 0, 1, 1], [], []>} : vector<8x8xf32>, vector<8x8xf32>, vector<8x8xf32> -> vector<8x8xf32>
    %404 = tpu.concatenate %352, %369, %386, %403 in 1 : vector<8x8xf32>, vector<8x8xf32>, vector<8x8xf32>, vector<8x8xf32> -> vector<8x32xf32>
    %405 = tpu.concatenate %332, %404 in 0 : vector<8x32xf32>, vector<8x32xf32> -> vector<16x32xf32>
    %cst_145 = arith.constant dense<0.000000e+00> : vector<16x32xf32>
    %406 = tpu.matmul %405, %226, %cst_145 {dimension_numbers = #tpu.dot_dimension_numbers<[1], [0], [0], [1], [0, 0, 1, 1], [], []>} : vector<16x32xf32>, vector<32x32xf32>, vector<16x32xf32> -> vector<16x32xf32>
    %407 = arith.addf %222, %406 : vector<16x32xf32>
    %408 = arith.mulf %407, %407 : vector<16x32xf32>
    %cst_146 = arith.constant dense<0.000000e+00> : vector<16xf32>
    %409 = vector.multi_reduction <add>, %408, %cst_146 [1] : vector<16x32xf32> to vector<16xf32>
    %410 = vector.shape_cast %409 : vector<16xf32> to vector<16x1xf32>
    %cst_147 = arith.constant 3.200000e+01 : f32
    %411 = vector.broadcast %cst_147 : f32 to vector<16x1xf32>
    %412 = arith.divf %410, %411 : vector<16x1xf32>
    %cst_148 = arith.constant 9.99999997E-7 : f32
    %413 = vector.broadcast %cst_148 : f32 to vector<16x1xf32>
    %414 = arith.addf %412, %413 : vector<16x1xf32>
    %415 = math.rsqrt %414 : vector<16x1xf32>
    %416 = vector.broadcast %415 : vector<16x1xf32> to vector<16x32xf32>
    %417 = arith.mulf %407, %416 : vector<16x32xf32>
    %418 = vector.broadcast %234 : vector<1x32xf32> to vector<16x32xf32>
    %419 = arith.mulf %417, %418 : vector<16x32xf32>
    %cst_149 = arith.constant dense<0.000000e+00> : vector<16x128xf32>
    %420 = tpu.matmul %419, %228, %cst_149 {dimension_numbers = #tpu.dot_dimension_numbers<[1], [0], [0], [1], [0, 0, 1, 1], [], []>} : vector<16x32xf32>, vector<32x128xf32>, vector<16x128xf32> -> vector<16x128xf32>
    %421 = vector.extract_strided_slice %420 {offsets = [0, 0], sizes = [16, 64], strides = [1, 1]} : vector<16x128xf32> to vector<16x64xf32>
    %422 = vector.extract_strided_slice %420 {offsets = [0, 64], sizes = [16, 64], strides = [1, 1]} : vector<16x128xf32> to vector<16x64xf32>
    %423 = arith.negf %421 : vector<16x64xf32>
    %424 = math.exp %423 : vector<16x64xf32>
    %cst_150 = arith.constant 1.000000e+00 : f32
    %425 = vector.broadcast %cst_150 : f32 to vector<16x64xf32>
    %426 = arith.addf %425, %424 : vector<16x64xf32>
    %427 = arith.divf %425, %426 : vector<16x64xf32>
    %428 = arith.mulf %421, %427 : vector<16x64xf32>
    %429 = arith.mulf %428, %422 : vector<16x64xf32>
    %cst_151 = arith.constant dense<0.000000e+00> : vector<16x32xf32>
    %430 = tpu.matmul %429, %230, %cst_151 {dimension_numbers = #tpu.dot_dimension_numbers<[1], [0], [0], [1], [0, 0, 1, 1], [], []>} : vector<16x64xf32>, vector<64x32xf32>, vector<16x32xf32> -> vector<16x32xf32>
    %431 = arith.addf %407, %430 : vector<16x32xf32>
    %c0_152 = arith.constant 0 : index
    %c0_153 = arith.constant 0 : index
    %c0_154 = arith.constant 0 : index
    %432 = vector.load %arg8[%c0_152, %c0_153, %c0_154] : memref<4x32x96xf32, #tpu.memory_space<vmem>>, vector<1x32x96xf32>
    %433 = vector.shape_cast %432 : vector<1x32x96xf32> to vector<32x96xf32>
    %c0_155 = arith.constant 0 : index
    %c0_156 = arith.constant 0 : index
    %c0_157 = arith.constant 0 : index
    %434 = vector.load %arg9[%c0_155, %c0_156, %c0_157] : memref<4x32x32xf32, #tpu.memory_space<vmem>>, vector<1x32x32xf32>
    %435 = vector.shape_cast %434 : vector<1x32x32xf32> to vector<32x32xf32>
    %c0_158 = arith.constant 0 : index
    %c0_159 = arith.constant 0 : index
    %c0_160 = arith.constant 0 : index
    %436 = vector.load %arg10[%c0_158, %c0_159, %c0_160] : memref<4x32x128xf32, #tpu.memory_space<vmem>>, vector<1x32x128xf32>
    %437 = vector.shape_cast %436 : vector<1x32x128xf32> to vector<32x128xf32>
    %c0_161 = arith.constant 0 : index
    %c0_162 = arith.constant 0 : index
    %c0_163 = arith.constant 0 : index
    %438 = vector.load %arg11[%c0_161, %c0_162, %c0_163] : memref<4x64x32xf32, #tpu.memory_space<vmem>>, vector<1x64x32xf32>
    %439 = vector.shape_cast %438 : vector<1x64x32xf32> to vector<64x32xf32>
    %c0_164 = arith.constant 0 : index
    %c0_165 = arith.constant 0 : index
    %c0_166 = arith.constant 0 : index
    %440 = vector.load %arg12[%c0_164, %c0_165, %c0_166] : memref<4x1x32xf32, #tpu.memory_space<vmem>>, vector<1x1x32xf32>
    %441 = vector.shape_cast %440 : vector<1x1x32xf32> to vector<1x32xf32>
    %c0_167 = arith.constant 0 : index
    %c0_168 = arith.constant 0 : index
    %c0_169 = arith.constant 0 : index
    %442 = vector.load %arg13[%c0_167, %c0_168, %c0_169] : memref<4x1x32xf32, #tpu.memory_space<vmem>>, vector<1x1x32xf32>
    %443 = vector.shape_cast %442 : vector<1x1x32xf32> to vector<1x32xf32>
    %444 = arith.mulf %431, %431 : vector<16x32xf32>
    %cst_170 = arith.constant dense<0.000000e+00> : vector<16xf32>
    %445 = vector.multi_reduction <add>, %444, %cst_170 [1] : vector<16x32xf32> to vector<16xf32>
    %446 = vector.shape_cast %445 : vector<16xf32> to vector<16x1xf32>
    %cst_171 = arith.constant 3.200000e+01 : f32
    %447 = vector.broadcast %cst_171 : f32 to vector<16x1xf32>
    %448 = arith.divf %446, %447 : vector<16x1xf32>
    %cst_172 = arith.constant 9.99999997E-7 : f32
    %449 = vector.broadcast %cst_172 : f32 to vector<16x1xf32>
    %450 = arith.addf %448, %449 : vector<16x1xf32>
    %451 = math.rsqrt %450 : vector<16x1xf32>
    %452 = vector.broadcast %451 : vector<16x1xf32> to vector<16x32xf32>
    %453 = arith.mulf %431, %452 : vector<16x32xf32>
    %454 = vector.broadcast %441 : vector<1x32xf32> to vector<16x32xf32>
    %455 = arith.mulf %453, %454 : vector<16x32xf32>
    %cst_173 = arith.constant dense<0.000000e+00> : vector<16x96xf32>
    %456 = tpu.matmul %455, %433, %cst_173 {dimension_numbers = #tpu.dot_dimension_numbers<[1], [0], [0], [1], [0, 0, 1, 1], [], []>} : vector<16x32xf32>, vector<32x96xf32>, vector<16x96xf32> -> vector<16x96xf32>
    %457 = vector.extract_strided_slice %456 {offsets = [0, 0], sizes = [16, 32], strides = [1, 1]} : vector<16x96xf32> to vector<16x32xf32>
    %cst_174 = arith.constant 0.353553385 : f32
    %458 = vector.broadcast %cst_174 : f32 to vector<16x32xf32>
    %459 = arith.mulf %457, %458 : vector<16x32xf32>
    %460 = vector.extract_strided_slice %456 {offsets = [0, 32], sizes = [16, 32], strides = [1, 1]} : vector<16x96xf32> to vector<16x32xf32>
    %461 = vector.extract_strided_slice %456 {offsets = [0, 64], sizes = [16, 32], strides = [1, 1]} : vector<16x96xf32> to vector<16x32xf32>
    %462 = arith.mulf %459, %8 : vector<16x32xf32>
    %cst_175 = arith.constant dense<0.000000e+00> : vector<16x32xf32>
    %463 = tpu.matmul %459, %10, %cst_175 {dimension_numbers = #tpu.dot_dimension_numbers<[1], [0], [0], [1], [0, 0, 1, 1], [], []>} : vector<16x32xf32>, vector<32x32xf32>, vector<16x32xf32> -> vector<16x32xf32>
    %464 = arith.mulf %463, %9 : vector<16x32xf32>
    %465 = arith.addf %462, %464 : vector<16x32xf32>
    %466 = arith.mulf %460, %8 : vector<16x32xf32>
    %cst_176 = arith.constant dense<0.000000e+00> : vector<16x32xf32>
    %467 = tpu.matmul %460, %10, %cst_176 {dimension_numbers = #tpu.dot_dimension_numbers<[1], [0], [0], [1], [0, 0, 1, 1], [], []>} : vector<16x32xf32>, vector<32x32xf32>, vector<16x32xf32> -> vector<16x32xf32>
    %468 = arith.mulf %467, %9 : vector<16x32xf32>
    %469 = arith.addf %466, %468 : vector<16x32xf32>
    %470 = vector.extract_strided_slice %465 {offsets = [0, 0], sizes = [8, 32], strides = [1, 1]} : vector<16x32xf32> to vector<8x32xf32>
    %471 = vector.extract_strided_slice %469 {offsets = [0, 0], sizes = [8, 32], strides = [1, 1]} : vector<16x32xf32> to vector<8x32xf32>
    %472 = vector.extract_strided_slice %461 {offsets = [0, 0], sizes = [8, 32], strides = [1, 1]} : vector<16x32xf32> to vector<8x32xf32>
    %473 = vector.extract_strided_slice %470 {offsets = [0, 0], sizes = [8, 8], strides = [1, 1]} : vector<8x32xf32> to vector<8x8xf32>
    %474 = vector.extract_strided_slice %471 {offsets = [0, 0], sizes = [8, 8], strides = [1, 1]} : vector<8x32xf32> to vector<8x8xf32>
    %475 = vector.extract_strided_slice %472 {offsets = [0, 0], sizes = [8, 8], strides = [1, 1]} : vector<8x32xf32> to vector<8x8xf32>
    %cst_177 = arith.constant dense<0.000000e+00> : vector<8x8xf32>
    %476 = tpu.matmul %473, %474, %cst_177 {dimension_numbers = #tpu.dot_dimension_numbers<[1], [1], [0], [0], [0, 0, 1, 0], [], []>} : vector<8x8xf32>, vector<8x8xf32>, vector<8x8xf32> -> vector<8x8xf32>
    %cst_178 = arith.constant -1.000000e+30 : f32
    %477 = vector.broadcast %cst_178 : f32 to vector<8x8xf32>
    %478 = arith.select %13, %476, %477 : vector<8x8xi1>, vector<8x8xf32>
    %cst_179 = arith.constant dense<0xFF800000> : vector<8xf32>
    %479 = vector.multi_reduction <maximumf>, %478, %cst_179 [1] : vector<8x8xf32> to vector<8xf32>
    %480 = vector.shape_cast %479 : vector<8xf32> to vector<8x1xf32>
    %481 = vector.broadcast %480 : vector<8x1xf32> to vector<8x8xf32>
    %482 = arith.subf %478, %481 : vector<8x8xf32>
    %483 = math.exp %482 : vector<8x8xf32>
    %cst_180 = arith.constant dense<0.000000e+00> : vector<8xf32>
    %484 = vector.multi_reduction <add>, %483, %cst_180 [1] : vector<8x8xf32> to vector<8xf32>
    %485 = vector.shape_cast %484 : vector<8xf32> to vector<8x1xf32>
    %486 = tpu.reciprocal %485 {approx = true} : vector<8x1xf32> -> vector<8x1xf32>
    %487 = vector.broadcast %486 : vector<8x1xf32> to vector<8x8xf32>
    %488 = arith.mulf %483, %487 : vector<8x8xf32>
    %cst_181 = arith.constant dense<0.000000e+00> : vector<8x8xf32>
    %489 = tpu.matmul %488, %475, %cst_181 {dimension_numbers = #tpu.dot_dimension_numbers<[1], [0], [0], [1], [0, 0, 1, 1], [], []>} : vector<8x8xf32>, vector<8x8xf32>, vector<8x8xf32> -> vector<8x8xf32>
    %490 = vector.extract_strided_slice %470 {offsets = [0, 8], sizes = [8, 8], strides = [1, 1]} : vector<8x32xf32> to vector<8x8xf32>
    %491 = vector.extract_strided_slice %471 {offsets = [0, 8], sizes = [8, 8], strides = [1, 1]} : vector<8x32xf32> to vector<8x8xf32>
    %492 = vector.extract_strided_slice %472 {offsets = [0, 8], sizes = [8, 8], strides = [1, 1]} : vector<8x32xf32> to vector<8x8xf32>
    %cst_182 = arith.constant dense<0.000000e+00> : vector<8x8xf32>
    %493 = tpu.matmul %490, %491, %cst_182 {dimension_numbers = #tpu.dot_dimension_numbers<[1], [1], [0], [0], [0, 0, 1, 0], [], []>} : vector<8x8xf32>, vector<8x8xf32>, vector<8x8xf32> -> vector<8x8xf32>
    %cst_183 = arith.constant -1.000000e+30 : f32
    %494 = vector.broadcast %cst_183 : f32 to vector<8x8xf32>
    %495 = arith.select %13, %493, %494 : vector<8x8xi1>, vector<8x8xf32>
    %cst_184 = arith.constant dense<0xFF800000> : vector<8xf32>
    %496 = vector.multi_reduction <maximumf>, %495, %cst_184 [1] : vector<8x8xf32> to vector<8xf32>
    %497 = vector.shape_cast %496 : vector<8xf32> to vector<8x1xf32>
    %498 = vector.broadcast %497 : vector<8x1xf32> to vector<8x8xf32>
    %499 = arith.subf %495, %498 : vector<8x8xf32>
    %500 = math.exp %499 : vector<8x8xf32>
    %cst_185 = arith.constant dense<0.000000e+00> : vector<8xf32>
    %501 = vector.multi_reduction <add>, %500, %cst_185 [1] : vector<8x8xf32> to vector<8xf32>
    %502 = vector.shape_cast %501 : vector<8xf32> to vector<8x1xf32>
    %503 = tpu.reciprocal %502 {approx = true} : vector<8x1xf32> -> vector<8x1xf32>
    %504 = vector.broadcast %503 : vector<8x1xf32> to vector<8x8xf32>
    %505 = arith.mulf %500, %504 : vector<8x8xf32>
    %cst_186 = arith.constant dense<0.000000e+00> : vector<8x8xf32>
    %506 = tpu.matmul %505, %492, %cst_186 {dimension_numbers = #tpu.dot_dimension_numbers<[1], [0], [0], [1], [0, 0, 1, 1], [], []>} : vector<8x8xf32>, vector<8x8xf32>, vector<8x8xf32> -> vector<8x8xf32>
    %507 = vector.extract_strided_slice %470 {offsets = [0, 16], sizes = [8, 8], strides = [1, 1]} : vector<8x32xf32> to vector<8x8xf32>
    %508 = vector.extract_strided_slice %471 {offsets = [0, 16], sizes = [8, 8], strides = [1, 1]} : vector<8x32xf32> to vector<8x8xf32>
    %509 = vector.extract_strided_slice %472 {offsets = [0, 16], sizes = [8, 8], strides = [1, 1]} : vector<8x32xf32> to vector<8x8xf32>
    %cst_187 = arith.constant dense<0.000000e+00> : vector<8x8xf32>
    %510 = tpu.matmul %507, %508, %cst_187 {dimension_numbers = #tpu.dot_dimension_numbers<[1], [1], [0], [0], [0, 0, 1, 0], [], []>} : vector<8x8xf32>, vector<8x8xf32>, vector<8x8xf32> -> vector<8x8xf32>
    %cst_188 = arith.constant -1.000000e+30 : f32
    %511 = vector.broadcast %cst_188 : f32 to vector<8x8xf32>
    %512 = arith.select %13, %510, %511 : vector<8x8xi1>, vector<8x8xf32>
    %cst_189 = arith.constant dense<0xFF800000> : vector<8xf32>
    %513 = vector.multi_reduction <maximumf>, %512, %cst_189 [1] : vector<8x8xf32> to vector<8xf32>
    %514 = vector.shape_cast %513 : vector<8xf32> to vector<8x1xf32>
    %515 = vector.broadcast %514 : vector<8x1xf32> to vector<8x8xf32>
    %516 = arith.subf %512, %515 : vector<8x8xf32>
    %517 = math.exp %516 : vector<8x8xf32>
    %cst_190 = arith.constant dense<0.000000e+00> : vector<8xf32>
    %518 = vector.multi_reduction <add>, %517, %cst_190 [1] : vector<8x8xf32> to vector<8xf32>
    %519 = vector.shape_cast %518 : vector<8xf32> to vector<8x1xf32>
    %520 = tpu.reciprocal %519 {approx = true} : vector<8x1xf32> -> vector<8x1xf32>
    %521 = vector.broadcast %520 : vector<8x1xf32> to vector<8x8xf32>
    %522 = arith.mulf %517, %521 : vector<8x8xf32>
    %cst_191 = arith.constant dense<0.000000e+00> : vector<8x8xf32>
    %523 = tpu.matmul %522, %509, %cst_191 {dimension_numbers = #tpu.dot_dimension_numbers<[1], [0], [0], [1], [0, 0, 1, 1], [], []>} : vector<8x8xf32>, vector<8x8xf32>, vector<8x8xf32> -> vector<8x8xf32>
    %524 = vector.extract_strided_slice %470 {offsets = [0, 24], sizes = [8, 8], strides = [1, 1]} : vector<8x32xf32> to vector<8x8xf32>
    %525 = vector.extract_strided_slice %471 {offsets = [0, 24], sizes = [8, 8], strides = [1, 1]} : vector<8x32xf32> to vector<8x8xf32>
    %526 = vector.extract_strided_slice %472 {offsets = [0, 24], sizes = [8, 8], strides = [1, 1]} : vector<8x32xf32> to vector<8x8xf32>
    %cst_192 = arith.constant dense<0.000000e+00> : vector<8x8xf32>
    %527 = tpu.matmul %524, %525, %cst_192 {dimension_numbers = #tpu.dot_dimension_numbers<[1], [1], [0], [0], [0, 0, 1, 0], [], []>} : vector<8x8xf32>, vector<8x8xf32>, vector<8x8xf32> -> vector<8x8xf32>
    %cst_193 = arith.constant -1.000000e+30 : f32
    %528 = vector.broadcast %cst_193 : f32 to vector<8x8xf32>
    %529 = arith.select %13, %527, %528 : vector<8x8xi1>, vector<8x8xf32>
    %cst_194 = arith.constant dense<0xFF800000> : vector<8xf32>
    %530 = vector.multi_reduction <maximumf>, %529, %cst_194 [1] : vector<8x8xf32> to vector<8xf32>
    %531 = vector.shape_cast %530 : vector<8xf32> to vector<8x1xf32>
    %532 = vector.broadcast %531 : vector<8x1xf32> to vector<8x8xf32>
    %533 = arith.subf %529, %532 : vector<8x8xf32>
    %534 = math.exp %533 : vector<8x8xf32>
    %cst_195 = arith.constant dense<0.000000e+00> : vector<8xf32>
    %535 = vector.multi_reduction <add>, %534, %cst_195 [1] : vector<8x8xf32> to vector<8xf32>
    %536 = vector.shape_cast %535 : vector<8xf32> to vector<8x1xf32>
    %537 = tpu.reciprocal %536 {approx = true} : vector<8x1xf32> -> vector<8x1xf32>
    %538 = vector.broadcast %537 : vector<8x1xf32> to vector<8x8xf32>
    %539 = arith.mulf %534, %538 : vector<8x8xf32>
    %cst_196 = arith.constant dense<0.000000e+00> : vector<8x8xf32>
    %540 = tpu.matmul %539, %526, %cst_196 {dimension_numbers = #tpu.dot_dimension_numbers<[1], [0], [0], [1], [0, 0, 1, 1], [], []>} : vector<8x8xf32>, vector<8x8xf32>, vector<8x8xf32> -> vector<8x8xf32>
    %541 = tpu.concatenate %489, %506, %523, %540 in 1 : vector<8x8xf32>, vector<8x8xf32>, vector<8x8xf32>, vector<8x8xf32> -> vector<8x32xf32>
    %542 = vector.extract_strided_slice %465 {offsets = [8, 0], sizes = [8, 32], strides = [1, 1]} : vector<16x32xf32> to vector<8x32xf32>
    %543 = vector.extract_strided_slice %469 {offsets = [8, 0], sizes = [8, 32], strides = [1, 1]} : vector<16x32xf32> to vector<8x32xf32>
    %544 = vector.extract_strided_slice %461 {offsets = [8, 0], sizes = [8, 32], strides = [1, 1]} : vector<16x32xf32> to vector<8x32xf32>
    %545 = vector.extract_strided_slice %542 {offsets = [0, 0], sizes = [8, 8], strides = [1, 1]} : vector<8x32xf32> to vector<8x8xf32>
    %546 = vector.extract_strided_slice %543 {offsets = [0, 0], sizes = [8, 8], strides = [1, 1]} : vector<8x32xf32> to vector<8x8xf32>
    %547 = vector.extract_strided_slice %544 {offsets = [0, 0], sizes = [8, 8], strides = [1, 1]} : vector<8x32xf32> to vector<8x8xf32>
    %cst_197 = arith.constant dense<0.000000e+00> : vector<8x8xf32>
    %548 = tpu.matmul %545, %546, %cst_197 {dimension_numbers = #tpu.dot_dimension_numbers<[1], [1], [0], [0], [0, 0, 1, 0], [], []>} : vector<8x8xf32>, vector<8x8xf32>, vector<8x8xf32> -> vector<8x8xf32>
    %cst_198 = arith.constant -1.000000e+30 : f32
    %549 = vector.broadcast %cst_198 : f32 to vector<8x8xf32>
    %550 = arith.select %13, %548, %549 : vector<8x8xi1>, vector<8x8xf32>
    %cst_199 = arith.constant dense<0xFF800000> : vector<8xf32>
    %551 = vector.multi_reduction <maximumf>, %550, %cst_199 [1] : vector<8x8xf32> to vector<8xf32>
    %552 = vector.shape_cast %551 : vector<8xf32> to vector<8x1xf32>
    %553 = vector.broadcast %552 : vector<8x1xf32> to vector<8x8xf32>
    %554 = arith.subf %550, %553 : vector<8x8xf32>
    %555 = math.exp %554 : vector<8x8xf32>
    %cst_200 = arith.constant dense<0.000000e+00> : vector<8xf32>
    %556 = vector.multi_reduction <add>, %555, %cst_200 [1] : vector<8x8xf32> to vector<8xf32>
    %557 = vector.shape_cast %556 : vector<8xf32> to vector<8x1xf32>
    %558 = tpu.reciprocal %557 {approx = true} : vector<8x1xf32> -> vector<8x1xf32>
    %559 = vector.broadcast %558 : vector<8x1xf32> to vector<8x8xf32>
    %560 = arith.mulf %555, %559 : vector<8x8xf32>
    %cst_201 = arith.constant dense<0.000000e+00> : vector<8x8xf32>
    %561 = tpu.matmul %560, %547, %cst_201 {dimension_numbers = #tpu.dot_dimension_numbers<[1], [0], [0], [1], [0, 0, 1, 1], [], []>} : vector<8x8xf32>, vector<8x8xf32>, vector<8x8xf32> -> vector<8x8xf32>
    %562 = vector.extract_strided_slice %542 {offsets = [0, 8], sizes = [8, 8], strides = [1, 1]} : vector<8x32xf32> to vector<8x8xf32>
    %563 = vector.extract_strided_slice %543 {offsets = [0, 8], sizes = [8, 8], strides = [1, 1]} : vector<8x32xf32> to vector<8x8xf32>
    %564 = vector.extract_strided_slice %544 {offsets = [0, 8], sizes = [8, 8], strides = [1, 1]} : vector<8x32xf32> to vector<8x8xf32>
    %cst_202 = arith.constant dense<0.000000e+00> : vector<8x8xf32>
    %565 = tpu.matmul %562, %563, %cst_202 {dimension_numbers = #tpu.dot_dimension_numbers<[1], [1], [0], [0], [0, 0, 1, 0], [], []>} : vector<8x8xf32>, vector<8x8xf32>, vector<8x8xf32> -> vector<8x8xf32>
    %cst_203 = arith.constant -1.000000e+30 : f32
    %566 = vector.broadcast %cst_203 : f32 to vector<8x8xf32>
    %567 = arith.select %13, %565, %566 : vector<8x8xi1>, vector<8x8xf32>
    %cst_204 = arith.constant dense<0xFF800000> : vector<8xf32>
    %568 = vector.multi_reduction <maximumf>, %567, %cst_204 [1] : vector<8x8xf32> to vector<8xf32>
    %569 = vector.shape_cast %568 : vector<8xf32> to vector<8x1xf32>
    %570 = vector.broadcast %569 : vector<8x1xf32> to vector<8x8xf32>
    %571 = arith.subf %567, %570 : vector<8x8xf32>
    %572 = math.exp %571 : vector<8x8xf32>
    %cst_205 = arith.constant dense<0.000000e+00> : vector<8xf32>
    %573 = vector.multi_reduction <add>, %572, %cst_205 [1] : vector<8x8xf32> to vector<8xf32>
    %574 = vector.shape_cast %573 : vector<8xf32> to vector<8x1xf32>
    %575 = tpu.reciprocal %574 {approx = true} : vector<8x1xf32> -> vector<8x1xf32>
    %576 = vector.broadcast %575 : vector<8x1xf32> to vector<8x8xf32>
    %577 = arith.mulf %572, %576 : vector<8x8xf32>
    %cst_206 = arith.constant dense<0.000000e+00> : vector<8x8xf32>
    %578 = tpu.matmul %577, %564, %cst_206 {dimension_numbers = #tpu.dot_dimension_numbers<[1], [0], [0], [1], [0, 0, 1, 1], [], []>} : vector<8x8xf32>, vector<8x8xf32>, vector<8x8xf32> -> vector<8x8xf32>
    %579 = vector.extract_strided_slice %542 {offsets = [0, 16], sizes = [8, 8], strides = [1, 1]} : vector<8x32xf32> to vector<8x8xf32>
    %580 = vector.extract_strided_slice %543 {offsets = [0, 16], sizes = [8, 8], strides = [1, 1]} : vector<8x32xf32> to vector<8x8xf32>
    %581 = vector.extract_strided_slice %544 {offsets = [0, 16], sizes = [8, 8], strides = [1, 1]} : vector<8x32xf32> to vector<8x8xf32>
    %cst_207 = arith.constant dense<0.000000e+00> : vector<8x8xf32>
    %582 = tpu.matmul %579, %580, %cst_207 {dimension_numbers = #tpu.dot_dimension_numbers<[1], [1], [0], [0], [0, 0, 1, 0], [], []>} : vector<8x8xf32>, vector<8x8xf32>, vector<8x8xf32> -> vector<8x8xf32>
    %cst_208 = arith.constant -1.000000e+30 : f32
    %583 = vector.broadcast %cst_208 : f32 to vector<8x8xf32>
    %584 = arith.select %13, %582, %583 : vector<8x8xi1>, vector<8x8xf32>
    %cst_209 = arith.constant dense<0xFF800000> : vector<8xf32>
    %585 = vector.multi_reduction <maximumf>, %584, %cst_209 [1] : vector<8x8xf32> to vector<8xf32>
    %586 = vector.shape_cast %585 : vector<8xf32> to vector<8x1xf32>
    %587 = vector.broadcast %586 : vector<8x1xf32> to vector<8x8xf32>
    %588 = arith.subf %584, %587 : vector<8x8xf32>
    %589 = math.exp %588 : vector<8x8xf32>
    %cst_210 = arith.constant dense<0.000000e+00> : vector<8xf32>
    %590 = vector.multi_reduction <add>, %589, %cst_210 [1] : vector<8x8xf32> to vector<8xf32>
    %591 = vector.shape_cast %590 : vector<8xf32> to vector<8x1xf32>
    %592 = tpu.reciprocal %591 {approx = true} : vector<8x1xf32> -> vector<8x1xf32>
    %593 = vector.broadcast %592 : vector<8x1xf32> to vector<8x8xf32>
    %594 = arith.mulf %589, %593 : vector<8x8xf32>
    %cst_211 = arith.constant dense<0.000000e+00> : vector<8x8xf32>
    %595 = tpu.matmul %594, %581, %cst_211 {dimension_numbers = #tpu.dot_dimension_numbers<[1], [0], [0], [1], [0, 0, 1, 1], [], []>} : vector<8x8xf32>, vector<8x8xf32>, vector<8x8xf32> -> vector<8x8xf32>
    %596 = vector.extract_strided_slice %542 {offsets = [0, 24], sizes = [8, 8], strides = [1, 1]} : vector<8x32xf32> to vector<8x8xf32>
    %597 = vector.extract_strided_slice %543 {offsets = [0, 24], sizes = [8, 8], strides = [1, 1]} : vector<8x32xf32> to vector<8x8xf32>
    %598 = vector.extract_strided_slice %544 {offsets = [0, 24], sizes = [8, 8], strides = [1, 1]} : vector<8x32xf32> to vector<8x8xf32>
    %cst_212 = arith.constant dense<0.000000e+00> : vector<8x8xf32>
    %599 = tpu.matmul %596, %597, %cst_212 {dimension_numbers = #tpu.dot_dimension_numbers<[1], [1], [0], [0], [0, 0, 1, 0], [], []>} : vector<8x8xf32>, vector<8x8xf32>, vector<8x8xf32> -> vector<8x8xf32>
    %cst_213 = arith.constant -1.000000e+30 : f32
    %600 = vector.broadcast %cst_213 : f32 to vector<8x8xf32>
    %601 = arith.select %13, %599, %600 : vector<8x8xi1>, vector<8x8xf32>
    %cst_214 = arith.constant dense<0xFF800000> : vector<8xf32>
    %602 = vector.multi_reduction <maximumf>, %601, %cst_214 [1] : vector<8x8xf32> to vector<8xf32>
    %603 = vector.shape_cast %602 : vector<8xf32> to vector<8x1xf32>
    %604 = vector.broadcast %603 : vector<8x1xf32> to vector<8x8xf32>
    %605 = arith.subf %601, %604 : vector<8x8xf32>
    %606 = math.exp %605 : vector<8x8xf32>
    %cst_215 = arith.constant dense<0.000000e+00> : vector<8xf32>
    %607 = vector.multi_reduction <add>, %606, %cst_215 [1] : vector<8x8xf32> to vector<8xf32>
    %608 = vector.shape_cast %607 : vector<8xf32> to vector<8x1xf32>
    %609 = tpu.reciprocal %608 {approx = true} : vector<8x1xf32> -> vector<8x1xf32>
    %610 = vector.broadcast %609 : vector<8x1xf32> to vector<8x8xf32>
    %611 = arith.mulf %606, %610 : vector<8x8xf32>
    %cst_216 = arith.constant dense<0.000000e+00> : vector<8x8xf32>
    %612 = tpu.matmul %611, %598, %cst_216 {dimension_numbers = #tpu.dot_dimension_numbers<[1], [0], [0], [1], [0, 0, 1, 1], [], []>} : vector<8x8xf32>, vector<8x8xf32>, vector<8x8xf32> -> vector<8x8xf32>
    %613 = tpu.concatenate %561, %578, %595, %612 in 1 : vector<8x8xf32>, vector<8x8xf32>, vector<8x8xf32>, vector<8x8xf32> -> vector<8x32xf32>
    %614 = tpu.concatenate %541, %613 in 0 : vector<8x32xf32>, vector<8x32xf32> -> vector<16x32xf32>
    %cst_217 = arith.constant dense<0.000000e+00> : vector<16x32xf32>
    %615 = tpu.matmul %614, %435, %cst_217 {dimension_numbers = #tpu.dot_dimension_numbers<[1], [0], [0], [1], [0, 0, 1, 1], [], []>} : vector<16x32xf32>, vector<32x32xf32>, vector<16x32xf32> -> vector<16x32xf32>
    %616 = arith.addf %431, %615 : vector<16x32xf32>
    %617 = arith.mulf %616, %616 : vector<16x32xf32>
    %cst_218 = arith.constant dense<0.000000e+00> : vector<16xf32>
    %618 = vector.multi_reduction <add>, %617, %cst_218 [1] : vector<16x32xf32> to vector<16xf32>
    %619 = vector.shape_cast %618 : vector<16xf32> to vector<16x1xf32>
    %cst_219 = arith.constant 3.200000e+01 : f32
    %620 = vector.broadcast %cst_219 : f32 to vector<16x1xf32>
    %621 = arith.divf %619, %620 : vector<16x1xf32>
    %cst_220 = arith.constant 9.99999997E-7 : f32
    %622 = vector.broadcast %cst_220 : f32 to vector<16x1xf32>
    %623 = arith.addf %621, %622 : vector<16x1xf32>
    %624 = math.rsqrt %623 : vector<16x1xf32>
    %625 = vector.broadcast %624 : vector<16x1xf32> to vector<16x32xf32>
    %626 = arith.mulf %616, %625 : vector<16x32xf32>
    %627 = vector.broadcast %443 : vector<1x32xf32> to vector<16x32xf32>
    %628 = arith.mulf %626, %627 : vector<16x32xf32>
    %cst_221 = arith.constant dense<0.000000e+00> : vector<16x128xf32>
    %629 = tpu.matmul %628, %437, %cst_221 {dimension_numbers = #tpu.dot_dimension_numbers<[1], [0], [0], [1], [0, 0, 1, 1], [], []>} : vector<16x32xf32>, vector<32x128xf32>, vector<16x128xf32> -> vector<16x128xf32>
    %630 = vector.extract_strided_slice %629 {offsets = [0, 0], sizes = [16, 64], strides = [1, 1]} : vector<16x128xf32> to vector<16x64xf32>
    %631 = vector.extract_strided_slice %629 {offsets = [0, 64], sizes = [16, 64], strides = [1, 1]} : vector<16x128xf32> to vector<16x64xf32>
    %632 = arith.negf %630 : vector<16x64xf32>
    %633 = math.exp %632 : vector<16x64xf32>
    %cst_222 = arith.constant 1.000000e+00 : f32
    %634 = vector.broadcast %cst_222 : f32 to vector<16x64xf32>
    %635 = arith.addf %634, %633 : vector<16x64xf32>
    %636 = arith.divf %634, %635 : vector<16x64xf32>
    %637 = arith.mulf %630, %636 : vector<16x64xf32>
    %638 = arith.mulf %637, %631 : vector<16x64xf32>
    %cst_223 = arith.constant dense<0.000000e+00> : vector<16x32xf32>
    %639 = tpu.matmul %638, %439, %cst_223 {dimension_numbers = #tpu.dot_dimension_numbers<[1], [0], [0], [1], [0, 0, 1, 1], [], []>} : vector<16x64xf32>, vector<64x32xf32>, vector<16x32xf32> -> vector<16x32xf32>
    %640 = arith.addf %616, %639 : vector<16x32xf32>
    %c1_224 = arith.constant 1 : index
    %c0_225 = arith.constant 0 : index
    %c0_226 = arith.constant 0 : index
    %641 = vector.load %arg8[%c1_224, %c0_225, %c0_226] : memref<4x32x96xf32, #tpu.memory_space<vmem>>, vector<1x32x96xf32>
    %642 = vector.shape_cast %641 : vector<1x32x96xf32> to vector<32x96xf32>
    %c1_227 = arith.constant 1 : index
    %c0_228 = arith.constant 0 : index
    %c0_229 = arith.constant 0 : index
    %643 = vector.load %arg9[%c1_227, %c0_228, %c0_229] : memref<4x32x32xf32, #tpu.memory_space<vmem>>, vector<1x32x32xf32>
    %644 = vector.shape_cast %643 : vector<1x32x32xf32> to vector<32x32xf32>
    %c1_230 = arith.constant 1 : index
    %c0_231 = arith.constant 0 : index
    %c0_232 = arith.constant 0 : index
    %645 = vector.load %arg10[%c1_230, %c0_231, %c0_232] : memref<4x32x128xf32, #tpu.memory_space<vmem>>, vector<1x32x128xf32>
    %646 = vector.shape_cast %645 : vector<1x32x128xf32> to vector<32x128xf32>
    %c1_233 = arith.constant 1 : index
    %c0_234 = arith.constant 0 : index
    %c0_235 = arith.constant 0 : index
    %647 = vector.load %arg11[%c1_233, %c0_234, %c0_235] : memref<4x64x32xf32, #tpu.memory_space<vmem>>, vector<1x64x32xf32>
    %648 = vector.shape_cast %647 : vector<1x64x32xf32> to vector<64x32xf32>
    %c1_236 = arith.constant 1 : index
    %c0_237 = arith.constant 0 : index
    %c0_238 = arith.constant 0 : index
    %649 = vector.load %arg12[%c1_236, %c0_237, %c0_238] : memref<4x1x32xf32, #tpu.memory_space<vmem>>, vector<1x1x32xf32>
    %650 = vector.shape_cast %649 : vector<1x1x32xf32> to vector<1x32xf32>
    %c1_239 = arith.constant 1 : index
    %c0_240 = arith.constant 0 : index
    %c0_241 = arith.constant 0 : index
    %651 = vector.load %arg13[%c1_239, %c0_240, %c0_241] : memref<4x1x32xf32, #tpu.memory_space<vmem>>, vector<1x1x32xf32>
    %652 = vector.shape_cast %651 : vector<1x1x32xf32> to vector<1x32xf32>
    %653 = arith.mulf %640, %640 : vector<16x32xf32>
    %cst_242 = arith.constant dense<0.000000e+00> : vector<16xf32>
    %654 = vector.multi_reduction <add>, %653, %cst_242 [1] : vector<16x32xf32> to vector<16xf32>
    %655 = vector.shape_cast %654 : vector<16xf32> to vector<16x1xf32>
    %cst_243 = arith.constant 3.200000e+01 : f32
    %656 = vector.broadcast %cst_243 : f32 to vector<16x1xf32>
    %657 = arith.divf %655, %656 : vector<16x1xf32>
    %cst_244 = arith.constant 9.99999997E-7 : f32
    %658 = vector.broadcast %cst_244 : f32 to vector<16x1xf32>
    %659 = arith.addf %657, %658 : vector<16x1xf32>
    %660 = math.rsqrt %659 : vector<16x1xf32>
    %661 = vector.broadcast %660 : vector<16x1xf32> to vector<16x32xf32>
    %662 = arith.mulf %640, %661 : vector<16x32xf32>
    %663 = vector.broadcast %650 : vector<1x32xf32> to vector<16x32xf32>
    %664 = arith.mulf %662, %663 : vector<16x32xf32>
    %cst_245 = arith.constant dense<0.000000e+00> : vector<16x96xf32>
    %665 = tpu.matmul %664, %642, %cst_245 {dimension_numbers = #tpu.dot_dimension_numbers<[1], [0], [0], [1], [0, 0, 1, 1], [], []>} : vector<16x32xf32>, vector<32x96xf32>, vector<16x96xf32> -> vector<16x96xf32>
    %666 = vector.extract_strided_slice %665 {offsets = [0, 0], sizes = [16, 32], strides = [1, 1]} : vector<16x96xf32> to vector<16x32xf32>
    %cst_246 = arith.constant 0.353553385 : f32
    %667 = vector.broadcast %cst_246 : f32 to vector<16x32xf32>
    %668 = arith.mulf %666, %667 : vector<16x32xf32>
    %669 = vector.extract_strided_slice %665 {offsets = [0, 32], sizes = [16, 32], strides = [1, 1]} : vector<16x96xf32> to vector<16x32xf32>
    %670 = vector.extract_strided_slice %665 {offsets = [0, 64], sizes = [16, 32], strides = [1, 1]} : vector<16x96xf32> to vector<16x32xf32>
    %671 = arith.mulf %668, %8 : vector<16x32xf32>
    %cst_247 = arith.constant dense<0.000000e+00> : vector<16x32xf32>
    %672 = tpu.matmul %668, %10, %cst_247 {dimension_numbers = #tpu.dot_dimension_numbers<[1], [0], [0], [1], [0, 0, 1, 1], [], []>} : vector<16x32xf32>, vector<32x32xf32>, vector<16x32xf32> -> vector<16x32xf32>
    %673 = arith.mulf %672, %9 : vector<16x32xf32>
    %674 = arith.addf %671, %673 : vector<16x32xf32>
    %675 = arith.mulf %669, %8 : vector<16x32xf32>
    %cst_248 = arith.constant dense<0.000000e+00> : vector<16x32xf32>
    %676 = tpu.matmul %669, %10, %cst_248 {dimension_numbers = #tpu.dot_dimension_numbers<[1], [0], [0], [1], [0, 0, 1, 1], [], []>} : vector<16x32xf32>, vector<32x32xf32>, vector<16x32xf32> -> vector<16x32xf32>
    %677 = arith.mulf %676, %9 : vector<16x32xf32>
    %678 = arith.addf %675, %677 : vector<16x32xf32>
    %679 = vector.extract_strided_slice %674 {offsets = [0, 0], sizes = [8, 32], strides = [1, 1]} : vector<16x32xf32> to vector<8x32xf32>
    %680 = vector.extract_strided_slice %678 {offsets = [0, 0], sizes = [8, 32], strides = [1, 1]} : vector<16x32xf32> to vector<8x32xf32>
    %681 = vector.extract_strided_slice %670 {offsets = [0, 0], sizes = [8, 32], strides = [1, 1]} : vector<16x32xf32> to vector<8x32xf32>
    %682 = vector.extract_strided_slice %679 {offsets = [0, 0], sizes = [8, 8], strides = [1, 1]} : vector<8x32xf32> to vector<8x8xf32>
    %683 = vector.extract_strided_slice %680 {offsets = [0, 0], sizes = [8, 8], strides = [1, 1]} : vector<8x32xf32> to vector<8x8xf32>
    %684 = vector.extract_strided_slice %681 {offsets = [0, 0], sizes = [8, 8], strides = [1, 1]} : vector<8x32xf32> to vector<8x8xf32>
    %cst_249 = arith.constant dense<0.000000e+00> : vector<8x8xf32>
    %685 = tpu.matmul %682, %683, %cst_249 {dimension_numbers = #tpu.dot_dimension_numbers<[1], [1], [0], [0], [0, 0, 1, 0], [], []>} : vector<8x8xf32>, vector<8x8xf32>, vector<8x8xf32> -> vector<8x8xf32>
    %cst_250 = arith.constant -1.000000e+30 : f32
    %686 = vector.broadcast %cst_250 : f32 to vector<8x8xf32>
    %687 = arith.select %13, %685, %686 : vector<8x8xi1>, vector<8x8xf32>
    %cst_251 = arith.constant dense<0xFF800000> : vector<8xf32>
    %688 = vector.multi_reduction <maximumf>, %687, %cst_251 [1] : vector<8x8xf32> to vector<8xf32>
    %689 = vector.shape_cast %688 : vector<8xf32> to vector<8x1xf32>
    %690 = vector.broadcast %689 : vector<8x1xf32> to vector<8x8xf32>
    %691 = arith.subf %687, %690 : vector<8x8xf32>
    %692 = math.exp %691 : vector<8x8xf32>
    %cst_252 = arith.constant dense<0.000000e+00> : vector<8xf32>
    %693 = vector.multi_reduction <add>, %692, %cst_252 [1] : vector<8x8xf32> to vector<8xf32>
    %694 = vector.shape_cast %693 : vector<8xf32> to vector<8x1xf32>
    %695 = tpu.reciprocal %694 {approx = true} : vector<8x1xf32> -> vector<8x1xf32>
    %696 = vector.broadcast %695 : vector<8x1xf32> to vector<8x8xf32>
    %697 = arith.mulf %692, %696 : vector<8x8xf32>
    %cst_253 = arith.constant dense<0.000000e+00> : vector<8x8xf32>
    %698 = tpu.matmul %697, %684, %cst_253 {dimension_numbers = #tpu.dot_dimension_numbers<[1], [0], [0], [1], [0, 0, 1, 1], [], []>} : vector<8x8xf32>, vector<8x8xf32>, vector<8x8xf32> -> vector<8x8xf32>
    %699 = vector.extract_strided_slice %679 {offsets = [0, 8], sizes = [8, 8], strides = [1, 1]} : vector<8x32xf32> to vector<8x8xf32>
    %700 = vector.extract_strided_slice %680 {offsets = [0, 8], sizes = [8, 8], strides = [1, 1]} : vector<8x32xf32> to vector<8x8xf32>
    %701 = vector.extract_strided_slice %681 {offsets = [0, 8], sizes = [8, 8], strides = [1, 1]} : vector<8x32xf32> to vector<8x8xf32>
    %cst_254 = arith.constant dense<0.000000e+00> : vector<8x8xf32>
    %702 = tpu.matmul %699, %700, %cst_254 {dimension_numbers = #tpu.dot_dimension_numbers<[1], [1], [0], [0], [0, 0, 1, 0], [], []>} : vector<8x8xf32>, vector<8x8xf32>, vector<8x8xf32> -> vector<8x8xf32>
    %cst_255 = arith.constant -1.000000e+30 : f32
    %703 = vector.broadcast %cst_255 : f32 to vector<8x8xf32>
    %704 = arith.select %13, %702, %703 : vector<8x8xi1>, vector<8x8xf32>
    %cst_256 = arith.constant dense<0xFF800000> : vector<8xf32>
    %705 = vector.multi_reduction <maximumf>, %704, %cst_256 [1] : vector<8x8xf32> to vector<8xf32>
    %706 = vector.shape_cast %705 : vector<8xf32> to vector<8x1xf32>
    %707 = vector.broadcast %706 : vector<8x1xf32> to vector<8x8xf32>
    %708 = arith.subf %704, %707 : vector<8x8xf32>
    %709 = math.exp %708 : vector<8x8xf32>
    %cst_257 = arith.constant dense<0.000000e+00> : vector<8xf32>
    %710 = vector.multi_reduction <add>, %709, %cst_257 [1] : vector<8x8xf32> to vector<8xf32>
    %711 = vector.shape_cast %710 : vector<8xf32> to vector<8x1xf32>
    %712 = tpu.reciprocal %711 {approx = true} : vector<8x1xf32> -> vector<8x1xf32>
    %713 = vector.broadcast %712 : vector<8x1xf32> to vector<8x8xf32>
    %714 = arith.mulf %709, %713 : vector<8x8xf32>
    %cst_258 = arith.constant dense<0.000000e+00> : vector<8x8xf32>
    %715 = tpu.matmul %714, %701, %cst_258 {dimension_numbers = #tpu.dot_dimension_numbers<[1], [0], [0], [1], [0, 0, 1, 1], [], []>} : vector<8x8xf32>, vector<8x8xf32>, vector<8x8xf32> -> vector<8x8xf32>
    %716 = vector.extract_strided_slice %679 {offsets = [0, 16], sizes = [8, 8], strides = [1, 1]} : vector<8x32xf32> to vector<8x8xf32>
    %717 = vector.extract_strided_slice %680 {offsets = [0, 16], sizes = [8, 8], strides = [1, 1]} : vector<8x32xf32> to vector<8x8xf32>
    %718 = vector.extract_strided_slice %681 {offsets = [0, 16], sizes = [8, 8], strides = [1, 1]} : vector<8x32xf32> to vector<8x8xf32>
    %cst_259 = arith.constant dense<0.000000e+00> : vector<8x8xf32>
    %719 = tpu.matmul %716, %717, %cst_259 {dimension_numbers = #tpu.dot_dimension_numbers<[1], [1], [0], [0], [0, 0, 1, 0], [], []>} : vector<8x8xf32>, vector<8x8xf32>, vector<8x8xf32> -> vector<8x8xf32>
    %cst_260 = arith.constant -1.000000e+30 : f32
    %720 = vector.broadcast %cst_260 : f32 to vector<8x8xf32>
    %721 = arith.select %13, %719, %720 : vector<8x8xi1>, vector<8x8xf32>
    %cst_261 = arith.constant dense<0xFF800000> : vector<8xf32>
    %722 = vector.multi_reduction <maximumf>, %721, %cst_261 [1] : vector<8x8xf32> to vector<8xf32>
    %723 = vector.shape_cast %722 : vector<8xf32> to vector<8x1xf32>
    %724 = vector.broadcast %723 : vector<8x1xf32> to vector<8x8xf32>
    %725 = arith.subf %721, %724 : vector<8x8xf32>
    %726 = math.exp %725 : vector<8x8xf32>
    %cst_262 = arith.constant dense<0.000000e+00> : vector<8xf32>
    %727 = vector.multi_reduction <add>, %726, %cst_262 [1] : vector<8x8xf32> to vector<8xf32>
    %728 = vector.shape_cast %727 : vector<8xf32> to vector<8x1xf32>
    %729 = tpu.reciprocal %728 {approx = true} : vector<8x1xf32> -> vector<8x1xf32>
    %730 = vector.broadcast %729 : vector<8x1xf32> to vector<8x8xf32>
    %731 = arith.mulf %726, %730 : vector<8x8xf32>
    %cst_263 = arith.constant dense<0.000000e+00> : vector<8x8xf32>
    %732 = tpu.matmul %731, %718, %cst_263 {dimension_numbers = #tpu.dot_dimension_numbers<[1], [0], [0], [1], [0, 0, 1, 1], [], []>} : vector<8x8xf32>, vector<8x8xf32>, vector<8x8xf32> -> vector<8x8xf32>
    %733 = vector.extract_strided_slice %679 {offsets = [0, 24], sizes = [8, 8], strides = [1, 1]} : vector<8x32xf32> to vector<8x8xf32>
    %734 = vector.extract_strided_slice %680 {offsets = [0, 24], sizes = [8, 8], strides = [1, 1]} : vector<8x32xf32> to vector<8x8xf32>
    %735 = vector.extract_strided_slice %681 {offsets = [0, 24], sizes = [8, 8], strides = [1, 1]} : vector<8x32xf32> to vector<8x8xf32>
    %cst_264 = arith.constant dense<0.000000e+00> : vector<8x8xf32>
    %736 = tpu.matmul %733, %734, %cst_264 {dimension_numbers = #tpu.dot_dimension_numbers<[1], [1], [0], [0], [0, 0, 1, 0], [], []>} : vector<8x8xf32>, vector<8x8xf32>, vector<8x8xf32> -> vector<8x8xf32>
    %cst_265 = arith.constant -1.000000e+30 : f32
    %737 = vector.broadcast %cst_265 : f32 to vector<8x8xf32>
    %738 = arith.select %13, %736, %737 : vector<8x8xi1>, vector<8x8xf32>
    %cst_266 = arith.constant dense<0xFF800000> : vector<8xf32>
    %739 = vector.multi_reduction <maximumf>, %738, %cst_266 [1] : vector<8x8xf32> to vector<8xf32>
    %740 = vector.shape_cast %739 : vector<8xf32> to vector<8x1xf32>
    %741 = vector.broadcast %740 : vector<8x1xf32> to vector<8x8xf32>
    %742 = arith.subf %738, %741 : vector<8x8xf32>
    %743 = math.exp %742 : vector<8x8xf32>
    %cst_267 = arith.constant dense<0.000000e+00> : vector<8xf32>
    %744 = vector.multi_reduction <add>, %743, %cst_267 [1] : vector<8x8xf32> to vector<8xf32>
    %745 = vector.shape_cast %744 : vector<8xf32> to vector<8x1xf32>
    %746 = tpu.reciprocal %745 {approx = true} : vector<8x1xf32> -> vector<8x1xf32>
    %747 = vector.broadcast %746 : vector<8x1xf32> to vector<8x8xf32>
    %748 = arith.mulf %743, %747 : vector<8x8xf32>
    %cst_268 = arith.constant dense<0.000000e+00> : vector<8x8xf32>
    %749 = tpu.matmul %748, %735, %cst_268 {dimension_numbers = #tpu.dot_dimension_numbers<[1], [0], [0], [1], [0, 0, 1, 1], [], []>} : vector<8x8xf32>, vector<8x8xf32>, vector<8x8xf32> -> vector<8x8xf32>
    %750 = tpu.concatenate %698, %715, %732, %749 in 1 : vector<8x8xf32>, vector<8x8xf32>, vector<8x8xf32>, vector<8x8xf32> -> vector<8x32xf32>
    %751 = vector.extract_strided_slice %674 {offsets = [8, 0], sizes = [8, 32], strides = [1, 1]} : vector<16x32xf32> to vector<8x32xf32>
    %752 = vector.extract_strided_slice %678 {offsets = [8, 0], sizes = [8, 32], strides = [1, 1]} : vector<16x32xf32> to vector<8x32xf32>
    %753 = vector.extract_strided_slice %670 {offsets = [8, 0], sizes = [8, 32], strides = [1, 1]} : vector<16x32xf32> to vector<8x32xf32>
    %754 = vector.extract_strided_slice %751 {offsets = [0, 0], sizes = [8, 8], strides = [1, 1]} : vector<8x32xf32> to vector<8x8xf32>
    %755 = vector.extract_strided_slice %752 {offsets = [0, 0], sizes = [8, 8], strides = [1, 1]} : vector<8x32xf32> to vector<8x8xf32>
    %756 = vector.extract_strided_slice %753 {offsets = [0, 0], sizes = [8, 8], strides = [1, 1]} : vector<8x32xf32> to vector<8x8xf32>
    %cst_269 = arith.constant dense<0.000000e+00> : vector<8x8xf32>
    %757 = tpu.matmul %754, %755, %cst_269 {dimension_numbers = #tpu.dot_dimension_numbers<[1], [1], [0], [0], [0, 0, 1, 0], [], []>} : vector<8x8xf32>, vector<8x8xf32>, vector<8x8xf32> -> vector<8x8xf32>
    %cst_270 = arith.constant -1.000000e+30 : f32
    %758 = vector.broadcast %cst_270 : f32 to vector<8x8xf32>
    %759 = arith.select %13, %757, %758 : vector<8x8xi1>, vector<8x8xf32>
    %cst_271 = arith.constant dense<0xFF800000> : vector<8xf32>
    %760 = vector.multi_reduction <maximumf>, %759, %cst_271 [1] : vector<8x8xf32> to vector<8xf32>
    %761 = vector.shape_cast %760 : vector<8xf32> to vector<8x1xf32>
    %762 = vector.broadcast %761 : vector<8x1xf32> to vector<8x8xf32>
    %763 = arith.subf %759, %762 : vector<8x8xf32>
    %764 = math.exp %763 : vector<8x8xf32>
    %cst_272 = arith.constant dense<0.000000e+00> : vector<8xf32>
    %765 = vector.multi_reduction <add>, %764, %cst_272 [1] : vector<8x8xf32> to vector<8xf32>
    %766 = vector.shape_cast %765 : vector<8xf32> to vector<8x1xf32>
    %767 = tpu.reciprocal %766 {approx = true} : vector<8x1xf32> -> vector<8x1xf32>
    %768 = vector.broadcast %767 : vector<8x1xf32> to vector<8x8xf32>
    %769 = arith.mulf %764, %768 : vector<8x8xf32>
    %cst_273 = arith.constant dense<0.000000e+00> : vector<8x8xf32>
    %770 = tpu.matmul %769, %756, %cst_273 {dimension_numbers = #tpu.dot_dimension_numbers<[1], [0], [0], [1], [0, 0, 1, 1], [], []>} : vector<8x8xf32>, vector<8x8xf32>, vector<8x8xf32> -> vector<8x8xf32>
    %771 = vector.extract_strided_slice %751 {offsets = [0, 8], sizes = [8, 8], strides = [1, 1]} : vector<8x32xf32> to vector<8x8xf32>
    %772 = vector.extract_strided_slice %752 {offsets = [0, 8], sizes = [8, 8], strides = [1, 1]} : vector<8x32xf32> to vector<8x8xf32>
    %773 = vector.extract_strided_slice %753 {offsets = [0, 8], sizes = [8, 8], strides = [1, 1]} : vector<8x32xf32> to vector<8x8xf32>
    %cst_274 = arith.constant dense<0.000000e+00> : vector<8x8xf32>
    %774 = tpu.matmul %771, %772, %cst_274 {dimension_numbers = #tpu.dot_dimension_numbers<[1], [1], [0], [0], [0, 0, 1, 0], [], []>} : vector<8x8xf32>, vector<8x8xf32>, vector<8x8xf32> -> vector<8x8xf32>
    %cst_275 = arith.constant -1.000000e+30 : f32
    %775 = vector.broadcast %cst_275 : f32 to vector<8x8xf32>
    %776 = arith.select %13, %774, %775 : vector<8x8xi1>, vector<8x8xf32>
    %cst_276 = arith.constant dense<0xFF800000> : vector<8xf32>
    %777 = vector.multi_reduction <maximumf>, %776, %cst_276 [1] : vector<8x8xf32> to vector<8xf32>
    %778 = vector.shape_cast %777 : vector<8xf32> to vector<8x1xf32>
    %779 = vector.broadcast %778 : vector<8x1xf32> to vector<8x8xf32>
    %780 = arith.subf %776, %779 : vector<8x8xf32>
    %781 = math.exp %780 : vector<8x8xf32>
    %cst_277 = arith.constant dense<0.000000e+00> : vector<8xf32>
    %782 = vector.multi_reduction <add>, %781, %cst_277 [1] : vector<8x8xf32> to vector<8xf32>
    %783 = vector.shape_cast %782 : vector<8xf32> to vector<8x1xf32>
    %784 = tpu.reciprocal %783 {approx = true} : vector<8x1xf32> -> vector<8x1xf32>
    %785 = vector.broadcast %784 : vector<8x1xf32> to vector<8x8xf32>
    %786 = arith.mulf %781, %785 : vector<8x8xf32>
    %cst_278 = arith.constant dense<0.000000e+00> : vector<8x8xf32>
    %787 = tpu.matmul %786, %773, %cst_278 {dimension_numbers = #tpu.dot_dimension_numbers<[1], [0], [0], [1], [0, 0, 1, 1], [], []>} : vector<8x8xf32>, vector<8x8xf32>, vector<8x8xf32> -> vector<8x8xf32>
    %788 = vector.extract_strided_slice %751 {offsets = [0, 16], sizes = [8, 8], strides = [1, 1]} : vector<8x32xf32> to vector<8x8xf32>
    %789 = vector.extract_strided_slice %752 {offsets = [0, 16], sizes = [8, 8], strides = [1, 1]} : vector<8x32xf32> to vector<8x8xf32>
    %790 = vector.extract_strided_slice %753 {offsets = [0, 16], sizes = [8, 8], strides = [1, 1]} : vector<8x32xf32> to vector<8x8xf32>
    %cst_279 = arith.constant dense<0.000000e+00> : vector<8x8xf32>
    %791 = tpu.matmul %788, %789, %cst_279 {dimension_numbers = #tpu.dot_dimension_numbers<[1], [1], [0], [0], [0, 0, 1, 0], [], []>} : vector<8x8xf32>, vector<8x8xf32>, vector<8x8xf32> -> vector<8x8xf32>
    %cst_280 = arith.constant -1.000000e+30 : f32
    %792 = vector.broadcast %cst_280 : f32 to vector<8x8xf32>
    %793 = arith.select %13, %791, %792 : vector<8x8xi1>, vector<8x8xf32>
    %cst_281 = arith.constant dense<0xFF800000> : vector<8xf32>
    %794 = vector.multi_reduction <maximumf>, %793, %cst_281 [1] : vector<8x8xf32> to vector<8xf32>
    %795 = vector.shape_cast %794 : vector<8xf32> to vector<8x1xf32>
    %796 = vector.broadcast %795 : vector<8x1xf32> to vector<8x8xf32>
    %797 = arith.subf %793, %796 : vector<8x8xf32>
    %798 = math.exp %797 : vector<8x8xf32>
    %cst_282 = arith.constant dense<0.000000e+00> : vector<8xf32>
    %799 = vector.multi_reduction <add>, %798, %cst_282 [1] : vector<8x8xf32> to vector<8xf32>
    %800 = vector.shape_cast %799 : vector<8xf32> to vector<8x1xf32>
    %801 = tpu.reciprocal %800 {approx = true} : vector<8x1xf32> -> vector<8x1xf32>
    %802 = vector.broadcast %801 : vector<8x1xf32> to vector<8x8xf32>
    %803 = arith.mulf %798, %802 : vector<8x8xf32>
    %cst_283 = arith.constant dense<0.000000e+00> : vector<8x8xf32>
    %804 = tpu.matmul %803, %790, %cst_283 {dimension_numbers = #tpu.dot_dimension_numbers<[1], [0], [0], [1], [0, 0, 1, 1], [], []>} : vector<8x8xf32>, vector<8x8xf32>, vector<8x8xf32> -> vector<8x8xf32>
    %805 = vector.extract_strided_slice %751 {offsets = [0, 24], sizes = [8, 8], strides = [1, 1]} : vector<8x32xf32> to vector<8x8xf32>
    %806 = vector.extract_strided_slice %752 {offsets = [0, 24], sizes = [8, 8], strides = [1, 1]} : vector<8x32xf32> to vector<8x8xf32>
    %807 = vector.extract_strided_slice %753 {offsets = [0, 24], sizes = [8, 8], strides = [1, 1]} : vector<8x32xf32> to vector<8x8xf32>
    %cst_284 = arith.constant dense<0.000000e+00> : vector<8x8xf32>
    %808 = tpu.matmul %805, %806, %cst_284 {dimension_numbers = #tpu.dot_dimension_numbers<[1], [1], [0], [0], [0, 0, 1, 0], [], []>} : vector<8x8xf32>, vector<8x8xf32>, vector<8x8xf32> -> vector<8x8xf32>
    %cst_285 = arith.constant -1.000000e+30 : f32
    %809 = vector.broadcast %cst_285 : f32 to vector<8x8xf32>
    %810 = arith.select %13, %808, %809 : vector<8x8xi1>, vector<8x8xf32>
    %cst_286 = arith.constant dense<0xFF800000> : vector<8xf32>
    %811 = vector.multi_reduction <maximumf>, %810, %cst_286 [1] : vector<8x8xf32> to vector<8xf32>
    %812 = vector.shape_cast %811 : vector<8xf32> to vector<8x1xf32>
    %813 = vector.broadcast %812 : vector<8x1xf32> to vector<8x8xf32>
    %814 = arith.subf %810, %813 : vector<8x8xf32>
    %815 = math.exp %814 : vector<8x8xf32>
    %cst_287 = arith.constant dense<0.000000e+00> : vector<8xf32>
    %816 = vector.multi_reduction <add>, %815, %cst_287 [1] : vector<8x8xf32> to vector<8xf32>
    %817 = vector.shape_cast %816 : vector<8xf32> to vector<8x1xf32>
    %818 = tpu.reciprocal %817 {approx = true} : vector<8x1xf32> -> vector<8x1xf32>
    %819 = vector.broadcast %818 : vector<8x1xf32> to vector<8x8xf32>
    %820 = arith.mulf %815, %819 : vector<8x8xf32>
    %cst_288 = arith.constant dense<0.000000e+00> : vector<8x8xf32>
    %821 = tpu.matmul %820, %807, %cst_288 {dimension_numbers = #tpu.dot_dimension_numbers<[1], [0], [0], [1], [0, 0, 1, 1], [], []>} : vector<8x8xf32>, vector<8x8xf32>, vector<8x8xf32> -> vector<8x8xf32>
    %822 = tpu.concatenate %770, %787, %804, %821 in 1 : vector<8x8xf32>, vector<8x8xf32>, vector<8x8xf32>, vector<8x8xf32> -> vector<8x32xf32>
    %823 = tpu.concatenate %750, %822 in 0 : vector<8x32xf32>, vector<8x32xf32> -> vector<16x32xf32>
    %cst_289 = arith.constant dense<0.000000e+00> : vector<16x32xf32>
    %824 = tpu.matmul %823, %644, %cst_289 {dimension_numbers = #tpu.dot_dimension_numbers<[1], [0], [0], [1], [0, 0, 1, 1], [], []>} : vector<16x32xf32>, vector<32x32xf32>, vector<16x32xf32> -> vector<16x32xf32>
    %825 = arith.addf %640, %824 : vector<16x32xf32>
    %826 = arith.mulf %825, %825 : vector<16x32xf32>
    %cst_290 = arith.constant dense<0.000000e+00> : vector<16xf32>
    %827 = vector.multi_reduction <add>, %826, %cst_290 [1] : vector<16x32xf32> to vector<16xf32>
    %828 = vector.shape_cast %827 : vector<16xf32> to vector<16x1xf32>
    %cst_291 = arith.constant 3.200000e+01 : f32
    %829 = vector.broadcast %cst_291 : f32 to vector<16x1xf32>
    %830 = arith.divf %828, %829 : vector<16x1xf32>
    %cst_292 = arith.constant 9.99999997E-7 : f32
    %831 = vector.broadcast %cst_292 : f32 to vector<16x1xf32>
    %832 = arith.addf %830, %831 : vector<16x1xf32>
    %833 = math.rsqrt %832 : vector<16x1xf32>
    %834 = vector.broadcast %833 : vector<16x1xf32> to vector<16x32xf32>
    %835 = arith.mulf %825, %834 : vector<16x32xf32>
    %836 = vector.broadcast %652 : vector<1x32xf32> to vector<16x32xf32>
    %837 = arith.mulf %835, %836 : vector<16x32xf32>
    %cst_293 = arith.constant dense<0.000000e+00> : vector<16x128xf32>
    %838 = tpu.matmul %837, %646, %cst_293 {dimension_numbers = #tpu.dot_dimension_numbers<[1], [0], [0], [1], [0, 0, 1, 1], [], []>} : vector<16x32xf32>, vector<32x128xf32>, vector<16x128xf32> -> vector<16x128xf32>
    %839 = vector.extract_strided_slice %838 {offsets = [0, 0], sizes = [16, 64], strides = [1, 1]} : vector<16x128xf32> to vector<16x64xf32>
    %840 = vector.extract_strided_slice %838 {offsets = [0, 64], sizes = [16, 64], strides = [1, 1]} : vector<16x128xf32> to vector<16x64xf32>
    %841 = arith.negf %839 : vector<16x64xf32>
    %842 = math.exp %841 : vector<16x64xf32>
    %cst_294 = arith.constant 1.000000e+00 : f32
    %843 = vector.broadcast %cst_294 : f32 to vector<16x64xf32>
    %844 = arith.addf %843, %842 : vector<16x64xf32>
    %845 = arith.divf %843, %844 : vector<16x64xf32>
    %846 = arith.mulf %839, %845 : vector<16x64xf32>
    %847 = arith.mulf %846, %840 : vector<16x64xf32>
    %cst_295 = arith.constant dense<0.000000e+00> : vector<16x32xf32>
    %848 = tpu.matmul %847, %648, %cst_295 {dimension_numbers = #tpu.dot_dimension_numbers<[1], [0], [0], [1], [0, 0, 1, 1], [], []>} : vector<16x64xf32>, vector<64x32xf32>, vector<16x32xf32> -> vector<16x32xf32>
    %849 = arith.addf %825, %848 : vector<16x32xf32>
    %c0_296 = arith.constant 0 : index
    %c0_297 = arith.constant 0 : index
    %c0_298 = arith.constant 0 : index
    %850 = vector.load %arg14[%c0_296, %c0_297, %c0_298] : memref<2x1x32xf32, #tpu.memory_space<vmem>>, vector<1x1x32xf32>
    %851 = vector.shape_cast %850 : vector<1x1x32xf32> to vector<1x32xf32>
    %852 = arith.mulf %849, %849 : vector<16x32xf32>
    %cst_299 = arith.constant dense<0.000000e+00> : vector<16xf32>
    %853 = vector.multi_reduction <add>, %852, %cst_299 [1] : vector<16x32xf32> to vector<16xf32>
    %854 = vector.shape_cast %853 : vector<16xf32> to vector<16x1xf32>
    %cst_300 = arith.constant 3.200000e+01 : f32
    %855 = vector.broadcast %cst_300 : f32 to vector<16x1xf32>
    %856 = arith.divf %854, %855 : vector<16x1xf32>
    %cst_301 = arith.constant 9.99999997E-7 : f32
    %857 = vector.broadcast %cst_301 : f32 to vector<16x1xf32>
    %858 = arith.addf %856, %857 : vector<16x1xf32>
    %859 = math.rsqrt %858 : vector<16x1xf32>
    %860 = vector.broadcast %859 : vector<16x1xf32> to vector<16x32xf32>
    %861 = arith.mulf %849, %860 : vector<16x32xf32>
    %862 = vector.broadcast %851 : vector<1x32xf32> to vector<16x32xf32>
    %863 = arith.mulf %861, %862 : vector<16x32xf32>
    %864 = arith.mulf %863, %863 : vector<16x32xf32>
    %cst_302 = arith.constant dense<0.000000e+00> : vector<16xf32>
    %865 = vector.multi_reduction <add>, %864, %cst_302 [1] : vector<16x32xf32> to vector<16xf32>
    %866 = vector.shape_cast %865 : vector<16xf32> to vector<16x1xf32>
    %cst_303 = arith.constant 3.200000e+01 : f32
    %867 = vector.broadcast %cst_303 : f32 to vector<16x1xf32>
    %868 = arith.divf %866, %867 : vector<16x1xf32>
    %cst_304 = arith.constant 9.99999997E-7 : f32
    %869 = vector.broadcast %cst_304 : f32 to vector<16x1xf32>
    %870 = arith.addf %868, %869 : vector<16x1xf32>
    %871 = math.rsqrt %870 : vector<16x1xf32>
    %872 = vector.broadcast %871 : vector<16x1xf32> to vector<16x32xf32>
    %873 = arith.mulf %863, %872 : vector<16x32xf32>
    %874 = vector.broadcast %851 : vector<1x32xf32> to vector<16x32xf32>
    %875 = arith.mulf %873, %874 : vector<16x32xf32>
    %c0_305 = arith.constant 0 : index
    %c0_306 = arith.constant 0 : index
    %c0_307 = arith.constant 0 : index
    %876 = vector.load %arg15[%c0_305, %c0_306, %c0_307] : memref<2x32x256xf32, #tpu.memory_space<vmem>>, vector<1x32x256xf32>
    %877 = vector.shape_cast %876 : vector<1x32x256xf32> to vector<32x256xf32>
    %cst_308 = arith.constant dense<0.000000e+00> : vector<16x256xf32>
    %878 = tpu.matmul %875, %877, %cst_308 {dimension_numbers = #tpu.dot_dimension_numbers<[1], [0], [0], [1], [0, 0, 1, 1], [], []>} : vector<16x32xf32>, vector<32x256xf32>, vector<16x256xf32> -> vector<16x256xf32>
    %c0_309 = arith.constant 0 : index
    %c0_310 = arith.constant 0 : index
    %c0_311 = arith.constant 0 : index
    %879 = vector.load %arg19[%c0_309, %c0_310, %c0_311] : memref<2x16x256xf32, #tpu.memory_space<vmem>>, vector<1x16x256xf32>
    %880 = vector.shape_cast %879 : vector<1x16x256xf32> to vector<16x256xf32>
    %881 = vector.shape_cast %878 : vector<16x256xf32> to vector<1x16x256xf32>
    tpu.vector_store %arg19[%c0_309, %c0_310, %c0_311], %881 {strides = array<i32>} : memref<2x16x256xf32, #tpu.memory_space<vmem>>, vector<1x16x256xf32>,
    %c2 = arith.constant 2 : index
    %c0_312 = arith.constant 0 : index
    %c0_313 = arith.constant 0 : index
    %882 = vector.load %arg8[%c2, %c0_312, %c0_313] : memref<4x32x96xf32, #tpu.memory_space<vmem>>, vector<1x32x96xf32>
    %883 = vector.shape_cast %882 : vector<1x32x96xf32> to vector<32x96xf32>
    %c2_314 = arith.constant 2 : index
    %c0_315 = arith.constant 0 : index
    %c0_316 = arith.constant 0 : index
    %884 = vector.load %arg9[%c2_314, %c0_315, %c0_316] : memref<4x32x32xf32, #tpu.memory_space<vmem>>, vector<1x32x32xf32>
    %885 = vector.shape_cast %884 : vector<1x32x32xf32> to vector<32x32xf32>
    %c2_317 = arith.constant 2 : index
    %c0_318 = arith.constant 0 : index
    %c0_319 = arith.constant 0 : index
    %886 = vector.load %arg10[%c2_317, %c0_318, %c0_319] : memref<4x32x128xf32, #tpu.memory_space<vmem>>, vector<1x32x128xf32>
    %887 = vector.shape_cast %886 : vector<1x32x128xf32> to vector<32x128xf32>
    %c2_320 = arith.constant 2 : index
    %c0_321 = arith.constant 0 : index
    %c0_322 = arith.constant 0 : index
    %888 = vector.load %arg11[%c2_320, %c0_321, %c0_322] : memref<4x64x32xf32, #tpu.memory_space<vmem>>, vector<1x64x32xf32>
    %889 = vector.shape_cast %888 : vector<1x64x32xf32> to vector<64x32xf32>
    %c2_323 = arith.constant 2 : index
    %c0_324 = arith.constant 0 : index
    %c0_325 = arith.constant 0 : index
    %890 = vector.load %arg12[%c2_323, %c0_324, %c0_325] : memref<4x1x32xf32, #tpu.memory_space<vmem>>, vector<1x1x32xf32>
    %891 = vector.shape_cast %890 : vector<1x1x32xf32> to vector<1x32xf32>
    %c2_326 = arith.constant 2 : index
    %c0_327 = arith.constant 0 : index
    %c0_328 = arith.constant 0 : index
    %892 = vector.load %arg13[%c2_326, %c0_327, %c0_328] : memref<4x1x32xf32, #tpu.memory_space<vmem>>, vector<1x1x32xf32>
    %893 = vector.shape_cast %892 : vector<1x1x32xf32> to vector<1x32xf32>
    %894 = arith.mulf %431, %431 : vector<16x32xf32>
    %cst_329 = arith.constant dense<0.000000e+00> : vector<16xf32>
    %895 = vector.multi_reduction <add>, %894, %cst_329 [1] : vector<16x32xf32> to vector<16xf32>
    %896 = vector.shape_cast %895 : vector<16xf32> to vector<16x1xf32>
    %cst_330 = arith.constant 3.200000e+01 : f32
    %897 = vector.broadcast %cst_330 : f32 to vector<16x1xf32>
    %898 = arith.divf %896, %897 : vector<16x1xf32>
    %cst_331 = arith.constant 9.99999997E-7 : f32
    %899 = vector.broadcast %cst_331 : f32 to vector<16x1xf32>
    %900 = arith.addf %898, %899 : vector<16x1xf32>
    %901 = math.rsqrt %900 : vector<16x1xf32>
    %902 = vector.broadcast %901 : vector<16x1xf32> to vector<16x32xf32>
    %903 = arith.mulf %431, %902 : vector<16x32xf32>
    %904 = vector.broadcast %891 : vector<1x32xf32> to vector<16x32xf32>
    %905 = arith.mulf %903, %904 : vector<16x32xf32>
    %cst_332 = arith.constant dense<0.000000e+00> : vector<16x96xf32>
    %906 = tpu.matmul %905, %883, %cst_332 {dimension_numbers = #tpu.dot_dimension_numbers<[1], [0], [0], [1], [0, 0, 1, 1], [], []>} : vector<16x32xf32>, vector<32x96xf32>, vector<16x96xf32> -> vector<16x96xf32>
    %907 = vector.extract_strided_slice %906 {offsets = [0, 0], sizes = [16, 32], strides = [1, 1]} : vector<16x96xf32> to vector<16x32xf32>
    %cst_333 = arith.constant 0.353553385 : f32
    %908 = vector.broadcast %cst_333 : f32 to vector<16x32xf32>
    %909 = arith.mulf %907, %908 : vector<16x32xf32>
    %910 = vector.extract_strided_slice %906 {offsets = [0, 32], sizes = [16, 32], strides = [1, 1]} : vector<16x96xf32> to vector<16x32xf32>
    %911 = vector.extract_strided_slice %906 {offsets = [0, 64], sizes = [16, 32], strides = [1, 1]} : vector<16x96xf32> to vector<16x32xf32>
    %912 = arith.mulf %909, %8 : vector<16x32xf32>
    %cst_334 = arith.constant dense<0.000000e+00> : vector<16x32xf32>
    %913 = tpu.matmul %909, %10, %cst_334 {dimension_numbers = #tpu.dot_dimension_numbers<[1], [0], [0], [1], [0, 0, 1, 1], [], []>} : vector<16x32xf32>, vector<32x32xf32>, vector<16x32xf32> -> vector<16x32xf32>
    %914 = arith.mulf %913, %9 : vector<16x32xf32>
    %915 = arith.addf %912, %914 : vector<16x32xf32>
    %916 = arith.mulf %910, %8 : vector<16x32xf32>
    %cst_335 = arith.constant dense<0.000000e+00> : vector<16x32xf32>
    %917 = tpu.matmul %910, %10, %cst_335 {dimension_numbers = #tpu.dot_dimension_numbers<[1], [0], [0], [1], [0, 0, 1, 1], [], []>} : vector<16x32xf32>, vector<32x32xf32>, vector<16x32xf32> -> vector<16x32xf32>
    %918 = arith.mulf %917, %9 : vector<16x32xf32>
    %919 = arith.addf %916, %918 : vector<16x32xf32>
    %920 = vector.extract_strided_slice %915 {offsets = [0, 0], sizes = [8, 32], strides = [1, 1]} : vector<16x32xf32> to vector<8x32xf32>
    %921 = vector.extract_strided_slice %919 {offsets = [0, 0], sizes = [8, 32], strides = [1, 1]} : vector<16x32xf32> to vector<8x32xf32>
    %922 = vector.extract_strided_slice %911 {offsets = [0, 0], sizes = [8, 32], strides = [1, 1]} : vector<16x32xf32> to vector<8x32xf32>
    %923 = vector.extract_strided_slice %920 {offsets = [0, 0], sizes = [8, 8], strides = [1, 1]} : vector<8x32xf32> to vector<8x8xf32>
    %924 = vector.extract_strided_slice %921 {offsets = [0, 0], sizes = [8, 8], strides = [1, 1]} : vector<8x32xf32> to vector<8x8xf32>
    %925 = vector.extract_strided_slice %922 {offsets = [0, 0], sizes = [8, 8], strides = [1, 1]} : vector<8x32xf32> to vector<8x8xf32>
    %cst_336 = arith.constant dense<0.000000e+00> : vector<8x8xf32>
    %926 = tpu.matmul %923, %924, %cst_336 {dimension_numbers = #tpu.dot_dimension_numbers<[1], [1], [0], [0], [0, 0, 1, 0], [], []>} : vector<8x8xf32>, vector<8x8xf32>, vector<8x8xf32> -> vector<8x8xf32>
    %cst_337 = arith.constant -1.000000e+30 : f32
    %927 = vector.broadcast %cst_337 : f32 to vector<8x8xf32>
    %928 = arith.select %13, %926, %927 : vector<8x8xi1>, vector<8x8xf32>
    %cst_338 = arith.constant dense<0xFF800000> : vector<8xf32>
    %929 = vector.multi_reduction <maximumf>, %928, %cst_338 [1] : vector<8x8xf32> to vector<8xf32>
    %930 = vector.shape_cast %929 : vector<8xf32> to vector<8x1xf32>
    %931 = vector.broadcast %930 : vector<8x1xf32> to vector<8x8xf32>
    %932 = arith.subf %928, %931 : vector<8x8xf32>
    %933 = math.exp %932 : vector<8x8xf32>
    %cst_339 = arith.constant dense<0.000000e+00> : vector<8xf32>
    %934 = vector.multi_reduction <add>, %933, %cst_339 [1] : vector<8x8xf32> to vector<8xf32>
    %935 = vector.shape_cast %934 : vector<8xf32> to vector<8x1xf32>
    %936 = tpu.reciprocal %935 {approx = true} : vector<8x1xf32> -> vector<8x1xf32>
    %937 = vector.broadcast %936 : vector<8x1xf32> to vector<8x8xf32>
    %938 = arith.mulf %933, %937 : vector<8x8xf32>
    %cst_340 = arith.constant dense<0.000000e+00> : vector<8x8xf32>
    %939 = tpu.matmul %938, %925, %cst_340 {dimension_numbers = #tpu.dot_dimension_numbers<[1], [0], [0], [1], [0, 0, 1, 1], [], []>} : vector<8x8xf32>, vector<8x8xf32>, vector<8x8xf32> -> vector<8x8xf32>
    %940 = vector.extract_strided_slice %920 {offsets = [0, 8], sizes = [8, 8], strides = [1, 1]} : vector<8x32xf32> to vector<8x8xf32>
    %941 = vector.extract_strided_slice %921 {offsets = [0, 8], sizes = [8, 8], strides = [1, 1]} : vector<8x32xf32> to vector<8x8xf32>
    %942 = vector.extract_strided_slice %922 {offsets = [0, 8], sizes = [8, 8], strides = [1, 1]} : vector<8x32xf32> to vector<8x8xf32>
    %cst_341 = arith.constant dense<0.000000e+00> : vector<8x8xf32>
    %943 = tpu.matmul %940, %941, %cst_341 {dimension_numbers = #tpu.dot_dimension_numbers<[1], [1], [0], [0], [0, 0, 1, 0], [], []>} : vector<8x8xf32>, vector<8x8xf32>, vector<8x8xf32> -> vector<8x8xf32>
    %cst_342 = arith.constant -1.000000e+30 : f32
    %944 = vector.broadcast %cst_342 : f32 to vector<8x8xf32>
    %945 = arith.select %13, %943, %944 : vector<8x8xi1>, vector<8x8xf32>
    %cst_343 = arith.constant dense<0xFF800000> : vector<8xf32>
    %946 = vector.multi_reduction <maximumf>, %945, %cst_343 [1] : vector<8x8xf32> to vector<8xf32>
    %947 = vector.shape_cast %946 : vector<8xf32> to vector<8x1xf32>
    %948 = vector.broadcast %947 : vector<8x1xf32> to vector<8x8xf32>
    %949 = arith.subf %945, %948 : vector<8x8xf32>
    %950 = math.exp %949 : vector<8x8xf32>
    %cst_344 = arith.constant dense<0.000000e+00> : vector<8xf32>
    %951 = vector.multi_reduction <add>, %950, %cst_344 [1] : vector<8x8xf32> to vector<8xf32>
    %952 = vector.shape_cast %951 : vector<8xf32> to vector<8x1xf32>
    %953 = tpu.reciprocal %952 {approx = true} : vector<8x1xf32> -> vector<8x1xf32>
    %954 = vector.broadcast %953 : vector<8x1xf32> to vector<8x8xf32>
    %955 = arith.mulf %950, %954 : vector<8x8xf32>
    %cst_345 = arith.constant dense<0.000000e+00> : vector<8x8xf32>
    %956 = tpu.matmul %955, %942, %cst_345 {dimension_numbers = #tpu.dot_dimension_numbers<[1], [0], [0], [1], [0, 0, 1, 1], [], []>} : vector<8x8xf32>, vector<8x8xf32>, vector<8x8xf32> -> vector<8x8xf32>
    %957 = vector.extract_strided_slice %920 {offsets = [0, 16], sizes = [8, 8], strides = [1, 1]} : vector<8x32xf32> to vector<8x8xf32>
    %958 = vector.extract_strided_slice %921 {offsets = [0, 16], sizes = [8, 8], strides = [1, 1]} : vector<8x32xf32> to vector<8x8xf32>
    %959 = vector.extract_strided_slice %922 {offsets = [0, 16], sizes = [8, 8], strides = [1, 1]} : vector<8x32xf32> to vector<8x8xf32>
    %cst_346 = arith.constant dense<0.000000e+00> : vector<8x8xf32>
    %960 = tpu.matmul %957, %958, %cst_346 {dimension_numbers = #tpu.dot_dimension_numbers<[1], [1], [0], [0], [0, 0, 1, 0], [], []>} : vector<8x8xf32>, vector<8x8xf32>, vector<8x8xf32> -> vector<8x8xf32>
    %cst_347 = arith.constant -1.000000e+30 : f32
    %961 = vector.broadcast %cst_347 : f32 to vector<8x8xf32>
    %962 = arith.select %13, %960, %961 : vector<8x8xi1>, vector<8x8xf32>
    %cst_348 = arith.constant dense<0xFF800000> : vector<8xf32>
    %963 = vector.multi_reduction <maximumf>, %962, %cst_348 [1] : vector<8x8xf32> to vector<8xf32>
    %964 = vector.shape_cast %963 : vector<8xf32> to vector<8x1xf32>
    %965 = vector.broadcast %964 : vector<8x1xf32> to vector<8x8xf32>
    %966 = arith.subf %962, %965 : vector<8x8xf32>
    %967 = math.exp %966 : vector<8x8xf32>
    %cst_349 = arith.constant dense<0.000000e+00> : vector<8xf32>
    %968 = vector.multi_reduction <add>, %967, %cst_349 [1] : vector<8x8xf32> to vector<8xf32>
    %969 = vector.shape_cast %968 : vector<8xf32> to vector<8x1xf32>
    %970 = tpu.reciprocal %969 {approx = true} : vector<8x1xf32> -> vector<8x1xf32>
    %971 = vector.broadcast %970 : vector<8x1xf32> to vector<8x8xf32>
    %972 = arith.mulf %967, %971 : vector<8x8xf32>
    %cst_350 = arith.constant dense<0.000000e+00> : vector<8x8xf32>
    %973 = tpu.matmul %972, %959, %cst_350 {dimension_numbers = #tpu.dot_dimension_numbers<[1], [0], [0], [1], [0, 0, 1, 1], [], []>} : vector<8x8xf32>, vector<8x8xf32>, vector<8x8xf32> -> vector<8x8xf32>
    %974 = vector.extract_strided_slice %920 {offsets = [0, 24], sizes = [8, 8], strides = [1, 1]} : vector<8x32xf32> to vector<8x8xf32>
    %975 = vector.extract_strided_slice %921 {offsets = [0, 24], sizes = [8, 8], strides = [1, 1]} : vector<8x32xf32> to vector<8x8xf32>
    %976 = vector.extract_strided_slice %922 {offsets = [0, 24], sizes = [8, 8], strides = [1, 1]} : vector<8x32xf32> to vector<8x8xf32>
    %cst_351 = arith.constant dense<0.000000e+00> : vector<8x8xf32>
    %977 = tpu.matmul %974, %975, %cst_351 {dimension_numbers = #tpu.dot_dimension_numbers<[1], [1], [0], [0], [0, 0, 1, 0], [], []>} : vector<8x8xf32>, vector<8x8xf32>, vector<8x8xf32> -> vector<8x8xf32>
    %cst_352 = arith.constant -1.000000e+30 : f32
    %978 = vector.broadcast %cst_352 : f32 to vector<8x8xf32>
    %979 = arith.select %13, %977, %978 : vector<8x8xi1>, vector<8x8xf32>
    %cst_353 = arith.constant dense<0xFF800000> : vector<8xf32>
    %980 = vector.multi_reduction <maximumf>, %979, %cst_353 [1] : vector<8x8xf32> to vector<8xf32>
    %981 = vector.shape_cast %980 : vector<8xf32> to vector<8x1xf32>
    %982 = vector.broadcast %981 : vector<8x1xf32> to vector<8x8xf32>
    %983 = arith.subf %979, %982 : vector<8x8xf32>
    %984 = math.exp %983 : vector<8x8xf32>
    %cst_354 = arith.constant dense<0.000000e+00> : vector<8xf32>
    %985 = vector.multi_reduction <add>, %984, %cst_354 [1] : vector<8x8xf32> to vector<8xf32>
    %986 = vector.shape_cast %985 : vector<8xf32> to vector<8x1xf32>
    %987 = tpu.reciprocal %986 {approx = true} : vector<8x1xf32> -> vector<8x1xf32>
    %988 = vector.broadcast %987 : vector<8x1xf32> to vector<8x8xf32>
    %989 = arith.mulf %984, %988 : vector<8x8xf32>
    %cst_355 = arith.constant dense<0.000000e+00> : vector<8x8xf32>
    %990 = tpu.matmul %989, %976, %cst_355 {dimension_numbers = #tpu.dot_dimension_numbers<[1], [0], [0], [1], [0, 0, 1, 1], [], []>} : vector<8x8xf32>, vector<8x8xf32>, vector<8x8xf32> -> vector<8x8xf32>
    %991 = tpu.concatenate %939, %956, %973, %990 in 1 : vector<8x8xf32>, vector<8x8xf32>, vector<8x8xf32>, vector<8x8xf32> -> vector<8x32xf32>
    %992 = vector.extract_strided_slice %915 {offsets = [8, 0], sizes = [8, 32], strides = [1, 1]} : vector<16x32xf32> to vector<8x32xf32>
    %993 = vector.extract_strided_slice %919 {offsets = [8, 0], sizes = [8, 32], strides = [1, 1]} : vector<16x32xf32> to vector<8x32xf32>
    %994 = vector.extract_strided_slice %911 {offsets = [8, 0], sizes = [8, 32], strides = [1, 1]} : vector<16x32xf32> to vector<8x32xf32>
    %995 = vector.extract_strided_slice %992 {offsets = [0, 0], sizes = [8, 8], strides = [1, 1]} : vector<8x32xf32> to vector<8x8xf32>
    %996 = vector.extract_strided_slice %993 {offsets = [0, 0], sizes = [8, 8], strides = [1, 1]} : vector<8x32xf32> to vector<8x8xf32>
    %997 = vector.extract_strided_slice %994 {offsets = [0, 0], sizes = [8, 8], strides = [1, 1]} : vector<8x32xf32> to vector<8x8xf32>
    %cst_356 = arith.constant dense<0.000000e+00> : vector<8x8xf32>
    %998 = tpu.matmul %995, %996, %cst_356 {dimension_numbers = #tpu.dot_dimension_numbers<[1], [1], [0], [0], [0, 0, 1, 0], [], []>} : vector<8x8xf32>, vector<8x8xf32>, vector<8x8xf32> -> vector<8x8xf32>
    %cst_357 = arith.constant -1.000000e+30 : f32
    %999 = vector.broadcast %cst_357 : f32 to vector<8x8xf32>
    %1000 = arith.select %13, %998, %999 : vector<8x8xi1>, vector<8x8xf32>
    %cst_358 = arith.constant dense<0xFF800000> : vector<8xf32>
    %1001 = vector.multi_reduction <maximumf>, %1000, %cst_358 [1] : vector<8x8xf32> to vector<8xf32>
    %1002 = vector.shape_cast %1001 : vector<8xf32> to vector<8x1xf32>
    %1003 = vector.broadcast %1002 : vector<8x1xf32> to vector<8x8xf32>
    %1004 = arith.subf %1000, %1003 : vector<8x8xf32>
    %1005 = math.exp %1004 : vector<8x8xf32>
    %cst_359 = arith.constant dense<0.000000e+00> : vector<8xf32>
    %1006 = vector.multi_reduction <add>, %1005, %cst_359 [1] : vector<8x8xf32> to vector<8xf32>
    %1007 = vector.shape_cast %1006 : vector<8xf32> to vector<8x1xf32>
    %1008 = tpu.reciprocal %1007 {approx = true} : vector<8x1xf32> -> vector<8x1xf32>
    %1009 = vector.broadcast %1008 : vector<8x1xf32> to vector<8x8xf32>
    %1010 = arith.mulf %1005, %1009 : vector<8x8xf32>
    %cst_360 = arith.constant dense<0.000000e+00> : vector<8x8xf32>
    %1011 = tpu.matmul %1010, %997, %cst_360 {dimension_numbers = #tpu.dot_dimension_numbers<[1], [0], [0], [1], [0, 0, 1, 1], [], []>} : vector<8x8xf32>, vector<8x8xf32>, vector<8x8xf32> -> vector<8x8xf32>
    %1012 = vector.extract_strided_slice %992 {offsets = [0, 8], sizes = [8, 8], strides = [1, 1]} : vector<8x32xf32> to vector<8x8xf32>
    %1013 = vector.extract_strided_slice %993 {offsets = [0, 8], sizes = [8, 8], strides = [1, 1]} : vector<8x32xf32> to vector<8x8xf32>
    %1014 = vector.extract_strided_slice %994 {offsets = [0, 8], sizes = [8, 8], strides = [1, 1]} : vector<8x32xf32> to vector<8x8xf32>
    %cst_361 = arith.constant dense<0.000000e+00> : vector<8x8xf32>
    %1015 = tpu.matmul %1012, %1013, %cst_361 {dimension_numbers = #tpu.dot_dimension_numbers<[1], [1], [0], [0], [0, 0, 1, 0], [], []>} : vector<8x8xf32>, vector<8x8xf32>, vector<8x8xf32> -> vector<8x8xf32>
    %cst_362 = arith.constant -1.000000e+30 : f32
    %1016 = vector.broadcast %cst_362 : f32 to vector<8x8xf32>
    %1017 = arith.select %13, %1015, %1016 : vector<8x8xi1>, vector<8x8xf32>
    %cst_363 = arith.constant dense<0xFF800000> : vector<8xf32>
    %1018 = vector.multi_reduction <maximumf>, %1017, %cst_363 [1] : vector<8x8xf32> to vector<8xf32>
    %1019 = vector.shape_cast %1018 : vector<8xf32> to vector<8x1xf32>
    %1020 = vector.broadcast %1019 : vector<8x1xf32> to vector<8x8xf32>
    %1021 = arith.subf %1017, %1020 : vector<8x8xf32>
    %1022 = math.exp %1021 : vector<8x8xf32>
    %cst_364 = arith.constant dense<0.000000e+00> : vector<8xf32>
    %1023 = vector.multi_reduction <add>, %1022, %cst_364 [1] : vector<8x8xf32> to vector<8xf32>
    %1024 = vector.shape_cast %1023 : vector<8xf32> to vector<8x1xf32>
    %1025 = tpu.reciprocal %1024 {approx = true} : vector<8x1xf32> -> vector<8x1xf32>
    %1026 = vector.broadcast %1025 : vector<8x1xf32> to vector<8x8xf32>
    %1027 = arith.mulf %1022, %1026 : vector<8x8xf32>
    %cst_365 = arith.constant dense<0.000000e+00> : vector<8x8xf32>
    %1028 = tpu.matmul %1027, %1014, %cst_365 {dimension_numbers = #tpu.dot_dimension_numbers<[1], [0], [0], [1], [0, 0, 1, 1], [], []>} : vector<8x8xf32>, vector<8x8xf32>, vector<8x8xf32> -> vector<8x8xf32>
    %1029 = vector.extract_strided_slice %992 {offsets = [0, 16], sizes = [8, 8], strides = [1, 1]} : vector<8x32xf32> to vector<8x8xf32>
    %1030 = vector.extract_strided_slice %993 {offsets = [0, 16], sizes = [8, 8], strides = [1, 1]} : vector<8x32xf32> to vector<8x8xf32>
    %1031 = vector.extract_strided_slice %994 {offsets = [0, 16], sizes = [8, 8], strides = [1, 1]} : vector<8x32xf32> to vector<8x8xf32>
    %cst_366 = arith.constant dense<0.000000e+00> : vector<8x8xf32>
    %1032 = tpu.matmul %1029, %1030, %cst_366 {dimension_numbers = #tpu.dot_dimension_numbers<[1], [1], [0], [0], [0, 0, 1, 0], [], []>} : vector<8x8xf32>, vector<8x8xf32>, vector<8x8xf32> -> vector<8x8xf32>
    %cst_367 = arith.constant -1.000000e+30 : f32
    %1033 = vector.broadcast %cst_367 : f32 to vector<8x8xf32>
    %1034 = arith.select %13, %1032, %1033 : vector<8x8xi1>, vector<8x8xf32>
    %cst_368 = arith.constant dense<0xFF800000> : vector<8xf32>
    %1035 = vector.multi_reduction <maximumf>, %1034, %cst_368 [1] : vector<8x8xf32> to vector<8xf32>
    %1036 = vector.shape_cast %1035 : vector<8xf32> to vector<8x1xf32>
    %1037 = vector.broadcast %1036 : vector<8x1xf32> to vector<8x8xf32>
    %1038 = arith.subf %1034, %1037 : vector<8x8xf32>
    %1039 = math.exp %1038 : vector<8x8xf32>
    %cst_369 = arith.constant dense<0.000000e+00> : vector<8xf32>
    %1040 = vector.multi_reduction <add>, %1039, %cst_369 [1] : vector<8x8xf32> to vector<8xf32>
    %1041 = vector.shape_cast %1040 : vector<8xf32> to vector<8x1xf32>
    %1042 = tpu.reciprocal %1041 {approx = true} : vector<8x1xf32> -> vector<8x1xf32>
    %1043 = vector.broadcast %1042 : vector<8x1xf32> to vector<8x8xf32>
    %1044 = arith.mulf %1039, %1043 : vector<8x8xf32>
    %cst_370 = arith.constant dense<0.000000e+00> : vector<8x8xf32>
    %1045 = tpu.matmul %1044, %1031, %cst_370 {dimension_numbers = #tpu.dot_dimension_numbers<[1], [0], [0], [1], [0, 0, 1, 1], [], []>} : vector<8x8xf32>, vector<8x8xf32>, vector<8x8xf32> -> vector<8x8xf32>
    %1046 = vector.extract_strided_slice %992 {offsets = [0, 24], sizes = [8, 8], strides = [1, 1]} : vector<8x32xf32> to vector<8x8xf32>
    %1047 = vector.extract_strided_slice %993 {offsets = [0, 24], sizes = [8, 8], strides = [1, 1]} : vector<8x32xf32> to vector<8x8xf32>
    %1048 = vector.extract_strided_slice %994 {offsets = [0, 24], sizes = [8, 8], strides = [1, 1]} : vector<8x32xf32> to vector<8x8xf32>
    %cst_371 = arith.constant dense<0.000000e+00> : vector<8x8xf32>
    %1049 = tpu.matmul %1046, %1047, %cst_371 {dimension_numbers = #tpu.dot_dimension_numbers<[1], [1], [0], [0], [0, 0, 1, 0], [], []>} : vector<8x8xf32>, vector<8x8xf32>, vector<8x8xf32> -> vector<8x8xf32>
    %cst_372 = arith.constant -1.000000e+30 : f32
    %1050 = vector.broadcast %cst_372 : f32 to vector<8x8xf32>
    %1051 = arith.select %13, %1049, %1050 : vector<8x8xi1>, vector<8x8xf32>
    %cst_373 = arith.constant dense<0xFF800000> : vector<8xf32>
    %1052 = vector.multi_reduction <maximumf>, %1051, %cst_373 [1] : vector<8x8xf32> to vector<8xf32>
    %1053 = vector.shape_cast %1052 : vector<8xf32> to vector<8x1xf32>
    %1054 = vector.broadcast %1053 : vector<8x1xf32> to vector<8x8xf32>
    %1055 = arith.subf %1051, %1054 : vector<8x8xf32>
    %1056 = math.exp %1055 : vector<8x8xf32>
    %cst_374 = arith.constant dense<0.000000e+00> : vector<8xf32>
    %1057 = vector.multi_reduction <add>, %1056, %cst_374 [1] : vector<8x8xf32> to vector<8xf32>
    %1058 = vector.shape_cast %1057 : vector<8xf32> to vector<8x1xf32>
    %1059 = tpu.reciprocal %1058 {approx = true} : vector<8x1xf32> -> vector<8x1xf32>
    %1060 = vector.broadcast %1059 : vector<8x1xf32> to vector<8x8xf32>
    %1061 = arith.mulf %1056, %1060 : vector<8x8xf32>
    %cst_375 = arith.constant dense<0.000000e+00> : vector<8x8xf32>
    %1062 = tpu.matmul %1061, %1048, %cst_375 {dimension_numbers = #tpu.dot_dimension_numbers<[1], [0], [0], [1], [0, 0, 1, 1], [], []>} : vector<8x8xf32>, vector<8x8xf32>, vector<8x8xf32> -> vector<8x8xf32>
    %1063 = tpu.concatenate %1011, %1028, %1045, %1062 in 1 : vector<8x8xf32>, vector<8x8xf32>, vector<8x8xf32>, vector<8x8xf32> -> vector<8x32xf32>
    %1064 = tpu.concatenate %991, %1063 in 0 : vector<8x32xf32>, vector<8x32xf32> -> vector<16x32xf32>
    %cst_376 = arith.constant dense<0.000000e+00> : vector<16x32xf32>
    %1065 = tpu.matmul %1064, %885, %cst_376 {dimension_numbers = #tpu.dot_dimension_numbers<[1], [0], [0], [1], [0, 0, 1, 1], [], []>} : vector<16x32xf32>, vector<32x32xf32>, vector<16x32xf32> -> vector<16x32xf32>
    %1066 = arith.addf %431, %1065 : vector<16x32xf32>
    %1067 = arith.mulf %1066, %1066 : vector<16x32xf32>
    %cst_377 = arith.constant dense<0.000000e+00> : vector<16xf32>
    %1068 = vector.multi_reduction <add>, %1067, %cst_377 [1] : vector<16x32xf32> to vector<16xf32>
    %1069 = vector.shape_cast %1068 : vector<16xf32> to vector<16x1xf32>
    %cst_378 = arith.constant 3.200000e+01 : f32
    %1070 = vector.broadcast %cst_378 : f32 to vector<16x1xf32>
    %1071 = arith.divf %1069, %1070 : vector<16x1xf32>
    %cst_379 = arith.constant 9.99999997E-7 : f32
    %1072 = vector.broadcast %cst_379 : f32 to vector<16x1xf32>
    %1073 = arith.addf %1071, %1072 : vector<16x1xf32>
    %1074 = math.rsqrt %1073 : vector<16x1xf32>
    %1075 = vector.broadcast %1074 : vector<16x1xf32> to vector<16x32xf32>
    %1076 = arith.mulf %1066, %1075 : vector<16x32xf32>
    %1077 = vector.broadcast %893 : vector<1x32xf32> to vector<16x32xf32>
    %1078 = arith.mulf %1076, %1077 : vector<16x32xf32>
    %cst_380 = arith.constant dense<0.000000e+00> : vector<16x128xf32>
    %1079 = tpu.matmul %1078, %887, %cst_380 {dimension_numbers = #tpu.dot_dimension_numbers<[1], [0], [0], [1], [0, 0, 1, 1], [], []>} : vector<16x32xf32>, vector<32x128xf32>, vector<16x128xf32> -> vector<16x128xf32>
    %1080 = vector.extract_strided_slice %1079 {offsets = [0, 0], sizes = [16, 64], strides = [1, 1]} : vector<16x128xf32> to vector<16x64xf32>
    %1081 = vector.extract_strided_slice %1079 {offsets = [0, 64], sizes = [16, 64], strides = [1, 1]} : vector<16x128xf32> to vector<16x64xf32>
    %1082 = arith.negf %1080 : vector<16x64xf32>
    %1083 = math.exp %1082 : vector<16x64xf32>
    %cst_381 = arith.constant 1.000000e+00 : f32
    %1084 = vector.broadcast %cst_381 : f32 to vector<16x64xf32>
    %1085 = arith.addf %1084, %1083 : vector<16x64xf32>
    %1086 = arith.divf %1084, %1085 : vector<16x64xf32>
    %1087 = arith.mulf %1080, %1086 : vector<16x64xf32>
    %1088 = arith.mulf %1087, %1081 : vector<16x64xf32>
    %cst_382 = arith.constant dense<0.000000e+00> : vector<16x32xf32>
    %1089 = tpu.matmul %1088, %889, %cst_382 {dimension_numbers = #tpu.dot_dimension_numbers<[1], [0], [0], [1], [0, 0, 1, 1], [], []>} : vector<16x64xf32>, vector<64x32xf32>, vector<16x32xf32> -> vector<16x32xf32>
    %1090 = arith.addf %1066, %1089 : vector<16x32xf32>
    %c3 = arith.constant 3 : index
    %c0_383 = arith.constant 0 : index
    %c0_384 = arith.constant 0 : index
    %1091 = vector.load %arg8[%c3, %c0_383, %c0_384] : memref<4x32x96xf32, #tpu.memory_space<vmem>>, vector<1x32x96xf32>
    %1092 = vector.shape_cast %1091 : vector<1x32x96xf32> to vector<32x96xf32>
    %c3_385 = arith.constant 3 : index
    %c0_386 = arith.constant 0 : index
    %c0_387 = arith.constant 0 : index
    %1093 = vector.load %arg9[%c3_385, %c0_386, %c0_387] : memref<4x32x32xf32, #tpu.memory_space<vmem>>, vector<1x32x32xf32>
    %1094 = vector.shape_cast %1093 : vector<1x32x32xf32> to vector<32x32xf32>
    %c3_388 = arith.constant 3 : index
    %c0_389 = arith.constant 0 : index
    %c0_390 = arith.constant 0 : index
    %1095 = vector.load %arg10[%c3_388, %c0_389, %c0_390] : memref<4x32x128xf32, #tpu.memory_space<vmem>>, vector<1x32x128xf32>
    %1096 = vector.shape_cast %1095 : vector<1x32x128xf32> to vector<32x128xf32>
    %c3_391 = arith.constant 3 : index
    %c0_392 = arith.constant 0 : index
    %c0_393 = arith.constant 0 : index
    %1097 = vector.load %arg11[%c3_391, %c0_392, %c0_393] : memref<4x64x32xf32, #tpu.memory_space<vmem>>, vector<1x64x32xf32>
    %1098 = vector.shape_cast %1097 : vector<1x64x32xf32> to vector<64x32xf32>
    %c3_394 = arith.constant 3 : index
    %c0_395 = arith.constant 0 : index
    %c0_396 = arith.constant 0 : index
    %1099 = vector.load %arg12[%c3_394, %c0_395, %c0_396] : memref<4x1x32xf32, #tpu.memory_space<vmem>>, vector<1x1x32xf32>
    %1100 = vector.shape_cast %1099 : vector<1x1x32xf32> to vector<1x32xf32>
    %c3_397 = arith.constant 3 : index
    %c0_398 = arith.constant 0 : index
    %c0_399 = arith.constant 0 : index
    %1101 = vector.load %arg13[%c3_397, %c0_398, %c0_399] : memref<4x1x32xf32, #tpu.memory_space<vmem>>, vector<1x1x32xf32>
    %1102 = vector.shape_cast %1101 : vector<1x1x32xf32> to vector<1x32xf32>
    %1103 = arith.mulf %1090, %1090 : vector<16x32xf32>
    %cst_400 = arith.constant dense<0.000000e+00> : vector<16xf32>
    %1104 = vector.multi_reduction <add>, %1103, %cst_400 [1] : vector<16x32xf32> to vector<16xf32>
    %1105 = vector.shape_cast %1104 : vector<16xf32> to vector<16x1xf32>
    %cst_401 = arith.constant 3.200000e+01 : f32
    %1106 = vector.broadcast %cst_401 : f32 to vector<16x1xf32>
    %1107 = arith.divf %1105, %1106 : vector<16x1xf32>
    %cst_402 = arith.constant 9.99999997E-7 : f32
    %1108 = vector.broadcast %cst_402 : f32 to vector<16x1xf32>
    %1109 = arith.addf %1107, %1108 : vector<16x1xf32>
    %1110 = math.rsqrt %1109 : vector<16x1xf32>
    %1111 = vector.broadcast %1110 : vector<16x1xf32> to vector<16x32xf32>
    %1112 = arith.mulf %1090, %1111 : vector<16x32xf32>
    %1113 = vector.broadcast %1100 : vector<1x32xf32> to vector<16x32xf32>
    %1114 = arith.mulf %1112, %1113 : vector<16x32xf32>
    %cst_403 = arith.constant dense<0.000000e+00> : vector<16x96xf32>
    %1115 = tpu.matmul %1114, %1092, %cst_403 {dimension_numbers = #tpu.dot_dimension_numbers<[1], [0], [0], [1], [0, 0, 1, 1], [], []>} : vector<16x32xf32>, vector<32x96xf32>, vector<16x96xf32> -> vector<16x96xf32>
    %1116 = vector.extract_strided_slice %1115 {offsets = [0, 0], sizes = [16, 32], strides = [1, 1]} : vector<16x96xf32> to vector<16x32xf32>
    %cst_404 = arith.constant 0.353553385 : f32
    %1117 = vector.broadcast %cst_404 : f32 to vector<16x32xf32>
    %1118 = arith.mulf %1116, %1117 : vector<16x32xf32>
    %1119 = vector.extract_strided_slice %1115 {offsets = [0, 32], sizes = [16, 32], strides = [1, 1]} : vector<16x96xf32> to vector<16x32xf32>
    %1120 = vector.extract_strided_slice %1115 {offsets = [0, 64], sizes = [16, 32], strides = [1, 1]} : vector<16x96xf32> to vector<16x32xf32>
    %1121 = arith.mulf %1118, %8 : vector<16x32xf32>
    %cst_405 = arith.constant dense<0.000000e+00> : vector<16x32xf32>
    %1122 = tpu.matmul %1118, %10, %cst_405 {dimension_numbers = #tpu.dot_dimension_numbers<[1], [0], [0], [1], [0, 0, 1, 1], [], []>} : vector<16x32xf32>, vector<32x32xf32>, vector<16x32xf32> -> vector<16x32xf32>
    %1123 = arith.mulf %1122, %9 : vector<16x32xf32>
    %1124 = arith.addf %1121, %1123 : vector<16x32xf32>
    %1125 = arith.mulf %1119, %8 : vector<16x32xf32>
    %cst_406 = arith.constant dense<0.000000e+00> : vector<16x32xf32>
    %1126 = tpu.matmul %1119, %10, %cst_406 {dimension_numbers = #tpu.dot_dimension_numbers<[1], [0], [0], [1], [0, 0, 1, 1], [], []>} : vector<16x32xf32>, vector<32x32xf32>, vector<16x32xf32> -> vector<16x32xf32>
    %1127 = arith.mulf %1126, %9 : vector<16x32xf32>
    %1128 = arith.addf %1125, %1127 : vector<16x32xf32>
    %1129 = vector.extract_strided_slice %1124 {offsets = [0, 0], sizes = [8, 32], strides = [1, 1]} : vector<16x32xf32> to vector<8x32xf32>
    %1130 = vector.extract_strided_slice %1128 {offsets = [0, 0], sizes = [8, 32], strides = [1, 1]} : vector<16x32xf32> to vector<8x32xf32>
    %1131 = vector.extract_strided_slice %1120 {offsets = [0, 0], sizes = [8, 32], strides = [1, 1]} : vector<16x32xf32> to vector<8x32xf32>
    %1132 = vector.extract_strided_slice %1129 {offsets = [0, 0], sizes = [8, 8], strides = [1, 1]} : vector<8x32xf32> to vector<8x8xf32>
    %1133 = vector.extract_strided_slice %1130 {offsets = [0, 0], sizes = [8, 8], strides = [1, 1]} : vector<8x32xf32> to vector<8x8xf32>
    %1134 = vector.extract_strided_slice %1131 {offsets = [0, 0], sizes = [8, 8], strides = [1, 1]} : vector<8x32xf32> to vector<8x8xf32>
    %cst_407 = arith.constant dense<0.000000e+00> : vector<8x8xf32>
    %1135 = tpu.matmul %1132, %1133, %cst_407 {dimension_numbers = #tpu.dot_dimension_numbers<[1], [1], [0], [0], [0, 0, 1, 0], [], []>} : vector<8x8xf32>, vector<8x8xf32>, vector<8x8xf32> -> vector<8x8xf32>
    %cst_408 = arith.constant -1.000000e+30 : f32
    %1136 = vector.broadcast %cst_408 : f32 to vector<8x8xf32>
    %1137 = arith.select %13, %1135, %1136 : vector<8x8xi1>, vector<8x8xf32>
    %cst_409 = arith.constant dense<0xFF800000> : vector<8xf32>
    %1138 = vector.multi_reduction <maximumf>, %1137, %cst_409 [1] : vector<8x8xf32> to vector<8xf32>
    %1139 = vector.shape_cast %1138 : vector<8xf32> to vector<8x1xf32>
    %1140 = vector.broadcast %1139 : vector<8x1xf32> to vector<8x8xf32>
    %1141 = arith.subf %1137, %1140 : vector<8x8xf32>
    %1142 = math.exp %1141 : vector<8x8xf32>
    %cst_410 = arith.constant dense<0.000000e+00> : vector<8xf32>
    %1143 = vector.multi_reduction <add>, %1142, %cst_410 [1] : vector<8x8xf32> to vector<8xf32>
    %1144 = vector.shape_cast %1143 : vector<8xf32> to vector<8x1xf32>
    %1145 = tpu.reciprocal %1144 {approx = true} : vector<8x1xf32> -> vector<8x1xf32>
    %1146 = vector.broadcast %1145 : vector<8x1xf32> to vector<8x8xf32>
    %1147 = arith.mulf %1142, %1146 : vector<8x8xf32>
    %cst_411 = arith.constant dense<0.000000e+00> : vector<8x8xf32>
    %1148 = tpu.matmul %1147, %1134, %cst_411 {dimension_numbers = #tpu.dot_dimension_numbers<[1], [0], [0], [1], [0, 0, 1, 1], [], []>} : vector<8x8xf32>, vector<8x8xf32>, vector<8x8xf32> -> vector<8x8xf32>
    %1149 = vector.extract_strided_slice %1129 {offsets = [0, 8], sizes = [8, 8], strides = [1, 1]} : vector<8x32xf32> to vector<8x8xf32>
    %1150 = vector.extract_strided_slice %1130 {offsets = [0, 8], sizes = [8, 8], strides = [1, 1]} : vector<8x32xf32> to vector<8x8xf32>
    %1151 = vector.extract_strided_slice %1131 {offsets = [0, 8], sizes = [8, 8], strides = [1, 1]} : vector<8x32xf32> to vector<8x8xf32>
    %cst_412 = arith.constant dense<0.000000e+00> : vector<8x8xf32>
    %1152 = tpu.matmul %1149, %1150, %cst_412 {dimension_numbers = #tpu.dot_dimension_numbers<[1], [1], [0], [0], [0, 0, 1, 0], [], []>} : vector<8x8xf32>, vector<8x8xf32>, vector<8x8xf32> -> vector<8x8xf32>
    %cst_413 = arith.constant -1.000000e+30 : f32
    %1153 = vector.broadcast %cst_413 : f32 to vector<8x8xf32>
    %1154 = arith.select %13, %1152, %1153 : vector<8x8xi1>, vector<8x8xf32>
    %cst_414 = arith.constant dense<0xFF800000> : vector<8xf32>
    %1155 = vector.multi_reduction <maximumf>, %1154, %cst_414 [1] : vector<8x8xf32> to vector<8xf32>
    %1156 = vector.shape_cast %1155 : vector<8xf32> to vector<8x1xf32>
    %1157 = vector.broadcast %1156 : vector<8x1xf32> to vector<8x8xf32>
    %1158 = arith.subf %1154, %1157 : vector<8x8xf32>
    %1159 = math.exp %1158 : vector<8x8xf32>
    %cst_415 = arith.constant dense<0.000000e+00> : vector<8xf32>
    %1160 = vector.multi_reduction <add>, %1159, %cst_415 [1] : vector<8x8xf32> to vector<8xf32>
    %1161 = vector.shape_cast %1160 : vector<8xf32> to vector<8x1xf32>
    %1162 = tpu.reciprocal %1161 {approx = true} : vector<8x1xf32> -> vector<8x1xf32>
    %1163 = vector.broadcast %1162 : vector<8x1xf32> to vector<8x8xf32>
    %1164 = arith.mulf %1159, %1163 : vector<8x8xf32>
    %cst_416 = arith.constant dense<0.000000e+00> : vector<8x8xf32>
    %1165 = tpu.matmul %1164, %1151, %cst_416 {dimension_numbers = #tpu.dot_dimension_numbers<[1], [0], [0], [1], [0, 0, 1, 1], [], []>} : vector<8x8xf32>, vector<8x8xf32>, vector<8x8xf32> -> vector<8x8xf32>
    %1166 = vector.extract_strided_slice %1129 {offsets = [0, 16], sizes = [8, 8], strides = [1, 1]} : vector<8x32xf32> to vector<8x8xf32>
    %1167 = vector.extract_strided_slice %1130 {offsets = [0, 16], sizes = [8, 8], strides = [1, 1]} : vector<8x32xf32> to vector<8x8xf32>
    %1168 = vector.extract_strided_slice %1131 {offsets = [0, 16], sizes = [8, 8], strides = [1, 1]} : vector<8x32xf32> to vector<8x8xf32>
    %cst_417 = arith.constant dense<0.000000e+00> : vector<8x8xf32>
    %1169 = tpu.matmul %1166, %1167, %cst_417 {dimension_numbers = #tpu.dot_dimension_numbers<[1], [1], [0], [0], [0, 0, 1, 0], [], []>} : vector<8x8xf32>, vector<8x8xf32>, vector<8x8xf32> -> vector<8x8xf32>
    %cst_418 = arith.constant -1.000000e+30 : f32
    %1170 = vector.broadcast %cst_418 : f32 to vector<8x8xf32>
    %1171 = arith.select %13, %1169, %1170 : vector<8x8xi1>, vector<8x8xf32>
    %cst_419 = arith.constant dense<0xFF800000> : vector<8xf32>
    %1172 = vector.multi_reduction <maximumf>, %1171, %cst_419 [1] : vector<8x8xf32> to vector<8xf32>
    %1173 = vector.shape_cast %1172 : vector<8xf32> to vector<8x1xf32>
    %1174 = vector.broadcast %1173 : vector<8x1xf32> to vector<8x8xf32>
    %1175 = arith.subf %1171, %1174 : vector<8x8xf32>
    %1176 = math.exp %1175 : vector<8x8xf32>
    %cst_420 = arith.constant dense<0.000000e+00> : vector<8xf32>
    %1177 = vector.multi_reduction <add>, %1176, %cst_420 [1] : vector<8x8xf32> to vector<8xf32>
    %1178 = vector.shape_cast %1177 : vector<8xf32> to vector<8x1xf32>
    %1179 = tpu.reciprocal %1178 {approx = true} : vector<8x1xf32> -> vector<8x1xf32>
    %1180 = vector.broadcast %1179 : vector<8x1xf32> to vector<8x8xf32>
    %1181 = arith.mulf %1176, %1180 : vector<8x8xf32>
    %cst_421 = arith.constant dense<0.000000e+00> : vector<8x8xf32>
    %1182 = tpu.matmul %1181, %1168, %cst_421 {dimension_numbers = #tpu.dot_dimension_numbers<[1], [0], [0], [1], [0, 0, 1, 1], [], []>} : vector<8x8xf32>, vector<8x8xf32>, vector<8x8xf32> -> vector<8x8xf32>
    %1183 = vector.extract_strided_slice %1129 {offsets = [0, 24], sizes = [8, 8], strides = [1, 1]} : vector<8x32xf32> to vector<8x8xf32>
    %1184 = vector.extract_strided_slice %1130 {offsets = [0, 24], sizes = [8, 8], strides = [1, 1]} : vector<8x32xf32> to vector<8x8xf32>
    %1185 = vector.extract_strided_slice %1131 {offsets = [0, 24], sizes = [8, 8], strides = [1, 1]} : vector<8x32xf32> to vector<8x8xf32>
    %cst_422 = arith.constant dense<0.000000e+00> : vector<8x8xf32>
    %1186 = tpu.matmul %1183, %1184, %cst_422 {dimension_numbers = #tpu.dot_dimension_numbers<[1], [1], [0], [0], [0, 0, 1, 0], [], []>} : vector<8x8xf32>, vector<8x8xf32>, vector<8x8xf32> -> vector<8x8xf32>
    %cst_423 = arith.constant -1.000000e+30 : f32
    %1187 = vector.broadcast %cst_423 : f32 to vector<8x8xf32>
    %1188 = arith.select %13, %1186, %1187 : vector<8x8xi1>, vector<8x8xf32>
    %cst_424 = arith.constant dense<0xFF800000> : vector<8xf32>
    %1189 = vector.multi_reduction <maximumf>, %1188, %cst_424 [1] : vector<8x8xf32> to vector<8xf32>
    %1190 = vector.shape_cast %1189 : vector<8xf32> to vector<8x1xf32>
    %1191 = vector.broadcast %1190 : vector<8x1xf32> to vector<8x8xf32>
    %1192 = arith.subf %1188, %1191 : vector<8x8xf32>
    %1193 = math.exp %1192 : vector<8x8xf32>
    %cst_425 = arith.constant dense<0.000000e+00> : vector<8xf32>
    %1194 = vector.multi_reduction <add>, %1193, %cst_425 [1] : vector<8x8xf32> to vector<8xf32>
    %1195 = vector.shape_cast %1194 : vector<8xf32> to vector<8x1xf32>
    %1196 = tpu.reciprocal %1195 {approx = true} : vector<8x1xf32> -> vector<8x1xf32>
    %1197 = vector.broadcast %1196 : vector<8x1xf32> to vector<8x8xf32>
    %1198 = arith.mulf %1193, %1197 : vector<8x8xf32>
    %cst_426 = arith.constant dense<0.000000e+00> : vector<8x8xf32>
    %1199 = tpu.matmul %1198, %1185, %cst_426 {dimension_numbers = #tpu.dot_dimension_numbers<[1], [0], [0], [1], [0, 0, 1, 1], [], []>} : vector<8x8xf32>, vector<8x8xf32>, vector<8x8xf32> -> vector<8x8xf32>
    %1200 = tpu.concatenate %1148, %1165, %1182, %1199 in 1 : vector<8x8xf32>, vector<8x8xf32>, vector<8x8xf32>, vector<8x8xf32> -> vector<8x32xf32>
    %1201 = vector.extract_strided_slice %1124 {offsets = [8, 0], sizes = [8, 32], strides = [1, 1]} : vector<16x32xf32> to vector<8x32xf32>
    %1202 = vector.extract_strided_slice %1128 {offsets = [8, 0], sizes = [8, 32], strides = [1, 1]} : vector<16x32xf32> to vector<8x32xf32>
    %1203 = vector.extract_strided_slice %1120 {offsets = [8, 0], sizes = [8, 32], strides = [1, 1]} : vector<16x32xf32> to vector<8x32xf32>
    %1204 = vector.extract_strided_slice %1201 {offsets = [0, 0], sizes = [8, 8], strides = [1, 1]} : vector<8x32xf32> to vector<8x8xf32>
    %1205 = vector.extract_strided_slice %1202 {offsets = [0, 0], sizes = [8, 8], strides = [1, 1]} : vector<8x32xf32> to vector<8x8xf32>
    %1206 = vector.extract_strided_slice %1203 {offsets = [0, 0], sizes = [8, 8], strides = [1, 1]} : vector<8x32xf32> to vector<8x8xf32>
    %cst_427 = arith.constant dense<0.000000e+00> : vector<8x8xf32>
    %1207 = tpu.matmul %1204, %1205, %cst_427 {dimension_numbers = #tpu.dot_dimension_numbers<[1], [1], [0], [0], [0, 0, 1, 0], [], []>} : vector<8x8xf32>, vector<8x8xf32>, vector<8x8xf32> -> vector<8x8xf32>
    %cst_428 = arith.constant -1.000000e+30 : f32
    %1208 = vector.broadcast %cst_428 : f32 to vector<8x8xf32>
    %1209 = arith.select %13, %1207, %1208 : vector<8x8xi1>, vector<8x8xf32>
    %cst_429 = arith.constant dense<0xFF800000> : vector<8xf32>
    %1210 = vector.multi_reduction <maximumf>, %1209, %cst_429 [1] : vector<8x8xf32> to vector<8xf32>
    %1211 = vector.shape_cast %1210 : vector<8xf32> to vector<8x1xf32>
    %1212 = vector.broadcast %1211 : vector<8x1xf32> to vector<8x8xf32>
    %1213 = arith.subf %1209, %1212 : vector<8x8xf32>
    %1214 = math.exp %1213 : vector<8x8xf32>
    %cst_430 = arith.constant dense<0.000000e+00> : vector<8xf32>
    %1215 = vector.multi_reduction <add>, %1214, %cst_430 [1] : vector<8x8xf32> to vector<8xf32>
    %1216 = vector.shape_cast %1215 : vector<8xf32> to vector<8x1xf32>
    %1217 = tpu.reciprocal %1216 {approx = true} : vector<8x1xf32> -> vector<8x1xf32>
    %1218 = vector.broadcast %1217 : vector<8x1xf32> to vector<8x8xf32>
    %1219 = arith.mulf %1214, %1218 : vector<8x8xf32>
    %cst_431 = arith.constant dense<0.000000e+00> : vector<8x8xf32>
    %1220 = tpu.matmul %1219, %1206, %cst_431 {dimension_numbers = #tpu.dot_dimension_numbers<[1], [0], [0], [1], [0, 0, 1, 1], [], []>} : vector<8x8xf32>, vector<8x8xf32>, vector<8x8xf32> -> vector<8x8xf32>
    %1221 = vector.extract_strided_slice %1201 {offsets = [0, 8], sizes = [8, 8], strides = [1, 1]} : vector<8x32xf32> to vector<8x8xf32>
    %1222 = vector.extract_strided_slice %1202 {offsets = [0, 8], sizes = [8, 8], strides = [1, 1]} : vector<8x32xf32> to vector<8x8xf32>
    %1223 = vector.extract_strided_slice %1203 {offsets = [0, 8], sizes = [8, 8], strides = [1, 1]} : vector<8x32xf32> to vector<8x8xf32>
    %cst_432 = arith.constant dense<0.000000e+00> : vector<8x8xf32>
    %1224 = tpu.matmul %1221, %1222, %cst_432 {dimension_numbers = #tpu.dot_dimension_numbers<[1], [1], [0], [0], [0, 0, 1, 0], [], []>} : vector<8x8xf32>, vector<8x8xf32>, vector<8x8xf32> -> vector<8x8xf32>
    %cst_433 = arith.constant -1.000000e+30 : f32
    %1225 = vector.broadcast %cst_433 : f32 to vector<8x8xf32>
    %1226 = arith.select %13, %1224, %1225 : vector<8x8xi1>, vector<8x8xf32>
    %cst_434 = arith.constant dense<0xFF800000> : vector<8xf32>
    %1227 = vector.multi_reduction <maximumf>, %1226, %cst_434 [1] : vector<8x8xf32> to vector<8xf32>
    %1228 = vector.shape_cast %1227 : vector<8xf32> to vector<8x1xf32>
    %1229 = vector.broadcast %1228 : vector<8x1xf32> to vector<8x8xf32>
    %1230 = arith.subf %1226, %1229 : vector<8x8xf32>
    %1231 = math.exp %1230 : vector<8x8xf32>
    %cst_435 = arith.constant dense<0.000000e+00> : vector<8xf32>
    %1232 = vector.multi_reduction <add>, %1231, %cst_435 [1] : vector<8x8xf32> to vector<8xf32>
    %1233 = vector.shape_cast %1232 : vector<8xf32> to vector<8x1xf32>
    %1234 = tpu.reciprocal %1233 {approx = true} : vector<8x1xf32> -> vector<8x1xf32>
    %1235 = vector.broadcast %1234 : vector<8x1xf32> to vector<8x8xf32>
    %1236 = arith.mulf %1231, %1235 : vector<8x8xf32>
    %cst_436 = arith.constant dense<0.000000e+00> : vector<8x8xf32>
    %1237 = tpu.matmul %1236, %1223, %cst_436 {dimension_numbers = #tpu.dot_dimension_numbers<[1], [0], [0], [1], [0, 0, 1, 1], [], []>} : vector<8x8xf32>, vector<8x8xf32>, vector<8x8xf32> -> vector<8x8xf32>
    %1238 = vector.extract_strided_slice %1201 {offsets = [0, 16], sizes = [8, 8], strides = [1, 1]} : vector<8x32xf32> to vector<8x8xf32>
    %1239 = vector.extract_strided_slice %1202 {offsets = [0, 16], sizes = [8, 8], strides = [1, 1]} : vector<8x32xf32> to vector<8x8xf32>
    %1240 = vector.extract_strided_slice %1203 {offsets = [0, 16], sizes = [8, 8], strides = [1, 1]} : vector<8x32xf32> to vector<8x8xf32>
    %cst_437 = arith.constant dense<0.000000e+00> : vector<8x8xf32>
    %1241 = tpu.matmul %1238, %1239, %cst_437 {dimension_numbers = #tpu.dot_dimension_numbers<[1], [1], [0], [0], [0, 0, 1, 0], [], []>} : vector<8x8xf32>, vector<8x8xf32>, vector<8x8xf32> -> vector<8x8xf32>
    %cst_438 = arith.constant -1.000000e+30 : f32
    %1242 = vector.broadcast %cst_438 : f32 to vector<8x8xf32>
    %1243 = arith.select %13, %1241, %1242 : vector<8x8xi1>, vector<8x8xf32>
    %cst_439 = arith.constant dense<0xFF800000> : vector<8xf32>
    %1244 = vector.multi_reduction <maximumf>, %1243, %cst_439 [1] : vector<8x8xf32> to vector<8xf32>
    %1245 = vector.shape_cast %1244 : vector<8xf32> to vector<8x1xf32>
    %1246 = vector.broadcast %1245 : vector<8x1xf32> to vector<8x8xf32>
    %1247 = arith.subf %1243, %1246 : vector<8x8xf32>
    %1248 = math.exp %1247 : vector<8x8xf32>
    %cst_440 = arith.constant dense<0.000000e+00> : vector<8xf32>
    %1249 = vector.multi_reduction <add>, %1248, %cst_440 [1] : vector<8x8xf32> to vector<8xf32>
    %1250 = vector.shape_cast %1249 : vector<8xf32> to vector<8x1xf32>
    %1251 = tpu.reciprocal %1250 {approx = true} : vector<8x1xf32> -> vector<8x1xf32>
    %1252 = vector.broadcast %1251 : vector<8x1xf32> to vector<8x8xf32>
    %1253 = arith.mulf %1248, %1252 : vector<8x8xf32>
    %cst_441 = arith.constant dense<0.000000e+00> : vector<8x8xf32>
    %1254 = tpu.matmul %1253, %1240, %cst_441 {dimension_numbers = #tpu.dot_dimension_numbers<[1], [0], [0], [1], [0, 0, 1, 1], [], []>} : vector<8x8xf32>, vector<8x8xf32>, vector<8x8xf32> -> vector<8x8xf32>
    %1255 = vector.extract_strided_slice %1201 {offsets = [0, 24], sizes = [8, 8], strides = [1, 1]} : vector<8x32xf32> to vector<8x8xf32>
    %1256 = vector.extract_strided_slice %1202 {offsets = [0, 24], sizes = [8, 8], strides = [1, 1]} : vector<8x32xf32> to vector<8x8xf32>
    %1257 = vector.extract_strided_slice %1203 {offsets = [0, 24], sizes = [8, 8], strides = [1, 1]} : vector<8x32xf32> to vector<8x8xf32>
    %cst_442 = arith.constant dense<0.000000e+00> : vector<8x8xf32>
    %1258 = tpu.matmul %1255, %1256, %cst_442 {dimension_numbers = #tpu.dot_dimension_numbers<[1], [1], [0], [0], [0, 0, 1, 0], [], []>} : vector<8x8xf32>, vector<8x8xf32>, vector<8x8xf32> -> vector<8x8xf32>
    %cst_443 = arith.constant -1.000000e+30 : f32
    %1259 = vector.broadcast %cst_443 : f32 to vector<8x8xf32>
    %1260 = arith.select %13, %1258, %1259 : vector<8x8xi1>, vector<8x8xf32>
    %cst_444 = arith.constant dense<0xFF800000> : vector<8xf32>
    %1261 = vector.multi_reduction <maximumf>, %1260, %cst_444 [1] : vector<8x8xf32> to vector<8xf32>
    %1262 = vector.shape_cast %1261 : vector<8xf32> to vector<8x1xf32>
    %1263 = vector.broadcast %1262 : vector<8x1xf32> to vector<8x8xf32>
    %1264 = arith.subf %1260, %1263 : vector<8x8xf32>
    %1265 = math.exp %1264 : vector<8x8xf32>
    %cst_445 = arith.constant dense<0.000000e+00> : vector<8xf32>
    %1266 = vector.multi_reduction <add>, %1265, %cst_445 [1] : vector<8x8xf32> to vector<8xf32>
    %1267 = vector.shape_cast %1266 : vector<8xf32> to vector<8x1xf32>
    %1268 = tpu.reciprocal %1267 {approx = true} : vector<8x1xf32> -> vector<8x1xf32>
    %1269 = vector.broadcast %1268 : vector<8x1xf32> to vector<8x8xf32>
    %1270 = arith.mulf %1265, %1269 : vector<8x8xf32>
    %cst_446 = arith.constant dense<0.000000e+00> : vector<8x8xf32>
    %1271 = tpu.matmul %1270, %1257, %cst_446 {dimension_numbers = #tpu.dot_dimension_numbers<[1], [0], [0], [1], [0, 0, 1, 1], [], []>} : vector<8x8xf32>, vector<8x8xf32>, vector<8x8xf32> -> vector<8x8xf32>
    %1272 = tpu.concatenate %1220, %1237, %1254, %1271 in 1 : vector<8x8xf32>, vector<8x8xf32>, vector<8x8xf32>, vector<8x8xf32> -> vector<8x32xf32>
    %1273 = tpu.concatenate %1200, %1272 in 0 : vector<8x32xf32>, vector<8x32xf32> -> vector<16x32xf32>
    %cst_447 = arith.constant dense<0.000000e+00> : vector<16x32xf32>
    %1274 = tpu.matmul %1273, %1094, %cst_447 {dimension_numbers = #tpu.dot_dimension_numbers<[1], [0], [0], [1], [0, 0, 1, 1], [], []>} : vector<16x32xf32>, vector<32x32xf32>, vector<16x32xf32> -> vector<16x32xf32>
    %1275 = arith.addf %1090, %1274 : vector<16x32xf32>
    %1276 = arith.mulf %1275, %1275 : vector<16x32xf32>
    %cst_448 = arith.constant dense<0.000000e+00> : vector<16xf32>
    %1277 = vector.multi_reduction <add>, %1276, %cst_448 [1] : vector<16x32xf32> to vector<16xf32>
    %1278 = vector.shape_cast %1277 : vector<16xf32> to vector<16x1xf32>
    %cst_449 = arith.constant 3.200000e+01 : f32
    %1279 = vector.broadcast %cst_449 : f32 to vector<16x1xf32>
    %1280 = arith.divf %1278, %1279 : vector<16x1xf32>
    %cst_450 = arith.constant 9.99999997E-7 : f32
    %1281 = vector.broadcast %cst_450 : f32 to vector<16x1xf32>
    %1282 = arith.addf %1280, %1281 : vector<16x1xf32>
    %1283 = math.rsqrt %1282 : vector<16x1xf32>
    %1284 = vector.broadcast %1283 : vector<16x1xf32> to vector<16x32xf32>
    %1285 = arith.mulf %1275, %1284 : vector<16x32xf32>
    %1286 = vector.broadcast %1102 : vector<1x32xf32> to vector<16x32xf32>
    %1287 = arith.mulf %1285, %1286 : vector<16x32xf32>
    %cst_451 = arith.constant dense<0.000000e+00> : vector<16x128xf32>
    %1288 = tpu.matmul %1287, %1096, %cst_451 {dimension_numbers = #tpu.dot_dimension_numbers<[1], [0], [0], [1], [0, 0, 1, 1], [], []>} : vector<16x32xf32>, vector<32x128xf32>, vector<16x128xf32> -> vector<16x128xf32>
    %1289 = vector.extract_strided_slice %1288 {offsets = [0, 0], sizes = [16, 64], strides = [1, 1]} : vector<16x128xf32> to vector<16x64xf32>
    %1290 = vector.extract_strided_slice %1288 {offsets = [0, 64], sizes = [16, 64], strides = [1, 1]} : vector<16x128xf32> to vector<16x64xf32>
    %1291 = arith.negf %1289 : vector<16x64xf32>
    %1292 = math.exp %1291 : vector<16x64xf32>
    %cst_452 = arith.constant 1.000000e+00 : f32
    %1293 = vector.broadcast %cst_452 : f32 to vector<16x64xf32>
    %1294 = arith.addf %1293, %1292 : vector<16x64xf32>
    %1295 = arith.divf %1293, %1294 : vector<16x64xf32>
    %1296 = arith.mulf %1289, %1295 : vector<16x64xf32>
    %1297 = arith.mulf %1296, %1290 : vector<16x64xf32>
    %cst_453 = arith.constant dense<0.000000e+00> : vector<16x32xf32>
    %1298 = tpu.matmul %1297, %1098, %cst_453 {dimension_numbers = #tpu.dot_dimension_numbers<[1], [0], [0], [1], [0, 0, 1, 1], [], []>} : vector<16x64xf32>, vector<64x32xf32>, vector<16x32xf32> -> vector<16x32xf32>
    %1299 = arith.addf %1275, %1298 : vector<16x32xf32>
    %c1_454 = arith.constant 1 : index
    %c0_455 = arith.constant 0 : index
    %c0_456 = arith.constant 0 : index
    %1300 = vector.load %arg14[%c1_454, %c0_455, %c0_456] : memref<2x1x32xf32, #tpu.memory_space<vmem>>, vector<1x1x32xf32>
    %1301 = vector.shape_cast %1300 : vector<1x1x32xf32> to vector<1x32xf32>
    %1302 = arith.mulf %1299, %1299 : vector<16x32xf32>
    %cst_457 = arith.constant dense<0.000000e+00> : vector<16xf32>
    %1303 = vector.multi_reduction <add>, %1302, %cst_457 [1] : vector<16x32xf32> to vector<16xf32>
    %1304 = vector.shape_cast %1303 : vector<16xf32> to vector<16x1xf32>
    %cst_458 = arith.constant 3.200000e+01 : f32
    %1305 = vector.broadcast %cst_458 : f32 to vector<16x1xf32>
    %1306 = arith.divf %1304, %1305 : vector<16x1xf32>
    %cst_459 = arith.constant 9.99999997E-7 : f32
    %1307 = vector.broadcast %cst_459 : f32 to vector<16x1xf32>
    %1308 = arith.addf %1306, %1307 : vector<16x1xf32>
    %1309 = math.rsqrt %1308 : vector<16x1xf32>
    %1310 = vector.broadcast %1309 : vector<16x1xf32> to vector<16x32xf32>
    %1311 = arith.mulf %1299, %1310 : vector<16x32xf32>
    %1312 = vector.broadcast %1301 : vector<1x32xf32> to vector<16x32xf32>
    %1313 = arith.mulf %1311, %1312 : vector<16x32xf32>
    %1314 = arith.mulf %1313, %1313 : vector<16x32xf32>
    %cst_460 = arith.constant dense<0.000000e+00> : vector<16xf32>
    %1315 = vector.multi_reduction <add>, %1314, %cst_460 [1] : vector<16x32xf32> to vector<16xf32>
    %1316 = vector.shape_cast %1315 : vector<16xf32> to vector<16x1xf32>
    %cst_461 = arith.constant 3.200000e+01 : f32
    %1317 = vector.broadcast %cst_461 : f32 to vector<16x1xf32>
    %1318 = arith.divf %1316, %1317 : vector<16x1xf32>
    %cst_462 = arith.constant 9.99999997E-7 : f32
    %1319 = vector.broadcast %cst_462 : f32 to vector<16x1xf32>
    %1320 = arith.addf %1318, %1319 : vector<16x1xf32>
    %1321 = math.rsqrt %1320 : vector<16x1xf32>
    %1322 = vector.broadcast %1321 : vector<16x1xf32> to vector<16x32xf32>
    %1323 = arith.mulf %1313, %1322 : vector<16x32xf32>
    %1324 = vector.broadcast %1301 : vector<1x32xf32> to vector<16x32xf32>
    %1325 = arith.mulf %1323, %1324 : vector<16x32xf32>
    %c1_463 = arith.constant 1 : index
    %c0_464 = arith.constant 0 : index
    %c0_465 = arith.constant 0 : index
    %1326 = vector.load %arg15[%c1_463, %c0_464, %c0_465] : memref<2x32x256xf32, #tpu.memory_space<vmem>>, vector<1x32x256xf32>
    %1327 = vector.shape_cast %1326 : vector<1x32x256xf32> to vector<32x256xf32>
    %cst_466 = arith.constant dense<0.000000e+00> : vector<16x256xf32>
    %1328 = tpu.matmul %1325, %1327, %cst_466 {dimension_numbers = #tpu.dot_dimension_numbers<[1], [0], [0], [1], [0, 0, 1, 1], [], []>} : vector<16x32xf32>, vector<32x256xf32>, vector<16x256xf32> -> vector<16x256xf32>
    %c1_467 = arith.constant 1 : index
    %c0_468 = arith.constant 0 : index
    %c0_469 = arith.constant 0 : index
    %1329 = vector.load %arg19[%c1_467, %c0_468, %c0_469] : memref<2x16x256xf32, #tpu.memory_space<vmem>>, vector<1x16x256xf32>
    %1330 = vector.shape_cast %1329 : vector<1x16x256xf32> to vector<16x256xf32>
    %1331 = vector.shape_cast %1328 : vector<16x256xf32> to vector<1x16x256xf32>
    tpu.vector_store %arg19[%c1_467, %c0_468, %c0_469], %1331 {strides = array<i32>} : memref<2x16x256xf32, #tpu.memory_space<vmem>>, vector<1x16x256xf32>,
    return
  }
}

</mosaic_0001>

<llo_original>
// kernel: treenet_forward.1
$region0: #{treenet_forward.1}
  #allocation0 [shape = 'u32[]', space=smem, size = 0x4, offset = 0x4, fixed_abs, tag = 'smem constant byte address 0x4 - core index']
  #allocation1 [shape = 'u32[72,128]{1,0:T(1,128)}', space=vmem, size = 0x9000, scoped, tag = 'internal scratch']
  %s0 = inlined_call_operand.vmem [shape: s32[16,1], index: 0, kind: input, shape index: {}]
  %s1 = inlined_call_operand.vmem [shape: f32[256,32], index: 1, kind: input, shape index: {}]
  %s2 = inlined_call_operand.vmem [shape: f32[2,32,96], index: 2, kind: input, shape index: {}]
  %s3 = inlined_call_operand.vmem [shape: f32[2,32,32], index: 3, kind: input, shape index: {}]
  %s4 = inlined_call_operand.vmem [shape: f32[2,32,128], index: 4, kind: input, shape index: {}]
  %s5 = inlined_call_operand.vmem [shape: f32[2,64,32], index: 5, kind: input, shape index: {}]
  %s6 = inlined_call_operand.vmem [shape: f32[2,1,32], index: 6, kind: input, shape index: {}]
  %s7 = inlined_call_operand.vmem [shape: f32[2,1,32], index: 7, kind: input, shape index: {}]
  %s8 = inlined_call_operand.vmem [shape: f32[4,32,96], index: 8, kind: input, shape index: {}]
  %s9 = inlined_call_operand.vmem [shape: f32[4,32,32], index: 9, kind: input, shape index: {}]
  %s10 = inlined_call_operand.vmem [shape: f32[4,32,128], index: 10, kind: input, shape index: {}]
  %s11 = inlined_call_operand.vmem [shape: f32[4,64,32], index: 11, kind: input, shape index: {}]
  %s12 = inlined_call_operand.vmem [shape: f32[4,1,32], index: 12, kind: input, shape index: {}]
  %s13 = inlined_call_operand.vmem [shape: f32[4,1,32], index: 13, kind: input, shape index: {}]
  %s14 = inlined_call_operand.vmem [shape: f32[2,1,32], index: 14, kind: input, shape index: {}]
  %s15 = inlined_call_operand.vmem [shape: f32[2,32,256], index: 15, kind: input, shape index: {}]
  %s16 = inlined_call_operand.vmem [shape: f32[16,32], index: 16, kind: input, shape index: {}]
  %s17 = inlined_call_operand.vmem [shape: f32[16,32], index: 17, kind: input, shape index: {}]
  %s18 = inlined_call_operand.vmem [shape: f32[32,32], index: 18, kind: input, shape index: {}]
  %s19 = inlined_call_operand.vmem [shape: f32[2,16,256], index: 19, kind: output, shape index: {}]
  %s20 = sld [smem:[#allocation0]]
  $region86: #{treenet_forward.1} parent=0
    _
  %s22 = ssub.s32 1, %s20
  %s23 = scalar_select 0, %s22, %s20
  // Predicated region
  $region2: #{treenet_forward.1} parent=0 // pred_check
    _
  $region3: #{treenet_forward.1} parent=0 // pred_check_branch
    %25 = sbr.rel (0) target = $region5
  $region4: #{treenet_forward.1} parent=0 // pred_region
    _
  $region5: #{treenet_forward.1} parent=0 // pred_fallthru
    _
  // Predicated region
  $region6: #{treenet_forward.1} parent=0 // pred_check
    _
  $region7: #{treenet_forward.1} parent=0 // pred_check_branch
    %27 = sbr.rel (0) target = $region9
  $region8: #{treenet_forward.1} parent=0 // pred_region
    _
  $region9: #{treenet_forward.1} parent=0 // pred_fallthru
    _
  // Predicated region
  $region10: #{treenet_forward.1} parent=0 // pred_check
    _
  $region11: #{treenet_forward.1} parent=0 // pred_check_branch
    %29 = sbr.rel (0) target = $region13
  $region12: #{treenet_forward.1} parent=0 // pred_region
    _
  $region13: #{treenet_forward.1} parent=0 // pred_fallthru
    _
  // Predicated region
  $region14: #{treenet_forward.1} parent=0 // pred_check
    _
  $region15: #{treenet_forward.1} parent=0 // pred_check_branch
    %31 = sbr.rel (0) target = $region17
  $region16: #{treenet_forward.1} parent=0 // pred_region
    _
  $region17: #{treenet_forward.1} parent=0 // pred_fallthru
    _
  // Predicated region
  $region18: #{treenet_forward.1} parent=0 // pred_check
    _
  $region19: #{treenet_forward.1} parent=0 // pred_check_branch
    %33 = sbr.rel (0) target = $region21
  $region20: #{treenet_forward.1} parent=0 // pred_region
    _
  $region21: #{treenet_forward.1} parent=0 // pred_fallthru
    _
  // Predicated region
  $region22: #{treenet_forward.1} parent=0 // pred_check
    _
  $region23: #{treenet_forward.1} parent=0 // pred_check_branch
    %35 = sbr.rel (0) target = $region25
  $region24: #{treenet_forward.1} parent=0 // pred_region
    _
  $region25: #{treenet_forward.1} parent=0 // pred_fallthru
    _
  // Predicated region
  $region26: #{treenet_forward.1} parent=0 // pred_check
    _
  $region27: #{treenet_forward.1} parent=0 // pred_check_branch
    %37 = sbr.rel (0) target = $region29
  $region28: #{treenet_forward.1} parent=0 // pred_region
    _
  $region29: #{treenet_forward.1} parent=0 // pred_fallthru
    _
  // Predicated region
  $region30: #{treenet_forward.1} parent=0 // pred_check
    _
  $region31: #{treenet_forward.1} parent=0 // pred_check_branch
    %39 = sbr.rel (0) target = $region33
  $region32: #{treenet_forward.1} parent=0 // pred_region
    _
  $region33: #{treenet_forward.1} parent=0 // pred_fallthru
    _
  // Predicated region
  $region34: #{treenet_forward.1} parent=0 // pred_check
    _
  $region35: #{treenet_forward.1} parent=0 // pred_check_branch
    %41 = sbr.rel (0) target = $region37
  $region36: #{treenet_forward.1} parent=0 // pred_region
    _
  $region37: #{treenet_forward.1} parent=0 // pred_fallthru
    _
  // Predicated region
  $region38: #{treenet_forward.1} parent=0 // pred_check
    _
  $region39: #{treenet_forward.1} parent=0 // pred_check_branch
    %43 = sbr.rel (0) target = $region41
  $region40: #{treenet_forward.1} parent=0 // pred_region
    _
  $region41: #{treenet_forward.1} parent=0 // pred_fallthru
    _
  // Predicated region
  $region42: #{treenet_forward.1} parent=0 // pred_check
    _
  $region43: #{treenet_forward.1} parent=0 // pred_check_branch
    %45 = sbr.rel (0) target = $region45
  $region44: #{treenet_forward.1} parent=0 // pred_region
    _
  $region45: #{treenet_forward.1} parent=0 // pred_fallthru
    _
  // Predicated region
  $region46: #{treenet_forward.1} parent=0 // pred_check
    _
  $region47: #{treenet_forward.1} parent=0 // pred_check_branch
    %47 = sbr.rel (0) target = $region49
  $region48: #{treenet_forward.1} parent=0 // pred_region
    _
  $region49: #{treenet_forward.1} parent=0 // pred_fallthru
    _
  // Predicated region
  $region50: #{treenet_forward.1} parent=0 // pred_check
    _
  $region51: #{treenet_forward.1} parent=0 // pred_check_branch
    %49 = sbr.rel (0) target = $region53
  $region52: #{treenet_forward.1} parent=0 // pred_region
    _
  $region53: #{treenet_forward.1} parent=0 // pred_fallthru
    _
  // Predicated region
  $region54: #{treenet_forward.1} parent=0 // pred_check
    _
  $region55: #{treenet_forward.1} parent=0 // pred_check_branch
    %51 = sbr.rel (0) target = $region57
  $region56: #{treenet_forward.1} parent=0 // pred_region
    _
  $region57: #{treenet_forward.1} parent=0 // pred_fallthru
    _
  // Predicated region
  $region58: #{treenet_forward.1} parent=0 // pred_check
    _
  $region59: #{treenet_forward.1} parent=0 // pred_check_branch
    %53 = sbr.rel (0) target = $region61
  $region60: #{treenet_forward.1} parent=0 // pred_region
    _
  $region61: #{treenet_forward.1} parent=0 // pred_fallthru
    _
  // Predicated region
  $region62: #{treenet_forward.1} parent=0 // pred_check
    _
  $region63: #{treenet_forward.1} parent=0 // pred_check_branch
    %55 = sbr.rel (0) target = $region65
  $region64: #{treenet_forward.1} parent=0 // pred_region
    _
  $region65: #{treenet_forward.1} parent=0 // pred_fallthru
    _
  // Predicated region
  $region66: #{treenet_forward.1} parent=0 // pred_check
    _
  $region67: #{treenet_forward.1} parent=0 // pred_check_branch
    %57 = sbr.rel (0) target = $region69
  $region68: #{treenet_forward.1} parent=0 // pred_region
    _
  $region69: #{treenet_forward.1} parent=0 // pred_fallthru
    _
  // Predicated region
  $region70: #{treenet_forward.1} parent=0 // pred_check
    _
  $region71: #{treenet_forward.1} parent=0 // pred_check_branch
    %59 = sbr.rel (0) target = $region73
  $region72: #{treenet_forward.1} parent=0 // pred_region
    _
  $region73: #{treenet_forward.1} parent=0 // pred_fallthru
    _
  // Predicated region
  $region74: #{treenet_forward.1} parent=0 // pred_check
    _
  $region75: #{treenet_forward.1} parent=0 // pred_check_branch
    %61 = sbr.rel (0) target = $region77
  $region76: #{treenet_forward.1} parent=0 // pred_region
    _
  $region77: #{treenet_forward.1} parent=0 // pred_fallthru
    _
  %v62 = vld [vmem:[%s0] sm:$0xff]
  %v63 = vld [vmem:[%s0 + $0x8] sm:$0xff]
  %v64 = vlaneseq
  %v65 = vand.u32 %v64, 127
  %v66 = vadd.s32 %v65, 128
  %67 = vset.pattern.permute.xlu0 0
  %68 = vperm.xlu0 %67, %v62
  %v69 = vpop.permute.xlu0 %68
  %70 = vset.pattern.permute.xlu0 0
  %71 = vperm.xlu0 %70, %v63
  %v72 = vpop.permute.xlu0 %71
  %vm73 = vcmp.eq.s32.totalorder %v65, %v69
  %vm74 = vcmp.eq.s32.totalorder %v66, %v69
  %vm75 = vcmp.eq.s32.totalorder %v65, %v72
  %vm76 = vcmp.eq.s32.totalorder %v66, %v72
  %v77 = vsel %vm73, 1, 0
  %v78 = vsel %vm74, 1, 0
  %v79 = vsel %vm75, 1, 0
  %v80 = vsel %vm76, 1, 0
  %v81 = vcvt.s32.f32 %v77
  %v82 = vcvt.s32.f32 %v78
  %v83 = vcvt.s32.f32 %v79
  %v84 = vcvt.s32.f32 %v80
  %v85 = vld [vmem:[%s1] sm:$0xff]
  %v86 = vld [vmem:[%s1 + $0x8] sm:$0xff]
  %v87 = vld [vmem:[%s1 + $0x10] sm:$0xff]
  %v88 = vld [vmem:[%s1 + $0x18] sm:$0xff]
  %v89 = vld [vmem:[%s1 + $0x20] sm:$0xff]
  %v90 = vld [vmem:[%s1 + $0x28] sm:$0xff]
  %v91 = vld [vmem:[%s1 + $0x30] sm:$0xff]
  %v92 = vld [vmem:[%s1 + $0x38] sm:$0xff]
  %v93 = vld [vmem:[%s1 + $0x40] sm:$0xff]
  %v94 = vld [vmem:[%s1 + $0x48] sm:$0xff]
  %v95 = vld [vmem:[%s1 + $0x50] sm:$0xff]
  %v96 = vld [vmem:[%s1 + $0x58] sm:$0xff]
  %v97 = vld [vmem:[%s1 + $0x60] sm:$0xff]
  %v98 = vld [vmem:[%s1 + $0x68] sm:$0xff]
  %v99 = vld [vmem:[%s1 + $0x70] sm:$0xff]
  %v100 = vld [vmem:[%s1 + $0x78] sm:$0xff]
  %v101 = vld [vmem:[%s1 + $0x80] sm:$0xff]
  %v102 = vld [vmem:[%s1 + $0x88] sm:$0xff]
  %v103 = vld [vmem:[%s1 + $0x90] sm:$0xff]
  %v104 = vld [vmem:[%s1 + $0x98] sm:$0xff]
  %v105 = vld [vmem:[%s1 + $0xa0] sm:$0xff]
  %v106 = vld [vmem:[%s1 + $0xa8] sm:$0xff]
  %v107 = vld [vmem:[%s1 + $0xb0] sm:$0xff]
  %v108 = vld [vmem:[%s1 + $0xb8] sm:$0xff]
  %v109 = vld [vmem:[%s1 + $0xc0] sm:$0xff]
  %v110 = vld [vmem:[%s1 + $0xc8] sm:$0xff]
  %v111 = vld [vmem:[%s1 + $0xd0] sm:$0xff]
  %v112 = vld [vmem:[%s1 + $0xd8] sm:$0xff]
  %v113 = vld [vmem:[%s1 + $0xe0] sm:$0xff]
  %v114 = vld [vmem:[%s1 + $0xe8] sm:$0xff]
  %v115 = vld [vmem:[%s1 + $0xf0] sm:$0xff]
  %v116 = vld [vmem:[%s1 + $0xf8] sm:$0xff]
  %117 = vmatpush.msra.mxu0 %v100
  %118 = vmatpush.msra.mxu0 %v99
  %119 = vmatpush.msra.mxu0 %v98
  %120 = vmatpush.msra.mxu0 %v97
  %121 = vmatpush.msra.mxu0 %v96
  %122 = vmatpush.msra.mxu0 %v95
  %123 = vmatpush.msra.mxu0 %v94
  %124 = vmatpush.msra.mxu0 %v93
  %125 = vmatpush.msra.mxu0 %v92
  %126 = vmatpush.msra.mxu0 %v91
  %127 = vmatpush.msra.mxu0 %v90
  %128 = vmatpush.msra.mxu0 %v89
  %129 = vmatpush.msra.mxu0 %v88
  %130 = vmatpush.msra.mxu0 %v87
  %131 = vmatpush.msra.mxu0 %v86
  %132 = vmatpush.msra.mxu0 %v85
  %133 = vmatmul.f32.gmra.mxu0 %v81
  %v134 = vpop.f32.mrf.mxu0
  %v135 = vadd.f32 0.0, %v134
  %136 = vmatmul.f32.gmra.mxu0 %v83
  %v137 = vpop.f32.mrf.mxu0
  %v138 = vadd.f32 0.0, %v137
  %139 = vdwg.mxu0
  %140 = vmatpush.msra.mxu0 %v116
  %141 = vmatpush.msra.mxu0 %v115
  %142 = vmatpush.msra.mxu0 %v114
  %143 = vmatpush.msra.mxu0 %v113
  %144 = vmatpush.msra.mxu0 %v112
  %145 = vmatpush.msra.mxu0 %v111
  %146 = vmatpush.msra.mxu0 %v110
  %147 = vmatpush.msra.mxu0 %v109
  %148 = vmatpush.msra.mxu0 %v108
  %149 = vmatpush.msra.mxu0 %v107
  %150 = vmatpush.msra.mxu0 %v106
  %151 = vmatpush.msra.mxu0 %v105
  %152 = vmatpush.msra.mxu0 %v104
  %153 = vmatpush.msra.mxu0 %v103
  %154 = vmatpush.msra.mxu0 %v102
  %155 = vmatpush.msra.mxu0 %v101
  %156 = vmatmul.f32.gmra.mxu0 %v82
  %v157 = vpop.f32.mrf.mxu0
  %v158 = vadd.f32 %v135, %v157
  %159 = vmatmul.f32.gmra.mxu0 %v84
  %v160 = vpop.f32.mrf.mxu0
  %v161 = vadd.f32 %v138, %v160
  %162 = vdwg.mxu0
  %v163 = vld [vmem:[%s16] sm:$0xff]
  %v164 = vld [vmem:[%s16 + $0x8] sm:$0xff]
  %v165 = vld [vmem:[%s17] sm:$0xff]
  %v166 = vld [vmem:[%s17 + $0x8] sm:$0xff]
  %v167 = vld [vmem:[%s18] sm:$0xff]
  %v168 = vld [vmem:[%s18 + $0x8] sm:$0xff]
  %v169 = vld [vmem:[%s18 + $0x10] sm:$0xff]
  %v170 = vld [vmem:[%s18 + $0x18] sm:$0xff]
  %v171 = vlaneseq
  %v172 = vshrl.u32 %v171, 7
  %vm173 = vcmp.le.s32.totalorder %v65, %v172
  %v174 = vld [vmem:[%s2] sm:$0xff]
  %v175 = vld [vmem:[%s2 + $0x8] sm:$0xff]
  %v176 = vld [vmem:[%s2 + $0x10] sm:$0xff]
  %v177 = vld [vmem:[%s2 + $0x18] sm:$0xff]
  %v178 = vld [vmem:[%s3] sm:$0xff]
  %v179 = vld [vmem:[%s3 + $0x8] sm:$0xff]
  %v180 = vld [vmem:[%s3 + $0x10] sm:$0xff]
  %v181 = vld [vmem:[%s3 + $0x18] sm:$0xff]
  %v182 = vld [vmem:[%s4] sm:$0xff]
  %v183 = vld [vmem:[%s4 + $0x8] sm:$0xff]
  %v184 = vld [vmem:[%s4 + $0x10] sm:$0xff]
  %v185 = vld [vmem:[%s4 + $0x18] sm:$0xff]
  %v186 = vld [vmem:[%s5] sm:$0xff]
  %v187 = vld [vmem:[%s5 + $0x8] sm:$0xff]
  %v188 = vld [vmem:[%s5 + $0x10] sm:$0xff]
  %v189 = vld [vmem:[%s5 + $0x18] sm:$0xff]
  %v190 = vld [vmem:[%s5 + $0x20] sm:$0xff]
  %v191 = vld [vmem:[%s5 + $0x28] sm:$0xff]
  %v192 = vld [vmem:[%s5 + $0x30] sm:$0xff]
  %v193 = vld [vmem:[%s5 + $0x38] sm:$0xff]
  %v194 = vld [vmem:[%s6] sm:$0x1]
  %v195 = vld [vmem:[%s7] sm:$0x1]
  %v196 = vmul.f32 %v158, %v158
  %v197 = vmul.f32 %v161, %v161
  %vm198 = vcmask 261120
  %v199 = vsel %vm198, %v196, 0.0
  %200 = vadd.xlane.f32.xlu0 %v199
  %v201 = vpop.xlane.xlu0 %200
  %v202 = vsel %vm198, %v197, 0.0
  %203 = vadd.xlane.f32.xlu0 %v202
  %v204 = vpop.xlane.xlu0 %203
  %v205 = vrcp.pop 32.0
  %v206 = vmul.f32 32.0, %v205
  %v207 = vsub.f32 1.0, %v206
  %v208 = vmul.f32 %v205, %v207
  %v209 = vadd.f32 %v205, %v208
  %vm210 = vweird.f32 %v205
  %v211 = vsel %vm210, %v205, %v209
  %v212 = vmul.f32 %v201, %v211
  %v213 = vmul.f32 %v204, %v211
  %v214 = vadd.f32 %v212, 1e-06
  %v215 = vadd.f32 %v213, 1e-06
  %v216 = vrsqrt.pop %v214
  %v217 = vmul.f32 %v216, %v214
  %v218 = vmul.f32 %v217, %v216
  %v219 = vmul.f32 0.5, %v218
  %v220 = vsub.f32 1.5, %v219
  %v221 = vmul.f32 %v216, %v220
  %vm222 = vweird.f32 %v214
  %vm223 = vweird.f32 %v216
  %vm224 = vmor %vm222, %vm223
  %v225 = vsel %vm224, %v216, %v221
  %v226 = vrsqrt.pop %v215
  %v227 = vmul.f32 %v226, %v215
  %v228 = vmul.f32 %v227, %v226
  %v229 = vmul.f32 0.5, %v228
  %v230 = vsub.f32 1.5, %v229
  %v231 = vmul.f32 %v226, %v230
  %vm232 = vweird.f32 %v215
  %vm233 = vweird.f32 %v226
  %vm234 = vmor %vm232, %vm233
  %v235 = vsel %vm234, %v226, %v231
  %v236 = vmul.f32 %v158, %v225
  %v237 = vmul.f32 %v161, %v235
  %v239 = vperm.slane %v194, 0
  %v241 = vmul.f32 %v236, %v239
  %v242 = vmul.f32 %v237, %v239
  %v244 = vsel %vm198, %v241, 0
  %v247 = vsel %vm198, %v242, 0
  %249 = vmatpush.msra.mxu0 0.0
  %250 = vmatpush.msra.mxu0 0.0
  %251 = vmatpush.msra.mxu0 0.0
  %252 = vmatpush.msra.mxu0 0.0
  %253 = vmatpush.msra.mxu0 0.0
  %254 = vmatpush.msra.mxu0 0.0
  %255 = vmatpush.msra.mxu0 0.0
  %256 = vmatpush.msra.mxu0 0.0
  %257 = vmatpush.msra.mxu0 0.0
  %258 = vmatpush.msra.mxu0 0.0
  %259 = vmatpush.msra.mxu0 0.0
  %260 = vmatpush.msra.mxu0 0.0
  %261 = vmatpush.msra.mxu0 %v177
  %262 = vmatpush.msra.mxu0 %v176
  %263 = vmatpush.msra.mxu0 %v175
  %264 = vmatpush.msra.mxu0 %v174
  %265 = vmatmul.f32.gmra.mxu0 %v244
  %v266 = vpop.f32.mrf.mxu0
  %v267 = vadd.f32 0.0, %v266
  %268 = vmatmul.f32.gmra.mxu0 %v247
  %v269 = vpop.f32.mrf.mxu0
  %v270 = vadd.f32 0.0, %v269
  %271 = vdwg.mxu0
  %v272 = vmul.f32 %v267, 0.35355338
  %v273 = vmul.f32 %v270, 0.35355338
  %v274 = vmul.f32 %v272, %v163
  %v275 = vmul.f32 %v273, %v164
  %v277 = vsel %vm198, %v272, 0
  %v280 = vsel %vm198, %v273, 0
  %282 = vmatpush.msra.mxu0 0.0
  %283 = vmatpush.msra.mxu0 0.0
  %284 = vmatpush.msra.mxu0 0.0
  %285 = vmatpush.msra.mxu0 0.0
  %286 = vmatpush.msra.mxu0 0.0
  %287 = vmatpush.msra.mxu0 0.0
  %288 = vmatpush.msra.mxu0 0.0
  %289 = vmatpush.msra.mxu0 0.0
  %290 = vmatpush.msra.mxu0 0.0
  %291 = vmatpush.msra.mxu0 0.0
  %292 = vmatpush.msra.mxu0 0.0
  %293 = vmatpush.msra.mxu0 0.0
  %294 = vmatpush.msra.mxu0 %v170
  %295 = vmatpush.msra.mxu0 %v169
  %296 = vmatpush.msra.mxu0 %v168
  %297 = vmatpush.msra.mxu0 %v167
  %298 = vmatmul.f32.gmra.mxu0 %v277
  %v299 = vpop.f32.mrf.mxu0
  %v300 = vadd.f32 0.0, %v299
  %301 = vmatmul.f32.gmra.mxu0 %v280
  %v302 = vpop.f32.mrf.mxu0
  %v303 = vadd.f32 0.0, %v302
  %304 = vdwg.mxu0
  %v305 = vmul.f32 %v300, %v165
  %v306 = vmul.f32 %v303, %v166
  %v307 = vadd.f32 %v274, %v305
  %v308 = vadd.f32 %v275, %v306
  %311 = vrot.lane.b32.xlu0 %v163, 32
  %v312 = vpop.permute.xlu0 %311
  %313 = vrot.lane.b32.xlu0 %v164, 32
  %v314 = vpop.permute.xlu0 %313
  %v317 = vmul.f32 %v267, %v312
  %v318 = vmul.f32 %v270, %v314
  %321 = vrot.lane.b32.xlu0 %v267, 96
  %v322 = vpop.permute.xlu0 %321
  %323 = vrot.lane.b32.xlu0 %v270, 96
  %v324 = vpop.permute.xlu0 %323
  %v325 = vsel %vm198, %v322, 0
  %v327 = vsel %vm198, %v324, 0
  %329 = vmatpush.msra.mxu0 0.0
  %330 = vmatpush.msra.mxu0 0.0
  %331 = vmatpush.msra.mxu0 0.0
  %332 = vmatpush.msra.mxu0 0.0
  %333 = vmatpush.msra.mxu0 0.0
  %334 = vmatpush.msra.mxu0 0.0
  %335 = vmatpush.msra.mxu0 0.0
  %336 = vmatpush.msra.mxu0 0.0
  %337 = vmatpush.msra.mxu0 0.0
  %338 = vmatpush.msra.mxu0 0.0
  %339 = vmatpush.msra.mxu0 0.0
  %340 = vmatpush.msra.mxu0 0.0
  %341 = vmatpush.msra.mxu0 %v170
  %342 = vmatpush.msra.mxu0 %v169
  %343 = vmatpush.msra.mxu0 %v168
  %344 = vmatpush.msra.mxu0 %v167
  %345 = vmatmul.f32.gmra.mxu0 %v325
  %v346 = vpop.f32.mrf.mxu0
  %v347 = vadd.f32 0.0, %v346
  %348 = vmatmul.f32.gmra.mxu0 %v327
  %v349 = vpop.f32.mrf.mxu0
  %v350 = vadd.f32 0.0, %v349
  %351 = vdwg.mxu0
  %v352 = vmul.f32 %v347, %v165
  %v353 = vmul.f32 %v350, %v166
  %356 = vrot.lane.b32.xlu0 %v352, 32
  %v357 = vpop.permute.xlu0 %356
  %358 = vrot.lane.b32.xlu0 %v353, 32
  %v359 = vpop.permute.xlu0 %358
  %v362 = vadd.f32 %v317, %v357
  %v363 = vadd.f32 %v318, %v359
  %365 = vrot.lane.b32.xlu0 %v362, 96
  %v366 = vpop.permute.xlu0 %365
  %vm367 = vcmask 64512
  %v369 = vsel %vm367, %v307, 0
  %v371 = vsel %vm367, %v366, 0
  %373 = vmatpush.xpose.msra.mxu0 0.0
  %374 = vmatpush.xpose.msra.mxu0 0.0
  %375 = vmatpush.xpose.msra.mxu0 0.0
  %376 = vmatpush.xpose.msra.mxu0 0.0
  %377 = vmatpush.xpose.msra.mxu0 0.0
  %378 = vmatpush.xpose.msra.mxu0 0.0
  %379 = vmatpush.xpose.msra.mxu0 0.0
  %380 = vmatpush.xpose.msra.mxu0 0.0
  %381 = vmatpush.xpose.msra.mxu0 0.0
  %382 = vmatpush.xpose.msra.mxu0 0.0
  %383 = vmatpush.xpose.msra.mxu0 0.0
  %384 = vmatpush.xpose.msra.mxu0 0.0
  %385 = vmatpush.xpose.msra.mxu0 0.0
  %386 = vmatpush.xpose.msra.mxu0 0.0
  %387 = vmatpush.xpose.msra.mxu0 0.0
  %388 = vmatpush.xpose.msra.mxu0 %v371
  %389 = vmatmul.f32.gmra.mxu0 %v369
  %v390 = vpop.f32.mrf.mxu0
  %v391 = vadd.f32 0.0, %v390
  %392 = vdwg.mxu0
  %v393 = vsel %vm173, %v391, -1e+30
  %v394 = vsel %vm367, %v393, -inf
  %395 = vmax.xlane.f32.xlu0 %v394
  %v396 = vpop.xlane.xlu0 %395
  %v397 = vsub.f32 %v393, %v396
  %v398 = vmul.f32 %v397, 1.442695
  %v399 = vpow.pop %v398
  %v400 = vsel %vm367, %v399, 0.0
  %401 = vadd.xlane.f32.xlu0 %v400
  %v402 = vpop.xlane.xlu0 %401
  %v403 = vrcp.pop %v402
  %v404 = vmul.f32 %v399, %v403
  %405 = vrot.lane.b32.xlu0 %v267, 64
  %v406 = vpop.permute.xlu0 %405
  %v409 = vsel %vm367, %v404, 0
  %411 = vmatpush.msra.mxu0 0.0
  %412 = vmatpush.msra.mxu0 0.0
  %413 = vmatpush.msra.mxu0 0.0
  %414 = vmatpush.msra.mxu0 0.0
  %415 = vmatpush.msra.mxu0 0.0
  %416 = vmatpush.msra.mxu0 0.0
  %417 = vmatpush.msra.mxu0 0.0
  %418 = vmatpush.msra.mxu0 0.0
  %419 = vmatpush.msra.mxu0 0.0
  %420 = vmatpush.msra.mxu0 0.0
  %421 = vmatpush.msra.mxu0 0.0
  %422 = vmatpush.msra.mxu0 0.0
  %423 = vmatpush.msra.mxu0 0.0
  %424 = vmatpush.msra.mxu0 0.0
  %425 = vmatpush.msra.mxu0 0.0
  %426 = vmatpush.msra.mxu0 %v406
  %427 = vmatmul.f32.gmra.mxu0 %v409
  %v428 = vpop.f32.mrf.mxu0
  %v429 = vadd.f32 0.0, %v428
  %430 = vdwg.mxu0
  %431 = vrot.lane.b32.xlu0 %v307, 120
  %v432 = vpop.permute.xlu0 %431
  %433 = vrot.lane.b32.xlu0 %v362, 88
  %v434 = vpop.permute.xlu0 %433
  %v435 = vsel %vm367, %v432, 0
  %v437 = vsel %vm367, %v434, 0
  %439 = vmatpush.xpose.msra.mxu0 0.0
  %440 = vmatpush.xpose.msra.mxu0 0.0
  %441 = vmatpush.xpose.msra.mxu0 0.0
  %442 = vmatpush.xpose.msra.mxu0 0.0
  %443 = vmatpush.xpose.msra.mxu0 0.0
  %444 = vmatpush.xpose.msra.mxu0 0.0
  %445 = vmatpush.xpose.msra.mxu0 0.0
  %446 = vmatpush.xpose.msra.mxu0 0.0
  %447 = vmatpush.xpose.msra.mxu0 0.0
  %448 = vmatpush.xpose.msra.mxu0 0.0
  %449 = vmatpush.xpose.msra.mxu0 0.0
  %450 = vmatpush.xpose.msra.mxu0 0.0
  %451 = vmatpush.xpose.msra.mxu0 0.0
  %452 = vmatpush.xpose.msra.mxu0 0.0
  %453 = vmatpush.xpose.msra.mxu0 0.0
  %454 = vmatpush.xpose.msra.mxu0 %v437
  %455 = vmatmul.f32.gmra.mxu0 %v435
  %v456 = vpop.f32.mrf.mxu0
  %v457 = vadd.f32 0.0, %v456
  %458 = vdwg.mxu0
  %v459 = vsel %vm173, %v457, -1e+30
  %v460 = vsel %vm367, %v459, -inf
  %461 = vmax.xlane.f32.xlu0 %v460
  %v462 = vpop.xlane.xlu0 %461
  %v463 = vsub.f32 %v459, %v462
  %v464 = vmul.f32 %v463, 1.442695
  %v465 = vpow.pop %v464
  %v466 = vsel %vm367, %v465, 0.0
  %467 = vadd.xlane.f32.xlu0 %v466
  %v468 = vpop.xlane.xlu0 %467
  %v469 = vrcp.pop %v468
  %v470 = vmul.f32 %v465, %v469
  %471 = vrot.lane.b32.xlu0 %v267, 56
  %v472 = vpop.permute.xlu0 %471
  %v475 = vsel %vm367, %v470, 0
  %477 = vmatpush.msra.mxu0 0.0
  %478 = vmatpush.msra.mxu0 0.0
  %479 = vmatpush.msra.mxu0 0.0
  %480 = vmatpush.msra.mxu0 0.0
  %481 = vmatpush.msra.mxu0 0.0
  %482 = vmatpush.msra.mxu0 0.0
  %483 = vmatpush.msra.mxu0 0.0
  %484 = vmatpush.msra.mxu0 0.0
  %485 = vmatpush.msra.mxu0 0.0
  %486 = vmatpush.msra.mxu0 0.0
  %487 = vmatpush.msra.mxu0 0.0
  %488 = vmatpush.msra.mxu0 0.0
  %489 = vmatpush.msra.mxu0 0.0
  %490 = vmatpush.msra.mxu0 0.0
  %491 = vmatpush.msra.mxu0 0.0
  %492 = vmatpush.msra.mxu0 %v472
  %493 = vmatmul.f32.gmra.mxu0 %v475
  %v494 = vpop.f32.mrf.mxu0
  %v495 = vadd.f32 0.0, %v494
  %496 = vdwg.mxu0
  %497 = vrot.lane.b32.xlu0 %v307, 112
  %v498 = vpop.permute.xlu0 %497
  %499 = vrot.lane.b32.xlu0 %v362, 80
  %v500 = vpop.permute.xlu0 %499
  %v501 = vsel %vm367, %v498, 0
  %v503 = vsel %vm367, %v500, 0
  %505 = vmatpush.xpose.msra.mxu0 0.0
  %506 = vmatpush.xpose.msra.mxu0 0.0
  %507 = vmatpush.xpose.msra.mxu0 0.0
  %508 = vmatpush.xpose.msra.mxu0 0.0
  %509 = vmatpush.xpose.msra.mxu0 0.0
  %510 = vmatpush.xpose.msra.mxu0 0.0
  %511 = vmatpush.xpose.msra.mxu0 0.0
  %512 = vmatpush.xpose.msra.mxu0 0.0
  %513 = vmatpush.xpose.msra.mxu0 0.0
  %514 = vmatpush.xpose.msra.mxu0 0.0
  %515 = vmatpush.xpose.msra.mxu0 0.0
  %516 = vmatpush.xpose.msra.mxu0 0.0
  %517 = vmatpush.xpose.msra.mxu0 0.0
  %518 = vmatpush.xpose.msra.mxu0 0.0
  %519 = vmatpush.xpose.msra.mxu0 0.0
  %520 = vmatpush.xpose.msra.mxu0 %v503
  %521 = vmatmul.f32.gmra.mxu0 %v501
  %v522 = vpop.f32.mrf.mxu0
  %v523 = vadd.f32 0.0, %v522
  %524 = vdwg.mxu0
  %v525 = vsel %vm173, %v523, -1e+30
  %v526 = vsel %vm367, %v525, -inf
  %527 = vmax.xlane.f32.xlu0 %v526
  %v528 = vpop.xlane.xlu0 %527
  %v529 = vsub.f32 %v525, %v528
  %v530 = vmul.f32 %v529, 1.442695
  %v531 = vpow.pop %v530
  %v532 = vsel %vm367, %v531, 0.0
  %533 = vadd.xlane.f32.xlu0 %v532
  %v534 = vpop.xlane.xlu0 %533
  %v535 = vrcp.pop %v534
  %v536 = vmul.f32 %v531, %v535
  %537 = vrot.lane.b32.xlu0 %v267, 48
  %v538 = vpop.permute.xlu0 %537
  %v541 = vsel %vm367, %v536, 0
  %543 = vmatpush.msra.mxu0 0.0
  %544 = vmatpush.msra.mxu0 0.0
  %545 = vmatpush.msra.mxu0 0.0
  %546 = vmatpush.msra.mxu0 0.0
  %547 = vmatpush.msra.mxu0 0.0
  %548 = vmatpush.msra.mxu0 0.0
  %549 = vmatpush.msra.mxu0 0.0
  %550 = vmatpush.msra.mxu0 0.0
  %551 = vmatpush.msra.mxu0 0.0
  %552 = vmatpush.msra.mxu0 0.0
  %553 = vmatpush.msra.mxu0 0.0
  %554 = vmatpush.msra.mxu0 0.0
  %555 = vmatpush.msra.mxu0 0.0
  %556 = vmatpush.msra.mxu0 0.0
  %557 = vmatpush.msra.mxu0 0.0
  %558 = vmatpush.msra.mxu0 %v538
  %559 = vmatmul.f32.gmra.mxu0 %v541
  %v560 = vpop.f32.mrf.mxu0
  %v561 = vadd.f32 0.0, %v560
  %562 = vdwg.mxu0
  %563 = vrot.lane.b32.xlu0 %v307, 104
  %v564 = vpop.permute.xlu0 %563
  %565 = vrot.lane.b32.xlu0 %v362, 72
  %v566 = vpop.permute.xlu0 %565
  %v567 = vsel %vm367, %v564, 0
  %v569 = vsel %vm367, %v566, 0
  %571 = vmatpush.xpose.msra.mxu0 0.0
  %572 = vmatpush.xpose.msra.mxu0 0.0
  %573 = vmatpush.xpose.msra.mxu0 0.0
  %574 = vmatpush.xpose.msra.mxu0 0.0
  %575 = vmatpush.xpose.msra.mxu0 0.0
  %576 = vmatpush.xpose.msra.mxu0 0.0
  %577 = vmatpush.xpose.msra.mxu0 0.0
  %578 = vmatpush.xpose.msra.mxu0 0.0
  %579 = vmatpush.xpose.msra.mxu0 0.0
  %580 = vmatpush.xpose.msra.mxu0 0.0
  %581 = vmatpush.xpose.msra.mxu0 0.0
  %582 = vmatpush.xpose.msra.mxu0 0.0
  %583 = vmatpush.xpose.msra.mxu0 0.0
  %584 = vmatpush.xpose.msra.mxu0 0.0
  %585 = vmatpush.xpose.msra.mxu0 0.0
  %586 = vmatpush.xpose.msra.mxu0 %v569
  %587 = vmatmul.f32.gmra.mxu0 %v567
  %v588 = vpop.f32.mrf.mxu0
  %v589 = vadd.f32 0.0, %v588
  %590 = vdwg.mxu0
  %v591 = vsel %vm173, %v589, -1e+30
  %v592 = vsel %vm367, %v591, -inf
  %593 = vmax.xlane.f32.xlu0 %v592
  %v594 = vpop.xlane.xlu0 %593
  %v595 = vsub.f32 %v591, %v594
  %v596 = vmul.f32 %v595, 1.442695
  %v597 = vpow.pop %v596
  %v598 = vsel %vm367, %v597, 0.0
  %599 = vadd.xlane.f32.xlu0 %v598
  %v600 = vpop.xlane.xlu0 %599
  %v601 = vrcp.pop %v600
  %v602 = vmul.f32 %v597, %v601
  %603 = vrot.lane.b32.xlu0 %v267, 40
  %v604 = vpop.permute.xlu0 %603
  %v607 = vsel %vm367, %v602, 0
  %609 = vmatpush.msra.mxu0 0.0
  %610 = vmatpush.msra.mxu0 0.0
  %611 = vmatpush.msra.mxu0 0.0
  %612 = vmatpush.msra.mxu0 0.0
  %613 = vmatpush.msra.mxu0 0.0
  %614 = vmatpush.msra.mxu0 0.0
  %615 = vmatpush.msra.mxu0 0.0
  %616 = vmatpush.msra.mxu0 0.0
  %617 = vmatpush.msra.mxu0 0.0
  %618 = vmatpush.msra.mxu0 0.0
  %619 = vmatpush.msra.mxu0 0.0
  %620 = vmatpush.msra.mxu0 0.0
  %621 = vmatpush.msra.mxu0 0.0
  %622 = vmatpush.msra.mxu0 0.0
  %623 = vmatpush.msra.mxu0 0.0
  %624 = vmatpush.msra.mxu0 %v604
  %625 = vmatmul.f32.gmra.mxu0 %v607
  %v626 = vpop.f32.mrf.mxu0
  %v627 = vadd.f32 0.0, %v626
  %628 = vdwg.mxu0
  %630 = vrot.lane.b32.xlu0 %v495, 8
  %v631 = vpop.permute.xlu0 %630
  %634 = vrot.lane.b32.xlu0 %v561, 16
  %v635 = vpop.permute.xlu0 %634
  %638 = vrot.lane.b32.xlu0 %v627, 24
  %v639 = vpop.permute.xlu0 %638
  %v641 = vsel %vm367, %v429, %v631
  %vm642 = vcmask 130048
  %v643 = vsel %vm642, %v641, %v635
  %vm644 = vcmask 195584
  %v645 = vsel %vm644, %v643, %v639
  %647 = vrot.lane.b32.xlu0 %v363, 96
  %v648 = vpop.permute.xlu0 %647
  %v650 = vsel %vm367, %v308, 0
  %v652 = vsel %vm367, %v648, 0
  %654 = vmatpush.xpose.msra.mxu0 0.0
  %655 = vmatpush.xpose.msra.mxu0 0.0
  %656 = vmatpush.xpose.msra.mxu0 0.0
  %657 = vmatpush.xpose.msra.mxu0 0.0
  %658 = vmatpush.xpose.msra.mxu0 0.0
  %659 = vmatpush.xpose.msra.mxu0 0.0
  %660 = vmatpush.xpose.msra.mxu0 0.0
  %661 = vmatpush.xpose.msra.mxu0 0.0
  %662 = vmatpush.xpose.msra.mxu0 0.0
  %663 = vmatpush.xpose.msra.mxu0 0.0
  %664 = vmatpush.xpose.msra.mxu0 0.0
  %665 = vmatpush.xpose.msra.mxu0 0.0
  %666 = vmatpush.xpose.msra.mxu0 0.0
  %667 = vmatpush.xpose.msra.mxu0 0.0
  %668 = vmatpush.xpose.msra.mxu0 0.0
  %669 = vmatpush.xpose.msra.mxu0 %v652
  %670 = vmatmul.f32.gmra.mxu0 %v650
  %v671 = vpop.f32.mrf.mxu0
  %v672 = vadd.f32 0.0, %v671
  %673 = vdwg.mxu0
  %v674 = vsel %vm173, %v672, -1e+30
  %v675 = vsel %vm367, %v674, -inf
  %676 = vmax.xlane.f32.xlu0 %v675
  %v677 = vpop.xlane.xlu0 %676
  %v678 = vsub.f32 %v674, %v677
  %v679 = vmul.f32 %v678, 1.442695
  %v680 = vpow.pop %v679
  %v681 = vsel %vm367, %v680, 0.0
  %682 = vadd.xlane.f32.xlu0 %v681
  %v683 = vpop.xlane.xlu0 %682
  %v684 = vrcp.pop %v683
  %v685 = vmul.f32 %v680, %v684
  %686 = vrot.lane.b32.xlu0 %v270, 64
  %v687 = vpop.permute.xlu0 %686
  %v690 = vsel %vm367, %v685, 0
  %692 = vmatpush.msra.mxu0 0.0
  %693 = vmatpush.msra.mxu0 0.0
  %694 = vmatpush.msra.mxu0 0.0
  %695 = vmatpush.msra.mxu0 0.0
  %696 = vmatpush.msra.mxu0 0.0
  %697 = vmatpush.msra.mxu0 0.0
  %698 = vmatpush.msra.mxu0 0.0
  %699 = vmatpush.msra.mxu0 0.0
  %700 = vmatpush.msra.mxu0 0.0
  %701 = vmatpush.msra.mxu0 0.0
  %702 = vmatpush.msra.mxu0 0.0
  %703 = vmatpush.msra.mxu0 0.0
  %704 = vmatpush.msra.mxu0 0.0
  %705 = vmatpush.msra.mxu0 0.0
  %706 = vmatpush.msra.mxu0 0.0
  %707 = vmatpush.msra.mxu0 %v687
  %708 = vmatmul.f32.gmra.mxu0 %v690
  %v709 = vpop.f32.mrf.mxu0
  %v710 = vadd.f32 0.0, %v709
  %711 = vdwg.mxu0
  %712 = vrot.lane.b32.xlu0 %v308, 120
  %v713 = vpop.permute.xlu0 %712
  %714 = vrot.lane.b32.xlu0 %v363, 88
  %v715 = vpop.permute.xlu0 %714
  %v716 = vsel %vm367, %v713, 0
  %v718 = vsel %vm367, %v715, 0
  %720 = vmatpush.xpose.msra.mxu0 0.0
  %721 = vmatpush.xpose.msra.mxu0 0.0
  %722 = vmatpush.xpose.msra.mxu0 0.0
  %723 = vmatpush.xpose.msra.mxu0 0.0
  %724 = vmatpush.xpose.msra.mxu0 0.0
  %725 = vmatpush.xpose.msra.mxu0 0.0
  %726 = vmatpush.xpose.msra.mxu0 0.0
  %727 = vmatpush.xpose.msra.mxu0 0.0
  %728 = vmatpush.xpose.msra.mxu0 0.0
  %729 = vmatpush.xpose.msra.mxu0 0.0
  %730 = vmatpush.xpose.msra.mxu0 0.0
  %731 = vmatpush.xpose.msra.mxu0 0.0
  %732 = vmatpush.xpose.msra.mxu0 0.0
  %733 = vmatpush.xpose.msra.mxu0 0.0
  %734 = vmatpush.xpose.msra.mxu0 0.0
  %735 = vmatpush.xpose.msra.mxu0 %v718
  %736 = vmatmul.f32.gmra.mxu0 %v716
  %v737 = vpop.f32.mrf.mxu0
  %v738 = vadd.f32 0.0, %v737
  %739 = vdwg.mxu0
  %v740 = vsel %vm173, %v738, -1e+30
  %v741 = vsel %vm367, %v740, -inf
  %742 = vmax.xlane.f32.xlu0 %v741
  %v743 = vpop.xlane.xlu0 %742
  %v744 = vsub.f32 %v740, %v743
  %v745 = vmul.f32 %v744, 1.442695
  %v746 = vpow.pop %v745
  %v747 = vsel %vm367, %v746, 0.0
  %748 = vadd.xlane.f32.xlu0 %v747
  %v749 = vpop.xlane.xlu0 %748
  %v750 = vrcp.pop %v749
  %v751 = vmul.f32 %v746, %v750
  %752 = vrot.lane.b32.xlu0 %v270, 56
  %v753 = vpop.permute.xlu0 %752
  %v756 = vsel %vm367, %v751, 0
  %758 = vmatpush.msra.mxu0 0.0
  %759 = vmatpush.msra.mxu0 0.0
  %760 = vmatpush.msra.mxu0 0.0
  %761 = vmatpush.msra.mxu0 0.0
  %762 = vmatpush.msra.mxu0 0.0
  %763 = vmatpush.msra.mxu0 0.0
  %764 = vmatpush.msra.mxu0 0.0
  %765 = vmatpush.msra.mxu0 0.0
  %766 = vmatpush.msra.mxu0 0.0
  %767 = vmatpush.msra.mxu0 0.0
  %768 = vmatpush.msra.mxu0 0.0
  %769 = vmatpush.msra.mxu0 0.0
  %770 = vmatpush.msra.mxu0 0.0
  %771 = vmatpush.msra.mxu0 0.0
  %772 = vmatpush.msra.mxu0 0.0
  %773 = vmatpush.msra.mxu0 %v753
  %774 = vmatmul.f32.gmra.mxu0 %v756
  %v775 = vpop.f32.mrf.mxu0
  %v776 = vadd.f32 0.0, %v775
  %777 = vdwg.mxu0
  %778 = vrot.lane.b32.xlu0 %v308, 112
  %v779 = vpop.permute.xlu0 %778
  %780 = vrot.lane.b32.xlu0 %v363, 80
  %v781 = vpop.permute.xlu0 %780
  %v782 = vsel %vm367, %v779, 0
  %v784 = vsel %vm367, %v781, 0
  %786 = vmatpush.xpose.msra.mxu0 0.0
  %787 = vmatpush.xpose.msra.mxu0 0.0
  %788 = vmatpush.xpose.msra.mxu0 0.0
  %789 = vmatpush.xpose.msra.mxu0 0.0
  %790 = vmatpush.xpose.msra.mxu0 0.0
  %791 = vmatpush.xpose.msra.mxu0 0.0
  %792 = vmatpush.xpose.msra.mxu0 0.0
  %793 = vmatpush.xpose.msra.mxu0 0.0
  %794 = vmatpush.xpose.msra.mxu0 0.0
  %795 = vmatpush.xpose.msra.mxu0 0.0
  %796 = vmatpush.xpose.msra.mxu0 0.0
  %797 = vmatpush.xpose.msra.mxu0 0.0
  %798 = vmatpush.xpose.msra.mxu0 0.0
  %799 = vmatpush.xpose.msra.mxu0 0.0
  %800 = vmatpush.xpose.msra.mxu0 0.0
  %801 = vmatpush.xpose.msra.mxu0 %v784
  %802 = vmatmul.f32.gmra.mxu0 %v782
  %v803 = vpop.f32.mrf.mxu0
  %v804 = vadd.f32 0.0, %v803
  %805 = vdwg.mxu0
  %v806 = vsel %vm173, %v804, -1e+30
  %v807 = vsel %vm367, %v806, -inf
  %808 = vmax.xlane.f32.xlu0 %v807
  %v809 = vpop.xlane.xlu0 %808
  %v810 = vsub.f32 %v806, %v809
  %v811 = vmul.f32 %v810, 1.442695
  %v812 = vpow.pop %v811
  %v813 = vsel %vm367, %v812, 0.0
  %814 = vadd.xlane.f32.xlu0 %v813
  %v815 = vpop.xlane.xlu0 %814
  %v816 = vrcp.pop %v815
  %v817 = vmul.f32 %v812, %v816
  %818 = vrot.lane.b32.xlu0 %v270, 48
  %v819 = vpop.permute.xlu0 %818
  %v822 = vsel %vm367, %v817, 0
  %824 = vmatpush.msra.mxu0 0.0
  %825 = vmatpush.msra.mxu0 0.0
  %826 = vmatpush.msra.mxu0 0.0
  %827 = vmatpush.msra.mxu0 0.0
  %828 = vmatpush.msra.mxu0 0.0
  %829 = vmatpush.msra.mxu0 0.0
  %830 = vmatpush.msra.mxu0 0.0
  %831 = vmatpush.msra.mxu0 0.0
  %832 = vmatpush.msra.mxu0 0.0
  %833 = vmatpush.msra.mxu0 0.0
  %834 = vmatpush.msra.mxu0 0.0
  %835 = vmatpush.msra.mxu0 0.0
  %836 = vmatpush.msra.mxu0 0.0
  %837 = vmatpush.msra.mxu0 0.0
  %838 = vmatpush.msra.mxu0 0.0
  %839 = vmatpush.msra.mxu0 %v819
  %840 = vmatmul.f32.gmra.mxu0 %v822
  %v841 = vpop.f32.mrf.mxu0
  %v842 = vadd.f32 0.0, %v841
  %843 = vdwg.mxu0
  %844 = vrot.lane.b32.xlu0 %v308, 104
  %v845 = vpop.permute.xlu0 %844
  %846 = vrot.lane.b32.xlu0 %v363, 72
  %v847 = vpop.permute.xlu0 %846
  %v848 = vsel %vm367, %v845, 0
  %v850 = vsel %vm367, %v847, 0
  %852 = vmatpush.xpose.msra.mxu0 0.0
  %853 = vmatpush.xpose.msra.mxu0 0.0
  %854 = vmatpush.xpose.msra.mxu0 0.0
  %855 = vmatpush.xpose.msra.mxu0 0.0
  %856 = vmatpush.xpose.msra.mxu0 0.0
  %857 = vmatpush.xpose.msra.mxu0 0.0
  %858 = vmatpush.xpose.msra.mxu0 0.0
  %859 = vmatpush.xpose.msra.mxu0 0.0
  %860 = vmatpush.xpose.msra.mxu0 0.0
  %861 = vmatpush.xpose.msra.mxu0 0.0
  %862 = vmatpush.xpose.msra.mxu0 0.0
  %863 = vmatpush.xpose.msra.mxu0 0.0
  %864 = vmatpush.xpose.msra.mxu0 0.0
  %865 = vmatpush.xpose.msra.mxu0 0.0
  %866 = vmatpush.xpose.msra.mxu0 0.0
  %867 = vmatpush.xpose.msra.mxu0 %v850
  %868 = vmatmul.f32.gmra.mxu0 %v848
  %v869 = vpop.f32.mrf.mxu0
  %v870 = vadd.f32 0.0, %v869
  %871 = vdwg.mxu0
  %v872 = vsel %vm173, %v870, -1e+30
  %v873 = vsel %vm367, %v872, -inf
  %874 = vmax.xlane.f32.xlu0 %v873
  %v875 = vpop.xlane.xlu0 %874
  %v876 = vsub.f32 %v872, %v875
  %v877 = vmul.f32 %v876, 1.442695
  %v878 = vpow.pop %v877
  %v879 = vsel %vm367, %v878, 0.0
  %880 = vadd.xlane.f32.xlu0 %v879
  %v881 = vpop.xlane.xlu0 %880
  %v882 = vrcp.pop %v881
  %v883 = vmul.f32 %v878, %v882
  %884 = vrot.lane.b32.xlu0 %v270, 40
  %v885 = vpop.permute.xlu0 %884
  %v888 = vsel %vm367, %v883, 0
  %890 = vmatpush.msra.mxu0 0.0
  %891 = vmatpush.msra.mxu0 0.0
  %892 = vmatpush.msra.mxu0 0.0
  %893 = vmatpush.msra.mxu0 0.0
  %894 = vmatpush.msra.mxu0 0.0
  %895 = vmatpush.msra.mxu0 0.0
  %896 = vmatpush.msra.mxu0 0.0
  %897 = vmatpush.msra.mxu0 0.0
  %898 = vmatpush.msra.mxu0 0.0
  %899 = vmatpush.msra.mxu0 0.0
  %900 = vmatpush.msra.mxu0 0.0
  %901 = vmatpush.msra.mxu0 0.0
  %902 = vmatpush.msra.mxu0 0.0
  %903 = vmatpush.msra.mxu0 0.0
  %904 = vmatpush.msra.mxu0 0.0
  %905 = vmatpush.msra.mxu0 %v885
  %906 = vmatmul.f32.gmra.mxu0 %v888
  %v907 = vpop.f32.mrf.mxu0
  %v908 = vadd.f32 0.0, %v907
  %909 = vdwg.mxu0
  %911 = vrot.lane.b32.xlu0 %v776, 8
  %v912 = vpop.permute.xlu0 %911
  %915 = vrot.lane.b32.xlu0 %v842, 16
  %v916 = vpop.permute.xlu0 %915
  %919 = vrot.lane.b32.xlu0 %v908, 24
  %v920 = vpop.permute.xlu0 %919
  %v922 = vsel %vm367, %v710, %v912
  %v923 = vsel %vm642, %v922, %v916
  %v924 = vsel %vm644, %v923, %v920
  %v926 = vsel %vm198, %v645, 0
  %v929 = vsel %vm198, %v924, 0
  %931 = vmatpush.msra.mxu0 0.0
  %932 = vmatpush.msra.mxu0 0.0
  %933 = vmatpush.msra.mxu0 0.0
  %934 = vmatpush.msra.mxu0 0.0
  %935 = vmatpush.msra.mxu0 0.0
  %936 = vmatpush.msra.mxu0 0.0
  %937 = vmatpush.msra.mxu0 0.0
  %938 = vmatpush.msra.mxu0 0.0
  %939 = vmatpush.msra.mxu0 0.0
  %940 = vmatpush.msra.mxu0 0.0
  %941 = vmatpush.msra.mxu0 0.0
  %942 = vmatpush.msra.mxu0 0.0
  %943 = vmatpush.msra.mxu0 %v181
  %944 = vmatpush.msra.mxu0 %v180
  %945 = vmatpush.msra.mxu0 %v179
  %946 = vmatpush.msra.mxu0 %v178
  %947 = vmatmul.f32.gmra.mxu0 %v926
  %v948 = vpop.f32.mrf.mxu0
  %v949 = vadd.f32 0.0, %v948
  %950 = vmatmul.f32.gmra.mxu0 %v929
  %v951 = vpop.f32.mrf.mxu0
  %v952 = vadd.f32 0.0, %v951
  %953 = vdwg.mxu0
  %v954 = vadd.f32 %v158, %v949
  %v955 = vadd.f32 %v161, %v952
  %v956 = vmul.f32 %v954, %v954
  %v957 = vmul.f32 %v955, %v955
  %v958 = vsel %vm198, %v956, 0.0
  %959 = vadd.xlane.f32.xlu0 %v958
  %v960 = vpop.xlane.xlu0 %959
  %v961 = vsel %vm198, %v957, 0.0
  %962 = vadd.xlane.f32.xlu0 %v961
  %v963 = vpop.xlane.xlu0 %962
  %v964 = vmul.f32 %v960, %v211
  %v965 = vmul.f32 %v963, %v211
  %v966 = vadd.f32 %v964, 1e-06
  %v967 = vadd.f32 %v965, 1e-06
  %v968 = vrsqrt.pop %v966
  %v969 = vmul.f32 %v968, %v966
  %v970 = vmul.f32 %v969, %v968
  %v971 = vmul.f32 0.5, %v970
  %v972 = vsub.f32 1.5, %v971
  %v973 = vmul.f32 %v968, %v972
  %vm974 = vweird.f32 %v966
  %vm975 = vweird.f32 %v968
  %vm976 = vmor %vm974, %vm975
  %v977 = vsel %vm976, %v968, %v973
  %v978 = vrsqrt.pop %v967
  %v979 = vmul.f32 %v978, %v967
  %v980 = vmul.f32 %v979, %v978
  %v981 = vmul.f32 0.5, %v980
  %v982 = vsub.f32 1.5, %v981
  %v983 = vmul.f32 %v978, %v982
  %vm984 = vweird.f32 %v967
  %vm985 = vweird.f32 %v978
  %vm986 = vmor %vm984, %vm985
  %v987 = vsel %vm986, %v978, %v983
  %v988 = vmul.f32 %v954, %v977
  %v989 = vmul.f32 %v955, %v987
  %v991 = vperm.slane %v195, 0
  %v993 = vmul.f32 %v988, %v991
  %v994 = vmul.f32 %v989, %v991
  %v996 = vsel %vm198, %v993, 0
  %v999 = vsel %vm198, %v994, 0
  %1001 = vmatpush.msra.mxu0 0.0
  %1002 = vmatpush.msra.mxu0 0.0
  %1003 = vmatpush.msra.mxu0 0.0
  %1004 = vmatpush.msra.mxu0 0.0
  %1005 = vmatpush.msra.mxu0 0.0
  %1006 = vmatpush.msra.mxu0 0.0
  %1007 = vmatpush.msra.mxu0 0.0
  %1008 = vmatpush.msra.mxu0 0.0
  %1009 = vmatpush.msra.mxu0 0.0
  %1010 = vmatpush.msra.mxu0 0.0
  %1011 = vmatpush.msra.mxu0 0.0
  %1012 = vmatpush.msra.mxu0 0.0
  %1013 = vmatpush.msra.mxu0 %v185
  %1014 = vmatpush.msra.mxu0 %v184
  %1015 = vmatpush.msra.mxu0 %v183
  %1016 = vmatpush.msra.mxu0 %v182
  %1017 = vmatmul.f32.gmra.mxu0 %v996
  %v1018 = vpop.f32.mrf.mxu0
  %v1019 = vadd.f32 0.0, %v1018
  %1020 = vmatmul.f32.gmra.mxu0 %v999
  %v1021 = vpop.f32.mrf.mxu0
  %v1022 = vadd.f32 0.0, %v1021
  %1023 = vdwg.mxu0
  %v1024 = vxor.u32 %v1019, 2147483648
  %v1025 = vxor.u32 %v1022, 2147483648
  %v1026 = vmul.f32 %v1024, 1.442695
  %v1027 = vpow.pop %v1026
  %v1028 = vmul.f32 %v1025, 1.442695
  %v1029 = vpow.pop %v1028
  %v1030 = vadd.f32 %v1027, 1.0
  %v1031 = vadd.f32 %v1029, 1.0
  %v1032 = vrcp.pop %v1030
  %v1033 = vmul.f32 %v1030, %v1032
  %v1034 = vsub.f32 1.0, %v1033
  %v1035 = vmul.f32 %v1032, %v1034
  %v1036 = vadd.f32 %v1032, %v1035
  %vm1037 = vweird.f32 %v1030
  %vm1038 = vweird.f32 %v1032
  %vm1039 = vmor %vm1037, %vm1038
  %v1040 = vsel %vm1039, %v1032, %v1036
  %v1041 = vand.u32 2147483647, %v1030
  %vm1042 = vcmp.eq.f32.partialorder %v1041, 8.507059e+37
  %v1043 = vand.u32 %v1030, 2147483648
  %v1044 = vor.u32 1.1754944e-38, %v1043
  %v1045 = vsel %vm1042, %v1044, %v1040
  %v1046 = vmul.f32 1.0, %v1045
  %v1047 = vrcp.pop %v1031
  %v1048 = vmul.f32 %v1031, %v1047
  %v1049 = vsub.f32 1.0, %v1048
  %v1050 = vmul.f32 %v1047, %v1049
  %v1051 = vadd.f32 %v1047, %v1050
  %vm1052 = vweird.f32 %v1031
  %vm1053 = vweird.f32 %v1047
  %vm1054 = vmor %vm1052, %vm1053
  %v1055 = vsel %vm1054, %v1047, %v1051
  %v1056 = vand.u32 2147483647, %v1031
  %vm1057 = vcmp.eq.f32.partialorder %v1056, 8.507059e+37
  %v1058 = vand.u32 %v1031, 2147483648
  %v1059 = vor.u32 1.1754944e-38, %v1058
  %v1060 = vsel %vm1057, %v1059, %v1055
  %v1061 = vmul.f32 1.0, %v1060
  %v1062 = vmul.f32 %v1019, %v1046
  %v1063 = vmul.f32 %v1022, %v1061
  %1066 = vrot.lane.b32.xlu0 %v1019, 64
  %v1067 = vpop.permute.xlu0 %1066
  %1068 = vrot.lane.b32.xlu0 %v1022, 64
  %v1069 = vpop.permute.xlu0 %1068
  %v1072 = vmul.f32 %v1062, %v1067
  %v1073 = vmul.f32 %v1063, %v1069
  %vm1074 = vcmask 523264
  %v1076 = vsel %vm1074, %v1072, 0
  %v1079 = vsel %vm1074, %v1073, 0
  %1081 = vmatpush.msra.mxu0 0.0
  %1082 = vmatpush.msra.mxu0 0.0
  %1083 = vmatpush.msra.mxu0 0.0
  %1084 = vmatpush.msra.mxu0 0.0
  %1085 = vmatpush.msra.mxu0 0.0
  %1086 = vmatpush.msra.mxu0 0.0
  %1087 = vmatpush.msra.mxu0 0.0
  %1088 = vmatpush.msra.mxu0 0.0
  %1089 = vmatpush.msra.mxu0 %v193
  %1090 = vmatpush.msra.mxu0 %v192
  %1091 = vmatpush.msra.mxu0 %v191
  %1092 = vmatpush.msra.mxu0 %v190
  %1093 = vmatpush.msra.mxu0 %v189
  %1094 = vmatpush.msra.mxu0 %v188
  %1095 = vmatpush.msra.mxu0 %v187
  %1096 = vmatpush.msra.mxu0 %v186
  %1097 = vmatmul.f32.gmra.mxu0 %v1076
  %v1098 = vpop.f32.mrf.mxu0
  %v1099 = vadd.f32 0.0, %v1098
  %1100 = vmatmul.f32.gmra.mxu0 %v1079
  %v1101 = vpop.f32.mrf.mxu0
  %v1102 = vadd.f32 0.0, %v1101
  %1103 = vdwg.mxu0
  %v1104 = vadd.f32 %v954, %v1099
  %v1105 = vadd.f32 %v955, %v1102
  %s1106 = scalar_lea.vmem %s2, 32
  %v1107 = vld [vmem:[%s1106] sm:$0xff]
  %v1108 = vld [vmem:[%s1106 + $0x8] sm:$0xff]
  %v1109 = vld [vmem:[%s1106 + $0x10] sm:$0xff]
  %v1110 = vld [vmem:[%s1106 + $0x18] sm:$0xff]
  %s1111 = scalar_lea.vmem %s3, 32
  %v1112 = vld [vmem:[%s1111] sm:$0xff]
  %v1113 = vld [vmem:[%s1111 + $0x8] sm:$0xff]
  %v1114 = vld [vmem:[%s1111 + $0x10] sm:$0xff]
  %v1115 = vld [vmem:[%s1111 + $0x18] sm:$0xff]
  %s1116 = scalar_lea.vmem %s4, 32
  %v1117 = vld [vmem:[%s1116] sm:$0xff]
  %v1118 = vld [vmem:[%s1116 + $0x8] sm:$0xff]
  %v1119 = vld [vmem:[%s1116 + $0x10] sm:$0xff]
  %v1120 = vld [vmem:[%s1116 + $0x18] sm:$0xff]
  %s1121 = scalar_lea.vmem %s5, 64
  %v1122 = vld [vmem:[%s1121] sm:$0xff]
  %v1123 = vld [vmem:[%s1121 + $0x8] sm:$0xff]
  %v1124 = vld [vmem:[%s1121 + $0x10] sm:$0xff]
  %v1125 = vld [vmem:[%s1121 + $0x18] sm:$0xff]
  %v1126 = vld [vmem:[%s1121 + $0x20] sm:$0xff]
  %v1127 = vld [vmem:[%s1121 + $0x28] sm:$0xff]
  %v1128 = vld [vmem:[%s1121 + $0x30] sm:$0xff]
  %v1129 = vld [vmem:[%s1121 + $0x38] sm:$0xff]
  %s1130 = scalar_lea.vmem %s6, 1
  %v1131 = vld [vmem:[%s1130] sm:$0x1]
  %s1132 = scalar_lea.vmem %s7, 1
  %v1133 = vld [vmem:[%s1132] sm:$0x1]
  %v1134 = vmul.f32 %v1104, %v1104
  %v1135 = vmul.f32 %v1105, %v1105
  %v1136 = vsel %vm198, %v1134, 0.0
  %1137 = vadd.xlane.f32.xlu0 %v1136
  %v1138 = vpop.xlane.xlu0 %1137
  %v1139 = vsel %vm198, %v1135, 0.0
  %1140 = vadd.xlane.f32.xlu0 %v1139
  %v1141 = vpop.xlane.xlu0 %1140
  %v1142 = vmul.f32 %v1138, %v211
  %v1143 = vmul.f32 %v1141, %v211
  %v1144 = vadd.f32 %v1142, 1e-06
  %v1145 = vadd.f32 %v1143, 1e-06
  %v1146 = vrsqrt.pop %v1144
  %v1147 = vmul.f32 %v1146, %v1144
  %v1148 = vmul.f32 %v1147, %v1146
  %v1149 = vmul.f32 0.5, %v1148
  %v1150 = vsub.f32 1.5, %v1149
  %v1151 = vmul.f32 %v1146, %v1150
  %vm1152 = vweird.f32 %v1144
  %vm1153 = vweird.f32 %v1146
  %vm1154 = vmor %vm1152, %vm1153
  %v1155 = vsel %vm1154, %v1146, %v1151
  %v1156 = vrsqrt.pop %v1145
  %v1157 = vmul.f32 %v1156, %v1145
  %v1158 = vmul.f32 %v1157, %v1156
  %v1159 = vmul.f32 0.5, %v1158
  %v1160 = vsub.f32 1.5, %v1159
  %v1161 = vmul.f32 %v1156, %v1160
  %vm1162 = vweird.f32 %v1145
  %vm1163 = vweird.f32 %v1156
  %vm1164 = vmor %vm1162, %vm1163
  %v1165 = vsel %vm1164, %v1156, %v1161
  %v1166 = vmul.f32 %v1104, %v1155
  %v1167 = vmul.f32 %v1105, %v1165
  %v1169 = vperm.slane %v1131, 0
  %v1171 = vmul.f32 %v1166, %v1169
  %v1172 = vmul.f32 %v1167, %v1169
  %v1174 = vsel %vm198, %v1171, 0
  %v1177 = vsel %vm198, %v1172, 0
  %1179 = vmatpush.msra.mxu0 0.0
  %1180 = vmatpush.msra.mxu0 0.0
  %1181 = vmatpush.msra.mxu0 0.0
  %1182 = vmatpush.msra.mxu0 0.0
  %1183 = vmatpush.msra.mxu0 0.0
  %1184 = vmatpush.msra.mxu0 0.0
  %1185 = vmatpush.msra.mxu0 0.0
  %1186 = vmatpush.msra.mxu0 0.0
  %1187 = vmatpush.msra.mxu0 0.0
  %1188 = vmatpush.msra.mxu0 0.0
  %1189 = vmatpush.msra.mxu0 0.0
  %1190 = vmatpush.msra.mxu0 0.0
  %1191 = vmatpush.msra.mxu0 %v1110
  %1192 = vmatpush.msra.mxu0 %v1109
  %1193 = vmatpush.msra.mxu0 %v1108
  %1194 = vmatpush.msra.mxu0 %v1107
  %1195 = vmatmul.f32.gmra.mxu0 %v1174
  %v1196 = vpop.f32.mrf.mxu0
  %v1197 = vadd.f32 0.0, %v1196
  %1198 = vmatmul.f32.gmra.mxu0 %v1177
  %v1199 = vpop.f32.mrf.mxu0
  %v1200 = vadd.f32 0.0, %v1199
  %1201 = vdwg.mxu0
  %v1202 = vmul.f32 %v1197, 0.35355338
  %v1203 = vmul.f32 %v1200, 0.35355338
  %v1204 = vmul.f32 %v1202, %v163
  %v1205 = vmul.f32 %v1203, %v164
  %v1207 = vsel %vm198, %v1202, 0
  %v1210 = vsel %vm198, %v1203, 0
  %1212 = vmatpush.msra.mxu0 0.0
  %1213 = vmatpush.msra.mxu0 0.0
  %1214 = vmatpush.msra.mxu0 0.0
  %1215 = vmatpush.msra.mxu0 0.0
  %1216 = vmatpush.msra.mxu0 0.0
  %1217 = vmatpush.msra.mxu0 0.0
  %1218 = vmatpush.msra.mxu0 0.0
  %1219 = vmatpush.msra.mxu0 0.0
  %1220 = vmatpush.msra.mxu0 0.0
  %1221 = vmatpush.msra.mxu0 0.0
  %1222 = vmatpush.msra.mxu0 0.0
  %1223 = vmatpush.msra.mxu0 0.0
  %1224 = vmatpush.msra.mxu0 %v170
  %1225 = vmatpush.msra.mxu0 %v169
  %1226 = vmatpush.msra.mxu0 %v168
  %1227 = vmatpush.msra.mxu0 %v167
  %1228 = vmatmul.f32.gmra.mxu0 %v1207
  %v1229 = vpop.f32.mrf.mxu0
  %v1230 = vadd.f32 0.0, %v1229
  %1231 = vmatmul.f32.gmra.mxu0 %v1210
  %v1232 = vpop.f32.mrf.mxu0
  %v1233 = vadd.f32 0.0, %v1232
  %1234 = vdwg.mxu0
  %v1235 = vmul.f32 %v1230, %v165
  %v1236 = vmul.f32 %v1233, %v166
  %v1237 = vadd.f32 %v1204, %v1235
  %v1238 = vadd.f32 %v1205, %v1236
  %v1239 = vmul.f32 %v1197, %v312
  %v1240 = vmul.f32 %v1200, %v314
  %1243 = vrot.lane.b32.xlu0 %v1197, 96
  %v1244 = vpop.permute.xlu0 %1243
  %1245 = vrot.lane.b32.xlu0 %v1200, 96
  %v1246 = vpop.permute.xlu0 %1245
  %v1247 = vsel %vm198, %v1244, 0
  %v1249 = vsel %vm198, %v1246, 0
  %1251 = vmatpush.msra.mxu0 0.0
  %1252 = vmatpush.msra.mxu0 0.0
  %1253 = vmatpush.msra.mxu0 0.0
  %1254 = vmatpush.msra.mxu0 0.0
  %1255 = vmatpush.msra.mxu0 0.0
  %1256 = vmatpush.msra.mxu0 0.0
  %1257 = vmatpush.msra.mxu0 0.0
  %1258 = vmatpush.msra.mxu0 0.0
  %1259 = vmatpush.msra.mxu0 0.0
  %1260 = vmatpush.msra.mxu0 0.0
  %1261 = vmatpush.msra.mxu0 0.0
  %1262 = vmatpush.msra.mxu0 0.0
  %1263 = vmatpush.msra.mxu0 %v170
  %1264 = vmatpush.msra.mxu0 %v169
  %1265 = vmatpush.msra.mxu0 %v168
  %1266 = vmatpush.msra.mxu0 %v167
  %1267 = vmatmul.f32.gmra.mxu0 %v1247
  %v1268 = vpop.f32.mrf.mxu0
  %v1269 = vadd.f32 0.0, %v1268
  %1270 = vmatmul.f32.gmra.mxu0 %v1249
  %v1271 = vpop.f32.mrf.mxu0
  %v1272 = vadd.f32 0.0, %v1271
  %1273 = vdwg.mxu0
  %v1274 = vmul.f32 %v1269, %v165
  %v1275 = vmul.f32 %v1272, %v166
  %1278 = vrot.lane.b32.xlu0 %v1274, 32
  %v1279 = vpop.permute.xlu0 %1278
  %1280 = vrot.lane.b32.xlu0 %v1275, 32
  %v1281 = vpop.permute.xlu0 %1280
  %v1284 = vadd.f32 %v1239, %v1279
  %v1285 = vadd.f32 %v1240, %v1281
  %1287 = vrot.lane.b32.xlu0 %v1284, 96
  %v1288 = vpop.permute.xlu0 %1287
  %v1290 = vsel %vm367, %v1237, 0
  %v1292 = vsel %vm367, %v1288, 0
  %1294 = vmatpush.xpose.msra.mxu0 0.0
  %1295 = vmatpush.xpose.msra.mxu0 0.0
  %1296 = vmatpush.xpose.msra.mxu0 0.0
  %1297 = vmatpush.xpose.msra.mxu0 0.0
  %1298 = vmatpush.xpose.msra.mxu0 0.0
  %1299 = vmatpush.xpose.msra.mxu0 0.0
  %1300 = vmatpush.xpose.msra.mxu0 0.0
  %1301 = vmatpush.xpose.msra.mxu0 0.0
  %1302 = vmatpush.xpose.msra.mxu0 0.0
  %1303 = vmatpush.xpose.msra.mxu0 0.0
  %1304 = vmatpush.xpose.msra.mxu0 0.0
  %1305 = vmatpush.xpose.msra.mxu0 0.0
  %1306 = vmatpush.xpose.msra.mxu0 0.0
  %1307 = vmatpush.xpose.msra.mxu0 0.0
  %1308 = vmatpush.xpose.msra.mxu0 0.0
  %1309 = vmatpush.xpose.msra.mxu0 %v1292
  %1310 = vmatmul.f32.gmra.mxu0 %v1290
  %v1311 = vpop.f32.mrf.mxu0
  %v1312 = vadd.f32 0.0, %v1311
  %1313 = vdwg.mxu0
  %v1314 = vsel %vm173, %v1312, -1e+30
  %v1315 = vsel %vm367, %v1314, -inf
  %1316 = vmax.xlane.f32.xlu0 %v1315
  %v1317 = vpop.xlane.xlu0 %1316
  %v1318 = vsub.f32 %v1314, %v1317
  %v1319 = vmul.f32 %v1318, 1.442695
  %v1320 = vpow.pop %v1319
  %v1321 = vsel %vm367, %v1320, 0.0
  %1322 = vadd.xlane.f32.xlu0 %v1321
  %v1323 = vpop.xlane.xlu0 %1322
  %v1324 = vrcp.pop %v1323
  %v1325 = vmul.f32 %v1320, %v1324
  %1326 = vrot.lane.b32.xlu0 %v1197, 64
  %v1327 = vpop.permute.xlu0 %1326
  %v1330 = vsel %vm367, %v1325, 0
  %1332 = vmatpush.msra.mxu0 0.0
  %1333 = vmatpush.msra.mxu0 0.0
  %1334 = vmatpush.msra.mxu0 0.0
  %1335 = vmatpush.msra.mxu0 0.0
  %1336 = vmatpush.msra.mxu0 0.0
  %1337 = vmatpush.msra.mxu0 0.0
  %1338 = vmatpush.msra.mxu0 0.0
  %1339 = vmatpush.msra.mxu0 0.0
  %1340 = vmatpush.msra.mxu0 0.0
  %1341 = vmatpush.msra.mxu0 0.0
  %1342 = vmatpush.msra.mxu0 0.0
  %1343 = vmatpush.msra.mxu0 0.0
  %1344 = vmatpush.msra.mxu0 0.0
  %1345 = vmatpush.msra.mxu0 0.0
  %1346 = vmatpush.msra.mxu0 0.0
  %1347 = vmatpush.msra.mxu0 %v1327
  %1348 = vmatmul.f32.gmra.mxu0 %v1330
  %v1349 = vpop.f32.mrf.mxu0
  %v1350 = vadd.f32 0.0, %v1349
  %1351 = vdwg.mxu0
  %1352 = vrot.lane.b32.xlu0 %v1237, 120
  %v1353 = vpop.permute.xlu0 %1352
  %1354 = vrot.lane.b32.xlu0 %v1284, 88
  %v1355 = vpop.permute.xlu0 %1354
  %v1356 = vsel %vm367, %v1353, 0
  %v1358 = vsel %vm367, %v1355, 0
  %1360 = vmatpush.xpose.msra.mxu0 0.0
  %1361 = vmatpush.xpose.msra.mxu0 0.0
  %1362 = vmatpush.xpose.msra.mxu0 0.0
  %1363 = vmatpush.xpose.msra.mxu0 0.0
  %1364 = vmatpush.xpose.msra.mxu0 0.0
  %1365 = vmatpush.xpose.msra.mxu0 0.0
  %1366 = vmatpush.xpose.msra.mxu0 0.0
  %1367 = vmatpush.xpose.msra.mxu0 0.0
  %1368 = vmatpush.xpose.msra.mxu0 0.0
  %1369 = vmatpush.xpose.msra.mxu0 0.0
  %1370 = vmatpush.xpose.msra.mxu0 0.0
  %1371 = vmatpush.xpose.msra.mxu0 0.0
  %1372 = vmatpush.xpose.msra.mxu0 0.0
  %1373 = vmatpush.xpose.msra.mxu0 0.0
  %1374 = vmatpush.xpose.msra.mxu0 0.0
  %1375 = vmatpush.xpose.msra.mxu0 %v1358
  %1376 = vmatmul.f32.gmra.mxu0 %v1356
  %v1377 = vpop.f32.mrf.mxu0
  %v1378 = vadd.f32 0.0, %v1377
  %1379 = vdwg.mxu0
  %v1380 = vsel %vm173, %v1378, -1e+30
  %v1381 = vsel %vm367, %v1380, -inf
  %1382 = vmax.xlane.f32.xlu0 %v1381
  %v1383 = vpop.xlane.xlu0 %1382
  %v1384 = vsub.f32 %v1380, %v1383
  %v1385 = vmul.f32 %v1384, 1.442695
  %v1386 = vpow.pop %v1385
  %v1387 = vsel %vm367, %v1386, 0.0
  %1388 = vadd.xlane.f32.xlu0 %v1387
  %v1389 = vpop.xlane.xlu0 %1388
  %v1390 = vrcp.pop %v1389
  %v1391 = vmul.f32 %v1386, %v1390
  %1392 = vrot.lane.b32.xlu0 %v1197, 56
  %v1393 = vpop.permute.xlu0 %1392
  %v1396 = vsel %vm367, %v1391, 0
  %1398 = vmatpush.msra.mxu0 0.0
  %1399 = vmatpush.msra.mxu0 0.0
  %1400 = vmatpush.msra.mxu0 0.0
  %1401 = vmatpush.msra.mxu0 0.0
  %1402 = vmatpush.msra.mxu0 0.0
  %1403 = vmatpush.msra.mxu0 0.0
  %1404 = vmatpush.msra.mxu0 0.0
  %1405 = vmatpush.msra.mxu0 0.0
  %1406 = vmatpush.msra.mxu0 0.0
  %1407 = vmatpush.msra.mxu0 0.0
  %1408 = vmatpush.msra.mxu0 0.0
  %1409 = vmatpush.msra.mxu0 0.0
  %1410 = vmatpush.msra.mxu0 0.0
  %1411 = vmatpush.msra.mxu0 0.0
  %1412 = vmatpush.msra.mxu0 0.0
  %1413 = vmatpush.msra.mxu0 %v1393
  %1414 = vmatmul.f32.gmra.mxu0 %v1396
  %v1415 = vpop.f32.mrf.mxu0
  %v1416 = vadd.f32 0.0, %v1415
  %1417 = vdwg.mxu0
  %1418 = vrot.lane.b32.xlu0 %v1237, 112
  %v1419 = vpop.permute.xlu0 %1418
  %1420 = vrot.lane.b32.xlu0 %v1284, 80
  %v1421 = vpop.permute.xlu0 %1420
  %v1422 = vsel %vm367, %v1419, 0
  %v1424 = vsel %vm367, %v1421, 0
  %1426 = vmatpush.xpose.msra.mxu0 0.0
  %1427 = vmatpush.xpose.msra.mxu0 0.0
  %1428 = vmatpush.xpose.msra.mxu0 0.0
  %1429 = vmatpush.xpose.msra.mxu0 0.0
  %1430 = vmatpush.xpose.msra.mxu0 0.0
  %1431 = vmatpush.xpose.msra.mxu0 0.0
  %1432 = vmatpush.xpose.msra.mxu0 0.0
  %1433 = vmatpush.xpose.msra.mxu0 0.0
  %1434 = vmatpush.xpose.msra.mxu0 0.0
  %1435 = vmatpush.xpose.msra.mxu0 0.0
  %1436 = vmatpush.xpose.msra.mxu0 0.0
  %1437 = vmatpush.xpose.msra.mxu0 0.0
  %1438 = vmatpush.xpose.msra.mxu0 0.0
  %1439 = vmatpush.xpose.msra.mxu0 0.0
  %1440 = vmatpush.xpose.msra.mxu0 0.0
  %1441 = vmatpush.xpose.msra.mxu0 %v1424
  %1442 = vmatmul.f32.gmra.mxu0 %v1422
  %v1443 = vpop.f32.mrf.mxu0
  %v1444 = vadd.f32 0.0, %v1443
  %1445 = vdwg.mxu0
  %v1446 = vsel %vm173, %v1444, -1e+30
  %v1447 = vsel %vm367, %v1446, -inf
  %1448 = vmax.xlane.f32.xlu0 %v1447
  %v1449 = vpop.xlane.xlu0 %1448
  %v1450 = vsub.f32 %v1446, %v1449
  %v1451 = vmul.f32 %v1450, 1.442695
  %v1452 = vpow.pop %v1451
  %v1453 = vsel %vm367, %v1452, 0.0
  %1454 = vadd.xlane.f32.xlu0 %v1453
  %v1455 = vpop.xlane.xlu0 %1454
  %v1456 = vrcp.pop %v1455
  %v1457 = vmul.f32 %v1452, %v1456
  %1458 = vrot.lane.b32.xlu0 %v1197, 48
  %v1459 = vpop.permute.xlu0 %1458
  %v1462 = vsel %vm367, %v1457, 0
  %1464 = vmatpush.msra.mxu0 0.0
  %1465 = vmatpush.msra.mxu0 0.0
  %1466 = vmatpush.msra.mxu0 0.0
  %1467 = vmatpush.msra.mxu0 0.0
  %1468 = vmatpush.msra.mxu0 0.0
  %1469 = vmatpush.msra.mxu0 0.0
  %1470 = vmatpush.msra.mxu0 0.0
  %1471 = vmatpush.msra.mxu0 0.0
  %1472 = vmatpush.msra.mxu0 0.0
  %1473 = vmatpush.msra.mxu0 0.0
  %1474 = vmatpush.msra.mxu0 0.0
  %1475 = vmatpush.msra.mxu0 0.0
  %1476 = vmatpush.msra.mxu0 0.0
  %1477 = vmatpush.msra.mxu0 0.0
  %1478 = vmatpush.msra.mxu0 0.0
  %1479 = vmatpush.msra.mxu0 %v1459
  %1480 = vmatmul.f32.gmra.mxu0 %v1462
  %v1481 = vpop.f32.mrf.mxu0
  %v1482 = vadd.f32 0.0, %v1481
  %1483 = vdwg.mxu0
  %1484 = vrot.lane.b32.xlu0 %v1237, 104
  %v1485 = vpop.permute.xlu0 %1484
  %1486 = vrot.lane.b32.xlu0 %v1284, 72
  %v1487 = vpop.permute.xlu0 %1486
  %v1488 = vsel %vm367, %v1485, 0
  %v1490 = vsel %vm367, %v1487, 0
  %1492 = vmatpush.xpose.msra.mxu0 0.0
  %1493 = vmatpush.xpose.msra.mxu0 0.0
  %1494 = vmatpush.xpose.msra.mxu0 0.0
  %1495 = vmatpush.xpose.msra.mxu0 0.0
  %1496 = vmatpush.xpose.msra.mxu0 0.0
  %1497 = vmatpush.xpose.msra.mxu0 0.0
  %1498 = vmatpush.xpose.msra.mxu0 0.0
  %1499 = vmatpush.xpose.msra.mxu0 0.0
  %1500 = vmatpush.xpose.msra.mxu0 0.0
  %1501 = vmatpush.xpose.msra.mxu0 0.0
  %1502 = vmatpush.xpose.msra.mxu0 0.0
  %1503 = vmatpush.xpose.msra.mxu0 0.0
  %1504 = vmatpush.xpose.msra.mxu0 0.0
  %1505 = vmatpush.xpose.msra.mxu0 0.0
  %1506 = vmatpush.xpose.msra.mxu0 0.0
  %1507 = vmatpush.xpose.msra.mxu0 %v1490
  %1508 = vmatmul.f32.gmra.mxu0 %v1488
  %v1509 = vpop.f32.mrf.mxu0
  %v1510 = vadd.f32 0.0, %v1509
  %1511 = vdwg.mxu0
  %v1512 = vsel %vm173, %v1510, -1e+30
  %v1513 = vsel %vm367, %v1512, -inf
  %1514 = vmax.xlane.f32.xlu0 %v1513
  %v1515 = vpop.xlane.xlu0 %1514
  %v1516 = vsub.f32 %v1512, %v1515
  %v1517 = vmul.f32 %v1516, 1.442695
  %v1518 = vpow.pop %v1517
  %v1519 = vsel %vm367, %v1518, 0.0
  %1520 = vadd.xlane.f32.xlu0 %v1519
  %v1521 = vpop.xlane.xlu0 %1520
  %v1522 = vrcp.pop %v1521
  %v1523 = vmul.f32 %v1518, %v1522
  %1524 = vrot.lane.b32.xlu0 %v1197, 40
  %v1525 = vpop.permute.xlu0 %1524
  %v1528 = vsel %vm367, %v1523, 0
  %1530 = vmatpush.msra.mxu0 0.0
  %1531 = vmatpush.msra.mxu0 0.0
  %1532 = vmatpush.msra.mxu0 0.0
  %1533 = vmatpush.msra.mxu0 0.0
  %1534 = vmatpush.msra.mxu0 0.0
  %1535 = vmatpush.msra.mxu0 0.0
  %1536 = vmatpush.msra.mxu0 0.0
  %1537 = vmatpush.msra.mxu0 0.0
  %1538 = vmatpush.msra.mxu0 0.0
  %1539 = vmatpush.msra.mxu0 0.0
  %1540 = vmatpush.msra.mxu0 0.0
  %1541 = vmatpush.msra.mxu0 0.0
  %1542 = vmatpush.msra.mxu0 0.0
  %1543 = vmatpush.msra.mxu0 0.0
  %1544 = vmatpush.msra.mxu0 0.0
  %1545 = vmatpush.msra.mxu0 %v1525
  %1546 = vmatmul.f32.gmra.mxu0 %v1528
  %v1547 = vpop.f32.mrf.mxu0
  %v1548 = vadd.f32 0.0, %v1547
  %1549 = vdwg.mxu0
  %1551 = vrot.lane.b32.xlu0 %v1416, 8
  %v1552 = vpop.permute.xlu0 %1551
  %1555 = vrot.lane.b32.xlu0 %v1482, 16
  %v1556 = vpop.permute.xlu0 %1555
  %1559 = vrot.lane.b32.xlu0 %v1548, 24
  %v1560 = vpop.permute.xlu0 %1559
  %v1562 = vsel %vm367, %v1350, %v1552
  %v1563 = vsel %vm642, %v1562, %v1556
  %v1564 = vsel %vm644, %v1563, %v1560
  %1566 = vrot.lane.b32.xlu0 %v1285, 96
  %v1567 = vpop.permute.xlu0 %1566
  %v1569 = vsel %vm367, %v1238, 0
  %v1571 = vsel %vm367, %v1567, 0
  %1573 = vmatpush.xpose.msra.mxu0 0.0
  %1574 = vmatpush.xpose.msra.mxu0 0.0
  %1575 = vmatpush.xpose.msra.mxu0 0.0
  %1576 = vmatpush.xpose.msra.mxu0 0.0
  %1577 = vmatpush.xpose.msra.mxu0 0.0
  %1578 = vmatpush.xpose.msra.mxu0 0.0
  %1579 = vmatpush.xpose.msra.mxu0 0.0
  %1580 = vmatpush.xpose.msra.mxu0 0.0
  %1581 = vmatpush.xpose.msra.mxu0 0.0
  %1582 = vmatpush.xpose.msra.mxu0 0.0
  %1583 = vmatpush.xpose.msra.mxu0 0.0
  %1584 = vmatpush.xpose.msra.mxu0 0.0
  %1585 = vmatpush.xpose.msra.mxu0 0.0
  %1586 = vmatpush.xpose.msra.mxu0 0.0
  %1587 = vmatpush.xpose.msra.mxu0 0.0
  %1588 = vmatpush.xpose.msra.mxu0 %v1571
  %1589 = vmatmul.f32.gmra.mxu0 %v1569
  %v1590 = vpop.f32.mrf.mxu0
  %v1591 = vadd.f32 0.0, %v1590
  %1592 = vdwg.mxu0
  %v1593 = vsel %vm173, %v1591, -1e+30
  %v1594 = vsel %vm367, %v1593, -inf
  %1595 = vmax.xlane.f32.xlu0 %v1594
  %v1596 = vpop.xlane.xlu0 %1595
  %v1597 = vsub.f32 %v1593, %v1596
  %v1598 = vmul.f32 %v1597, 1.442695
  %v1599 = vpow.pop %v1598
  %v1600 = vsel %vm367, %v1599, 0.0
  %1601 = vadd.xlane.f32.xlu0 %v1600
  %v1602 = vpop.xlane.xlu0 %1601
  %v1603 = vrcp.pop %v1602
  %v1604 = vmul.f32 %v1599, %v1603
  %1605 = vrot.lane.b32.xlu0 %v1200, 64
  %v1606 = vpop.permute.xlu0 %1605
  %v1609 = vsel %vm367, %v1604, 0
  %1611 = vmatpush.msra.mxu0 0.0
  %1612 = vmatpush.msra.mxu0 0.0
  %1613 = vmatpush.msra.mxu0 0.0
  %1614 = vmatpush.msra.mxu0 0.0
  %1615 = vmatpush.msra.mxu0 0.0
  %1616 = vmatpush.msra.mxu0 0.0
  %1617 = vmatpush.msra.mxu0 0.0
  %1618 = vmatpush.msra.mxu0 0.0
  %1619 = vmatpush.msra.mxu0 0.0
  %1620 = vmatpush.msra.mxu0 0.0
  %1621 = vmatpush.msra.mxu0 0.0
  %1622 = vmatpush.msra.mxu0 0.0
  %1623 = vmatpush.msra.mxu0 0.0
  %1624 = vmatpush.msra.mxu0 0.0
  %1625 = vmatpush.msra.mxu0 0.0
  %1626 = vmatpush.msra.mxu0 %v1606
  %1627 = vmatmul.f32.gmra.mxu0 %v1609
  %v1628 = vpop.f32.mrf.mxu0
  %v1629 = vadd.f32 0.0, %v1628
  %1630 = vdwg.mxu0
  %1631 = vrot.lane.b32.xlu0 %v1238, 120
  %v1632 = vpop.permute.xlu0 %1631
  %1633 = vrot.lane.b32.xlu0 %v1285, 88
  %v1634 = vpop.permute.xlu0 %1633
  %v1635 = vsel %vm367, %v1632, 0
  %v1637 = vsel %vm367, %v1634, 0
  %1639 = vmatpush.xpose.msra.mxu0 0.0
  %1640 = vmatpush.xpose.msra.mxu0 0.0
  %1641 = vmatpush.xpose.msra.mxu0 0.0
  %1642 = vmatpush.xpose.msra.mxu0 0.0
  %1643 = vmatpush.xpose.msra.mxu0 0.0
  %1644 = vmatpush.xpose.msra.mxu0 0.0
  %1645 = vmatpush.xpose.msra.mxu0 0.0
  %1646 = vmatpush.xpose.msra.mxu0 0.0
  %1647 = vmatpush.xpose.msra.mxu0 0.0
  %1648 = vmatpush.xpose.msra.mxu0 0.0
  %1649 = vmatpush.xpose.msra.mxu0 0.0
  %1650 = vmatpush.xpose.msra.mxu0 0.0
  %1651 = vmatpush.xpose.msra.mxu0 0.0
  %1652 = vmatpush.xpose.msra.mxu0 0.0
  %1653 = vmatpush.xpose.msra.mxu0 0.0
  %1654 = vmatpush.xpose.msra.mxu0 %v1637
  %1655 = vmatmul.f32.gmra.mxu0 %v1635
  %v1656 = vpop.f32.mrf.mxu0
  %v1657 = vadd.f32 0.0, %v1656
  %1658 = vdwg.mxu0
  %v1659 = vsel %vm173, %v1657, -1e+30
  %v1660 = vsel %vm367, %v1659, -inf
  %1661 = vmax.xlane.f32.xlu0 %v1660
  %v1662 = vpop.xlane.xlu0 %1661
  %v1663 = vsub.f32 %v1659, %v1662
  %v1664 = vmul.f32 %v1663, 1.442695
  %v1665 = vpow.pop %v1664
  %v1666 = vsel %vm367, %v1665, 0.0
  %1667 = vadd.xlane.f32.xlu0 %v1666
  %v1668 = vpop.xlane.xlu0 %1667
  %v1669 = vrcp.pop %v1668
  %v1670 = vmul.f32 %v1665, %v1669
  %1671 = vrot.lane.b32.xlu0 %v1200, 56
  %v1672 = vpop.permute.xlu0 %1671
  %v1675 = vsel %vm367, %v1670, 0
  %1677 = vmatpush.msra.mxu0 0.0
  %1678 = vmatpush.msra.mxu0 0.0
  %1679 = vmatpush.msra.mxu0 0.0
  %1680 = vmatpush.msra.mxu0 0.0
  %1681 = vmatpush.msra.mxu0 0.0
  %1682 = vmatpush.msra.mxu0 0.0
  %1683 = vmatpush.msra.mxu0 0.0
  %1684 = vmatpush.msra.mxu0 0.0
  %1685 = vmatpush.msra.mxu0 0.0
  %1686 = vmatpush.msra.mxu0 0.0
  %1687 = vmatpush.msra.mxu0 0.0
  %1688 = vmatpush.msra.mxu0 0.0
  %1689 = vmatpush.msra.mxu0 0.0
  %1690 = vmatpush.msra.mxu0 0.0
  %1691 = vmatpush.msra.mxu0 0.0
  %1692 = vmatpush.msra.mxu0 %v1672
  %1693 = vmatmul.f32.gmra.mxu0 %v1675
  %v1694 = vpop.f32.mrf.mxu0
  %v1695 = vadd.f32 0.0, %v1694
  %1696 = vdwg.mxu0
  %1697 = vrot.lane.b32.xlu0 %v1238, 112
  %v1698 = vpop.permute.xlu0 %1697
  %1699 = vrot.lane.b32.xlu0 %v1285, 80
  %v1700 = vpop.permute.xlu0 %1699
  %v1701 = vsel %vm367, %v1698, 0
  %v1703 = vsel %vm367, %v1700, 0
  %1705 = vmatpush.xpose.msra.mxu0 0.0
  %1706 = vmatpush.xpose.msra.mxu0 0.0
  %1707 = vmatpush.xpose.msra.mxu0 0.0
  %1708 = vmatpush.xpose.msra.mxu0 0.0
  %1709 = vmatpush.xpose.msra.mxu0 0.0
  %1710 = vmatpush.xpose.msra.mxu0 0.0
  %1711 = vmatpush.xpose.msra.mxu0 0.0
  %1712 = vmatpush.xpose.msra.mxu0 0.0
  %1713 = vmatpush.xpose.msra.mxu0 0.0
  %1714 = vmatpush.xpose.msra.mxu0 0.0
  %1715 = vmatpush.xpose.msra.mxu0 0.0
  %1716 = vmatpush.xpose.msra.mxu0 0.0
  %1717 = vmatpush.xpose.msra.mxu0 0.0
  %1718 = vmatpush.xpose.msra.mxu0 0.0
  %1719 = vmatpush.xpose.msra.mxu0 0.0
  %1720 = vmatpush.xpose.msra.mxu0 %v1703
  %1721 = vmatmul.f32.gmra.mxu0 %v1701
  %v1722 = vpop.f32.mrf.mxu0
  %v1723 = vadd.f32 0.0, %v1722
  %1724 = vdwg.mxu0
  %v1725 = vsel %vm173, %v1723, -1e+30
  %v1726 = vsel %vm367, %v1725, -inf
  %1727 = vmax.xlane.f32.xlu0 %v1726
  %v1728 = vpop.xlane.xlu0 %1727
  %v1729 = vsub.f32 %v1725, %v1728
  %v1730 = vmul.f32 %v1729, 1.442695
  %v1731 = vpow.pop %v1730
  %v1732 = vsel %vm367, %v1731, 0.0
  %1733 = vadd.xlane.f32.xlu0 %v1732
  %v1734 = vpop.xlane.xlu0 %1733
  %v1735 = vrcp.pop %v1734
  %v1736 = vmul.f32 %v1731, %v1735
  %1737 = vrot.lane.b32.xlu0 %v1200, 48
  %v1738 = vpop.permute.xlu0 %1737
  %v1741 = vsel %vm367, %v1736, 0
  %1743 = vmatpush.msra.mxu0 0.0
  %1744 = vmatpush.msra.mxu0 0.0
  %1745 = vmatpush.msra.mxu0 0.0
  %1746 = vmatpush.msra.mxu0 0.0
  %1747 = vmatpush.msra.mxu0 0.0
  %1748 = vmatpush.msra.mxu0 0.0
  %1749 = vmatpush.msra.mxu0 0.0
  %1750 = vmatpush.msra.mxu0 0.0
  %1751 = vmatpush.msra.mxu0 0.0
  %1752 = vmatpush.msra.mxu0 0.0
  %1753 = vmatpush.msra.mxu0 0.0
  %1754 = vmatpush.msra.mxu0 0.0
  %1755 = vmatpush.msra.mxu0 0.0
  %1756 = vmatpush.msra.mxu0 0.0
  %1757 = vmatpush.msra.mxu0 0.0
  %1758 = vmatpush.msra.mxu0 %v1738
  %1759 = vmatmul.f32.gmra.mxu0 %v1741
  %v1760 = vpop.f32.mrf.mxu0
  %v1761 = vadd.f32 0.0, %v1760
  %1762 = vdwg.mxu0
  %1763 = vrot.lane.b32.xlu0 %v1238, 104
  %v1764 = vpop.permute.xlu0 %1763
  %1765 = vrot.lane.b32.xlu0 %v1285, 72
  %v1766 = vpop.permute.xlu0 %1765
  %v1767 = vsel %vm367, %v1764, 0
  %v1769 = vsel %vm367, %v1766, 0
  %1771 = vmatpush.xpose.msra.mxu0 0.0
  %1772 = vmatpush.xpose.msra.mxu0 0.0
  %1773 = vmatpush.xpose.msra.mxu0 0.0
  %1774 = vmatpush.xpose.msra.mxu0 0.0
  %1775 = vmatpush.xpose.msra.mxu0 0.0
  %1776 = vmatpush.xpose.msra.mxu0 0.0
  %1777 = vmatpush.xpose.msra.mxu0 0.0
  %1778 = vmatpush.xpose.msra.mxu0 0.0
  %1779 = vmatpush.xpose.msra.mxu0 0.0
  %1780 = vmatpush.xpose.msra.mxu0 0.0
  %1781 = vmatpush.xpose.msra.mxu0 0.0
  %1782 = vmatpush.xpose.msra.mxu0 0.0
  %1783 = vmatpush.xpose.msra.mxu0 0.0
  %1784 = vmatpush.xpose.msra.mxu0 0.0
  %1785 = vmatpush.xpose.msra.mxu0 0.0
  %1786 = vmatpush.xpose.msra.mxu0 %v1769
  %1787 = vmatmul.f32.gmra.mxu0 %v1767
  %v1788 = vpop.f32.mrf.mxu0
  %v1789 = vadd.f32 0.0, %v1788
  %1790 = vdwg.mxu0
  %v1791 = vsel %vm173, %v1789, -1e+30
  %v1792 = vsel %vm367, %v1791, -inf
  %1793 = vmax.xlane.f32.xlu0 %v1792
  %v1794 = vpop.xlane.xlu0 %1793
  %v1795 = vsub.f32 %v1791, %v1794
  %v1796 = vmul.f32 %v1795, 1.442695
  %v1797 = vpow.pop %v1796
  %v1798 = vsel %vm367, %v1797, 0.0
  %1799 = vadd.xlane.f32.xlu0 %v1798
  %v1800 = vpop.xlane.xlu0 %1799
  %v1801 = vrcp.pop %v1800
  %v1802 = vmul.f32 %v1797, %v1801
  %1803 = vrot.lane.b32.xlu0 %v1200, 40
  %v1804 = vpop.permute.xlu0 %1803
  %v1807 = vsel %vm367, %v1802, 0
  %1809 = vmatpush.msra.mxu0 0.0
  %1810 = vmatpush.msra.mxu0 0.0
  %1811 = vmatpush.msra.mxu0 0.0
  %1812 = vmatpush.msra.mxu0 0.0
  %1813 = vmatpush.msra.mxu0 0.0
  %1814 = vmatpush.msra.mxu0 0.0
  %1815 = vmatpush.msra.mxu0 0.0
  %1816 = vmatpush.msra.mxu0 0.0
  %1817 = vmatpush.msra.mxu0 0.0
  %1818 = vmatpush.msra.mxu0 0.0
  %1819 = vmatpush.msra.mxu0 0.0
  %1820 = vmatpush.msra.mxu0 0.0
  %1821 = vmatpush.msra.mxu0 0.0
  %1822 = vmatpush.msra.mxu0 0.0
  %1823 = vmatpush.msra.mxu0 0.0
  %1824 = vmatpush.msra.mxu0 %v1804
  %1825 = vmatmul.f32.gmra.mxu0 %v1807
  %v1826 = vpop.f32.mrf.mxu0
  %v1827 = vadd.f32 0.0, %v1826
  %1828 = vdwg.mxu0
  %1830 = vrot.lane.b32.xlu0 %v1695, 8
  %v1831 = vpop.permute.xlu0 %1830
  %1834 = vrot.lane.b32.xlu0 %v1761, 16
  %v1835 = vpop.permute.xlu0 %1834
  %1838 = vrot.lane.b32.xlu0 %v1827, 24
  %v1839 = vpop.permute.xlu0 %1838
  %v1841 = vsel %vm367, %v1629, %v1831
  %v1842 = vsel %vm642, %v1841, %v1835
  %v1843 = vsel %vm644, %v1842, %v1839
  %v1845 = vsel %vm198, %v1564, 0
  %v1848 = vsel %vm198, %v1843, 0
  %1850 = vmatpush.msra.mxu0 0.0
  %1851 = vmatpush.msra.mxu0 0.0
  %1852 = vmatpush.msra.mxu0 0.0
  %1853 = vmatpush.msra.mxu0 0.0
  %1854 = vmatpush.msra.mxu0 0.0
  %1855 = vmatpush.msra.mxu0 0.0
  %1856 = vmatpush.msra.mxu0 0.0
  %1857 = vmatpush.msra.mxu0 0.0
  %1858 = vmatpush.msra.mxu0 0.0
  %1859 = vmatpush.msra.mxu0 0.0
  %1860 = vmatpush.msra.mxu0 0.0
  %1861 = vmatpush.msra.mxu0 0.0
  %1862 = vmatpush.msra.mxu0 %v1115
  %1863 = vmatpush.msra.mxu0 %v1114
  %1864 = vmatpush.msra.mxu0 %v1113
  %1865 = vmatpush.msra.mxu0 %v1112
  %1866 = vmatmul.f32.gmra.mxu0 %v1845
  %v1867 = vpop.f32.mrf.mxu0
  %v1868 = vadd.f32 0.0, %v1867
  %1869 = vmatmul.f32.gmra.mxu0 %v1848
  %v1870 = vpop.f32.mrf.mxu0
  %v1871 = vadd.f32 0.0, %v1870
  %1872 = vdwg.mxu0
  %v1873 = vadd.f32 %v1104, %v1868
  %v1874 = vadd.f32 %v1105, %v1871
  %v1875 = vmul.f32 %v1873, %v1873
  %v1876 = vmul.f32 %v1874, %v1874
  %v1877 = vsel %vm198, %v1875, 0.0
  %1878 = vadd.xlane.f32.xlu0 %v1877
  %v1879 = vpop.xlane.xlu0 %1878
  %v1880 = vsel %vm198, %v1876, 0.0
  %1881 = vadd.xlane.f32.xlu0 %v1880
  %v1882 = vpop.xlane.xlu0 %1881
  %v1883 = vmul.f32 %v1879, %v211
  %v1884 = vmul.f32 %v1882, %v211
  %v1885 = vadd.f32 %v1883, 1e-06
  %v1886 = vadd.f32 %v1884, 1e-06
  %v1887 = vrsqrt.pop %v1885
  %v1888 = vmul.f32 %v1887, %v1885
  %v1889 = vmul.f32 %v1888, %v1887
  %v1890 = vmul.f32 0.5, %v1889
  %v1891 = vsub.f32 1.5, %v1890
  %v1892 = vmul.f32 %v1887, %v1891
  %vm1893 = vweird.f32 %v1885
  %vm1894 = vweird.f32 %v1887
  %vm1895 = vmor %vm1893, %vm1894
  %v1896 = vsel %vm1895, %v1887, %v1892
  %v1897 = vrsqrt.pop %v1886
  %v1898 = vmul.f32 %v1897, %v1886
  %v1899 = vmul.f32 %v1898, %v1897
  %v1900 = vmul.f32 0.5, %v1899
  %v1901 = vsub.f32 1.5, %v1900
  %v1902 = vmul.f32 %v1897, %v1901
  %vm1903 = vweird.f32 %v1886
  %vm1904 = vweird.f32 %v1897
  %vm1905 = vmor %vm1903, %vm1904
  %v1906 = vsel %vm1905, %v1897, %v1902
  %v1907 = vmul.f32 %v1873, %v1896
  %v1908 = vmul.f32 %v1874, %v1906
  %v1910 = vperm.slane %v1133, 0
  %v1912 = vmul.f32 %v1907, %v1910
  %v1913 = vmul.f32 %v1908, %v1910
  %v1915 = vsel %vm198, %v1912, 0
  %v1918 = vsel %vm198, %v1913, 0
  %1920 = vmatpush.msra.mxu0 0.0
  %1921 = vmatpush.msra.mxu0 0.0
  %1922 = vmatpush.msra.mxu0 0.0
  %1923 = vmatpush.msra.mxu0 0.0
  %1924 = vmatpush.msra.mxu0 0.0
  %1925 = vmatpush.msra.mxu0 0.0
  %1926 = vmatpush.msra.mxu0 0.0
  %1927 = vmatpush.msra.mxu0 0.0
  %1928 = vmatpush.msra.mxu0 0.0
  %1929 = vmatpush.msra.mxu0 0.0
  %1930 = vmatpush.msra.mxu0 0.0
  %1931 = vmatpush.msra.mxu0 0.0
  %1932 = vmatpush.msra.mxu0 %v1120
  %1933 = vmatpush.msra.mxu0 %v1119
  %1934 = vmatpush.msra.mxu0 %v1118
  %1935 = vmatpush.msra.mxu0 %v1117
  %1936 = vmatmul.f32.gmra.mxu0 %v1915
  %v1937 = vpop.f32.mrf.mxu0
  %v1938 = vadd.f32 0.0, %v1937
  %1939 = vmatmul.f32.gmra.mxu0 %v1918
  %v1940 = vpop.f32.mrf.mxu0
  %v1941 = vadd.f32 0.0, %v1940
  %1942 = vdwg.mxu0
  %v1943 = vxor.u32 %v1938, 2147483648
  %v1944 = vxor.u32 %v1941, 2147483648
  %v1945 = vmul.f32 %v1943, 1.442695
  %v1946 = vpow.pop %v1945
  %v1947 = vmul.f32 %v1944, 1.442695
  %v1948 = vpow.pop %v1947
  %v1949 = vadd.f32 %v1946, 1.0
  %v1950 = vadd.f32 %v1948, 1.0
  %v1951 = vrcp.pop %v1949
  %v1952 = vmul.f32 %v1949, %v1951
  %v1953 = vsub.f32 1.0, %v1952
  %v1954 = vmul.f32 %v1951, %v1953
  %v1955 = vadd.f32 %v1951, %v1954
  %vm1956 = vweird.f32 %v1949
  %vm1957 = vweird.f32 %v1951
  %vm1958 = vmor %vm1956, %vm1957
  %v1959 = vsel %vm1958, %v1951, %v1955
  %v1960 = vand.u32 2147483647, %v1949
  %vm1961 = vcmp.eq.f32.partialorder %v1960, 8.507059e+37
  %v1962 = vand.u32 %v1949, 2147483648
  %v1963 = vor.u32 1.1754944e-38, %v1962
  %v1964 = vsel %vm1961, %v1963, %v1959
  %v1965 = vmul.f32 1.0, %v1964
  %v1966 = vrcp.pop %v1950
  %v1967 = vmul.f32 %v1950, %v1966
  %v1968 = vsub.f32 1.0, %v1967
  %v1969 = vmul.f32 %v1966, %v1968
  %v1970 = vadd.f32 %v1966, %v1969
  %vm1971 = vweird.f32 %v1950
  %vm1972 = vweird.f32 %v1966
  %vm1973 = vmor %vm1971, %vm1972
  %v1974 = vsel %vm1973, %v1966, %v1970
  %v1975 = vand.u32 2147483647, %v1950
  %vm1976 = vcmp.eq.f32.partialorder %v1975, 8.507059e+37
  %v1977 = vand.u32 %v1950, 2147483648
  %v1978 = vor.u32 1.1754944e-38, %v1977
  %v1979 = vsel %vm1976, %v1978, %v1974
  %v1980 = vmul.f32 1.0, %v1979
  %v1981 = vmul.f32 %v1938, %v1965
  %v1982 = vmul.f32 %v1941, %v1980
  %1985 = vrot.lane.b32.xlu0 %v1938, 64
  %v1986 = vpop.permute.xlu0 %1985
  %1987 = vrot.lane.b32.xlu0 %v1941, 64
  %v1988 = vpop.permute.xlu0 %1987
  %v1991 = vmul.f32 %v1981, %v1986
  %v1992 = vmul.f32 %v1982, %v1988
  %v1994 = vsel %vm1074, %v1991, 0
  %v1997 = vsel %vm1074, %v1992, 0
  %1999 = vmatpush.msra.mxu0 0.0
  %2000 = vmatpush.msra.mxu0 0.0
  %2001 = vmatpush.msra.mxu0 0.0
  %2002 = vmatpush.msra.mxu0 0.0
  %2003 = vmatpush.msra.mxu0 0.0
  %2004 = vmatpush.msra.mxu0 0.0
  %2005 = vmatpush.msra.mxu0 0.0
  %2006 = vmatpush.msra.mxu0 0.0
  %2007 = vmatpush.msra.mxu0 %v1129
  %2008 = vmatpush.msra.mxu0 %v1128
  %2009 = vmatpush.msra.mxu0 %v1127
  %2010 = vmatpush.msra.mxu0 %v1126
  %2011 = vmatpush.msra.mxu0 %v1125
  %2012 = vmatpush.msra.mxu0 %v1124
  %2013 = vmatpush.msra.mxu0 %v1123
  %2014 = vmatpush.msra.mxu0 %v1122
  %2015 = vmatmul.f32.gmra.mxu0 %v1994
  %v2016 = vpop.f32.mrf.mxu0
  %v2017 = vadd.f32 0.0, %v2016
  %2018 = vmatmul.f32.gmra.mxu0 %v1997
  %v2019 = vpop.f32.mrf.mxu0
  %v2020 = vadd.f32 0.0, %v2019
  %2021 = vdwg.mxu0
  %v2022 = vadd.f32 %v1873, %v2017
  %v2023 = vadd.f32 %v1874, %v2020
  %v2024 = vld [vmem:[%s8] sm:$0xff]
  %v2025 = vld [vmem:[%s8 + $0x8] sm:$0xff]
  %v2026 = vld [vmem:[%s8 + $0x10] sm:$0xff]
  %v2027 = vld [vmem:[%s8 + $0x18] sm:$0xff]
  %v2028 = vld [vmem:[%s9] sm:$0xff]
  %v2029 = vld [vmem:[%s9 + $0x8] sm:$0xff]
  %v2030 = vld [vmem:[%s9 + $0x10] sm:$0xff]
  %v2031 = vld [vmem:[%s9 + $0x18] sm:$0xff]
  %v2032 = vld [vmem:[%s10] sm:$0xff]
  %v2033 = vld [vmem:[%s10 + $0x8] sm:$0xff]
  %v2034 = vld [vmem:[%s10 + $0x10] sm:$0xff]
  %v2035 = vld [vmem:[%s10 + $0x18] sm:$0xff]
  %v2036 = vld [vmem:[%s11] sm:$0xff]
  %v2037 = vld [vmem:[%s11 + $0x8] sm:$0xff]
  %v2038 = vld [vmem:[%s11 + $0x10] sm:$0xff]
  %v2039 = vld [vmem:[%s11 + $0x18] sm:$0xff]
  %v2040 = vld [vmem:[%s11 + $0x20] sm:$0xff]
  %v2041 = vld [vmem:[%s11 + $0x28] sm:$0xff]
  %v2042 = vld [vmem:[%s11 + $0x30] sm:$0xff]
  %v2043 = vld [vmem:[%s11 + $0x38] sm:$0xff]
  %v2044 = vld [vmem:[%s12] sm:$0x1]
  %v2045 = vld [vmem:[%s13] sm:$0x1]
  %v2046 = vmul.f32 %v2022, %v2022
  %v2047 = vmul.f32 %v2023, %v2023
  %v2048 = vsel %vm198, %v2046, 0.0
  %2049 = vadd.xlane.f32.xlu0 %v2048
  %v2050 = vpop.xlane.xlu0 %2049
  %v2051 = vsel %vm198, %v2047, 0.0
  %2052 = vadd.xlane.f32.xlu0 %v2051
  %v2053 = vpop.xlane.xlu0 %2052
  %v2054 = vmul.f32 %v2050, %v211
  %v2055 = vmul.f32 %v2053, %v211
  %v2056 = vadd.f32 %v2054, 1e-06
  %v2057 = vadd.f32 %v2055, 1e-06
  %v2058 = vrsqrt.pop %v2056
  %v2059 = vmul.f32 %v2058, %v2056
  %v2060 = vmul.f32 %v2059, %v2058
  %v2061 = vmul.f32 0.5, %v2060
  %v2062 = vsub.f32 1.5, %v2061
  %v2063 = vmul.f32 %v2058, %v2062
  %vm2064 = vweird.f32 %v2056
  %vm2065 = vweird.f32 %v2058
  %vm2066 = vmor %vm2064, %vm2065
  %v2067 = vsel %vm2066, %v2058, %v2063
  %v2068 = vrsqrt.pop %v2057
  %v2069 = vmul.f32 %v2068, %v2057
  %v2070 = vmul.f32 %v2069, %v2068
  %v2071 = vmul.f32 0.5, %v2070
  %v2072 = vsub.f32 1.5, %v2071
  %v2073 = vmul.f32 %v2068, %v2072
  %vm2074 = vweird.f32 %v2057
  %vm2075 = vweird.f32 %v2068
  %vm2076 = vmor %vm2074, %vm2075
  %v2077 = vsel %vm2076, %v2068, %v2073
  %v2078 = vmul.f32 %v2022, %v2067
  %v2079 = vmul.f32 %v2023, %v2077
  %v2081 = vperm.slane %v2044, 0
  %v2083 = vmul.f32 %v2078, %v2081
  %v2084 = vmul.f32 %v2079, %v2081
  %v2086 = vsel %vm198, %v2083, 0
  %v2089 = vsel %vm198, %v2084, 0
  %2091 = vmatpush.msra.mxu0 0.0
  %2092 = vmatpush.msra.mxu0 0.0
  %2093 = vmatpush.msra.mxu0 0.0
  %2094 = vmatpush.msra.mxu0 0.0
  %2095 = vmatpush.msra.mxu0 0.0
  %2096 = vmatpush.msra.mxu0 0.0
  %2097 = vmatpush.msra.mxu0 0.0
  %2098 = vmatpush.msra.mxu0 0.0
  %2099 = vmatpush.msra.mxu0 0.0
  %2100 = vmatpush.msra.mxu0 0.0
  %2101 = vmatpush.msra.mxu0 0.0
  %2102 = vmatpush.msra.mxu0 0.0
  %2103 = vmatpush.msra.mxu0 %v2027
  %2104 = vmatpush.msra.mxu0 %v2026
  %2105 = vmatpush.msra.mxu0 %v2025
  %2106 = vmatpush.msra.mxu0 %v2024
  %2107 = vmatmul.f32.gmra.mxu0 %v2086
  %v2108 = vpop.f32.mrf.mxu0
  %v2109 = vadd.f32 0.0, %v2108
  %2110 = vmatmul.f32.gmra.mxu0 %v2089
  %v2111 = vpop.f32.mrf.mxu0
  %v2112 = vadd.f32 0.0, %v2111
  %2113 = vdwg.mxu0
  %v2114 = vmul.f32 %v2109, 0.35355338
  %v2115 = vmul.f32 %v2112, 0.35355338
  %v2116 = vmul.f32 %v2114, %v163
  %v2117 = vmul.f32 %v2115, %v164
  %v2119 = vsel %vm198, %v2114, 0
  %v2122 = vsel %vm198, %v2115, 0
  %2124 = vmatpush.msra.mxu0 0.0
  %2125 = vmatpush.msra.mxu0 0.0
  %2126 = vmatpush.msra.mxu0 0.0
  %2127 = vmatpush.msra.mxu0 0.0
  %2128 = vmatpush.msra.mxu0 0.0
  %2129 = vmatpush.msra.mxu0 0.0
  %2130 = vmatpush.msra.mxu0 0.0
  %2131 = vmatpush.msra.mxu0 0.0
  %2132 = vmatpush.msra.mxu0 0.0
  %2133 = vmatpush.msra.mxu0 0.0
  %2134 = vmatpush.msra.mxu0 0.0
  %2135 = vmatpush.msra.mxu0 0.0
  %2136 = vmatpush.msra.mxu0 %v170
  %2137 = vmatpush.msra.mxu0 %v169
  %2138 = vmatpush.msra.mxu0 %v168
  %2139 = vmatpush.msra.mxu0 %v167
  %2140 = vmatmul.f32.gmra.mxu0 %v2119
  %v2141 = vpop.f32.mrf.mxu0
  %v2142 = vadd.f32 0.0, %v2141
  %2143 = vmatmul.f32.gmra.mxu0 %v2122
  %v2144 = vpop.f32.mrf.mxu0
  %v2145 = vadd.f32 0.0, %v2144
  %2146 = vdwg.mxu0
  %v2147 = vmul.f32 %v2142, %v165
  %v2148 = vmul.f32 %v2145, %v166
  %v2149 = vadd.f32 %v2116, %v2147
  %v2150 = vadd.f32 %v2117, %v2148
  %v2151 = vmul.f32 %v2109, %v312
  %v2152 = vmul.f32 %v2112, %v314
  %2155 = vrot.lane.b32.xlu0 %v2109, 96
  %v2156 = vpop.permute.xlu0 %2155
  %2157 = vrot.lane.b32.xlu0 %v2112, 96
  %v2158 = vpop.permute.xlu0 %2157
  %v2159 = vsel %vm198, %v2156, 0
  %v2161 = vsel %vm198, %v2158, 0
  %2163 = vmatpush.msra.mxu0 0.0
  %2164 = vmatpush.msra.mxu0 0.0
  %2165 = vmatpush.msra.mxu0 0.0
  %2166 = vmatpush.msra.mxu0 0.0
  %2167 = vmatpush.msra.mxu0 0.0
  %2168 = vmatpush.msra.mxu0 0.0
  %2169 = vmatpush.msra.mxu0 0.0
  %2170 = vmatpush.msra.mxu0 0.0
  %2171 = vmatpush.msra.mxu0 0.0
  %2172 = vmatpush.msra.mxu0 0.0
  %2173 = vmatpush.msra.mxu0 0.0
  %2174 = vmatpush.msra.mxu0 0.0
  %2175 = vmatpush.msra.mxu0 %v170
  %2176 = vmatpush.msra.mxu0 %v169
  %2177 = vmatpush.msra.mxu0 %v168
  %2178 = vmatpush.msra.mxu0 %v167
  %2179 = vmatmul.f32.gmra.mxu0 %v2159
  %v2180 = vpop.f32.mrf.mxu0
  %v2181 = vadd.f32 0.0, %v2180
  %2182 = vmatmul.f32.gmra.mxu0 %v2161
  %v2183 = vpop.f32.mrf.mxu0
  %v2184 = vadd.f32 0.0, %v2183
  %2185 = vdwg.mxu0
  %v2186 = vmul.f32 %v2181, %v165
  %v2187 = vmul.f32 %v2184, %v166
  %2190 = vrot.lane.b32.xlu0 %v2186, 32
  %v2191 = vpop.permute.xlu0 %2190
  %2192 = vrot.lane.b32.xlu0 %v2187, 32
  %v2193 = vpop.permute.xlu0 %2192
  %v2196 = vadd.f32 %v2151, %v2191
  %v2197 = vadd.f32 %v2152, %v2193
  %2199 = vrot.lane.b32.xlu0 %v2196, 96
  %v2200 = vpop.permute.xlu0 %2199
  %v2202 = vsel %vm367, %v2149, 0
  %v2204 = vsel %vm367, %v2200, 0
  %2206 = vmatpush.xpose.msra.mxu0 0.0
  %2207 = vmatpush.xpose.msra.mxu0 0.0
  %2208 = vmatpush.xpose.msra.mxu0 0.0
  %2209 = vmatpush.xpose.msra.mxu0 0.0
  %2210 = vmatpush.xpose.msra.mxu0 0.0
  %2211 = vmatpush.xpose.msra.mxu0 0.0
  %2212 = vmatpush.xpose.msra.mxu0 0.0
  %2213 = vmatpush.xpose.msra.mxu0 0.0
  %2214 = vmatpush.xpose.msra.mxu0 0.0
  %2215 = vmatpush.xpose.msra.mxu0 0.0
  %2216 = vmatpush.xpose.msra.mxu0 0.0
  %2217 = vmatpush.xpose.msra.mxu0 0.0
  %2218 = vmatpush.xpose.msra.mxu0 0.0
  %2219 = vmatpush.xpose.msra.mxu0 0.0
  %2220 = vmatpush.xpose.msra.mxu0 0.0
  %2221 = vmatpush.xpose.msra.mxu0 %v2204
  %2222 = vmatmul.f32.gmra.mxu0 %v2202
  %v2223 = vpop.f32.mrf.mxu0
  %v2224 = vadd.f32 0.0, %v2223
  %2225 = vdwg.mxu0
  %v2226 = vsel %vm173, %v2224, -1e+30
  %v2227 = vsel %vm367, %v2226, -inf
  %2228 = vmax.xlane.f32.xlu0 %v2227
  %v2229 = vpop.xlane.xlu0 %2228
  %v2230 = vsub.f32 %v2226, %v2229
  %v2231 = vmul.f32 %v2230, 1.442695
  %v2232 = vpow.pop %v2231
  %v2233 = vsel %vm367, %v2232, 0.0
  %2234 = vadd.xlane.f32.xlu0 %v2233
  %v2235 = vpop.xlane.xlu0 %2234
  %v2236 = vrcp.pop %v2235
  %v2237 = vmul.f32 %v2232, %v2236
  %2238 = vrot.lane.b32.xlu0 %v2109, 64
  %v2239 = vpop.permute.xlu0 %2238
  %v2242 = vsel %vm367, %v2237, 0
  %2244 = vmatpush.msra.mxu0 0.0
  %2245 = vmatpush.msra.mxu0 0.0
  %2246 = vmatpush.msra.mxu0 0.0
  %2247 = vmatpush.msra.mxu0 0.0
  %2248 = vmatpush.msra.mxu0 0.0
  %2249 = vmatpush.msra.mxu0 0.0
  %2250 = vmatpush.msra.mxu0 0.0
  %2251 = vmatpush.msra.mxu0 0.0
  %2252 = vmatpush.msra.mxu0 0.0
  %2253 = vmatpush.msra.mxu0 0.0
  %2254 = vmatpush.msra.mxu0 0.0
  %2255 = vmatpush.msra.mxu0 0.0
  %2256 = vmatpush.msra.mxu0 0.0
  %2257 = vmatpush.msra.mxu0 0.0
  %2258 = vmatpush.msra.mxu0 0.0
  %2259 = vmatpush.msra.mxu0 %v2239
  %2260 = vmatmul.f32.gmra.mxu0 %v2242
  %v2261 = vpop.f32.mrf.mxu0
  %v2262 = vadd.f32 0.0, %v2261
  %2263 = vdwg.mxu0
  %2264 = vrot.lane.b32.xlu0 %v2149, 120
  %v2265 = vpop.permute.xlu0 %2264
  %2266 = vrot.lane.b32.xlu0 %v2196, 88
  %v2267 = vpop.permute.xlu0 %2266
  %v2268 = vsel %vm367, %v2265, 0
  %v2270 = vsel %vm367, %v2267, 0
  %2272 = vmatpush.xpose.msra.mxu0 0.0
  %2273 = vmatpush.xpose.msra.mxu0 0.0
  %2274 = vmatpush.xpose.msra.mxu0 0.0
  %2275 = vmatpush.xpose.msra.mxu0 0.0
  %2276 = vmatpush.xpose.msra.mxu0 0.0
  %2277 = vmatpush.xpose.msra.mxu0 0.0
  %2278 = vmatpush.xpose.msra.mxu0 0.0
  %2279 = vmatpush.xpose.msra.mxu0 0.0
  %2280 = vmatpush.xpose.msra.mxu0 0.0
  %2281 = vmatpush.xpose.msra.mxu0 0.0
  %2282 = vmatpush.xpose.msra.mxu0 0.0
  %2283 = vmatpush.xpose.msra.mxu0 0.0
  %2284 = vmatpush.xpose.msra.mxu0 0.0
  %2285 = vmatpush.xpose.msra.mxu0 0.0
  %2286 = vmatpush.xpose.msra.mxu0 0.0
  %2287 = vmatpush.xpose.msra.mxu0 %v2270
  %2288 = vmatmul.f32.gmra.mxu0 %v2268
  %v2289 = vpop.f32.mrf.mxu0
  %v2290 = vadd.f32 0.0, %v2289
  %2291 = vdwg.mxu0
  %v2292 = vsel %vm173, %v2290, -1e+30
  %v2293 = vsel %vm367, %v2292, -inf
  %2294 = vmax.xlane.f32.xlu0 %v2293
  %v2295 = vpop.xlane.xlu0 %2294
  %v2296 = vsub.f32 %v2292, %v2295
  %v2297 = vmul.f32 %v2296, 1.442695
  %v2298 = vpow.pop %v2297
  %v2299 = vsel %vm367, %v2298, 0.0
  %2300 = vadd.xlane.f32.xlu0 %v2299
  %v2301 = vpop.xlane.xlu0 %2300
  %v2302 = vrcp.pop %v2301
  %v2303 = vmul.f32 %v2298, %v2302
  %2304 = vrot.lane.b32.xlu0 %v2109, 56
  %v2305 = vpop.permute.xlu0 %2304
  %v2308 = vsel %vm367, %v2303, 0
  %2310 = vmatpush.msra.mxu0 0.0
  %2311 = vmatpush.msra.mxu0 0.0
  %2312 = vmatpush.msra.mxu0 0.0
  %2313 = vmatpush.msra.mxu0 0.0
  %2314 = vmatpush.msra.mxu0 0.0
  %2315 = vmatpush.msra.mxu0 0.0
  %2316 = vmatpush.msra.mxu0 0.0
  %2317 = vmatpush.msra.mxu0 0.0
  %2318 = vmatpush.msra.mxu0 0.0
  %2319 = vmatpush.msra.mxu0 0.0
  %2320 = vmatpush.msra.mxu0 0.0
  %2321 = vmatpush.msra.mxu0 0.0
  %2322 = vmatpush.msra.mxu0 0.0
  %2323 = vmatpush.msra.mxu0 0.0
  %2324 = vmatpush.msra.mxu0 0.0
  %2325 = vmatpush.msra.mxu0 %v2305
  %2326 = vmatmul.f32.gmra.mxu0 %v2308
  %v2327 = vpop.f32.mrf.mxu0
  %v2328 = vadd.f32 0.0, %v2327
  %2329 = vdwg.mxu0
  %2330 = vrot.lane.b32.xlu0 %v2149, 112
  %v2331 = vpop.permute.xlu0 %2330
  %2332 = vrot.lane.b32.xlu0 %v2196, 80
  %v2333 = vpop.permute.xlu0 %2332
  %v2334 = vsel %vm367, %v2331, 0
  %v2336 = vsel %vm367, %v2333, 0
  %2338 = vmatpush.xpose.msra.mxu0 0.0
  %2339 = vmatpush.xpose.msra.mxu0 0.0
  %2340 = vmatpush.xpose.msra.mxu0 0.0
  %2341 = vmatpush.xpose.msra.mxu0 0.0
  %2342 = vmatpush.xpose.msra.mxu0 0.0
  %2343 = vmatpush.xpose.msra.mxu0 0.0
  %2344 = vmatpush.xpose.msra.mxu0 0.0
  %2345 = vmatpush.xpose.msra.mxu0 0.0
  %2346 = vmatpush.xpose.msra.mxu0 0.0
  %2347 = vmatpush.xpose.msra.mxu0 0.0
  %2348 = vmatpush.xpose.msra.mxu0 0.0
  %2349 = vmatpush.xpose.msra.mxu0 0.0
  %2350 = vmatpush.xpose.msra.mxu0 0.0
  %2351 = vmatpush.xpose.msra.mxu0 0.0
  %2352 = vmatpush.xpose.msra.mxu0 0.0
  %2353 = vmatpush.xpose.msra.mxu0 %v2336
  %2354 = vmatmul.f32.gmra.mxu0 %v2334
  %v2355 = vpop.f32.mrf.mxu0
  %v2356 = vadd.f32 0.0, %v2355
  %2357 = vdwg.mxu0
  %v2358 = vsel %vm173, %v2356, -1e+30
  %v2359 = vsel %vm367, %v2358, -inf
  %2360 = vmax.xlane.f32.xlu0 %v2359
  %v2361 = vpop.xlane.xlu0 %2360
  %v2362 = vsub.f32 %v2358, %v2361
  %v2363 = vmul.f32 %v2362, 1.442695
  %v2364 = vpow.pop %v2363
  %v2365 = vsel %vm367, %v2364, 0.0
  %2366 = vadd.xlane.f32.xlu0 %v2365
  %v2367 = vpop.xlane.xlu0 %2366
  %v2368 = vrcp.pop %v2367
  %v2369 = vmul.f32 %v2364, %v2368
  %2370 = vrot.lane.b32.xlu0 %v2109, 48
  %v2371 = vpop.permute.xlu0 %2370
  %v2374 = vsel %vm367, %v2369, 0
  %2376 = vmatpush.msra.mxu0 0.0
  %2377 = vmatpush.msra.mxu0 0.0
  %2378 = vmatpush.msra.mxu0 0.0
  %2379 = vmatpush.msra.mxu0 0.0
  %2380 = vmatpush.msra.mxu0 0.0
  %2381 = vmatpush.msra.mxu0 0.0
  %2382 = vmatpush.msra.mxu0 0.0
  %2383 = vmatpush.msra.mxu0 0.0
  %2384 = vmatpush.msra.mxu0 0.0
  %2385 = vmatpush.msra.mxu0 0.0
  %2386 = vmatpush.msra.mxu0 0.0
  %2387 = vmatpush.msra.mxu0 0.0
  %2388 = vmatpush.msra.mxu0 0.0
  %2389 = vmatpush.msra.mxu0 0.0
  %2390 = vmatpush.msra.mxu0 0.0
  %2391 = vmatpush.msra.mxu0 %v2371
  %2392 = vmatmul.f32.gmra.mxu0 %v2374
  %v2393 = vpop.f32.mrf.mxu0
  %v2394 = vadd.f32 0.0, %v2393
  %2395 = vdwg.mxu0
  %2396 = vrot.lane.b32.xlu0 %v2149, 104
  %v2397 = vpop.permute.xlu0 %2396
  %2398 = vrot.lane.b32.xlu0 %v2196, 72
  %v2399 = vpop.permute.xlu0 %2398
  %v2400 = vsel %vm367, %v2397, 0
  %v2402 = vsel %vm367, %v2399, 0
  %2404 = vmatpush.xpose.msra.mxu0 0.0
  %2405 = vmatpush.xpose.msra.mxu0 0.0
  %2406 = vmatpush.xpose.msra.mxu0 0.0
  %2407 = vmatpush.xpose.msra.mxu0 0.0
  %2408 = vmatpush.xpose.msra.mxu0 0.0
  %2409 = vmatpush.xpose.msra.mxu0 0.0
  %2410 = vmatpush.xpose.msra.mxu0 0.0
  %2411 = vmatpush.xpose.msra.mxu0 0.0
  %2412 = vmatpush.xpose.msra.mxu0 0.0
  %2413 = vmatpush.xpose.msra.mxu0 0.0
  %2414 = vmatpush.xpose.msra.mxu0 0.0
  %2415 = vmatpush.xpose.msra.mxu0 0.0
  %2416 = vmatpush.xpose.msra.mxu0 0.0
  %2417 = vmatpush.xpose.msra.mxu0 0.0
  %2418 = vmatpush.xpose.msra.mxu0 0.0
  %2419 = vmatpush.xpose.msra.mxu0 %v2402
  %2420 = vmatmul.f32.gmra.mxu0 %v2400
  %v2421 = vpop.f32.mrf.mxu0
  %v2422 = vadd.f32 0.0, %v2421
  %2423 = vdwg.mxu0
  %v2424 = vsel %vm173, %v2422, -1e+30
  %v2425 = vsel %vm367, %v2424, -inf
  %2426 = vmax.xlane.f32.xlu0 %v2425
  %v2427 = vpop.xlane.xlu0 %2426
  %v2428 = vsub.f32 %v2424, %v2427
  %v2429 = vmul.f32 %v2428, 1.442695
  %v2430 = vpow.pop %v2429
  %v2431 = vsel %vm367, %v2430, 0.0
  %2432 = vadd.xlane.f32.xlu0 %v2431
  %v2433 = vpop.xlane.xlu0 %2432
  %v2434 = vrcp.pop %v2433
  %v2435 = vmul.f32 %v2430, %v2434
  %2436 = vrot.lane.b32.xlu0 %v2109, 40
  %v2437 = vpop.permute.xlu0 %2436
  %v2440 = vsel %vm367, %v2435, 0
  %2442 = vmatpush.msra.mxu0 0.0
  %2443 = vmatpush.msra.mxu0 0.0
  %2444 = vmatpush.msra.mxu0 0.0
  %2445 = vmatpush.msra.mxu0 0.0
  %2446 = vmatpush.msra.mxu0 0.0
  %2447 = vmatpush.msra.mxu0 0.0
  %2448 = vmatpush.msra.mxu0 0.0
  %2449 = vmatpush.msra.mxu0 0.0
  %2450 = vmatpush.msra.mxu0 0.0
  %2451 = vmatpush.msra.mxu0 0.0
  %2452 = vmatpush.msra.mxu0 0.0
  %2453 = vmatpush.msra.mxu0 0.0
  %2454 = vmatpush.msra.mxu0 0.0
  %2455 = vmatpush.msra.mxu0 0.0
  %2456 = vmatpush.msra.mxu0 0.0
  %2457 = vmatpush.msra.mxu0 %v2437
  %2458 = vmatmul.f32.gmra.mxu0 %v2440
  %v2459 = vpop.f32.mrf.mxu0
  %v2460 = vadd.f32 0.0, %v2459
  %2461 = vdwg.mxu0
  %2463 = vrot.lane.b32.xlu0 %v2328, 8
  %v2464 = vpop.permute.xlu0 %2463
  %2467 = vrot.lane.b32.xlu0 %v2394, 16
  %v2468 = vpop.permute.xlu0 %2467
  %2471 = vrot.lane.b32.xlu0 %v2460, 24
  %v2472 = vpop.permute.xlu0 %2471
  %v2474 = vsel %vm367, %v2262, %v2464
  %v2475 = vsel %vm642, %v2474, %v2468
  %v2476 = vsel %vm644, %v2475, %v2472
  %2478 = vrot.lane.b32.xlu0 %v2197, 96
  %v2479 = vpop.permute.xlu0 %2478
  %v2481 = vsel %vm367, %v2150, 0
  %v2483 = vsel %vm367, %v2479, 0
  %2485 = vmatpush.xpose.msra.mxu0 0.0
  %2486 = vmatpush.xpose.msra.mxu0 0.0
  %2487 = vmatpush.xpose.msra.mxu0 0.0
  %2488 = vmatpush.xpose.msra.mxu0 0.0
  %2489 = vmatpush.xpose.msra.mxu0 0.0
  %2490 = vmatpush.xpose.msra.mxu0 0.0
  %2491 = vmatpush.xpose.msra.mxu0 0.0
  %2492 = vmatpush.xpose.msra.mxu0 0.0
  %2493 = vmatpush.xpose.msra.mxu0 0.0
  %2494 = vmatpush.xpose.msra.mxu0 0.0
  %2495 = vmatpush.xpose.msra.mxu0 0.0
  %2496 = vmatpush.xpose.msra.mxu0 0.0
  %2497 = vmatpush.xpose.msra.mxu0 0.0
  %2498 = vmatpush.xpose.msra.mxu0 0.0
  %2499 = vmatpush.xpose.msra.mxu0 0.0
  %2500 = vmatpush.xpose.msra.mxu0 %v2483
  %2501 = vmatmul.f32.gmra.mxu0 %v2481
  %v2502 = vpop.f32.mrf.mxu0
  %v2503 = vadd.f32 0.0, %v2502
  %2504 = vdwg.mxu0
  %v2505 = vsel %vm173, %v2503, -1e+30
  %v2506 = vsel %vm367, %v2505, -inf
  %2507 = vmax.xlane.f32.xlu0 %v2506
  %v2508 = vpop.xlane.xlu0 %2507
  %v2509 = vsub.f32 %v2505, %v2508
  %v2510 = vmul.f32 %v2509, 1.442695
  %v2511 = vpow.pop %v2510
  %v2512 = vsel %vm367, %v2511, 0.0
  %2513 = vadd.xlane.f32.xlu0 %v2512
  %v2514 = vpop.xlane.xlu0 %2513
  %v2515 = vrcp.pop %v2514
  %v2516 = vmul.f32 %v2511, %v2515
  %2517 = vrot.lane.b32.xlu0 %v2112, 64
  %v2518 = vpop.permute.xlu0 %2517
  %v2521 = vsel %vm367, %v2516, 0
  %2523 = vmatpush.msra.mxu0 0.0
  %2524 = vmatpush.msra.mxu0 0.0
  %2525 = vmatpush.msra.mxu0 0.0
  %2526 = vmatpush.msra.mxu0 0.0
  %2527 = vmatpush.msra.mxu0 0.0
  %2528 = vmatpush.msra.mxu0 0.0
  %2529 = vmatpush.msra.mxu0 0.0
  %2530 = vmatpush.msra.mxu0 0.0
  %2531 = vmatpush.msra.mxu0 0.0
  %2532 = vmatpush.msra.mxu0 0.0
  %2533 = vmatpush.msra.mxu0 0.0
  %2534 = vmatpush.msra.mxu0 0.0
  %2535 = vmatpush.msra.mxu0 0.0
  %2536 = vmatpush.msra.mxu0 0.0
  %2537 = vmatpush.msra.mxu0 0.0
  %2538 = vmatpush.msra.mxu0 %v2518
  %2539 = vmatmul.f32.gmra.mxu0 %v2521
  %v2540 = vpop.f32.mrf.mxu0
  %v2541 = vadd.f32 0.0, %v2540
  %2542 = vdwg.mxu0
  %2543 = vrot.lane.b32.xlu0 %v2150, 120
  %v2544 = vpop.permute.xlu0 %2543
  %2545 = vrot.lane.b32.xlu0 %v2197, 88
  %v2546 = vpop.permute.xlu0 %2545
  %v2547 = vsel %vm367, %v2544, 0
  %v2549 = vsel %vm367, %v2546, 0
  %2551 = vmatpush.xpose.msra.mxu0 0.0
  %2552 = vmatpush.xpose.msra.mxu0 0.0
  %2553 = vmatpush.xpose.msra.mxu0 0.0
  %2554 = vmatpush.xpose.msra.mxu0 0.0
  %2555 = vmatpush.xpose.msra.mxu0 0.0
  %2556 = vmatpush.xpose.msra.mxu0 0.0
  %2557 = vmatpush.xpose.msra.mxu0 0.0
  %2558 = vmatpush.xpose.msra.mxu0 0.0
  %2559 = vmatpush.xpose.msra.mxu0 0.0
  %2560 = vmatpush.xpose.msra.mxu0 0.0
  %2561 = vmatpush.xpose.msra.mxu0 0.0
  %2562 = vmatpush.xpose.msra.mxu0 0.0
  %2563 = vmatpush.xpose.msra.mxu0 0.0
  %2564 = vmatpush.xpose.msra.mxu0 0.0
  %2565 = vmatpush.xpose.msra.mxu0 0.0
  %2566 = vmatpush.xpose.msra.mxu0 %v2549
  %2567 = vmatmul.f32.gmra.mxu0 %v2547
  %v2568 = vpop.f32.mrf.mxu0
  %v2569 = vadd.f32 0.0, %v2568
  %2570 = vdwg.mxu0
  %v2571 = vsel %vm173, %v2569, -1e+30
  %v2572 = vsel %vm367, %v2571, -inf
  %2573 = vmax.xlane.f32.xlu0 %v2572
  %v2574 = vpop.xlane.xlu0 %2573
  %v2575 = vsub.f32 %v2571, %v2574
  %v2576 = vmul.f32 %v2575, 1.442695
  %v2577 = vpow.pop %v2576
  %v2578 = vsel %vm367, %v2577, 0.0
  %2579 = vadd.xlane.f32.xlu0 %v2578
  %v2580 = vpop.xlane.xlu0 %2579
  %v2581 = vrcp.pop %v2580
  %v2582 = vmul.f32 %v2577, %v2581
  %2583 = vrot.lane.b32.xlu0 %v2112, 56
  %v2584 = vpop.permute.xlu0 %2583
  %v2587 = vsel %vm367, %v2582, 0
  %2589 = vmatpush.msra.mxu0 0.0
  %2590 = vmatpush.msra.mxu0 0.0
  %2591 = vmatpush.msra.mxu0 0.0
  %2592 = vmatpush.msra.mxu0 0.0
  %2593 = vmatpush.msra.mxu0 0.0
  %2594 = vmatpush.msra.mxu0 0.0
  %2595 = vmatpush.msra.mxu0 0.0
  %2596 = vmatpush.msra.mxu0 0.0
  %2597 = vmatpush.msra.mxu0 0.0
  %2598 = vmatpush.msra.mxu0 0.0
  %2599 = vmatpush.msra.mxu0 0.0
  %2600 = vmatpush.msra.mxu0 0.0
  %2601 = vmatpush.msra.mxu0 0.0
  %2602 = vmatpush.msra.mxu0 0.0
  %2603 = vmatpush.msra.mxu0 0.0
  %2604 = vmatpush.msra.mxu0 %v2584
  %2605 = vmatmul.f32.gmra.mxu0 %v2587
  %v2606 = vpop.f32.mrf.mxu0
  %v2607 = vadd.f32 0.0, %v2606
  %2608 = vdwg.mxu0
  %2609 = vrot.lane.b32.xlu0 %v2150, 112
  %v2610 = vpop.permute.xlu0 %2609
  %2611 = vrot.lane.b32.xlu0 %v2197, 80
  %v2612 = vpop.permute.xlu0 %2611
  %v2613 = vsel %vm367, %v2610, 0
  %v2615 = vsel %vm367, %v2612, 0
  %2617 = vmatpush.xpose.msra.mxu0 0.0
  %2618 = vmatpush.xpose.msra.mxu0 0.0
  %2619 = vmatpush.xpose.msra.mxu0 0.0
  %2620 = vmatpush.xpose.msra.mxu0 0.0
  %2621 = vmatpush.xpose.msra.mxu0 0.0
  %2622 = vmatpush.xpose.msra.mxu0 0.0
  %2623 = vmatpush.xpose.msra.mxu0 0.0
  %2624 = vmatpush.xpose.msra.mxu0 0.0
  %2625 = vmatpush.xpose.msra.mxu0 0.0
  %2626 = vmatpush.xpose.msra.mxu0 0.0
  %2627 = vmatpush.xpose.msra.mxu0 0.0
  %2628 = vmatpush.xpose.msra.mxu0 0.0
  %2629 = vmatpush.xpose.msra.mxu0 0.0
  %2630 = vmatpush.xpose.msra.mxu0 0.0
  %2631 = vmatpush.xpose.msra.mxu0 0.0
  %2632 = vmatpush.xpose.msra.mxu0 %v2615
  %2633 = vmatmul.f32.gmra.mxu0 %v2613
  %v2634 = vpop.f32.mrf.mxu0
  %v2635 = vadd.f32 0.0, %v2634
  %2636 = vdwg.mxu0
  %v2637 = vsel %vm173, %v2635, -1e+30
  %v2638 = vsel %vm367, %v2637, -inf
  %2639 = vmax.xlane.f32.xlu0 %v2638
  %v2640 = vpop.xlane.xlu0 %2639
  %v2641 = vsub.f32 %v2637, %v2640
  %v2642 = vmul.f32 %v2641, 1.442695
  %v2643 = vpow.pop %v2642
  %v2644 = vsel %vm367, %v2643, 0.0
  %2645 = vadd.xlane.f32.xlu0 %v2644
  %v2646 = vpop.xlane.xlu0 %2645
  %v2647 = vrcp.pop %v2646
  %v2648 = vmul.f32 %v2643, %v2647
  %2649 = vrot.lane.b32.xlu0 %v2112, 48
  %v2650 = vpop.permute.xlu0 %2649
  %v2653 = vsel %vm367, %v2648, 0
  %2655 = vmatpush.msra.mxu0 0.0
  %2656 = vmatpush.msra.mxu0 0.0
  %2657 = vmatpush.msra.mxu0 0.0
  %2658 = vmatpush.msra.mxu0 0.0
  %2659 = vmatpush.msra.mxu0 0.0
  %2660 = vmatpush.msra.mxu0 0.0
  %2661 = vmatpush.msra.mxu0 0.0
  %2662 = vmatpush.msra.mxu0 0.0
  %2663 = vmatpush.msra.mxu0 0.0
  %2664 = vmatpush.msra.mxu0 0.0
  %2665 = vmatpush.msra.mxu0 0.0
  %2666 = vmatpush.msra.mxu0 0.0
  %2667 = vmatpush.msra.mxu0 0.0
  %2668 = vmatpush.msra.mxu0 0.0
  %2669 = vmatpush.msra.mxu0 0.0
  %2670 = vmatpush.msra.mxu0 %v2650
  %2671 = vmatmul.f32.gmra.mxu0 %v2653
  %v2672 = vpop.f32.mrf.mxu0
  %v2673 = vadd.f32 0.0, %v2672
  %2674 = vdwg.mxu0
  %2675 = vrot.lane.b32.xlu0 %v2150, 104
  %v2676 = vpop.permute.xlu0 %2675
  %2677 = vrot.lane.b32.xlu0 %v2197, 72
  %v2678 = vpop.permute.xlu0 %2677
  %v2679 = vsel %vm367, %v2676, 0
  %v2681 = vsel %vm367, %v2678, 0
  %2683 = vmatpush.xpose.msra.mxu0 0.0
  %2684 = vmatpush.xpose.msra.mxu0 0.0
  %2685 = vmatpush.xpose.msra.mxu0 0.0
  %2686 = vmatpush.xpose.msra.mxu0 0.0
  %2687 = vmatpush.xpose.msra.mxu0 0.0
  %2688 = vmatpush.xpose.msra.mxu0 0.0
  %2689 = vmatpush.xpose.msra.mxu0 0.0
  %2690 = vmatpush.xpose.msra.mxu0 0.0
  %2691 = vmatpush.xpose.msra.mxu0 0.0
  %2692 = vmatpush.xpose.msra.mxu0 0.0
  %2693 = vmatpush.xpose.msra.mxu0 0.0
  %2694 = vmatpush.xpose.msra.mxu0 0.0
  %2695 = vmatpush.xpose.msra.mxu0 0.0
  %2696 = vmatpush.xpose.msra.mxu0 0.0
  %2697 = vmatpush.xpose.msra.mxu0 0.0
  %2698 = vmatpush.xpose.msra.mxu0 %v2681
  %2699 = vmatmul.f32.gmra.mxu0 %v2679
  %v2700 = vpop.f32.mrf.mxu0
  %v2701 = vadd.f32 0.0, %v2700
  %2702 = vdwg.mxu0
  %v2703 = vsel %vm173, %v2701, -1e+30
  %v2704 = vsel %vm367, %v2703, -inf
  %2705 = vmax.xlane.f32.xlu0 %v2704
  %v2706 = vpop.xlane.xlu0 %2705
  %v2707 = vsub.f32 %v2703, %v2706
  %v2708 = vmul.f32 %v2707, 1.442695
  %v2709 = vpow.pop %v2708
  %v2710 = vsel %vm367, %v2709, 0.0
  %2711 = vadd.xlane.f32.xlu0 %v2710
  %v2712 = vpop.xlane.xlu0 %2711
  %v2713 = vrcp.pop %v2712
  %v2714 = vmul.f32 %v2709, %v2713
  %2715 = vrot.lane.b32.xlu0 %v2112, 40
  %v2716 = vpop.permute.xlu0 %2715
  %v2719 = vsel %vm367, %v2714, 0
  %2721 = vmatpush.msra.mxu0 0.0
  %2722 = vmatpush.msra.mxu0 0.0
  %2723 = vmatpush.msra.mxu0 0.0
  %2724 = vmatpush.msra.mxu0 0.0
  %2725 = vmatpush.msra.mxu0 0.0
  %2726 = vmatpush.msra.mxu0 0.0
  %2727 = vmatpush.msra.mxu0 0.0
  %2728 = vmatpush.msra.mxu0 0.0
  %2729 = vmatpush.msra.mxu0 0.0
  %2730 = vmatpush.msra.mxu0 0.0
  %2731 = vmatpush.msra.mxu0 0.0
  %2732 = vmatpush.msra.mxu0 0.0
  %2733 = vmatpush.msra.mxu0 0.0
  %2734 = vmatpush.msra.mxu0 0.0
  %2735 = vmatpush.msra.mxu0 0.0
  %2736 = vmatpush.msra.mxu0 %v2716
  %2737 = vmatmul.f32.gmra.mxu0 %v2719
  %v2738 = vpop.f32.mrf.mxu0
  %v2739 = vadd.f32 0.0, %v2738
  %2740 = vdwg.mxu0
  %2742 = vrot.lane.b32.xlu0 %v2607, 8
  %v2743 = vpop.permute.xlu0 %2742
  %2746 = vrot.lane.b32.xlu0 %v2673, 16
  %v2747 = vpop.permute.xlu0 %2746
  %2750 = vrot.lane.b32.xlu0 %v2739, 24
  %v2751 = vpop.permute.xlu0 %2750
  %v2753 = vsel %vm367, %v2541, %v2743
  %v2754 = vsel %vm642, %v2753, %v2747
  %v2755 = vsel %vm644, %v2754, %v2751
  %v2757 = vsel %vm198, %v2476, 0
  %v2760 = vsel %vm198, %v2755, 0
  %2762 = vmatpush.msra.mxu0 0.0
  %2763 = vmatpush.msra.mxu0 0.0
  %2764 = vmatpush.msra.mxu0 0.0
  %2765 = vmatpush.msra.mxu0 0.0
  %2766 = vmatpush.msra.mxu0 0.0
  %2767 = vmatpush.msra.mxu0 0.0
  %2768 = vmatpush.msra.mxu0 0.0
  %2769 = vmatpush.msra.mxu0 0.0
  %2770 = vmatpush.msra.mxu0 0.0
  %2771 = vmatpush.msra.mxu0 0.0
  %2772 = vmatpush.msra.mxu0 0.0
  %2773 = vmatpush.msra.mxu0 0.0
  %2774 = vmatpush.msra.mxu0 %v2031
  %2775 = vmatpush.msra.mxu0 %v2030
  %2776 = vmatpush.msra.mxu0 %v2029
  %2777 = vmatpush.msra.mxu0 %v2028
  %2778 = vmatmul.f32.gmra.mxu0 %v2757
  %v2779 = vpop.f32.mrf.mxu0
  %v2780 = vadd.f32 0.0, %v2779
  %2781 = vmatmul.f32.gmra.mxu0 %v2760
  %v2782 = vpop.f32.mrf.mxu0
  %v2783 = vadd.f32 0.0, %v2782
  %2784 = vdwg.mxu0
  %v2785 = vadd.f32 %v2022, %v2780
  %v2786 = vadd.f32 %v2023, %v2783
  %v2787 = vmul.f32 %v2785, %v2785
  %v2788 = vmul.f32 %v2786, %v2786
  %v2789 = vsel %vm198, %v2787, 0.0
  %2790 = vadd.xlane.f32.xlu0 %v2789
  %v2791 = vpop.xlane.xlu0 %2790
  %v2792 = vsel %vm198, %v2788, 0.0
  %2793 = vadd.xlane.f32.xlu0 %v2792
  %v2794 = vpop.xlane.xlu0 %2793
  %v2795 = vmul.f32 %v2791, %v211
  %v2796 = vmul.f32 %v2794, %v211
  %v2797 = vadd.f32 %v2795, 1e-06
  %v2798 = vadd.f32 %v2796, 1e-06
  %v2799 = vrsqrt.pop %v2797
  %v2800 = vmul.f32 %v2799, %v2797
  %v2801 = vmul.f32 %v2800, %v2799
  %v2802 = vmul.f32 0.5, %v2801
  %v2803 = vsub.f32 1.5, %v2802
  %v2804 = vmul.f32 %v2799, %v2803
  %vm2805 = vweird.f32 %v2797
  %vm2806 = vweird.f32 %v2799
  %vm2807 = vmor %vm2805, %vm2806
  %v2808 = vsel %vm2807, %v2799, %v2804
  %v2809 = vrsqrt.pop %v2798
  %v2810 = vmul.f32 %v2809, %v2798
  %v2811 = vmul.f32 %v2810, %v2809
  %v2812 = vmul.f32 0.5, %v2811
  %v2813 = vsub.f32 1.5, %v2812
  %v2814 = vmul.f32 %v2809, %v2813
  %vm2815 = vweird.f32 %v2798
  %vm2816 = vweird.f32 %v2809
  %vm2817 = vmor %vm2815, %vm2816
  %v2818 = vsel %vm2817, %v2809, %v2814
  %v2819 = vmul.f32 %v2785, %v2808
  %v2820 = vmul.f32 %v2786, %v2818
  %v2822 = vperm.slane %v2045, 0
  %v2824 = vmul.f32 %v2819, %v2822
  %v2825 = vmul.f32 %v2820, %v2822
  %v2827 = vsel %vm198, %v2824, 0
  %v2830 = vsel %vm198, %v2825, 0
  %2832 = vmatpush.msra.mxu0 0.0
  %2833 = vmatpush.msra.mxu0 0.0
  %2834 = vmatpush.msra.mxu0 0.0
  %2835 = vmatpush.msra.mxu0 0.0
  %2836 = vmatpush.msra.mxu0 0.0
  %2837 = vmatpush.msra.mxu0 0.0
  %2838 = vmatpush.msra.mxu0 0.0
  %2839 = vmatpush.msra.mxu0 0.0
  %2840 = vmatpush.msra.mxu0 0.0
  %2841 = vmatpush.msra.mxu0 0.0
  %2842 = vmatpush.msra.mxu0 0.0
  %2843 = vmatpush.msra.mxu0 0.0
  %2844 = vmatpush.msra.mxu0 %v2035
  %2845 = vmatpush.msra.mxu0 %v2034
  %2846 = vmatpush.msra.mxu0 %v2033
  %2847 = vmatpush.msra.mxu0 %v2032
  %2848 = vmatmul.f32.gmra.mxu0 %v2827
  %v2849 = vpop.f32.mrf.mxu0
  %v2850 = vadd.f32 0.0, %v2849
  %2851 = vmatmul.f32.gmra.mxu0 %v2830
  %v2852 = vpop.f32.mrf.mxu0
  %v2853 = vadd.f32 0.0, %v2852
  %2854 = vdwg.mxu0
  %v2855 = vxor.u32 %v2850, 2147483648
  %v2856 = vxor.u32 %v2853, 2147483648
  %v2857 = vmul.f32 %v2855, 1.442695
  %v2858 = vpow.pop %v2857
  %v2859 = vmul.f32 %v2856, 1.442695
  %v2860 = vpow.pop %v2859
  %v2861 = vadd.f32 %v2858, 1.0
  %v2862 = vadd.f32 %v2860, 1.0
  %v2863 = vrcp.pop %v2861
  %v2864 = vmul.f32 %v2861, %v2863
  %v2865 = vsub.f32 1.0, %v2864
  %v2866 = vmul.f32 %v2863, %v2865
  %v2867 = vadd.f32 %v2863, %v2866
  %vm2868 = vweird.f32 %v2861
  %vm2869 = vweird.f32 %v2863
  %vm2870 = vmor %vm2868, %vm2869
  %v2871 = vsel %vm2870, %v2863, %v2867
  %v2872 = vand.u32 2147483647, %v2861
  %vm2873 = vcmp.eq.f32.partialorder %v2872, 8.507059e+37
  %v2874 = vand.u32 %v2861, 2147483648
  %v2875 = vor.u32 1.1754944e-38, %v2874
  %v2876 = vsel %vm2873, %v2875, %v2871
  %v2877 = vmul.f32 1.0, %v2876
  %v2878 = vrcp.pop %v2862
  %v2879 = vmul.f32 %v2862, %v2878
  %v2880 = vsub.f32 1.0, %v2879
  %v2881 = vmul.f32 %v2878, %v2880
  %v2882 = vadd.f32 %v2878, %v2881
  %vm2883 = vweird.f32 %v2862
  %vm2884 = vweird.f32 %v2878
  %vm2885 = vmor %vm2883, %vm2884
  %v2886 = vsel %vm2885, %v2878, %v2882
  %v2887 = vand.u32 2147483647, %v2862
  %vm2888 = vcmp.eq.f32.partialorder %v2887, 8.507059e+37
  %v2889 = vand.u32 %v2862, 2147483648
  %v2890 = vor.u32 1.1754944e-38, %v2889
  %v2891 = vsel %vm2888, %v2890, %v2886
  %v2892 = vmul.f32 1.0, %v2891
  %v2893 = vmul.f32 %v2850, %v2877
  %v2894 = vmul.f32 %v2853, %v2892
  %2897 = vrot.lane.b32.xlu0 %v2850, 64
  %v2898 = vpop.permute.xlu0 %2897
  %2899 = vrot.lane.b32.xlu0 %v2853, 64
  %v2900 = vpop.permute.xlu0 %2899
  %v2903 = vmul.f32 %v2893, %v2898
  %v2904 = vmul.f32 %v2894, %v2900
  %v2906 = vsel %vm1074, %v2903, 0
  %v2909 = vsel %vm1074, %v2904, 0
  %2911 = vmatpush.msra.mxu0 0.0
  %2912 = vmatpush.msra.mxu0 0.0
  %2913 = vmatpush.msra.mxu0 0.0
  %2914 = vmatpush.msra.mxu0 0.0
  %2915 = vmatpush.msra.mxu0 0.0
  %2916 = vmatpush.msra.mxu0 0.0
  %2917 = vmatpush.msra.mxu0 0.0
  %2918 = vmatpush.msra.mxu0 0.0
  %2919 = vmatpush.msra.mxu0 %v2043
  %2920 = vmatpush.msra.mxu0 %v2042
  %2921 = vmatpush.msra.mxu0 %v2041
  %2922 = vmatpush.msra.mxu0 %v2040
  %2923 = vmatpush.msra.mxu0 %v2039
  %2924 = vmatpush.msra.mxu0 %v2038
  %2925 = vmatpush.msra.mxu0 %v2037
  %2926 = vmatpush.msra.mxu0 %v2036
  %2927 = vmatmul.f32.gmra.mxu0 %v2906
  %v2928 = vpop.f32.mrf.mxu0
  %v2929 = vadd.f32 0.0, %v2928
  %2930 = vmatmul.f32.gmra.mxu0 %v2909
  %v2931 = vpop.f32.mrf.mxu0
  %v2932 = vadd.f32 0.0, %v2931
  %2933 = vdwg.mxu0
  %v2934 = vadd.f32 %v2785, %v2929
  %v2935 = vadd.f32 %v2786, %v2932
  %s2936 = scalar_lea.vmem %s8, 32
  %v2937 = vld [vmem:[%s2936] sm:$0xff]
  %v2938 = vld [vmem:[%s2936 + $0x8] sm:$0xff]
  %v2939 = vld [vmem:[%s2936 + $0x10] sm:$0xff]
  %v2940 = vld [vmem:[%s2936 + $0x18] sm:$0xff]
  %s2941 = scalar_lea.vmem %s9, 32
  %v2942 = vld [vmem:[%s2941] sm:$0xff]
  %v2943 = vld [vmem:[%s2941 + $0x8] sm:$0xff]
  %v2944 = vld [vmem:[%s2941 + $0x10] sm:$0xff]
  %v2945 = vld [vmem:[%s2941 + $0x18] sm:$0xff]
  %s2946 = scalar_lea.vmem %s10, 32
  %v2947 = vld [vmem:[%s2946] sm:$0xff]
  %v2948 = vld [vmem:[%s2946 + $0x8] sm:$0xff]
  %v2949 = vld [vmem:[%s2946 + $0x10] sm:$0xff]
  %v2950 = vld [vmem:[%s2946 + $0x18] sm:$0xff]
  %s2951 = scalar_lea.vmem %s11, 64
  %v2952 = vld [vmem:[%s2951] sm:$0xff]
  %v2953 = vld [vmem:[%s2951 + $0x8] sm:$0xff]
  %v2954 = vld [vmem:[%s2951 + $0x10] sm:$0xff]
  %v2955 = vld [vmem:[%s2951 + $0x18] sm:$0xff]
  %v2956 = vld [vmem:[%s2951 + $0x20] sm:$0xff]
  %v2957 = vld [vmem:[%s2951 + $0x28] sm:$0xff]
  %v2958 = vld [vmem:[%s2951 + $0x30] sm:$0xff]
  %v2959 = vld [vmem:[%s2951 + $0x38] sm:$0xff]
  %s2960 = scalar_lea.vmem %s12, 1
  %v2961 = vld [vmem:[%s2960] sm:$0x1]
  %s2962 = scalar_lea.vmem %s13, 1
  %v2963 = vld [vmem:[%s2962] sm:$0x1]
  %v2964 = vmul.f32 %v2934, %v2934
  %v2965 = vmul.f32 %v2935, %v2935
  %v2966 = vsel %vm198, %v2964, 0.0
  %2967 = vadd.xlane.f32.xlu0 %v2966
  %v2968 = vpop.xlane.xlu0 %2967
  %v2969 = vsel %vm198, %v2965, 0.0
  %2970 = vadd.xlane.f32.xlu0 %v2969
  %v2971 = vpop.xlane.xlu0 %2970
  %v2972 = vmul.f32 %v2968, %v211
  %v2973 = vmul.f32 %v2971, %v211
  %v2974 = vadd.f32 %v2972, 1e-06
  %v2975 = vadd.f32 %v2973, 1e-06
  %v2976 = vrsqrt.pop %v2974
  %v2977 = vmul.f32 %v2976, %v2974
  %v2978 = vmul.f32 %v2977, %v2976
  %v2979 = vmul.f32 0.5, %v2978
  %v2980 = vsub.f32 1.5, %v2979
  %v2981 = vmul.f32 %v2976, %v2980
  %vm2982 = vweird.f32 %v2974
  %vm2983 = vweird.f32 %v2976
  %vm2984 = vmor %vm2982, %vm2983
  %v2985 = vsel %vm2984, %v2976, %v2981
  %v2986 = vrsqrt.pop %v2975
  %v2987 = vmul.f32 %v2986, %v2975
  %v2988 = vmul.f32 %v2987, %v2986
  %v2989 = vmul.f32 0.5, %v2988
  %v2990 = vsub.f32 1.5, %v2989
  %v2991 = vmul.f32 %v2986, %v2990
  %vm2992 = vweird.f32 %v2975
  %vm2993 = vweird.f32 %v2986
  %vm2994 = vmor %vm2992, %vm2993
  %v2995 = vsel %vm2994, %v2986, %v2991
  %v2996 = vmul.f32 %v2934, %v2985
  %v2997 = vmul.f32 %v2935, %v2995
  %v2999 = vperm.slane %v2961, 0
  %v3001 = vmul.f32 %v2996, %v2999
  %v3002 = vmul.f32 %v2997, %v2999
  %v3004 = vsel %vm198, %v3001, 0
  %v3007 = vsel %vm198, %v3002, 0
  %3009 = vmatpush.msra.mxu0 0.0
  %3010 = vmatpush.msra.mxu0 0.0
  %3011 = vmatpush.msra.mxu0 0.0
  %3012 = vmatpush.msra.mxu0 0.0
  %3013 = vmatpush.msra.mxu0 0.0
  %3014 = vmatpush.msra.mxu0 0.0
  %3015 = vmatpush.msra.mxu0 0.0
  %3016 = vmatpush.msra.mxu0 0.0
  %3017 = vmatpush.msra.mxu0 0.0
  %3018 = vmatpush.msra.mxu0 0.0
  %3019 = vmatpush.msra.mxu0 0.0
  %3020 = vmatpush.msra.mxu0 0.0
  %3021 = vmatpush.msra.mxu0 %v2940
  %3022 = vmatpush.msra.mxu0 %v2939
  %3023 = vmatpush.msra.mxu0 %v2938
  %3024 = vmatpush.msra.mxu0 %v2937
  %3025 = vmatmul.f32.gmra.mxu0 %v3004
  %v3026 = vpop.f32.mrf.mxu0
  %v3027 = vadd.f32 0.0, %v3026
  %3028 = vmatmul.f32.gmra.mxu0 %v3007
  %v3029 = vpop.f32.mrf.mxu0
  %v3030 = vadd.f32 0.0, %v3029
  %3031 = vdwg.mxu0
  %v3032 = vmul.f32 %v3027, 0.35355338
  %v3033 = vmul.f32 %v3030, 0.35355338
  %v3034 = vmul.f32 %v3032, %v163
  %v3035 = vmul.f32 %v3033, %v164
  %v3037 = vsel %vm198, %v3032, 0
  %v3040 = vsel %vm198, %v3033, 0
  %3042 = vmatpush.msra.mxu0 0.0
  %3043 = vmatpush.msra.mxu0 0.0
  %3044 = vmatpush.msra.mxu0 0.0
  %3045 = vmatpush.msra.mxu0 0.0
  %3046 = vmatpush.msra.mxu0 0.0
  %3047 = vmatpush.msra.mxu0 0.0
  %3048 = vmatpush.msra.mxu0 0.0
  %3049 = vmatpush.msra.mxu0 0.0
  %3050 = vmatpush.msra.mxu0 0.0
  %3051 = vmatpush.msra.mxu0 0.0
  %3052 = vmatpush.msra.mxu0 0.0
  %3053 = vmatpush.msra.mxu0 0.0
  %3054 = vmatpush.msra.mxu0 %v170
  %3055 = vmatpush.msra.mxu0 %v169
  %3056 = vmatpush.msra.mxu0 %v168
  %3057 = vmatpush.msra.mxu0 %v167
  %3058 = vmatmul.f32.gmra.mxu0 %v3037
  %v3059 = vpop.f32.mrf.mxu0
  %v3060 = vadd.f32 0.0, %v3059
  %3061 = vmatmul.f32.gmra.mxu0 %v3040
  %v3062 = vpop.f32.mrf.mxu0
  %v3063 = vadd.f32 0.0, %v3062
  %3064 = vdwg.mxu0
  %v3065 = vmul.f32 %v3060, %v165
  %v3066 = vmul.f32 %v3063, %v166
  %v3067 = vadd.f32 %v3034, %v3065
  %v3068 = vadd.f32 %v3035, %v3066
  %v3069 = vmul.f32 %v3027, %v312
  %v3070 = vmul.f32 %v3030, %v314
  %3073 = vrot.lane.b32.xlu0 %v3027, 96
  %v3074 = vpop.permute.xlu0 %3073
  %3075 = vrot.lane.b32.xlu0 %v3030, 96
  %v3076 = vpop.permute.xlu0 %3075
  %v3077 = vsel %vm198, %v3074, 0
  %v3079 = vsel %vm198, %v3076, 0
  %3081 = vmatpush.msra.mxu0 0.0
  %3082 = vmatpush.msra.mxu0 0.0
  %3083 = vmatpush.msra.mxu0 0.0
  %3084 = vmatpush.msra.mxu0 0.0
  %3085 = vmatpush.msra.mxu0 0.0
  %3086 = vmatpush.msra.mxu0 0.0
  %3087 = vmatpush.msra.mxu0 0.0
  %3088 = vmatpush.msra.mxu0 0.0
  %3089 = vmatpush.msra.mxu0 0.0
  %3090 = vmatpush.msra.mxu0 0.0
  %3091 = vmatpush.msra.mxu0 0.0
  %3092 = vmatpush.msra.mxu0 0.0
  %3093 = vmatpush.msra.mxu0 %v170
  %3094 = vmatpush.msra.mxu0 %v169
  %3095 = vmatpush.msra.mxu0 %v168
  %3096 = vmatpush.msra.mxu0 %v167
  %3097 = vmatmul.f32.gmra.mxu0 %v3077
  %v3098 = vpop.f32.mrf.mxu0
  %v3099 = vadd.f32 0.0, %v3098
  %3100 = vmatmul.f32.gmra.mxu0 %v3079
  %v3101 = vpop.f32.mrf.mxu0
  %v3102 = vadd.f32 0.0, %v3101
  %3103 = vdwg.mxu0
  %v3104 = vmul.f32 %v3099, %v165
  %v3105 = vmul.f32 %v3102, %v166
  %3108 = vrot.lane.b32.xlu0 %v3104, 32
  %v3109 = vpop.permute.xlu0 %3108
  %3110 = vrot.lane.b32.xlu0 %v3105, 32
  %v3111 = vpop.permute.xlu0 %3110
  %v3114 = vadd.f32 %v3069, %v3109
  %v3115 = vadd.f32 %v3070, %v3111
  %3117 = vrot.lane.b32.xlu0 %v3114, 96
  %v3118 = vpop.permute.xlu0 %3117
  %v3120 = vsel %vm367, %v3067, 0
  %v3122 = vsel %vm367, %v3118, 0
  %3124 = vmatpush.xpose.msra.mxu0 0.0
  %3125 = vmatpush.xpose.msra.mxu0 0.0
  %3126 = vmatpush.xpose.msra.mxu0 0.0
  %3127 = vmatpush.xpose.msra.mxu0 0.0
  %3128 = vmatpush.xpose.msra.mxu0 0.0
  %3129 = vmatpush.xpose.msra.mxu0 0.0
  %3130 = vmatpush.xpose.msra.mxu0 0.0
  %3131 = vmatpush.xpose.msra.mxu0 0.0
  %3132 = vmatpush.xpose.msra.mxu0 0.0
  %3133 = vmatpush.xpose.msra.mxu0 0.0
  %3134 = vmatpush.xpose.msra.mxu0 0.0
  %3135 = vmatpush.xpose.msra.mxu0 0.0
  %3136 = vmatpush.xpose.msra.mxu0 0.0
  %3137 = vmatpush.xpose.msra.mxu0 0.0
  %3138 = vmatpush.xpose.msra.mxu0 0.0
  %3139 = vmatpush.xpose.msra.mxu0 %v3122
  %3140 = vmatmul.f32.gmra.mxu0 %v3120
  %v3141 = vpop.f32.mrf.mxu0
  %v3142 = vadd.f32 0.0, %v3141
  %3143 = vdwg.mxu0
  %v3144 = vsel %vm173, %v3142, -1e+30
  %v3145 = vsel %vm367, %v3144, -inf
  %3146 = vmax.xlane.f32.xlu0 %v3145
  %v3147 = vpop.xlane.xlu0 %3146
  %v3148 = vsub.f32 %v3144, %v3147
  %v3149 = vmul.f32 %v3148, 1.442695
  %v3150 = vpow.pop %v3149
  %v3151 = vsel %vm367, %v3150, 0.0
  %3152 = vadd.xlane.f32.xlu0 %v3151
  %v3153 = vpop.xlane.xlu0 %3152
  %v3154 = vrcp.pop %v3153
  %v3155 = vmul.f32 %v3150, %v3154
  %3156 = vrot.lane.b32.xlu0 %v3027, 64
  %v3157 = vpop.permute.xlu0 %3156
  %v3160 = vsel %vm367, %v3155, 0
  %3162 = vmatpush.msra.mxu0 0.0
  %3163 = vmatpush.msra.mxu0 0.0
  %3164 = vmatpush.msra.mxu0 0.0
  %3165 = vmatpush.msra.mxu0 0.0
  %3166 = vmatpush.msra.mxu0 0.0
  %3167 = vmatpush.msra.mxu0 0.0
  %3168 = vmatpush.msra.mxu0 0.0
  %3169 = vmatpush.msra.mxu0 0.0
  %3170 = vmatpush.msra.mxu0 0.0
  %3171 = vmatpush.msra.mxu0 0.0
  %3172 = vmatpush.msra.mxu0 0.0
  %3173 = vmatpush.msra.mxu0 0.0
  %3174 = vmatpush.msra.mxu0 0.0
  %3175 = vmatpush.msra.mxu0 0.0
  %3176 = vmatpush.msra.mxu0 0.0
  %3177 = vmatpush.msra.mxu0 %v3157
  %3178 = vmatmul.f32.gmra.mxu0 %v3160
  %v3179 = vpop.f32.mrf.mxu0
  %v3180 = vadd.f32 0.0, %v3179
  %3181 = vdwg.mxu0
  %3182 = vrot.lane.b32.xlu0 %v3067, 120
  %v3183 = vpop.permute.xlu0 %3182
  %3184 = vrot.lane.b32.xlu0 %v3114, 88
  %v3185 = vpop.permute.xlu0 %3184
  %v3186 = vsel %vm367, %v3183, 0
  %v3188 = vsel %vm367, %v3185, 0
  %3190 = vmatpush.xpose.msra.mxu0 0.0
  %3191 = vmatpush.xpose.msra.mxu0 0.0
  %3192 = vmatpush.xpose.msra.mxu0 0.0
  %3193 = vmatpush.xpose.msra.mxu0 0.0
  %3194 = vmatpush.xpose.msra.mxu0 0.0
  %3195 = vmatpush.xpose.msra.mxu0 0.0
  %3196 = vmatpush.xpose.msra.mxu0 0.0
  %3197 = vmatpush.xpose.msra.mxu0 0.0
  %3198 = vmatpush.xpose.msra.mxu0 0.0
  %3199 = vmatpush.xpose.msra.mxu0 0.0
  %3200 = vmatpush.xpose.msra.mxu0 0.0
  %3201 = vmatpush.xpose.msra.mxu0 0.0
  %3202 = vmatpush.xpose.msra.mxu0 0.0
  %3203 = vmatpush.xpose.msra.mxu0 0.0
  %3204 = vmatpush.xpose.msra.mxu0 0.0
  %3205 = vmatpush.xpose.msra.mxu0 %v3188
  %3206 = vmatmul.f32.gmra.mxu0 %v3186
  %v3207 = vpop.f32.mrf.mxu0
  %v3208 = vadd.f32 0.0, %v3207
  %3209 = vdwg.mxu0
  %v3210 = vsel %vm173, %v3208, -1e+30
  %v3211 = vsel %vm367, %v3210, -inf
  %3212 = vmax.xlane.f32.xlu0 %v3211
  %v3213 = vpop.xlane.xlu0 %3212
  %v3214 = vsub.f32 %v3210, %v3213
  %v3215 = vmul.f32 %v3214, 1.442695
  %v3216 = vpow.pop %v3215
  %v3217 = vsel %vm367, %v3216, 0.0
  %3218 = vadd.xlane.f32.xlu0 %v3217
  %v3219 = vpop.xlane.xlu0 %3218
  %v3220 = vrcp.pop %v3219
  %v3221 = vmul.f32 %v3216, %v3220
  %3222 = vrot.lane.b32.xlu0 %v3027, 56
  %v3223 = vpop.permute.xlu0 %3222
  %v3226 = vsel %vm367, %v3221, 0
  %3228 = vmatpush.msra.mxu0 0.0
  %3229 = vmatpush.msra.mxu0 0.0
  %3230 = vmatpush.msra.mxu0 0.0
  %3231 = vmatpush.msra.mxu0 0.0
  %3232 = vmatpush.msra.mxu0 0.0
  %3233 = vmatpush.msra.mxu0 0.0
  %3234 = vmatpush.msra.mxu0 0.0
  %3235 = vmatpush.msra.mxu0 0.0
  %3236 = vmatpush.msra.mxu0 0.0
  %3237 = vmatpush.msra.mxu0 0.0
  %3238 = vmatpush.msra.mxu0 0.0
  %3239 = vmatpush.msra.mxu0 0.0
  %3240 = vmatpush.msra.mxu0 0.0
  %3241 = vmatpush.msra.mxu0 0.0
  %3242 = vmatpush.msra.mxu0 0.0
  %3243 = vmatpush.msra.mxu0 %v3223
  %3244 = vmatmul.f32.gmra.mxu0 %v3226
  %v3245 = vpop.f32.mrf.mxu0
  %v3246 = vadd.f32 0.0, %v3245
  %3247 = vdwg.mxu0
  %3248 = vrot.lane.b32.xlu0 %v3067, 112
  %v3249 = vpop.permute.xlu0 %3248
  %3250 = vrot.lane.b32.xlu0 %v3114, 80
  %v3251 = vpop.permute.xlu0 %3250
  %v3252 = vsel %vm367, %v3249, 0
  %v3254 = vsel %vm367, %v3251, 0
  %3256 = vmatpush.xpose.msra.mxu0 0.0
  %3257 = vmatpush.xpose.msra.mxu0 0.0
  %3258 = vmatpush.xpose.msra.mxu0 0.0
  %3259 = vmatpush.xpose.msra.mxu0 0.0
  %3260 = vmatpush.xpose.msra.mxu0 0.0
  %3261 = vmatpush.xpose.msra.mxu0 0.0
  %3262 = vmatpush.xpose.msra.mxu0 0.0
  %3263 = vmatpush.xpose.msra.mxu0 0.0
  %3264 = vmatpush.xpose.msra.mxu0 0.0
  %3265 = vmatpush.xpose.msra.mxu0 0.0
  %3266 = vmatpush.xpose.msra.mxu0 0.0
  %3267 = vmatpush.xpose.msra.mxu0 0.0
  %3268 = vmatpush.xpose.msra.mxu0 0.0
  %3269 = vmatpush.xpose.msra.mxu0 0.0
  %3270 = vmatpush.xpose.msra.mxu0 0.0
  %3271 = vmatpush.xpose.msra.mxu0 %v3254
  %3272 = vmatmul.f32.gmra.mxu0 %v3252
  %v3273 = vpop.f32.mrf.mxu0
  %v3274 = vadd.f32 0.0, %v3273
  %3275 = vdwg.mxu0
  %v3276 = vsel %vm173, %v3274, -1e+30
  %v3277 = vsel %vm367, %v3276, -inf
  %3278 = vmax.xlane.f32.xlu0 %v3277
  %v3279 = vpop.xlane.xlu0 %3278
  %v3280 = vsub.f32 %v3276, %v3279
  %v3281 = vmul.f32 %v3280, 1.442695
  %v3282 = vpow.pop %v3281
  %v3283 = vsel %vm367, %v3282, 0.0
  %3284 = vadd.xlane.f32.xlu0 %v3283
  %v3285 = vpop.xlane.xlu0 %3284
  %v3286 = vrcp.pop %v3285
  %v3287 = vmul.f32 %v3282, %v3286
  %3288 = vrot.lane.b32.xlu0 %v3027, 48
  %v3289 = vpop.permute.xlu0 %3288
  %v3292 = vsel %vm367, %v3287, 0
  %3294 = vmatpush.msra.mxu0 0.0
  %3295 = vmatpush.msra.mxu0 0.0
  %3296 = vmatpush.msra.mxu0 0.0
  %3297 = vmatpush.msra.mxu0 0.0
  %3298 = vmatpush.msra.mxu0 0.0
  %3299 = vmatpush.msra.mxu0 0.0
  %3300 = vmatpush.msra.mxu0 0.0
  %3301 = vmatpush.msra.mxu0 0.0
  %3302 = vmatpush.msra.mxu0 0.0
  %3303 = vmatpush.msra.mxu0 0.0
  %3304 = vmatpush.msra.mxu0 0.0
  %3305 = vmatpush.msra.mxu0 0.0
  %3306 = vmatpush.msra.mxu0 0.0
  %3307 = vmatpush.msra.mxu0 0.0
  %3308 = vmatpush.msra.mxu0 0.0
  %3309 = vmatpush.msra.mxu0 %v3289
  %3310 = vmatmul.f32.gmra.mxu0 %v3292
  %v3311 = vpop.f32.mrf.mxu0
  %v3312 = vadd.f32 0.0, %v3311
  %3313 = vdwg.mxu0
  %3314 = vrot.lane.b32.xlu0 %v3067, 104
  %v3315 = vpop.permute.xlu0 %3314
  %3316 = vrot.lane.b32.xlu0 %v3114, 72
  %v3317 = vpop.permute.xlu0 %3316
  %v3318 = vsel %vm367, %v3315, 0
  %v3320 = vsel %vm367, %v3317, 0
  %3322 = vmatpush.xpose.msra.mxu0 0.0
  %3323 = vmatpush.xpose.msra.mxu0 0.0
  %3324 = vmatpush.xpose.msra.mxu0 0.0
  %3325 = vmatpush.xpose.msra.mxu0 0.0
  %3326 = vmatpush.xpose.msra.mxu0 0.0
  %3327 = vmatpush.xpose.msra.mxu0 0.0
  %3328 = vmatpush.xpose.msra.mxu0 0.0
  %3329 = vmatpush.xpose.msra.mxu0 0.0
  %3330 = vmatpush.xpose.msra.mxu0 0.0
  %3331 = vmatpush.xpose.msra.mxu0 0.0
  %3332 = vmatpush.xpose.msra.mxu0 0.0
  %3333 = vmatpush.xpose.msra.mxu0 0.0
  %3334 = vmatpush.xpose.msra.mxu0 0.0
  %3335 = vmatpush.xpose.msra.mxu0 0.0
  %3336 = vmatpush.xpose.msra.mxu0 0.0
  %3337 = vmatpush.xpose.msra.mxu0 %v3320
  %3338 = vmatmul.f32.gmra.mxu0 %v3318
  %v3339 = vpop.f32.mrf.mxu0
  %v3340 = vadd.f32 0.0, %v3339
  %3341 = vdwg.mxu0
  %v3342 = vsel %vm173, %v3340, -1e+30
  %v3343 = vsel %vm367, %v3342, -inf
  %3344 = vmax.xlane.f32.xlu0 %v3343
  %v3345 = vpop.xlane.xlu0 %3344
  %v3346 = vsub.f32 %v3342, %v3345
  %v3347 = vmul.f32 %v3346, 1.442695
  %v3348 = vpow.pop %v3347
  %v3349 = vsel %vm367, %v3348, 0.0
  %3350 = vadd.xlane.f32.xlu0 %v3349
  %v3351 = vpop.xlane.xlu0 %3350
  %v3352 = vrcp.pop %v3351
  %v3353 = vmul.f32 %v3348, %v3352
  %3354 = vrot.lane.b32.xlu0 %v3027, 40
  %v3355 = vpop.permute.xlu0 %3354
  %v3358 = vsel %vm367, %v3353, 0
  %3360 = vmatpush.msra.mxu0 0.0
  %3361 = vmatpush.msra.mxu0 0.0
  %3362 = vmatpush.msra.mxu0 0.0
  %3363 = vmatpush.msra.mxu0 0.0
  %3364 = vmatpush.msra.mxu0 0.0
  %3365 = vmatpush.msra.mxu0 0.0
  %3366 = vmatpush.msra.mxu0 0.0
  %3367 = vmatpush.msra.mxu0 0.0
  %3368 = vmatpush.msra.mxu0 0.0
  %3369 = vmatpush.msra.mxu0 0.0
  %3370 = vmatpush.msra.mxu0 0.0
  %3371 = vmatpush.msra.mxu0 0.0
  %3372 = vmatpush.msra.mxu0 0.0
  %3373 = vmatpush.msra.mxu0 0.0
  %3374 = vmatpush.msra.mxu0 0.0
  %3375 = vmatpush.msra.mxu0 %v3355
  %3376 = vmatmul.f32.gmra.mxu0 %v3358
  %v3377 = vpop.f32.mrf.mxu0
  %v3378 = vadd.f32 0.0, %v3377
  %3379 = vdwg.mxu0
  %3381 = vrot.lane.b32.xlu0 %v3246, 8
  %v3382 = vpop.permute.xlu0 %3381
  %3385 = vrot.lane.b32.xlu0 %v3312, 16
  %v3386 = vpop.permute.xlu0 %3385
  %3389 = vrot.lane.b32.xlu0 %v3378, 24
  %v3390 = vpop.permute.xlu0 %3389
  %v3392 = vsel %vm367, %v3180, %v3382
  %v3393 = vsel %vm642, %v3392, %v3386
  %v3394 = vsel %vm644, %v3393, %v3390
  %3396 = vrot.lane.b32.xlu0 %v3115, 96
  %v3397 = vpop.permute.xlu0 %3396
  %v3399 = vsel %vm367, %v3068, 0
  %v3401 = vsel %vm367, %v3397, 0
  %3403 = vmatpush.xpose.msra.mxu0 0.0
  %3404 = vmatpush.xpose.msra.mxu0 0.0
  %3405 = vmatpush.xpose.msra.mxu0 0.0
  %3406 = vmatpush.xpose.msra.mxu0 0.0
  %3407 = vmatpush.xpose.msra.mxu0 0.0
  %3408 = vmatpush.xpose.msra.mxu0 0.0
  %3409 = vmatpush.xpose.msra.mxu0 0.0
  %3410 = vmatpush.xpose.msra.mxu0 0.0
  %3411 = vmatpush.xpose.msra.mxu0 0.0
  %3412 = vmatpush.xpose.msra.mxu0 0.0
  %3413 = vmatpush.xpose.msra.mxu0 0.0
  %3414 = vmatpush.xpose.msra.mxu0 0.0
  %3415 = vmatpush.xpose.msra.mxu0 0.0
  %3416 = vmatpush.xpose.msra.mxu0 0.0
  %3417 = vmatpush.xpose.msra.mxu0 0.0
  %3418 = vmatpush.xpose.msra.mxu0 %v3401
  %3419 = vmatmul.f32.gmra.mxu0 %v3399
  %v3420 = vpop.f32.mrf.mxu0
  %v3421 = vadd.f32 0.0, %v3420
  %3422 = vdwg.mxu0
  %v3423 = vsel %vm173, %v3421, -1e+30
  %v3424 = vsel %vm367, %v3423, -inf
  %3425 = vmax.xlane.f32.xlu0 %v3424
  %v3426 = vpop.xlane.xlu0 %3425
  %v3427 = vsub.f32 %v3423, %v3426
  %v3428 = vmul.f32 %v3427, 1.442695
  %v3429 = vpow.pop %v3428
  %v3430 = vsel %vm367, %v3429, 0.0
  %3431 = vadd.xlane.f32.xlu0 %v3430
  %v3432 = vpop.xlane.xlu0 %3431
  %v3433 = vrcp.pop %v3432
  %v3434 = vmul.f32 %v3429, %v3433
  %3435 = vrot.lane.b32.xlu0 %v3030, 64
  %v3436 = vpop.permute.xlu0 %3435
  %v3439 = vsel %vm367, %v3434, 0
  %3441 = vmatpush.msra.mxu0 0.0
  %3442 = vmatpush.msra.mxu0 0.0
  %3443 = vmatpush.msra.mxu0 0.0
  %3444 = vmatpush.msra.mxu0 0.0
  %3445 = vmatpush.msra.mxu0 0.0
  %3446 = vmatpush.msra.mxu0 0.0
  %3447 = vmatpush.msra.mxu0 0.0
  %3448 = vmatpush.msra.mxu0 0.0
  %3449 = vmatpush.msra.mxu0 0.0
  %3450 = vmatpush.msra.mxu0 0.0
  %3451 = vmatpush.msra.mxu0 0.0
  %3452 = vmatpush.msra.mxu0 0.0
  %3453 = vmatpush.msra.mxu0 0.0
  %3454 = vmatpush.msra.mxu0 0.0
  %3455 = vmatpush.msra.mxu0 0.0
  %3456 = vmatpush.msra.mxu0 %v3436
  %3457 = vmatmul.f32.gmra.mxu0 %v3439
  %v3458 = vpop.f32.mrf.mxu0
  %v3459 = vadd.f32 0.0, %v3458
  %3460 = vdwg.mxu0
  %3461 = vrot.lane.b32.xlu0 %v3068, 120
  %v3462 = vpop.permute.xlu0 %3461
  %3463 = vrot.lane.b32.xlu0 %v3115, 88
  %v3464 = vpop.permute.xlu0 %3463
  %v3465 = vsel %vm367, %v3462, 0
  %v3467 = vsel %vm367, %v3464, 0
  %3469 = vmatpush.xpose.msra.mxu0 0.0
  %3470 = vmatpush.xpose.msra.mxu0 0.0
  %3471 = vmatpush.xpose.msra.mxu0 0.0
  %3472 = vmatpush.xpose.msra.mxu0 0.0
  %3473 = vmatpush.xpose.msra.mxu0 0.0
  %3474 = vmatpush.xpose.msra.mxu0 0.0
  %3475 = vmatpush.xpose.msra.mxu0 0.0
  %3476 = vmatpush.xpose.msra.mxu0 0.0
  %3477 = vmatpush.xpose.msra.mxu0 0.0
  %3478 = vmatpush.xpose.msra.mxu0 0.0
  %3479 = vmatpush.xpose.msra.mxu0 0.0
  %3480 = vmatpush.xpose.msra.mxu0 0.0
  %3481 = vmatpush.xpose.msra.mxu0 0.0
  %3482 = vmatpush.xpose.msra.mxu0 0.0
  %3483 = vmatpush.xpose.msra.mxu0 0.0
  %3484 = vmatpush.xpose.msra.mxu0 %v3467
  %3485 = vmatmul.f32.gmra.mxu0 %v3465
  %v3486 = vpop.f32.mrf.mxu0
  %v3487 = vadd.f32 0.0, %v3486
  %3488 = vdwg.mxu0
  %v3489 = vsel %vm173, %v3487, -1e+30
  %v3490 = vsel %vm367, %v3489, -inf
  %3491 = vmax.xlane.f32.xlu0 %v3490
  %v3492 = vpop.xlane.xlu0 %3491
  %v3493 = vsub.f32 %v3489, %v3492
  %v3494 = vmul.f32 %v3493, 1.442695
  %v3495 = vpow.pop %v3494
  %v3496 = vsel %vm367, %v3495, 0.0
  %3497 = vadd.xlane.f32.xlu0 %v3496
  %v3498 = vpop.xlane.xlu0 %3497
  %v3499 = vrcp.pop %v3498
  %v3500 = vmul.f32 %v3495, %v3499
  %3501 = vrot.lane.b32.xlu0 %v3030, 56
  %v3502 = vpop.permute.xlu0 %3501
  %v3505 = vsel %vm367, %v3500, 0
  %3507 = vmatpush.msra.mxu0 0.0
  %3508 = vmatpush.msra.mxu0 0.0
  %3509 = vmatpush.msra.mxu0 0.0
  %3510 = vmatpush.msra.mxu0 0.0
  %3511 = vmatpush.msra.mxu0 0.0
  %3512 = vmatpush.msra.mxu0 0.0
  %3513 = vmatpush.msra.mxu0 0.0
  %3514 = vmatpush.msra.mxu0 0.0
  %3515 = vmatpush.msra.mxu0 0.0
  %3516 = vmatpush.msra.mxu0 0.0
  %3517 = vmatpush.msra.mxu0 0.0
  %3518 = vmatpush.msra.mxu0 0.0
  %3519 = vmatpush.msra.mxu0 0.0
  %3520 = vmatpush.msra.mxu0 0.0
  %3521 = vmatpush.msra.mxu0 0.0
  %3522 = vmatpush.msra.mxu0 %v3502
  %3523 = vmatmul.f32.gmra.mxu0 %v3505
  %v3524 = vpop.f32.mrf.mxu0
  %v3525 = vadd.f32 0.0, %v3524
  %3526 = vdwg.mxu0
  %3527 = vrot.lane.b32.xlu0 %v3068, 112
  %v3528 = vpop.permute.xlu0 %3527
  %3529 = vrot.lane.b32.xlu0 %v3115, 80
  %v3530 = vpop.permute.xlu0 %3529
  %v3531 = vsel %vm367, %v3528, 0
  %v3533 = vsel %vm367, %v3530, 0
  %3535 = vmatpush.xpose.msra.mxu0 0.0
  %3536 = vmatpush.xpose.msra.mxu0 0.0
  %3537 = vmatpush.xpose.msra.mxu0 0.0
  %3538 = vmatpush.xpose.msra.mxu0 0.0
  %3539 = vmatpush.xpose.msra.mxu0 0.0
  %3540 = vmatpush.xpose.msra.mxu0 0.0
  %3541 = vmatpush.xpose.msra.mxu0 0.0
  %3542 = vmatpush.xpose.msra.mxu0 0.0
  %3543 = vmatpush.xpose.msra.mxu0 0.0
  %3544 = vmatpush.xpose.msra.mxu0 0.0
  %3545 = vmatpush.xpose.msra.mxu0 0.0
  %3546 = vmatpush.xpose.msra.mxu0 0.0
  %3547 = vmatpush.xpose.msra.mxu0 0.0
  %3548 = vmatpush.xpose.msra.mxu0 0.0
  %3549 = vmatpush.xpose.msra.mxu0 0.0
  %3550 = vmatpush.xpose.msra.mxu0 %v3533
  %3551 = vmatmul.f32.gmra.mxu0 %v3531
  %v3552 = vpop.f32.mrf.mxu0
  %v3553 = vadd.f32 0.0, %v3552
  %3554 = vdwg.mxu0
  %v3555 = vsel %vm173, %v3553, -1e+30
  %v3556 = vsel %vm367, %v3555, -inf
  %3557 = vmax.xlane.f32.xlu0 %v3556
  %v3558 = vpop.xlane.xlu0 %3557
  %v3559 = vsub.f32 %v3555, %v3558
  %v3560 = vmul.f32 %v3559, 1.442695
  %v3561 = vpow.pop %v3560
  %v3562 = vsel %vm367, %v3561, 0.0
  %3563 = vadd.xlane.f32.xlu0 %v3562
  %v3564 = vpop.xlane.xlu0 %3563
  %v3565 = vrcp.pop %v3564
  %v3566 = vmul.f32 %v3561, %v3565
  %3567 = vrot.lane.b32.xlu0 %v3030, 48
  %v3568 = vpop.permute.xlu0 %3567
  %v3571 = vsel %vm367, %v3566, 0
  %3573 = vmatpush.msra.mxu0 0.0
  %3574 = vmatpush.msra.mxu0 0.0
  %3575 = vmatpush.msra.mxu0 0.0
  %3576 = vmatpush.msra.mxu0 0.0
  %3577 = vmatpush.msra.mxu0 0.0
  %3578 = vmatpush.msra.mxu0 0.0
  %3579 = vmatpush.msra.mxu0 0.0
  %3580 = vmatpush.msra.mxu0 0.0
  %3581 = vmatpush.msra.mxu0 0.0
  %3582 = vmatpush.msra.mxu0 0.0
  %3583 = vmatpush.msra.mxu0 0.0
  %3584 = vmatpush.msra.mxu0 0.0
  %3585 = vmatpush.msra.mxu0 0.0
  %3586 = vmatpush.msra.mxu0 0.0
  %3587 = vmatpush.msra.mxu0 0.0
  %3588 = vmatpush.msra.mxu0 %v3568
  %3589 = vmatmul.f32.gmra.mxu0 %v3571
  %v3590 = vpop.f32.mrf.mxu0
  %v3591 = vadd.f32 0.0, %v3590
  %3592 = vdwg.mxu0
  %3593 = vrot.lane.b32.xlu0 %v3068, 104
  %v3594 = vpop.permute.xlu0 %3593
  %3595 = vrot.lane.b32.xlu0 %v3115, 72
  %v3596 = vpop.permute.xlu0 %3595
  %v3597 = vsel %vm367, %v3594, 0
  %v3599 = vsel %vm367, %v3596, 0
  %3601 = vmatpush.xpose.msra.mxu0 0.0
  %3602 = vmatpush.xpose.msra.mxu0 0.0
  %3603 = vmatpush.xpose.msra.mxu0 0.0
  %3604 = vmatpush.xpose.msra.mxu0 0.0
  %3605 = vmatpush.xpose.msra.mxu0 0.0
  %3606 = vmatpush.xpose.msra.mxu0 0.0
  %3607 = vmatpush.xpose.msra.mxu0 0.0
  %3608 = vmatpush.xpose.msra.mxu0 0.0
  %3609 = vmatpush.xpose.msra.mxu0 0.0
  %3610 = vmatpush.xpose.msra.mxu0 0.0
  %3611 = vmatpush.xpose.msra.mxu0 0.0
  %3612 = vmatpush.xpose.msra.mxu0 0.0
  %3613 = vmatpush.xpose.msra.mxu0 0.0
  %3614 = vmatpush.xpose.msra.mxu0 0.0
  %3615 = vmatpush.xpose.msra.mxu0 0.0
  %3616 = vmatpush.xpose.msra.mxu0 %v3599
  %3617 = vmatmul.f32.gmra.mxu0 %v3597
  %v3618 = vpop.f32.mrf.mxu0
  %v3619 = vadd.f32 0.0, %v3618
  %3620 = vdwg.mxu0
  %v3621 = vsel %vm173, %v3619, -1e+30
  %v3622 = vsel %vm367, %v3621, -inf
  %3623 = vmax.xlane.f32.xlu0 %v3622
  %v3624 = vpop.xlane.xlu0 %3623
  %v3625 = vsub.f32 %v3621, %v3624
  %v3626 = vmul.f32 %v3625, 1.442695
  %v3627 = vpow.pop %v3626
  %v3628 = vsel %vm367, %v3627, 0.0
  %3629 = vadd.xlane.f32.xlu0 %v3628
  %v3630 = vpop.xlane.xlu0 %3629
  %v3631 = vrcp.pop %v3630
  %v3632 = vmul.f32 %v3627, %v3631
  %3633 = vrot.lane.b32.xlu0 %v3030, 40
  %v3634 = vpop.permute.xlu0 %3633
  %v3637 = vsel %vm367, %v3632, 0
  %3639 = vmatpush.msra.mxu0 0.0
  %3640 = vmatpush.msra.mxu0 0.0
  %3641 = vmatpush.msra.mxu0 0.0
  %3642 = vmatpush.msra.mxu0 0.0
  %3643 = vmatpush.msra.mxu0 0.0
  %3644 = vmatpush.msra.mxu0 0.0
  %3645 = vmatpush.msra.mxu0 0.0
  %3646 = vmatpush.msra.mxu0 0.0
  %3647 = vmatpush.msra.mxu0 0.0
  %3648 = vmatpush.msra.mxu0 0.0
  %3649 = vmatpush.msra.mxu0 0.0
  %3650 = vmatpush.msra.mxu0 0.0
  %3651 = vmatpush.msra.mxu0 0.0
  %3652 = vmatpush.msra.mxu0 0.0
  %3653 = vmatpush.msra.mxu0 0.0
  %3654 = vmatpush.msra.mxu0 %v3634
  %3655 = vmatmul.f32.gmra.mxu0 %v3637
  %v3656 = vpop.f32.mrf.mxu0
  %v3657 = vadd.f32 0.0, %v3656
  %3658 = vdwg.mxu0
  %3660 = vrot.lane.b32.xlu0 %v3525, 8
  %v3661 = vpop.permute.xlu0 %3660
  %3664 = vrot.lane.b32.xlu0 %v3591, 16
  %v3665 = vpop.permute.xlu0 %3664
  %3668 = vrot.lane.b32.xlu0 %v3657, 24
  %v3669 = vpop.permute.xlu0 %3668
  %v3671 = vsel %vm367, %v3459, %v3661
  %v3672 = vsel %vm642, %v3671, %v3665
  %v3673 = vsel %vm644, %v3672, %v3669
  %v3675 = vsel %vm198, %v3394, 0
  %v3678 = vsel %vm198, %v3673, 0
  %3680 = vmatpush.msra.mxu0 0.0
  %3681 = vmatpush.msra.mxu0 0.0
  %3682 = vmatpush.msra.mxu0 0.0
  %3683 = vmatpush.msra.mxu0 0.0
  %3684 = vmatpush.msra.mxu0 0.0
  %3685 = vmatpush.msra.mxu0 0.0
  %3686 = vmatpush.msra.mxu0 0.0
  %3687 = vmatpush.msra.mxu0 0.0
  %3688 = vmatpush.msra.mxu0 0.0
  %3689 = vmatpush.msra.mxu0 0.0
  %3690 = vmatpush.msra.mxu0 0.0
  %3691 = vmatpush.msra.mxu0 0.0
  %3692 = vmatpush.msra.mxu0 %v2945
  %3693 = vmatpush.msra.mxu0 %v2944
  %3694 = vmatpush.msra.mxu0 %v2943
  %3695 = vmatpush.msra.mxu0 %v2942
  %3696 = vmatmul.f32.gmra.mxu0 %v3675
  %v3697 = vpop.f32.mrf.mxu0
  %v3698 = vadd.f32 0.0, %v3697
  %3699 = vmatmul.f32.gmra.mxu0 %v3678
  %v3700 = vpop.f32.mrf.mxu0
  %v3701 = vadd.f32 0.0, %v3700
  %3702 = vdwg.mxu0
  %v3703 = vadd.f32 %v2934, %v3698
  %v3704 = vadd.f32 %v2935, %v3701
  %v3705 = vmul.f32 %v3703, %v3703
  %v3706 = vmul.f32 %v3704, %v3704
  %v3707 = vsel %vm198, %v3705, 0.0
  %3708 = vadd.xlane.f32.xlu0 %v3707
  %v3709 = vpop.xlane.xlu0 %3708
  %v3710 = vsel %vm198, %v3706, 0.0
  %3711 = vadd.xlane.f32.xlu0 %v3710
  %v3712 = vpop.xlane.xlu0 %3711
  %v3713 = vmul.f32 %v3709, %v211
  %v3714 = vmul.f32 %v3712, %v211
  %v3715 = vadd.f32 %v3713, 1e-06
  %v3716 = vadd.f32 %v3714, 1e-06
  %v3717 = vrsqrt.pop %v3715
  %v3718 = vmul.f32 %v3717, %v3715
  %v3719 = vmul.f32 %v3718, %v3717
  %v3720 = vmul.f32 0.5, %v3719
  %v3721 = vsub.f32 1.5, %v3720
  %v3722 = vmul.f32 %v3717, %v3721
  %vm3723 = vweird.f32 %v3715
  %vm3724 = vweird.f32 %v3717
  %vm3725 = vmor %vm3723, %vm3724
  %v3726 = vsel %vm3725, %v3717, %v3722
  %v3727 = vrsqrt.pop %v3716
  %v3728 = vmul.f32 %v3727, %v3716
  %v3729 = vmul.f32 %v3728, %v3727
  %v3730 = vmul.f32 0.5, %v3729
  %v3731 = vsub.f32 1.5, %v3730
  %v3732 = vmul.f32 %v3727, %v3731
  %vm3733 = vweird.f32 %v3716
  %vm3734 = vweird.f32 %v3727
  %vm3735 = vmor %vm3733, %vm3734
  %v3736 = vsel %vm3735, %v3727, %v3732
  %v3737 = vmul.f32 %v3703, %v3726
  %v3738 = vmul.f32 %v3704, %v3736
  %v3740 = vperm.slane %v2963, 0
  %v3742 = vmul.f32 %v3737, %v3740
  %v3743 = vmul.f32 %v3738, %v3740
  %v3745 = vsel %vm198, %v3742, 0
  %v3748 = vsel %vm198, %v3743, 0
  %3750 = vmatpush.msra.mxu0 0.0
  %3751 = vmatpush.msra.mxu0 0.0
  %3752 = vmatpush.msra.mxu0 0.0
  %3753 = vmatpush.msra.mxu0 0.0
  %3754 = vmatpush.msra.mxu0 0.0
  %3755 = vmatpush.msra.mxu0 0.0
  %3756 = vmatpush.msra.mxu0 0.0
  %3757 = vmatpush.msra.mxu0 0.0
  %3758 = vmatpush.msra.mxu0 0.0
  %3759 = vmatpush.msra.mxu0 0.0
  %3760 = vmatpush.msra.mxu0 0.0
  %3761 = vmatpush.msra.mxu0 0.0
  %3762 = vmatpush.msra.mxu0 %v2950
  %3763 = vmatpush.msra.mxu0 %v2949
  %3764 = vmatpush.msra.mxu0 %v2948
  %3765 = vmatpush.msra.mxu0 %v2947
  %3766 = vmatmul.f32.gmra.mxu0 %v3745
  %v3767 = vpop.f32.mrf.mxu0
  %v3768 = vadd.f32 0.0, %v3767
  %3769 = vmatmul.f32.gmra.mxu0 %v3748
  %v3770 = vpop.f32.mrf.mxu0
  %v3771 = vadd.f32 0.0, %v3770
  %3772 = vdwg.mxu0
  %v3773 = vxor.u32 %v3768, 2147483648
  %v3774 = vxor.u32 %v3771, 2147483648
  %v3775 = vmul.f32 %v3773, 1.442695
  %v3776 = vpow.pop %v3775
  %v3777 = vmul.f32 %v3774, 1.442695
  %v3778 = vpow.pop %v3777
  %v3779 = vadd.f32 %v3776, 1.0
  %v3780 = vadd.f32 %v3778, 1.0
  %v3781 = vrcp.pop %v3779
  %v3782 = vmul.f32 %v3779, %v3781
  %v3783 = vsub.f32 1.0, %v3782
  %v3784 = vmul.f32 %v3781, %v3783
  %v3785 = vadd.f32 %v3781, %v3784
  %vm3786 = vweird.f32 %v3779
  %vm3787 = vweird.f32 %v3781
  %vm3788 = vmor %vm3786, %vm3787
  %v3789 = vsel %vm3788, %v3781, %v3785
  %v3790 = vand.u32 2147483647, %v3779
  %vm3791 = vcmp.eq.f32.partialorder %v3790, 8.507059e+37
  %v3792 = vand.u32 %v3779, 2147483648
  %v3793 = vor.u32 1.1754944e-38, %v3792
  %v3794 = vsel %vm3791, %v3793, %v3789
  %v3795 = vmul.f32 1.0, %v3794
  %v3796 = vrcp.pop %v3780
  %v3797 = vmul.f32 %v3780, %v3796
  %v3798 = vsub.f32 1.0, %v3797
  %v3799 = vmul.f32 %v3796, %v3798
  %v3800 = vadd.f32 %v3796, %v3799
  %vm3801 = vweird.f32 %v3780
  %vm3802 = vweird.f32 %v3796
  %vm3803 = vmor %vm3801, %vm3802
  %v3804 = vsel %vm3803, %v3796, %v3800
  %v3805 = vand.u32 2147483647, %v3780
  %vm3806 = vcmp.eq.f32.partialorder %v3805, 8.507059e+37
  %v3807 = vand.u32 %v3780, 2147483648
  %v3808 = vor.u32 1.1754944e-38, %v3807
  %v3809 = vsel %vm3806, %v3808, %v3804
  %v3810 = vmul.f32 1.0, %v3809
  %v3811 = vmul.f32 %v3768, %v3795
  %v3812 = vmul.f32 %v3771, %v3810
  %3815 = vrot.lane.b32.xlu0 %v3768, 64
  %v3816 = vpop.permute.xlu0 %3815
  %3817 = vrot.lane.b32.xlu0 %v3771, 64
  %v3818 = vpop.permute.xlu0 %3817
  %v3821 = vmul.f32 %v3811, %v3816
  %v3822 = vmul.f32 %v3812, %v3818
  %v3824 = vsel %vm1074, %v3821, 0
  %v3827 = vsel %vm1074, %v3822, 0
  %3829 = vmatpush.msra.mxu0 0.0
  %3830 = vmatpush.msra.mxu0 0.0
  %3831 = vmatpush.msra.mxu0 0.0
  %3832 = vmatpush.msra.mxu0 0.0
  %3833 = vmatpush.msra.mxu0 0.0
  %3834 = vmatpush.msra.mxu0 0.0
  %3835 = vmatpush.msra.mxu0 0.0
  %3836 = vmatpush.msra.mxu0 0.0
  %3837 = vmatpush.msra.mxu0 %v2959
  %3838 = vmatpush.msra.mxu0 %v2958
  %3839 = vmatpush.msra.mxu0 %v2957
  %3840 = vmatpush.msra.mxu0 %v2956
  %3841 = vmatpush.msra.mxu0 %v2955
  %3842 = vmatpush.msra.mxu0 %v2954
  %3843 = vmatpush.msra.mxu0 %v2953
  %3844 = vmatpush.msra.mxu0 %v2952
  %3845 = vmatmul.f32.gmra.mxu0 %v3824
  %v3846 = vpop.f32.mrf.mxu0
  %v3847 = vadd.f32 0.0, %v3846
  %3848 = vmatmul.f32.gmra.mxu0 %v3827
  %v3849 = vpop.f32.mrf.mxu0
  %v3850 = vadd.f32 0.0, %v3849
  %3851 = vdwg.mxu0
  %v3852 = vadd.f32 %v3703, %v3847
  %v3853 = vadd.f32 %v3704, %v3850
  %v3854 = vld [vmem:[%s14] sm:$0x1]
  %v3855 = vmul.f32 %v3852, %v3852
  %v3856 = vmul.f32 %v3853, %v3853
  %v3857 = vsel %vm198, %v3855, 0.0
  %3858 = vadd.xlane.f32.xlu0 %v3857
  %v3859 = vpop.xlane.xlu0 %3858
  %v3860 = vsel %vm198, %v3856, 0.0
  %3861 = vadd.xlane.f32.xlu0 %v3860
  %v3862 = vpop.xlane.xlu0 %3861
  %v3863 = vmul.f32 %v3859, %v211
  %v3864 = vmul.f32 %v3862, %v211
  %v3865 = vadd.f32 %v3863, 1e-06
  %v3866 = vadd.f32 %v3864, 1e-06
  %v3867 = vrsqrt.pop %v3865
  %v3868 = vmul.f32 %v3867, %v3865
  %v3869 = vmul.f32 %v3868, %v3867
  %v3870 = vmul.f32 0.5, %v3869
  %v3871 = vsub.f32 1.5, %v3870
  %v3872 = vmul.f32 %v3867, %v3871
  %vm3873 = vweird.f32 %v3865
  %vm3874 = vweird.f32 %v3867
  %vm3875 = vmor %vm3873, %vm3874
  %v3876 = vsel %vm3875, %v3867, %v3872
  %v3877 = vrsqrt.pop %v3866
  %v3878 = vmul.f32 %v3877, %v3866
  %v3879 = vmul.f32 %v3878, %v3877
  %v3880 = vmul.f32 0.5, %v3879
  %v3881 = vsub.f32 1.5, %v3880
  %v3882 = vmul.f32 %v3877, %v3881
  %vm3883 = vweird.f32 %v3866
  %vm3884 = vweird.f32 %v3877
  %vm3885 = vmor %vm3883, %vm3884
  %v3886 = vsel %vm3885, %v3877, %v3882
  %v3887 = vmul.f32 %v3852, %v3876
  %v3888 = vmul.f32 %v3853, %v3886
  %v3890 = vperm.slane %v3854, 0
  %v3892 = vmul.f32 %v3887, %v3890
  %v3893 = vmul.f32 %v3888, %v3890
  %v3894 = vmul.f32 %v3892, %v3892
  %v3895 = vmul.f32 %v3893, %v3893
  %v3896 = vsel %vm198, %v3894, 0.0
  %3897 = vadd.xlane.f32.xlu0 %v3896
  %v3898 = vpop.xlane.xlu0 %3897
  %v3899 = vsel %vm198, %v3895, 0.0
  %3900 = vadd.xlane.f32.xlu0 %v3899
  %v3901 = vpop.xlane.xlu0 %3900
  %v3902 = vmul.f32 %v3898, %v211
  %v3903 = vmul.f32 %v3901, %v211
  %v3904 = vadd.f32 %v3902, 1e-06
  %v3905 = vadd.f32 %v3903, 1e-06
  %v3906 = vrsqrt.pop %v3904
  %v3907 = vmul.f32 %v3906, %v3904
  %v3908 = vmul.f32 %v3907, %v3906
  %v3909 = vmul.f32 0.5, %v3908
  %v3910 = vsub.f32 1.5, %v3909
  %v3911 = vmul.f32 %v3906, %v3910
  %vm3912 = vweird.f32 %v3904
  %vm3913 = vweird.f32 %v3906
  %vm3914 = vmor %vm3912, %vm3913
  %v3915 = vsel %vm3914, %v3906, %v3911
  %v3916 = vrsqrt.pop %v3905
  %v3917 = vmul.f32 %v3916, %v3905
  %v3918 = vmul.f32 %v3917, %v3916
  %v3919 = vmul.f32 0.5, %v3918
  %v3920 = vsub.f32 1.5, %v3919
  %v3921 = vmul.f32 %v3916, %v3920
  %vm3922 = vweird.f32 %v3905
  %vm3923 = vweird.f32 %v3916
  %vm3924 = vmor %vm3922, %vm3923
  %v3925 = vsel %vm3924, %v3916, %v3921
  %v3926 = vmul.f32 %v3892, %v3915
  %v3927 = vmul.f32 %v3893, %v3925
  %v3928 = vmul.f32 %v3926, %v3890
  %v3929 = vmul.f32 %v3927, %v3890
  %v3930 = vld [vmem:[%s15] sm:$0xff]
  %v3931 = vld [vmem:[%s15 + $0x8] sm:$0xff]
  %v3932 = vld [vmem:[%s15 + $0x10] sm:$0xff]
  %v3933 = vld [vmem:[%s15 + $0x18] sm:$0xff]
  %v3934 = vld [vmem:[%s15 + $0x20] sm:$0xff]
  %v3935 = vld [vmem:[%s15 + $0x28] sm:$0xff]
  %v3936 = vld [vmem:[%s15 + $0x30] sm:$0xff]
  %v3937 = vld [vmem:[%s15 + $0x38] sm:$0xff]
  %v3939 = vsel %vm198, %v3928, 0
  %v3942 = vsel %vm198, %v3929, 0
  %3944 = vmatpush.msra.mxu0 0.0
  %3945 = vmatpush.msra.mxu0 0.0
  %3946 = vmatpush.msra.mxu0 0.0
  %3947 = vmatpush.msra.mxu0 0.0
  %3948 = vmatpush.msra.mxu0 0.0
  %3949 = vmatpush.msra.mxu0 0.0
  %3950 = vmatpush.msra.mxu0 0.0
  %3951 = vmatpush.msra.mxu0 0.0
  %3952 = vmatpush.msra.mxu0 0.0
  %3953 = vmatpush.msra.mxu0 0.0
  %3954 = vmatpush.msra.mxu0 0.0
  %3955 = vmatpush.msra.mxu0 0.0
  %3956 = vmatpush.msra.mxu0 %v3936
  %3957 = vmatpush.msra.mxu0 %v3934
  %3958 = vmatpush.msra.mxu0 %v3932
  %3959 = vmatpush.msra.mxu0 %v3930
  %3960 = vmatmul.f32.gmra.mxu0 %v3939
  %v3961 = vpop.f32.mrf.mxu0
  %v3962 = vadd.f32 0.0, %v3961
  %3963 = vmatmul.f32.gmra.mxu0 %v3942
  %v3964 = vpop.f32.mrf.mxu0
  %v3965 = vadd.f32 0.0, %v3964
  %3966 = vdwg.mxu0
  %3967 = vmatpush.msra.mxu0 0.0
  %3968 = vmatpush.msra.mxu0 0.0
  %3969 = vmatpush.msra.mxu0 0.0
  %3970 = vmatpush.msra.mxu0 0.0
  %3971 = vmatpush.msra.mxu0 0.0
  %3972 = vmatpush.msra.mxu0 0.0
  %3973 = vmatpush.msra.mxu0 0.0
  %3974 = vmatpush.msra.mxu0 0.0
  %3975 = vmatpush.msra.mxu0 0.0
  %3976 = vmatpush.msra.mxu0 0.0
  %3977 = vmatpush.msra.mxu0 0.0
  %3978 = vmatpush.msra.mxu0 0.0
  %3979 = vmatpush.msra.mxu0 %v3937
  %3980 = vmatpush.msra.mxu0 %v3935
  %3981 = vmatpush.msra.mxu0 %v3933
  %3982 = vmatpush.msra.mxu0 %v3931
  %3983 = vmatmul.f32.gmra.mxu0 %v3939
  %v3984 = vpop.f32.mrf.mxu0
  %v3985 = vadd.f32 0.0, %v3984
  %3986 = vmatmul.f32.gmra.mxu0 %v3942
  %v3987 = vpop.f32.mrf.mxu0
  %v3988 = vadd.f32 0.0, %v3987
  %3989 = vdwg.mxu0
  %3990 = vst [vmem:[%s19] sm:$0xff] %v3962
  %3991 = vst [vmem:[%s19 + $0x8] sm:$0xff] %v3985
  %3992 = vst [vmem:[%s19 + $0x10] sm:$0xff] %v3965
  %3993 = vst [vmem:[%s19 + $0x18] sm:$0xff] %v3988
  %s3994 = scalar_lea.vmem %s8, 64
  %v3995 = vld [vmem:[%s3994] sm:$0xff]
  %v3996 = vld [vmem:[%s3994 + $0x8] sm:$0xff]
  %v3997 = vld [vmem:[%s3994 + $0x10] sm:$0xff]
  %v3998 = vld [vmem:[%s3994 + $0x18] sm:$0xff]
  %s3999 = scalar_lea.vmem %s9, 64
  %v4000 = vld [vmem:[%s3999] sm:$0xff]
  %v4001 = vld [vmem:[%s3999 + $0x8] sm:$0xff]
  %v4002 = vld [vmem:[%s3999 + $0x10] sm:$0xff]
  %v4003 = vld [vmem:[%s3999 + $0x18] sm:$0xff]
  %s4004 = scalar_lea.vmem %s10, 64
  %v4005 = vld [vmem:[%s4004] sm:$0xff]
  %v4006 = vld [vmem:[%s4004 + $0x8] sm:$0xff]
  %v4007 = vld [vmem:[%s4004 + $0x10] sm:$0xff]
  %v4008 = vld [vmem:[%s4004 + $0x18] sm:$0xff]
  %s4009 = scalar_lea.vmem %s11, 128
  %v4010 = vld [vmem:[%s4009] sm:$0xff]
  %v4011 = vld [vmem:[%s4009 + $0x8] sm:$0xff]
  %v4012 = vld [vmem:[%s4009 + $0x10] sm:$0xff]
  %v4013 = vld [vmem:[%s4009 + $0x18] sm:$0xff]
  %v4014 = vld [vmem:[%s4009 + $0x20] sm:$0xff]
  %v4015 = vld [vmem:[%s4009 + $0x28] sm:$0xff]
  %v4016 = vld [vmem:[%s4009 + $0x30] sm:$0xff]
  %v4017 = vld [vmem:[%s4009 + $0x38] sm:$0xff]
  %s4018 = scalar_lea.vmem %s12, 2
  %v4019 = vld [vmem:[%s4018] sm:$0x1]
  %s4020 = scalar_lea.vmem %s13, 2
  %v4021 = vld [vmem:[%s4020] sm:$0x1]
  %v4023 = vperm.slane %v4019, 0
  %v4025 = vmul.f32 %v2078, %v4023
  %v4026 = vmul.f32 %v2079, %v4023
  %v4028 = vsel %vm198, %v4025, 0
  %v4031 = vsel %vm198, %v4026, 0
  %4033 = vmatpush.msra.mxu0 0.0
  %4034 = vmatpush.msra.mxu0 0.0
  %4035 = vmatpush.msra.mxu0 0.0
  %4036 = vmatpush.msra.mxu0 0.0
  %4037 = vmatpush.msra.mxu0 0.0
  %4038 = vmatpush.msra.mxu0 0.0
  %4039 = vmatpush.msra.mxu0 0.0
  %4040 = vmatpush.msra.mxu0 0.0
  %4041 = vmatpush.msra.mxu0 0.0
  %4042 = vmatpush.msra.mxu0 0.0
  %4043 = vmatpush.msra.mxu0 0.0
  %4044 = vmatpush.msra.mxu0 0.0
  %4045 = vmatpush.msra.mxu0 %v3998
  %4046 = vmatpush.msra.mxu0 %v3997
  %4047 = vmatpush.msra.mxu0 %v3996
  %4048 = vmatpush.msra.mxu0 %v3995
  %4049 = vmatmul.f32.gmra.mxu0 %v4028
  %v4050 = vpop.f32.mrf.mxu0
  %v4051 = vadd.f32 0.0, %v4050
  %4052 = vmatmul.f32.gmra.mxu0 %v4031
  %v4053 = vpop.f32.mrf.mxu0
  %v4054 = vadd.f32 0.0, %v4053
  %4055 = vdwg.mxu0
  %v4056 = vmul.f32 %v4051, 0.35355338
  %v4057 = vmul.f32 %v4054, 0.35355338
  %v4058 = vmul.f32 %v4056, %v163
  %v4059 = vmul.f32 %v4057, %v164
  %v4061 = vsel %vm198, %v4056, 0
  %v4064 = vsel %vm198, %v4057, 0
  %4066 = vmatpush.msra.mxu0 0.0
  %4067 = vmatpush.msra.mxu0 0.0
  %4068 = vmatpush.msra.mxu0 0.0
  %4069 = vmatpush.msra.mxu0 0.0
  %4070 = vmatpush.msra.mxu0 0.0
  %4071 = vmatpush.msra.mxu0 0.0
  %4072 = vmatpush.msra.mxu0 0.0
  %4073 = vmatpush.msra.mxu0 0.0
  %4074 = vmatpush.msra.mxu0 0.0
  %4075 = vmatpush.msra.mxu0 0.0
  %4076 = vmatpush.msra.mxu0 0.0
  %4077 = vmatpush.msra.mxu0 0.0
  %4078 = vmatpush.msra.mxu0 %v170
  %4079 = vmatpush.msra.mxu0 %v169
  %4080 = vmatpush.msra.mxu0 %v168
  %4081 = vmatpush.msra.mxu0 %v167
  %4082 = vmatmul.f32.gmra.mxu0 %v4061
  %v4083 = vpop.f32.mrf.mxu0
  %v4084 = vadd.f32 0.0, %v4083
  %4085 = vmatmul.f32.gmra.mxu0 %v4064
  %v4086 = vpop.f32.mrf.mxu0
  %v4087 = vadd.f32 0.0, %v4086
  %4088 = vdwg.mxu0
  %v4089 = vmul.f32 %v4084, %v165
  %v4090 = vmul.f32 %v4087, %v166
  %v4091 = vadd.f32 %v4058, %v4089
  %v4092 = vadd.f32 %v4059, %v4090
  %v4093 = vmul.f32 %v4051, %v312
  %v4094 = vmul.f32 %v4054, %v314
  %4097 = vrot.lane.b32.xlu0 %v4051, 96
  %v4098 = vpop.permute.xlu0 %4097
  %4099 = vrot.lane.b32.xlu0 %v4054, 96
  %v4100 = vpop.permute.xlu0 %4099
  %v4101 = vsel %vm198, %v4098, 0
  %v4103 = vsel %vm198, %v4100, 0
  %4105 = vmatpush.msra.mxu0 0.0
  %4106 = vmatpush.msra.mxu0 0.0
  %4107 = vmatpush.msra.mxu0 0.0
  %4108 = vmatpush.msra.mxu0 0.0
  %4109 = vmatpush.msra.mxu0 0.0
  %4110 = vmatpush.msra.mxu0 0.0
  %4111 = vmatpush.msra.mxu0 0.0
  %4112 = vmatpush.msra.mxu0 0.0
  %4113 = vmatpush.msra.mxu0 0.0
  %4114 = vmatpush.msra.mxu0 0.0
  %4115 = vmatpush.msra.mxu0 0.0
  %4116 = vmatpush.msra.mxu0 0.0
  %4117 = vmatpush.msra.mxu0 %v170
  %4118 = vmatpush.msra.mxu0 %v169
  %4119 = vmatpush.msra.mxu0 %v168
  %4120 = vmatpush.msra.mxu0 %v167
  %4121 = vmatmul.f32.gmra.mxu0 %v4101
  %v4122 = vpop.f32.mrf.mxu0
  %v4123 = vadd.f32 0.0, %v4122
  %4124 = vmatmul.f32.gmra.mxu0 %v4103
  %v4125 = vpop.f32.mrf.mxu0
  %v4126 = vadd.f32 0.0, %v4125
  %4127 = vdwg.mxu0
  %v4128 = vmul.f32 %v4123, %v165
  %v4129 = vmul.f32 %v4126, %v166
  %4132 = vrot.lane.b32.xlu0 %v4128, 32
  %v4133 = vpop.permute.xlu0 %4132
  %4134 = vrot.lane.b32.xlu0 %v4129, 32
  %v4135 = vpop.permute.xlu0 %4134
  %v4138 = vadd.f32 %v4093, %v4133
  %v4139 = vadd.f32 %v4094, %v4135
  %4141 = vrot.lane.b32.xlu0 %v4138, 96
  %v4142 = vpop.permute.xlu0 %4141
  %v4144 = vsel %vm367, %v4091, 0
  %v4146 = vsel %vm367, %v4142, 0
  %4148 = vmatpush.xpose.msra.mxu0 0.0
  %4149 = vmatpush.xpose.msra.mxu0 0.0
  %4150 = vmatpush.xpose.msra.mxu0 0.0
  %4151 = vmatpush.xpose.msra.mxu0 0.0
  %4152 = vmatpush.xpose.msra.mxu0 0.0
  %4153 = vmatpush.xpose.msra.mxu0 0.0
  %4154 = vmatpush.xpose.msra.mxu0 0.0
  %4155 = vmatpush.xpose.msra.mxu0 0.0
  %4156 = vmatpush.xpose.msra.mxu0 0.0
  %4157 = vmatpush.xpose.msra.mxu0 0.0
  %4158 = vmatpush.xpose.msra.mxu0 0.0
  %4159 = vmatpush.xpose.msra.mxu0 0.0
  %4160 = vmatpush.xpose.msra.mxu0 0.0
  %4161 = vmatpush.xpose.msra.mxu0 0.0
  %4162 = vmatpush.xpose.msra.mxu0 0.0
  %4163 = vmatpush.xpose.msra.mxu0 %v4146
  %4164 = vmatmul.f32.gmra.mxu0 %v4144
  %v4165 = vpop.f32.mrf.mxu0
  %v4166 = vadd.f32 0.0, %v4165
  %4167 = vdwg.mxu0
  %v4168 = vsel %vm173, %v4166, -1e+30
  %v4169 = vsel %vm367, %v4168, -inf
  %4170 = vmax.xlane.f32.xlu0 %v4169
  %v4171 = vpop.xlane.xlu0 %4170
  %v4172 = vsub.f32 %v4168, %v4171
  %v4173 = vmul.f32 %v4172, 1.442695
  %v4174 = vpow.pop %v4173
  %v4175 = vsel %vm367, %v4174, 0.0
  %4176 = vadd.xlane.f32.xlu0 %v4175
  %v4177 = vpop.xlane.xlu0 %4176
  %v4178 = vrcp.pop %v4177
  %v4179 = vmul.f32 %v4174, %v4178
  %4180 = vrot.lane.b32.xlu0 %v4051, 64
  %v4181 = vpop.permute.xlu0 %4180
  %v4184 = vsel %vm367, %v4179, 0
  %4186 = vmatpush.msra.mxu0 0.0
  %4187 = vmatpush.msra.mxu0 0.0
  %4188 = vmatpush.msra.mxu0 0.0
  %4189 = vmatpush.msra.mxu0 0.0
  %4190 = vmatpush.msra.mxu0 0.0
  %4191 = vmatpush.msra.mxu0 0.0
  %4192 = vmatpush.msra.mxu0 0.0
  %4193 = vmatpush.msra.mxu0 0.0
  %4194 = vmatpush.msra.mxu0 0.0
  %4195 = vmatpush.msra.mxu0 0.0
  %4196 = vmatpush.msra.mxu0 0.0
  %4197 = vmatpush.msra.mxu0 0.0
  %4198 = vmatpush.msra.mxu0 0.0
  %4199 = vmatpush.msra.mxu0 0.0
  %4200 = vmatpush.msra.mxu0 0.0
  %4201 = vmatpush.msra.mxu0 %v4181
  %4202 = vmatmul.f32.gmra.mxu0 %v4184
  %v4203 = vpop.f32.mrf.mxu0
  %v4204 = vadd.f32 0.0, %v4203
  %4205 = vdwg.mxu0
  %4206 = vrot.lane.b32.xlu0 %v4091, 120
  %v4207 = vpop.permute.xlu0 %4206
  %4208 = vrot.lane.b32.xlu0 %v4138, 88
  %v4209 = vpop.permute.xlu0 %4208
  %v4210 = vsel %vm367, %v4207, 0
  %v4212 = vsel %vm367, %v4209, 0
  %4214 = vmatpush.xpose.msra.mxu0 0.0
  %4215 = vmatpush.xpose.msra.mxu0 0.0
  %4216 = vmatpush.xpose.msra.mxu0 0.0
  %4217 = vmatpush.xpose.msra.mxu0 0.0
  %4218 = vmatpush.xpose.msra.mxu0 0.0
  %4219 = vmatpush.xpose.msra.mxu0 0.0
  %4220 = vmatpush.xpose.msra.mxu0 0.0
  %4221 = vmatpush.xpose.msra.mxu0 0.0
  %4222 = vmatpush.xpose.msra.mxu0 0.0
  %4223 = vmatpush.xpose.msra.mxu0 0.0
  %4224 = vmatpush.xpose.msra.mxu0 0.0
  %4225 = vmatpush.xpose.msra.mxu0 0.0
  %4226 = vmatpush.xpose.msra.mxu0 0.0
  %4227 = vmatpush.xpose.msra.mxu0 0.0
  %4228 = vmatpush.xpose.msra.mxu0 0.0
  %4229 = vmatpush.xpose.msra.mxu0 %v4212
  %4230 = vmatmul.f32.gmra.mxu0 %v4210
  %v4231 = vpop.f32.mrf.mxu0
  %v4232 = vadd.f32 0.0, %v4231
  %4233 = vdwg.mxu0
  %v4234 = vsel %vm173, %v4232, -1e+30
  %v4235 = vsel %vm367, %v4234, -inf
  %4236 = vmax.xlane.f32.xlu0 %v4235
  %v4237 = vpop.xlane.xlu0 %4236
  %v4238 = vsub.f32 %v4234, %v4237
  %v4239 = vmul.f32 %v4238, 1.442695
  %v4240 = vpow.pop %v4239
  %v4241 = vsel %vm367, %v4240, 0.0
  %4242 = vadd.xlane.f32.xlu0 %v4241
  %v4243 = vpop.xlane.xlu0 %4242
  %v4244 = vrcp.pop %v4243
  %v4245 = vmul.f32 %v4240, %v4244
  %4246 = vrot.lane.b32.xlu0 %v4051, 56
  %v4247 = vpop.permute.xlu0 %4246
  %v4250 = vsel %vm367, %v4245, 0
  %4252 = vmatpush.msra.mxu0 0.0
  %4253 = vmatpush.msra.mxu0 0.0
  %4254 = vmatpush.msra.mxu0 0.0
  %4255 = vmatpush.msra.mxu0 0.0
  %4256 = vmatpush.msra.mxu0 0.0
  %4257 = vmatpush.msra.mxu0 0.0
  %4258 = vmatpush.msra.mxu0 0.0
  %4259 = vmatpush.msra.mxu0 0.0
  %4260 = vmatpush.msra.mxu0 0.0
  %4261 = vmatpush.msra.mxu0 0.0
  %4262 = vmatpush.msra.mxu0 0.0
  %4263 = vmatpush.msra.mxu0 0.0
  %4264 = vmatpush.msra.mxu0 0.0
  %4265 = vmatpush.msra.mxu0 0.0
  %4266 = vmatpush.msra.mxu0 0.0
  %4267 = vmatpush.msra.mxu0 %v4247
  %4268 = vmatmul.f32.gmra.mxu0 %v4250
  %v4269 = vpop.f32.mrf.mxu0
  %v4270 = vadd.f32 0.0, %v4269
  %4271 = vdwg.mxu0
  %4272 = vrot.lane.b32.xlu0 %v4091, 112
  %v4273 = vpop.permute.xlu0 %4272
  %4274 = vrot.lane.b32.xlu0 %v4138, 80
  %v4275 = vpop.permute.xlu0 %4274
  %v4276 = vsel %vm367, %v4273, 0
  %v4278 = vsel %vm367, %v4275, 0
  %4280 = vmatpush.xpose.msra.mxu0 0.0
  %4281 = vmatpush.xpose.msra.mxu0 0.0
  %4282 = vmatpush.xpose.msra.mxu0 0.0
  %4283 = vmatpush.xpose.msra.mxu0 0.0
  %4284 = vmatpush.xpose.msra.mxu0 0.0
  %4285 = vmatpush.xpose.msra.mxu0 0.0
  %4286 = vmatpush.xpose.msra.mxu0 0.0
  %4287 = vmatpush.xpose.msra.mxu0 0.0
  %4288 = vmatpush.xpose.msra.mxu0 0.0
  %4289 = vmatpush.xpose.msra.mxu0 0.0
  %4290 = vmatpush.xpose.msra.mxu0 0.0
  %4291 = vmatpush.xpose.msra.mxu0 0.0
  %4292 = vmatpush.xpose.msra.mxu0 0.0
  %4293 = vmatpush.xpose.msra.mxu0 0.0
  %4294 = vmatpush.xpose.msra.mxu0 0.0
  %4295 = vmatpush.xpose.msra.mxu0 %v4278
  %4296 = vmatmul.f32.gmra.mxu0 %v4276
  %v4297 = vpop.f32.mrf.mxu0
  %v4298 = vadd.f32 0.0, %v4297
  %4299 = vdwg.mxu0
  %v4300 = vsel %vm173, %v4298, -1e+30
  %v4301 = vsel %vm367, %v4300, -inf
  %4302 = vmax.xlane.f32.xlu0 %v4301
  %v4303 = vpop.xlane.xlu0 %4302
  %v4304 = vsub.f32 %v4300, %v4303
  %v4305 = vmul.f32 %v4304, 1.442695
  %v4306 = vpow.pop %v4305
  %v4307 = vsel %vm367, %v4306, 0.0
  %4308 = vadd.xlane.f32.xlu0 %v4307
  %v4309 = vpop.xlane.xlu0 %4308
  %v4310 = vrcp.pop %v4309
  %v4311 = vmul.f32 %v4306, %v4310
  %4312 = vrot.lane.b32.xlu0 %v4051, 48
  %v4313 = vpop.permute.xlu0 %4312
  %v4316 = vsel %vm367, %v4311, 0
  %4318 = vmatpush.msra.mxu0 0.0
  %4319 = vmatpush.msra.mxu0 0.0
  %4320 = vmatpush.msra.mxu0 0.0
  %4321 = vmatpush.msra.mxu0 0.0
  %4322 = vmatpush.msra.mxu0 0.0
  %4323 = vmatpush.msra.mxu0 0.0
  %4324 = vmatpush.msra.mxu0 0.0
  %4325 = vmatpush.msra.mxu0 0.0
  %4326 = vmatpush.msra.mxu0 0.0
  %4327 = vmatpush.msra.mxu0 0.0
  %4328 = vmatpush.msra.mxu0 0.0
  %4329 = vmatpush.msra.mxu0 0.0
  %4330 = vmatpush.msra.mxu0 0.0
  %4331 = vmatpush.msra.mxu0 0.0
  %4332 = vmatpush.msra.mxu0 0.0
  %4333 = vmatpush.msra.mxu0 %v4313
  %4334 = vmatmul.f32.gmra.mxu0 %v4316
  %v4335 = vpop.f32.mrf.mxu0
  %v4336 = vadd.f32 0.0, %v4335
  %4337 = vdwg.mxu0
  %4338 = vrot.lane.b32.xlu0 %v4091, 104
  %v4339 = vpop.permute.xlu0 %4338
  %4340 = vrot.lane.b32.xlu0 %v4138, 72
  %v4341 = vpop.permute.xlu0 %4340
  %v4342 = vsel %vm367, %v4339, 0
  %v4344 = vsel %vm367, %v4341, 0
  %4346 = vmatpush.xpose.msra.mxu0 0.0
  %4347 = vmatpush.xpose.msra.mxu0 0.0
  %4348 = vmatpush.xpose.msra.mxu0 0.0
  %4349 = vmatpush.xpose.msra.mxu0 0.0
  %4350 = vmatpush.xpose.msra.mxu0 0.0
  %4351 = vmatpush.xpose.msra.mxu0 0.0
  %4352 = vmatpush.xpose.msra.mxu0 0.0
  %4353 = vmatpush.xpose.msra.mxu0 0.0
  %4354 = vmatpush.xpose.msra.mxu0 0.0
  %4355 = vmatpush.xpose.msra.mxu0 0.0
  %4356 = vmatpush.xpose.msra.mxu0 0.0
  %4357 = vmatpush.xpose.msra.mxu0 0.0
  %4358 = vmatpush.xpose.msra.mxu0 0.0
  %4359 = vmatpush.xpose.msra.mxu0 0.0
  %4360 = vmatpush.xpose.msra.mxu0 0.0
  %4361 = vmatpush.xpose.msra.mxu0 %v4344
  %4362 = vmatmul.f32.gmra.mxu0 %v4342
  %v4363 = vpop.f32.mrf.mxu0
  %v4364 = vadd.f32 0.0, %v4363
  %4365 = vdwg.mxu0
  %v4366 = vsel %vm173, %v4364, -1e+30
  %v4367 = vsel %vm367, %v4366, -inf
  %4368 = vmax.xlane.f32.xlu0 %v4367
  %v4369 = vpop.xlane.xlu0 %4368
  %v4370 = vsub.f32 %v4366, %v4369
  %v4371 = vmul.f32 %v4370, 1.442695
  %v4372 = vpow.pop %v4371
  %v4373 = vsel %vm367, %v4372, 0.0
  %4374 = vadd.xlane.f32.xlu0 %v4373
  %v4375 = vpop.xlane.xlu0 %4374
  %v4376 = vrcp.pop %v4375
  %v4377 = vmul.f32 %v4372, %v4376
  %4378 = vrot.lane.b32.xlu0 %v4051, 40
  %v4379 = vpop.permute.xlu0 %4378
  %v4382 = vsel %vm367, %v4377, 0
  %4384 = vmatpush.msra.mxu0 0.0
  %4385 = vmatpush.msra.mxu0 0.0
  %4386 = vmatpush.msra.mxu0 0.0
  %4387 = vmatpush.msra.mxu0 0.0
  %4388 = vmatpush.msra.mxu0 0.0
  %4389 = vmatpush.msra.mxu0 0.0
  %4390 = vmatpush.msra.mxu0 0.0
  %4391 = vmatpush.msra.mxu0 0.0
  %4392 = vmatpush.msra.mxu0 0.0
  %4393 = vmatpush.msra.mxu0 0.0
  %4394 = vmatpush.msra.mxu0 0.0
  %4395 = vmatpush.msra.mxu0 0.0
  %4396 = vmatpush.msra.mxu0 0.0
  %4397 = vmatpush.msra.mxu0 0.0
  %4398 = vmatpush.msra.mxu0 0.0
  %4399 = vmatpush.msra.mxu0 %v4379
  %4400 = vmatmul.f32.gmra.mxu0 %v4382
  %v4401 = vpop.f32.mrf.mxu0
  %v4402 = vadd.f32 0.0, %v4401
  %4403 = vdwg.mxu0
  %4405 = vrot.lane.b32.xlu0 %v4270, 8
  %v4406 = vpop.permute.xlu0 %4405
  %4409 = vrot.lane.b32.xlu0 %v4336, 16
  %v4410 = vpop.permute.xlu0 %4409
  %4413 = vrot.lane.b32.xlu0 %v4402, 24
  %v4414 = vpop.permute.xlu0 %4413
  %v4416 = vsel %vm367, %v4204, %v4406
  %v4417 = vsel %vm642, %v4416, %v4410
  %v4418 = vsel %vm644, %v4417, %v4414
  %4420 = vrot.lane.b32.xlu0 %v4139, 96
  %v4421 = vpop.permute.xlu0 %4420
  %v4423 = vsel %vm367, %v4092, 0
  %v4425 = vsel %vm367, %v4421, 0
  %4427 = vmatpush.xpose.msra.mxu0 0.0
  %4428 = vmatpush.xpose.msra.mxu0 0.0
  %4429 = vmatpush.xpose.msra.mxu0 0.0
  %4430 = vmatpush.xpose.msra.mxu0 0.0
  %4431 = vmatpush.xpose.msra.mxu0 0.0
  %4432 = vmatpush.xpose.msra.mxu0 0.0
  %4433 = vmatpush.xpose.msra.mxu0 0.0
  %4434 = vmatpush.xpose.msra.mxu0 0.0
  %4435 = vmatpush.xpose.msra.mxu0 0.0
  %4436 = vmatpush.xpose.msra.mxu0 0.0
  %4437 = vmatpush.xpose.msra.mxu0 0.0
  %4438 = vmatpush.xpose.msra.mxu0 0.0
  %4439 = vmatpush.xpose.msra.mxu0 0.0
  %4440 = vmatpush.xpose.msra.mxu0 0.0
  %4441 = vmatpush.xpose.msra.mxu0 0.0
  %4442 = vmatpush.xpose.msra.mxu0 %v4425
  %4443 = vmatmul.f32.gmra.mxu0 %v4423
  %v4444 = vpop.f32.mrf.mxu0
  %v4445 = vadd.f32 0.0, %v4444
  %4446 = vdwg.mxu0
  %v4447 = vsel %vm173, %v4445, -1e+30
  %v4448 = vsel %vm367, %v4447, -inf
  %4449 = vmax.xlane.f32.xlu0 %v4448
  %v4450 = vpop.xlane.xlu0 %4449
  %v4451 = vsub.f32 %v4447, %v4450
  %v4452 = vmul.f32 %v4451, 1.442695
  %v4453 = vpow.pop %v4452
  %v4454 = vsel %vm367, %v4453, 0.0
  %4455 = vadd.xlane.f32.xlu0 %v4454
  %v4456 = vpop.xlane.xlu0 %4455
  %v4457 = vrcp.pop %v4456
  %v4458 = vmul.f32 %v4453, %v4457
  %4459 = vrot.lane.b32.xlu0 %v4054, 64
  %v4460 = vpop.permute.xlu0 %4459
  %v4463 = vsel %vm367, %v4458, 0
  %4465 = vmatpush.msra.mxu0 0.0
  %4466 = vmatpush.msra.mxu0 0.0
  %4467 = vmatpush.msra.mxu0 0.0
  %4468 = vmatpush.msra.mxu0 0.0
  %4469 = vmatpush.msra.mxu0 0.0
  %4470 = vmatpush.msra.mxu0 0.0
  %4471 = vmatpush.msra.mxu0 0.0
  %4472 = vmatpush.msra.mxu0 0.0
  %4473 = vmatpush.msra.mxu0 0.0
  %4474 = vmatpush.msra.mxu0 0.0
  %4475 = vmatpush.msra.mxu0 0.0
  %4476 = vmatpush.msra.mxu0 0.0
  %4477 = vmatpush.msra.mxu0 0.0
  %4478 = vmatpush.msra.mxu0 0.0
  %4479 = vmatpush.msra.mxu0 0.0
  %4480 = vmatpush.msra.mxu0 %v4460
  %4481 = vmatmul.f32.gmra.mxu0 %v4463
  %v4482 = vpop.f32.mrf.mxu0
  %v4483 = vadd.f32 0.0, %v4482
  %4484 = vdwg.mxu0
  %4485 = vrot.lane.b32.xlu0 %v4092, 120
  %v4486 = vpop.permute.xlu0 %4485
  %4487 = vrot.lane.b32.xlu0 %v4139, 88
  %v4488 = vpop.permute.xlu0 %4487
  %v4489 = vsel %vm367, %v4486, 0
  %v4491 = vsel %vm367, %v4488, 0
  %4493 = vmatpush.xpose.msra.mxu0 0.0
  %4494 = vmatpush.xpose.msra.mxu0 0.0
  %4495 = vmatpush.xpose.msra.mxu0 0.0
  %4496 = vmatpush.xpose.msra.mxu0 0.0
  %4497 = vmatpush.xpose.msra.mxu0 0.0
  %4498 = vmatpush.xpose.msra.mxu0 0.0
  %4499 = vmatpush.xpose.msra.mxu0 0.0
  %4500 = vmatpush.xpose.msra.mxu0 0.0
  %4501 = vmatpush.xpose.msra.mxu0 0.0
  %4502 = vmatpush.xpose.msra.mxu0 0.0
  %4503 = vmatpush.xpose.msra.mxu0 0.0
  %4504 = vmatpush.xpose.msra.mxu0 0.0
  %4505 = vmatpush.xpose.msra.mxu0 0.0
  %4506 = vmatpush.xpose.msra.mxu0 0.0
  %4507 = vmatpush.xpose.msra.mxu0 0.0
  %4508 = vmatpush.xpose.msra.mxu0 %v4491
  %4509 = vmatmul.f32.gmra.mxu0 %v4489
  %v4510 = vpop.f32.mrf.mxu0
  %v4511 = vadd.f32 0.0, %v4510
  %4512 = vdwg.mxu0
  %v4513 = vsel %vm173, %v4511, -1e+30
  %v4514 = vsel %vm367, %v4513, -inf
  %4515 = vmax.xlane.f32.xlu0 %v4514
  %v4516 = vpop.xlane.xlu0 %4515
  %v4517 = vsub.f32 %v4513, %v4516
  %v4518 = vmul.f32 %v4517, 1.442695
  %v4519 = vpow.pop %v4518
  %v4520 = vsel %vm367, %v4519, 0.0
  %4521 = vadd.xlane.f32.xlu0 %v4520
  %v4522 = vpop.xlane.xlu0 %4521
  %v4523 = vrcp.pop %v4522
  %v4524 = vmul.f32 %v4519, %v4523
  %4525 = vrot.lane.b32.xlu0 %v4054, 56
  %v4526 = vpop.permute.xlu0 %4525
  %v4529 = vsel %vm367, %v4524, 0
  %4531 = vmatpush.msra.mxu0 0.0
  %4532 = vmatpush.msra.mxu0 0.0
  %4533 = vmatpush.msra.mxu0 0.0
  %4534 = vmatpush.msra.mxu0 0.0
  %4535 = vmatpush.msra.mxu0 0.0
  %4536 = vmatpush.msra.mxu0 0.0
  %4537 = vmatpush.msra.mxu0 0.0
  %4538 = vmatpush.msra.mxu0 0.0
  %4539 = vmatpush.msra.mxu0 0.0
  %4540 = vmatpush.msra.mxu0 0.0
  %4541 = vmatpush.msra.mxu0 0.0
  %4542 = vmatpush.msra.mxu0 0.0
  %4543 = vmatpush.msra.mxu0 0.0
  %4544 = vmatpush.msra.mxu0 0.0
  %4545 = vmatpush.msra.mxu0 0.0
  %4546 = vmatpush.msra.mxu0 %v4526
  %4547 = vmatmul.f32.gmra.mxu0 %v4529
  %v4548 = vpop.f32.mrf.mxu0
  %v4549 = vadd.f32 0.0, %v4548
  %4550 = vdwg.mxu0
  %4551 = vrot.lane.b32.xlu0 %v4092, 112
  %v4552 = vpop.permute.xlu0 %4551
  %4553 = vrot.lane.b32.xlu0 %v4139, 80
  %v4554 = vpop.permute.xlu0 %4553
  %v4555 = vsel %vm367, %v4552, 0
  %v4557 = vsel %vm367, %v4554, 0
  %4559 = vmatpush.xpose.msra.mxu0 0.0
  %4560 = vmatpush.xpose.msra.mxu0 0.0
  %4561 = vmatpush.xpose.msra.mxu0 0.0
  %4562 = vmatpush.xpose.msra.mxu0 0.0
  %4563 = vmatpush.xpose.msra.mxu0 0.0
  %4564 = vmatpush.xpose.msra.mxu0 0.0
  %4565 = vmatpush.xpose.msra.mxu0 0.0
  %4566 = vmatpush.xpose.msra.mxu0 0.0
  %4567 = vmatpush.xpose.msra.mxu0 0.0
  %4568 = vmatpush.xpose.msra.mxu0 0.0
  %4569 = vmatpush.xpose.msra.mxu0 0.0
  %4570 = vmatpush.xpose.msra.mxu0 0.0
  %4571 = vmatpush.xpose.msra.mxu0 0.0
  %4572 = vmatpush.xpose.msra.mxu0 0.0
  %4573 = vmatpush.xpose.msra.mxu0 0.0
  %4574 = vmatpush.xpose.msra.mxu0 %v4557
  %4575 = vmatmul.f32.gmra.mxu0 %v4555
  %v4576 = vpop.f32.mrf.mxu0
  %v4577 = vadd.f32 0.0, %v4576
  %4578 = vdwg.mxu0
  %v4579 = vsel %vm173, %v4577, -1e+30
  %v4580 = vsel %vm367, %v4579, -inf
  %4581 = vmax.xlane.f32.xlu0 %v4580
  %v4582 = vpop.xlane.xlu0 %4581
  %v4583 = vsub.f32 %v4579, %v4582
  %v4584 = vmul.f32 %v4583, 1.442695
  %v4585 = vpow.pop %v4584
  %v4586 = vsel %vm367, %v4585, 0.0
  %4587 = vadd.xlane.f32.xlu0 %v4586
  %v4588 = vpop.xlane.xlu0 %4587
  %v4589 = vrcp.pop %v4588
  %v4590 = vmul.f32 %v4585, %v4589
  %4591 = vrot.lane.b32.xlu0 %v4054, 48
  %v4592 = vpop.permute.xlu0 %4591
  %v4595 = vsel %vm367, %v4590, 0
  %4597 = vmatpush.msra.mxu0 0.0
  %4598 = vmatpush.msra.mxu0 0.0
  %4599 = vmatpush.msra.mxu0 0.0
  %4600 = vmatpush.msra.mxu0 0.0
  %4601 = vmatpush.msra.mxu0 0.0
  %4602 = vmatpush.msra.mxu0 0.0
  %4603 = vmatpush.msra.mxu0 0.0
  %4604 = vmatpush.msra.mxu0 0.0
  %4605 = vmatpush.msra.mxu0 0.0
  %4606 = vmatpush.msra.mxu0 0.0
  %4607 = vmatpush.msra.mxu0 0.0
  %4608 = vmatpush.msra.mxu0 0.0
  %4609 = vmatpush.msra.mxu0 0.0
  %4610 = vmatpush.msra.mxu0 0.0
  %4611 = vmatpush.msra.mxu0 0.0
  %4612 = vmatpush.msra.mxu0 %v4592
  %4613 = vmatmul.f32.gmra.mxu0 %v4595
  %v4614 = vpop.f32.mrf.mxu0
  %v4615 = vadd.f32 0.0, %v4614
  %4616 = vdwg.mxu0
  %4617 = vrot.lane.b32.xlu0 %v4092, 104
  %v4618 = vpop.permute.xlu0 %4617
  %4619 = vrot.lane.b32.xlu0 %v4139, 72
  %v4620 = vpop.permute.xlu0 %4619
  %v4621 = vsel %vm367, %v4618, 0
  %v4623 = vsel %vm367, %v4620, 0
  %4625 = vmatpush.xpose.msra.mxu0 0.0
  %4626 = vmatpush.xpose.msra.mxu0 0.0
  %4627 = vmatpush.xpose.msra.mxu0 0.0
  %4628 = vmatpush.xpose.msra.mxu0 0.0
  %4629 = vmatpush.xpose.msra.mxu0 0.0
  %4630 = vmatpush.xpose.msra.mxu0 0.0
  %4631 = vmatpush.xpose.msra.mxu0 0.0
  %4632 = vmatpush.xpose.msra.mxu0 0.0
  %4633 = vmatpush.xpose.msra.mxu0 0.0
  %4634 = vmatpush.xpose.msra.mxu0 0.0
  %4635 = vmatpush.xpose.msra.mxu0 0.0
  %4636 = vmatpush.xpose.msra.mxu0 0.0
  %4637 = vmatpush.xpose.msra.mxu0 0.0
  %4638 = vmatpush.xpose.msra.mxu0 0.0
  %4639 = vmatpush.xpose.msra.mxu0 0.0
  %4640 = vmatpush.xpose.msra.mxu0 %v4623
  %4641 = vmatmul.f32.gmra.mxu0 %v4621
  %v4642 = vpop.f32.mrf.mxu0
  %v4643 = vadd.f32 0.0, %v4642
  %4644 = vdwg.mxu0
  %v4645 = vsel %vm173, %v4643, -1e+30
  %v4646 = vsel %vm367, %v4645, -inf
  %4647 = vmax.xlane.f32.xlu0 %v4646
  %v4648 = vpop.xlane.xlu0 %4647
  %v4649 = vsub.f32 %v4645, %v4648
  %v4650 = vmul.f32 %v4649, 1.442695
  %v4651 = vpow.pop %v4650
  %v4652 = vsel %vm367, %v4651, 0.0
  %4653 = vadd.xlane.f32.xlu0 %v4652
  %v4654 = vpop.xlane.xlu0 %4653
  %v4655 = vrcp.pop %v4654
  %v4656 = vmul.f32 %v4651, %v4655
  %4657 = vrot.lane.b32.xlu0 %v4054, 40
  %v4658 = vpop.permute.xlu0 %4657
  %v4661 = vsel %vm367, %v4656, 0
  %4663 = vmatpush.msra.mxu0 0.0
  %4664 = vmatpush.msra.mxu0 0.0
  %4665 = vmatpush.msra.mxu0 0.0
  %4666 = vmatpush.msra.mxu0 0.0
  %4667 = vmatpush.msra.mxu0 0.0
  %4668 = vmatpush.msra.mxu0 0.0
  %4669 = vmatpush.msra.mxu0 0.0
  %4670 = vmatpush.msra.mxu0 0.0
  %4671 = vmatpush.msra.mxu0 0.0
  %4672 = vmatpush.msra.mxu0 0.0
  %4673 = vmatpush.msra.mxu0 0.0
  %4674 = vmatpush.msra.mxu0 0.0
  %4675 = vmatpush.msra.mxu0 0.0
  %4676 = vmatpush.msra.mxu0 0.0
  %4677 = vmatpush.msra.mxu0 0.0
  %4678 = vmatpush.msra.mxu0 %v4658
  %4679 = vmatmul.f32.gmra.mxu0 %v4661
  %v4680 = vpop.f32.mrf.mxu0
  %v4681 = vadd.f32 0.0, %v4680
  %4682 = vdwg.mxu0
  %4684 = vrot.lane.b32.xlu0 %v4549, 8
  %v4685 = vpop.permute.xlu0 %4684
  %4688 = vrot.lane.b32.xlu0 %v4615, 16
  %v4689 = vpop.permute.xlu0 %4688
  %4692 = vrot.lane.b32.xlu0 %v4681, 24
  %v4693 = vpop.permute.xlu0 %4692
  %v4695 = vsel %vm367, %v4483, %v4685
  %v4696 = vsel %vm642, %v4695, %v4689
  %v4697 = vsel %vm644, %v4696, %v4693
  %v4699 = vsel %vm198, %v4418, 0
  %v4702 = vsel %vm198, %v4697, 0
  %4704 = vmatpush.msra.mxu0 0.0
  %4705 = vmatpush.msra.mxu0 0.0
  %4706 = vmatpush.msra.mxu0 0.0
  %4707 = vmatpush.msra.mxu0 0.0
  %4708 = vmatpush.msra.mxu0 0.0
  %4709 = vmatpush.msra.mxu0 0.0
  %4710 = vmatpush.msra.mxu0 0.0
  %4711 = vmatpush.msra.mxu0 0.0
  %4712 = vmatpush.msra.mxu0 0.0
  %4713 = vmatpush.msra.mxu0 0.0
  %4714 = vmatpush.msra.mxu0 0.0
  %4715 = vmatpush.msra.mxu0 0.0
  %4716 = vmatpush.msra.mxu0 %v4003
  %4717 = vmatpush.msra.mxu0 %v4002
  %4718 = vmatpush.msra.mxu0 %v4001
  %4719 = vmatpush.msra.mxu0 %v4000
  %4720 = vmatmul.f32.gmra.mxu0 %v4699
  %v4721 = vpop.f32.mrf.mxu0
  %v4722 = vadd.f32 0.0, %v4721
  %4723 = vmatmul.f32.gmra.mxu0 %v4702
  %v4724 = vpop.f32.mrf.mxu0
  %v4725 = vadd.f32 0.0, %v4724
  %4726 = vdwg.mxu0
  %v4727 = vadd.f32 %v2022, %v4722
  %v4728 = vadd.f32 %v2023, %v4725
  %v4729 = vmul.f32 %v4727, %v4727
  %v4730 = vmul.f32 %v4728, %v4728
  %v4731 = vsel %vm198, %v4729, 0.0
  %4732 = vadd.xlane.f32.xlu0 %v4731
  %v4733 = vpop.xlane.xlu0 %4732
  %v4734 = vsel %vm198, %v4730, 0.0
  %4735 = vadd.xlane.f32.xlu0 %v4734
  %v4736 = vpop.xlane.xlu0 %4735
  %v4737 = vmul.f32 %v4733, %v211
  %v4738 = vmul.f32 %v4736, %v211
  %v4739 = vadd.f32 %v4737, 1e-06
  %v4740 = vadd.f32 %v4738, 1e-06
  %v4741 = vrsqrt.pop %v4739
  %v4742 = vmul.f32 %v4741, %v4739
  %v4743 = vmul.f32 %v4742, %v4741
  %v4744 = vmul.f32 0.5, %v4743
  %v4745 = vsub.f32 1.5, %v4744
  %v4746 = vmul.f32 %v4741, %v4745
  %vm4747 = vweird.f32 %v4739
  %vm4748 = vweird.f32 %v4741
  %vm4749 = vmor %vm4747, %vm4748
  %v4750 = vsel %vm4749, %v4741, %v4746
  %v4751 = vrsqrt.pop %v4740
  %v4752 = vmul.f32 %v4751, %v4740
  %v4753 = vmul.f32 %v4752, %v4751
  %v4754 = vmul.f32 0.5, %v4753
  %v4755 = vsub.f32 1.5, %v4754
  %v4756 = vmul.f32 %v4751, %v4755
  %vm4757 = vweird.f32 %v4740
  %vm4758 = vweird.f32 %v4751
  %vm4759 = vmor %vm4757, %vm4758
  %v4760 = vsel %vm4759, %v4751, %v4756
  %v4761 = vmul.f32 %v4727, %v4750
  %v4762 = vmul.f32 %v4728, %v4760
  %v4764 = vperm.slane %v4021, 0
  %v4766 = vmul.f32 %v4761, %v4764
  %v4767 = vmul.f32 %v4762, %v4764
  %v4769 = vsel %vm198, %v4766, 0
  %v4772 = vsel %vm198, %v4767, 0
  %4774 = vmatpush.msra.mxu0 0.0
  %4775 = vmatpush.msra.mxu0 0.0
  %4776 = vmatpush.msra.mxu0 0.0
  %4777 = vmatpush.msra.mxu0 0.0
  %4778 = vmatpush.msra.mxu0 0.0
  %4779 = vmatpush.msra.mxu0 0.0
  %4780 = vmatpush.msra.mxu0 0.0
  %4781 = vmatpush.msra.mxu0 0.0
  %4782 = vmatpush.msra.mxu0 0.0
  %4783 = vmatpush.msra.mxu0 0.0
  %4784 = vmatpush.msra.mxu0 0.0
  %4785 = vmatpush.msra.mxu0 0.0
  %4786 = vmatpush.msra.mxu0 %v4008
  %4787 = vmatpush.msra.mxu0 %v4007
  %4788 = vmatpush.msra.mxu0 %v4006
  %4789 = vmatpush.msra.mxu0 %v4005
  %4790 = vmatmul.f32.gmra.mxu0 %v4769
  %v4791 = vpop.f32.mrf.mxu0
  %v4792 = vadd.f32 0.0, %v4791
  %4793 = vmatmul.f32.gmra.mxu0 %v4772
  %v4794 = vpop.f32.mrf.mxu0
  %v4795 = vadd.f32 0.0, %v4794
  %4796 = vdwg.mxu0
  %v4797 = vxor.u32 %v4792, 2147483648
  %v4798 = vxor.u32 %v4795, 2147483648
  %v4799 = vmul.f32 %v4797, 1.442695
  %v4800 = vpow.pop %v4799
  %v4801 = vmul.f32 %v4798, 1.442695
  %v4802 = vpow.pop %v4801
  %v4803 = vadd.f32 %v4800, 1.0
  %v4804 = vadd.f32 %v4802, 1.0
  %v4805 = vrcp.pop %v4803
  %v4806 = vmul.f32 %v4803, %v4805
  %v4807 = vsub.f32 1.0, %v4806
  %v4808 = vmul.f32 %v4805, %v4807
  %v4809 = vadd.f32 %v4805, %v4808
  %vm4810 = vweird.f32 %v4803
  %vm4811 = vweird.f32 %v4805
  %vm4812 = vmor %vm4810, %vm4811
  %v4813 = vsel %vm4812, %v4805, %v4809
  %v4814 = vand.u32 2147483647, %v4803
  %vm4815 = vcmp.eq.f32.partialorder %v4814, 8.507059e+37
  %v4816 = vand.u32 %v4803, 2147483648
  %v4817 = vor.u32 1.1754944e-38, %v4816
  %v4818 = vsel %vm4815, %v4817, %v4813
  %v4819 = vmul.f32 1.0, %v4818
  %v4820 = vrcp.pop %v4804
  %v4821 = vmul.f32 %v4804, %v4820
  %v4822 = vsub.f32 1.0, %v4821
  %v4823 = vmul.f32 %v4820, %v4822
  %v4824 = vadd.f32 %v4820, %v4823
  %vm4825 = vweird.f32 %v4804
  %vm4826 = vweird.f32 %v4820
  %vm4827 = vmor %vm4825, %vm4826
  %v4828 = vsel %vm4827, %v4820, %v4824
  %v4829 = vand.u32 2147483647, %v4804
  %vm4830 = vcmp.eq.f32.partialorder %v4829, 8.507059e+37
  %v4831 = vand.u32 %v4804, 2147483648
  %v4832 = vor.u32 1.1754944e-38, %v4831
  %v4833 = vsel %vm4830, %v4832, %v4828
  %v4834 = vmul.f32 1.0, %v4833
  %v4835 = vmul.f32 %v4792, %v4819
  %v4836 = vmul.f32 %v4795, %v4834
  %4839 = vrot.lane.b32.xlu0 %v4792, 64
  %v4840 = vpop.permute.xlu0 %4839
  %4841 = vrot.lane.b32.xlu0 %v4795, 64
  %v4842 = vpop.permute.xlu0 %4841
  %v4845 = vmul.f32 %v4835, %v4840
  %v4846 = vmul.f32 %v4836, %v4842
  %v4848 = vsel %vm1074, %v4845, 0
  %v4851 = vsel %vm1074, %v4846, 0
  %4853 = vmatpush.msra.mxu0 0.0
  %4854 = vmatpush.msra.mxu0 0.0
  %4855 = vmatpush.msra.mxu0 0.0
  %4856 = vmatpush.msra.mxu0 0.0
  %4857 = vmatpush.msra.mxu0 0.0
  %4858 = vmatpush.msra.mxu0 0.0
  %4859 = vmatpush.msra.mxu0 0.0
  %4860 = vmatpush.msra.mxu0 0.0
  %4861 = vmatpush.msra.mxu0 %v4017
  %4862 = vmatpush.msra.mxu0 %v4016
  %4863 = vmatpush.msra.mxu0 %v4015
  %4864 = vmatpush.msra.mxu0 %v4014
  %4865 = vmatpush.msra.mxu0 %v4013
  %4866 = vmatpush.msra.mxu0 %v4012
  %4867 = vmatpush.msra.mxu0 %v4011
  %4868 = vmatpush.msra.mxu0 %v4010
  %4869 = vmatmul.f32.gmra.mxu0 %v4848
  %v4870 = vpop.f32.mrf.mxu0
  %v4871 = vadd.f32 0.0, %v4870
  %4872 = vmatmul.f32.gmra.mxu0 %v4851
  %v4873 = vpop.f32.mrf.mxu0
  %v4874 = vadd.f32 0.0, %v4873
  %4875 = vdwg.mxu0
  %v4876 = vadd.f32 %v4727, %v4871
  %v4877 = vadd.f32 %v4728, %v4874
  %s4878 = scalar_lea.vmem %s8, 96
  %v4879 = vld [vmem:[%s4878] sm:$0xff]
  %v4880 = vld [vmem:[%s4878 + $0x8] sm:$0xff]
  %v4881 = vld [vmem:[%s4878 + $0x10] sm:$0xff]
  %v4882 = vld [vmem:[%s4878 + $0x18] sm:$0xff]
  %s4883 = scalar_lea.vmem %s9, 96
  %v4884 = vld [vmem:[%s4883] sm:$0xff]
  %v4885 = vld [vmem:[%s4883 + $0x8] sm:$0xff]
  %v4886 = vld [vmem:[%s4883 + $0x10] sm:$0xff]
  %v4887 = vld [vmem:[%s4883 + $0x18] sm:$0xff]
  %s4888 = scalar_lea.vmem %s10, 96
  %v4889 = vld [vmem:[%s4888] sm:$0xff]
  %v4890 = vld [vmem:[%s4888 + $0x8] sm:$0xff]
  %v4891 = vld [vmem:[%s4888 + $0x10] sm:$0xff]
  %v4892 = vld [vmem:[%s4888 + $0x18] sm:$0xff]
  %s4893 = scalar_lea.vmem %s11, 192
  %v4894 = vld [vmem:[%s4893] sm:$0xff]
  %v4895 = vld [vmem:[%s4893 + $0x8] sm:$0xff]
  %v4896 = vld [vmem:[%s4893 + $0x10] sm:$0xff]
  %v4897 = vld [vmem:[%s4893 + $0x18] sm:$0xff]
  %v4898 = vld [vmem:[%s4893 + $0x20] sm:$0xff]
  %v4899 = vld [vmem:[%s4893 + $0x28] sm:$0xff]
  %v4900 = vld [vmem:[%s4893 + $0x30] sm:$0xff]
  %v4901 = vld [vmem:[%s4893 + $0x38] sm:$0xff]
  %s4902 = scalar_lea.vmem %s12, 3
  %v4903 = vld [vmem:[%s4902] sm:$0x1]
  %s4904 = scalar_lea.vmem %s13, 3
  %v4905 = vld [vmem:[%s4904] sm:$0x1]
  %v4906 = vmul.f32 %v4876, %v4876
  %v4907 = vmul.f32 %v4877, %v4877
  %v4908 = vsel %vm198, %v4906, 0.0
  %4909 = vadd.xlane.f32.xlu0 %v4908
  %v4910 = vpop.xlane.xlu0 %4909
  %v4911 = vsel %vm198, %v4907, 0.0
  %4912 = vadd.xlane.f32.xlu0 %v4911
  %v4913 = vpop.xlane.xlu0 %4912
  %v4914 = vmul.f32 %v4910, %v211
  %v4915 = vmul.f32 %v4913, %v211
  %v4916 = vadd.f32 %v4914, 1e-06
  %v4917 = vadd.f32 %v4915, 1e-06
  %v4918 = vrsqrt.pop %v4916
  %v4919 = vmul.f32 %v4918, %v4916
  %v4920 = vmul.f32 %v4919, %v4918
  %v4921 = vmul.f32 0.5, %v4920
  %v4922 = vsub.f32 1.5, %v4921
  %v4923 = vmul.f32 %v4918, %v4922
  %vm4924 = vweird.f32 %v4916
  %vm4925 = vweird.f32 %v4918
  %vm4926 = vmor %vm4924, %vm4925
  %v4927 = vsel %vm4926, %v4918, %v4923
  %v4928 = vrsqrt.pop %v4917
  %v4929 = vmul.f32 %v4928, %v4917
  %v4930 = vmul.f32 %v4929, %v4928
  %v4931 = vmul.f32 0.5, %v4930
  %v4932 = vsub.f32 1.5, %v4931
  %v4933 = vmul.f32 %v4928, %v4932
  %vm4934 = vweird.f32 %v4917
  %vm4935 = vweird.f32 %v4928
  %vm4936 = vmor %vm4934, %vm4935
  %v4937 = vsel %vm4936, %v4928, %v4933
  %v4938 = vmul.f32 %v4876, %v4927
  %v4939 = vmul.f32 %v4877, %v4937
  %v4941 = vperm.slane %v4903, 0
  %v4943 = vmul.f32 %v4938, %v4941
  %v4944 = vmul.f32 %v4939, %v4941
  %v4946 = vsel %vm198, %v4943, 0
  %v4949 = vsel %vm198, %v4944, 0
  %4951 = vmatpush.msra.mxu0 0.0
  %4952 = vmatpush.msra.mxu0 0.0
  %4953 = vmatpush.msra.mxu0 0.0
  %4954 = vmatpush.msra.mxu0 0.0
  %4955 = vmatpush.msra.mxu0 0.0
  %4956 = vmatpush.msra.mxu0 0.0
  %4957 = vmatpush.msra.mxu0 0.0
  %4958 = vmatpush.msra.mxu0 0.0
  %4959 = vmatpush.msra.mxu0 0.0
  %4960 = vmatpush.msra.mxu0 0.0
  %4961 = vmatpush.msra.mxu0 0.0
  %4962 = vmatpush.msra.mxu0 0.0
  %4963 = vmatpush.msra.mxu0 %v4882
  %4964 = vmatpush.msra.mxu0 %v4881
  %4965 = vmatpush.msra.mxu0 %v4880
  %4966 = vmatpush.msra.mxu0 %v4879
  %4967 = vmatmul.f32.gmra.mxu0 %v4946
  %v4968 = vpop.f32.mrf.mxu0
  %v4969 = vadd.f32 0.0, %v4968
  %4970 = vmatmul.f32.gmra.mxu0 %v4949
  %v4971 = vpop.f32.mrf.mxu0
  %v4972 = vadd.f32 0.0, %v4971
  %4973 = vdwg.mxu0
  %v4974 = vmul.f32 %v4969, 0.35355338
  %v4975 = vmul.f32 %v4972, 0.35355338
  %v4976 = vmul.f32 %v4974, %v163
  %v4977 = vmul.f32 %v4975, %v164
  %v4979 = vsel %vm198, %v4974, 0
  %v4982 = vsel %vm198, %v4975, 0
  %4984 = vmatpush.msra.mxu0 0.0
  %4985 = vmatpush.msra.mxu0 0.0
  %4986 = vmatpush.msra.mxu0 0.0
  %4987 = vmatpush.msra.mxu0 0.0
  %4988 = vmatpush.msra.mxu0 0.0
  %4989 = vmatpush.msra.mxu0 0.0
  %4990 = vmatpush.msra.mxu0 0.0
  %4991 = vmatpush.msra.mxu0 0.0
  %4992 = vmatpush.msra.mxu0 0.0
  %4993 = vmatpush.msra.mxu0 0.0
  %4994 = vmatpush.msra.mxu0 0.0
  %4995 = vmatpush.msra.mxu0 0.0
  %4996 = vmatpush.msra.mxu0 %v170
  %4997 = vmatpush.msra.mxu0 %v169
  %4998 = vmatpush.msra.mxu0 %v168
  %4999 = vmatpush.msra.mxu0 %v167
  %5000 = vmatmul.f32.gmra.mxu0 %v4979
  %v5001 = vpop.f32.mrf.mxu0
  %v5002 = vadd.f32 0.0, %v5001
  %5003 = vmatmul.f32.gmra.mxu0 %v4982
  %v5004 = vpop.f32.mrf.mxu0
  %v5005 = vadd.f32 0.0, %v5004
  %5006 = vdwg.mxu0
  %v5007 = vmul.f32 %v5002, %v165
  %v5008 = vmul.f32 %v5005, %v166
  %v5009 = vadd.f32 %v4976, %v5007
  %v5010 = vadd.f32 %v4977, %v5008
  %v5011 = vmul.f32 %v4969, %v312
  %v5012 = vmul.f32 %v4972, %v314
  %5015 = vrot.lane.b32.xlu0 %v4969, 96
  %v5016 = vpop.permute.xlu0 %5015
  %5017 = vrot.lane.b32.xlu0 %v4972, 96
  %v5018 = vpop.permute.xlu0 %5017
  %v5019 = vsel %vm198, %v5016, 0
  %v5021 = vsel %vm198, %v5018, 0
  %5023 = vmatpush.msra.mxu0 0.0
  %5024 = vmatpush.msra.mxu0 0.0
  %5025 = vmatpush.msra.mxu0 0.0
  %5026 = vmatpush.msra.mxu0 0.0
  %5027 = vmatpush.msra.mxu0 0.0
  %5028 = vmatpush.msra.mxu0 0.0
  %5029 = vmatpush.msra.mxu0 0.0
  %5030 = vmatpush.msra.mxu0 0.0
  %5031 = vmatpush.msra.mxu0 0.0
  %5032 = vmatpush.msra.mxu0 0.0
  %5033 = vmatpush.msra.mxu0 0.0
  %5034 = vmatpush.msra.mxu0 0.0
  %5035 = vmatpush.msra.mxu0 %v170
  %5036 = vmatpush.msra.mxu0 %v169
  %5037 = vmatpush.msra.mxu0 %v168
  %5038 = vmatpush.msra.mxu0 %v167
  %5039 = vmatmul.f32.gmra.mxu0 %v5019
  %v5040 = vpop.f32.mrf.mxu0
  %v5041 = vadd.f32 0.0, %v5040
  %5042 = vmatmul.f32.gmra.mxu0 %v5021
  %v5043 = vpop.f32.mrf.mxu0
  %v5044 = vadd.f32 0.0, %v5043
  %5045 = vdwg.mxu0
  %v5046 = vmul.f32 %v5041, %v165
  %v5047 = vmul.f32 %v5044, %v166
  %5050 = vrot.lane.b32.xlu0 %v5046, 32
  %v5051 = vpop.permute.xlu0 %5050
  %5052 = vrot.lane.b32.xlu0 %v5047, 32
  %v5053 = vpop.permute.xlu0 %5052
  %v5056 = vadd.f32 %v5011, %v5051
  %v5057 = vadd.f32 %v5012, %v5053
  %5059 = vrot.lane.b32.xlu0 %v5056, 96
  %v5060 = vpop.permute.xlu0 %5059
  %v5062 = vsel %vm367, %v5009, 0
  %v5064 = vsel %vm367, %v5060, 0
  %5066 = vmatpush.xpose.msra.mxu0 0.0
  %5067 = vmatpush.xpose.msra.mxu0 0.0
  %5068 = vmatpush.xpose.msra.mxu0 0.0
  %5069 = vmatpush.xpose.msra.mxu0 0.0
  %5070 = vmatpush.xpose.msra.mxu0 0.0
  %5071 = vmatpush.xpose.msra.mxu0 0.0
  %5072 = vmatpush.xpose.msra.mxu0 0.0
  %5073 = vmatpush.xpose.msra.mxu0 0.0
  %5074 = vmatpush.xpose.msra.mxu0 0.0
  %5075 = vmatpush.xpose.msra.mxu0 0.0
  %5076 = vmatpush.xpose.msra.mxu0 0.0
  %5077 = vmatpush.xpose.msra.mxu0 0.0
  %5078 = vmatpush.xpose.msra.mxu0 0.0
  %5079 = vmatpush.xpose.msra.mxu0 0.0
  %5080 = vmatpush.xpose.msra.mxu0 0.0
  %5081 = vmatpush.xpose.msra.mxu0 %v5064
  %5082 = vmatmul.f32.gmra.mxu0 %v5062
  %v5083 = vpop.f32.mrf.mxu0
  %v5084 = vadd.f32 0.0, %v5083
  %5085 = vdwg.mxu0
  %v5086 = vsel %vm173, %v5084, -1e+30
  %v5087 = vsel %vm367, %v5086, -inf
  %5088 = vmax.xlane.f32.xlu0 %v5087
  %v5089 = vpop.xlane.xlu0 %5088
  %v5090 = vsub.f32 %v5086, %v5089
  %v5091 = vmul.f32 %v5090, 1.442695
  %v5092 = vpow.pop %v5091
  %v5093 = vsel %vm367, %v5092, 0.0
  %5094 = vadd.xlane.f32.xlu0 %v5093
  %v5095 = vpop.xlane.xlu0 %5094
  %v5096 = vrcp.pop %v5095
  %v5097 = vmul.f32 %v5092, %v5096
  %5098 = vrot.lane.b32.xlu0 %v4969, 64
  %v5099 = vpop.permute.xlu0 %5098
  %v5102 = vsel %vm367, %v5097, 0
  %5104 = vmatpush.msra.mxu0 0.0
  %5105 = vmatpush.msra.mxu0 0.0
  %5106 = vmatpush.msra.mxu0 0.0
  %5107 = vmatpush.msra.mxu0 0.0
  %5108 = vmatpush.msra.mxu0 0.0
  %5109 = vmatpush.msra.mxu0 0.0
  %5110 = vmatpush.msra.mxu0 0.0
  %5111 = vmatpush.msra.mxu0 0.0
  %5112 = vmatpush.msra.mxu0 0.0
  %5113 = vmatpush.msra.mxu0 0.0
  %5114 = vmatpush.msra.mxu0 0.0
  %5115 = vmatpush.msra.mxu0 0.0
  %5116 = vmatpush.msra.mxu0 0.0
  %5117 = vmatpush.msra.mxu0 0.0
  %5118 = vmatpush.msra.mxu0 0.0
  %5119 = vmatpush.msra.mxu0 %v5099
  %5120 = vmatmul.f32.gmra.mxu0 %v5102
  %v5121 = vpop.f32.mrf.mxu0
  %v5122 = vadd.f32 0.0, %v5121
  %5123 = vdwg.mxu0
  %5124 = vrot.lane.b32.xlu0 %v5009, 120
  %v5125 = vpop.permute.xlu0 %5124
  %5126 = vrot.lane.b32.xlu0 %v5056, 88
  %v5127 = vpop.permute.xlu0 %5126
  %v5128 = vsel %vm367, %v5125, 0
  %v5130 = vsel %vm367, %v5127, 0
  %5132 = vmatpush.xpose.msra.mxu0 0.0
  %5133 = vmatpush.xpose.msra.mxu0 0.0
  %5134 = vmatpush.xpose.msra.mxu0 0.0
  %5135 = vmatpush.xpose.msra.mxu0 0.0
  %5136 = vmatpush.xpose.msra.mxu0 0.0
  %5137 = vmatpush.xpose.msra.mxu0 0.0
  %5138 = vmatpush.xpose.msra.mxu0 0.0
  %5139 = vmatpush.xpose.msra.mxu0 0.0
  %5140 = vmatpush.xpose.msra.mxu0 0.0
  %5141 = vmatpush.xpose.msra.mxu0 0.0
  %5142 = vmatpush.xpose.msra.mxu0 0.0
  %5143 = vmatpush.xpose.msra.mxu0 0.0
  %5144 = vmatpush.xpose.msra.mxu0 0.0
  %5145 = vmatpush.xpose.msra.mxu0 0.0
  %5146 = vmatpush.xpose.msra.mxu0 0.0
  %5147 = vmatpush.xpose.msra.mxu0 %v5130
  %5148 = vmatmul.f32.gmra.mxu0 %v5128
  %v5149 = vpop.f32.mrf.mxu0
  %v5150 = vadd.f32 0.0, %v5149
  %5151 = vdwg.mxu0
  %v5152 = vsel %vm173, %v5150, -1e+30
  %v5153 = vsel %vm367, %v5152, -inf
  %5154 = vmax.xlane.f32.xlu0 %v5153
  %v5155 = vpop.xlane.xlu0 %5154
  %v5156 = vsub.f32 %v5152, %v5155
  %v5157 = vmul.f32 %v5156, 1.442695
  %v5158 = vpow.pop %v5157
  %v5159 = vsel %vm367, %v5158, 0.0
  %5160 = vadd.xlane.f32.xlu0 %v5159
  %v5161 = vpop.xlane.xlu0 %5160
  %v5162 = vrcp.pop %v5161
  %v5163 = vmul.f32 %v5158, %v5162
  %5164 = vrot.lane.b32.xlu0 %v4969, 56
  %v5165 = vpop.permute.xlu0 %5164
  %v5168 = vsel %vm367, %v5163, 0
  %5170 = vmatpush.msra.mxu0 0.0
  %5171 = vmatpush.msra.mxu0 0.0
  %5172 = vmatpush.msra.mxu0 0.0
  %5173 = vmatpush.msra.mxu0 0.0
  %5174 = vmatpush.msra.mxu0 0.0
  %5175 = vmatpush.msra.mxu0 0.0
  %5176 = vmatpush.msra.mxu0 0.0
  %5177 = vmatpush.msra.mxu0 0.0
  %5178 = vmatpush.msra.mxu0 0.0
  %5179 = vmatpush.msra.mxu0 0.0
  %5180 = vmatpush.msra.mxu0 0.0
  %5181 = vmatpush.msra.mxu0 0.0
  %5182 = vmatpush.msra.mxu0 0.0
  %5183 = vmatpush.msra.mxu0 0.0
  %5184 = vmatpush.msra.mxu0 0.0
  %5185 = vmatpush.msra.mxu0 %v5165
  %5186 = vmatmul.f32.gmra.mxu0 %v5168
  %v5187 = vpop.f32.mrf.mxu0
  %v5188 = vadd.f32 0.0, %v5187
  %5189 = vdwg.mxu0
  %5190 = vrot.lane.b32.xlu0 %v5009, 112
  %v5191 = vpop.permute.xlu0 %5190
  %5192 = vrot.lane.b32.xlu0 %v5056, 80
  %v5193 = vpop.permute.xlu0 %5192
  %v5194 = vsel %vm367, %v5191, 0
  %v5196 = vsel %vm367, %v5193, 0
  %5198 = vmatpush.xpose.msra.mxu0 0.0
  %5199 = vmatpush.xpose.msra.mxu0 0.0
  %5200 = vmatpush.xpose.msra.mxu0 0.0
  %5201 = vmatpush.xpose.msra.mxu0 0.0
  %5202 = vmatpush.xpose.msra.mxu0 0.0
  %5203 = vmatpush.xpose.msra.mxu0 0.0
  %5204 = vmatpush.xpose.msra.mxu0 0.0
  %5205 = vmatpush.xpose.msra.mxu0 0.0
  %5206 = vmatpush.xpose.msra.mxu0 0.0
  %5207 = vmatpush.xpose.msra.mxu0 0.0
  %5208 = vmatpush.xpose.msra.mxu0 0.0
  %5209 = vmatpush.xpose.msra.mxu0 0.0
  %5210 = vmatpush.xpose.msra.mxu0 0.0
  %5211 = vmatpush.xpose.msra.mxu0 0.0
  %5212 = vmatpush.xpose.msra.mxu0 0.0
  %5213 = vmatpush.xpose.msra.mxu0 %v5196
  %5214 = vmatmul.f32.gmra.mxu0 %v5194
  %v5215 = vpop.f32.mrf.mxu0
  %v5216 = vadd.f32 0.0, %v5215
  %5217 = vdwg.mxu0
  %v5218 = vsel %vm173, %v5216, -1e+30
  %v5219 = vsel %vm367, %v5218, -inf
  %5220 = vmax.xlane.f32.xlu0 %v5219
  %v5221 = vpop.xlane.xlu0 %5220
  %v5222 = vsub.f32 %v5218, %v5221
  %v5223 = vmul.f32 %v5222, 1.442695
  %v5224 = vpow.pop %v5223
  %v5225 = vsel %vm367, %v5224, 0.0
  %5226 = vadd.xlane.f32.xlu0 %v5225
  %v5227 = vpop.xlane.xlu0 %5226
  %v5228 = vrcp.pop %v5227
  %v5229 = vmul.f32 %v5224, %v5228
  %5230 = vrot.lane.b32.xlu0 %v4969, 48
  %v5231 = vpop.permute.xlu0 %5230
  %v5234 = vsel %vm367, %v5229, 0
  %5236 = vmatpush.msra.mxu0 0.0
  %5237 = vmatpush.msra.mxu0 0.0
  %5238 = vmatpush.msra.mxu0 0.0
  %5239 = vmatpush.msra.mxu0 0.0
  %5240 = vmatpush.msra.mxu0 0.0
  %5241 = vmatpush.msra.mxu0 0.0
  %5242 = vmatpush.msra.mxu0 0.0
  %5243 = vmatpush.msra.mxu0 0.0
  %5244 = vmatpush.msra.mxu0 0.0
  %5245 = vmatpush.msra.mxu0 0.0
  %5246 = vmatpush.msra.mxu0 0.0
  %5247 = vmatpush.msra.mxu0 0.0
  %5248 = vmatpush.msra.mxu0 0.0
  %5249 = vmatpush.msra.mxu0 0.0
  %5250 = vmatpush.msra.mxu0 0.0
  %5251 = vmatpush.msra.mxu0 %v5231
  %5252 = vmatmul.f32.gmra.mxu0 %v5234
  %v5253 = vpop.f32.mrf.mxu0
  %v5254 = vadd.f32 0.0, %v5253
  %5255 = vdwg.mxu0
  %5256 = vrot.lane.b32.xlu0 %v5009, 104
  %v5257 = vpop.permute.xlu0 %5256
  %5258 = vrot.lane.b32.xlu0 %v5056, 72
  %v5259 = vpop.permute.xlu0 %5258
  %v5260 = vsel %vm367, %v5257, 0
  %v5262 = vsel %vm367, %v5259, 0
  %5264 = vmatpush.xpose.msra.mxu0 0.0
  %5265 = vmatpush.xpose.msra.mxu0 0.0
  %5266 = vmatpush.xpose.msra.mxu0 0.0
  %5267 = vmatpush.xpose.msra.mxu0 0.0
  %5268 = vmatpush.xpose.msra.mxu0 0.0
  %5269 = vmatpush.xpose.msra.mxu0 0.0
  %5270 = vmatpush.xpose.msra.mxu0 0.0
  %5271 = vmatpush.xpose.msra.mxu0 0.0
  %5272 = vmatpush.xpose.msra.mxu0 0.0
  %5273 = vmatpush.xpose.msra.mxu0 0.0
  %5274 = vmatpush.xpose.msra.mxu0 0.0
  %5275 = vmatpush.xpose.msra.mxu0 0.0
  %5276 = vmatpush.xpose.msra.mxu0 0.0
  %5277 = vmatpush.xpose.msra.mxu0 0.0
  %5278 = vmatpush.xpose.msra.mxu0 0.0
  %5279 = vmatpush.xpose.msra.mxu0 %v5262
  %5280 = vmatmul.f32.gmra.mxu0 %v5260
  %v5281 = vpop.f32.mrf.mxu0
  %v5282 = vadd.f32 0.0, %v5281
  %5283 = vdwg.mxu0
  %v5284 = vsel %vm173, %v5282, -1e+30
  %v5285 = vsel %vm367, %v5284, -inf
  %5286 = vmax.xlane.f32.xlu0 %v5285
  %v5287 = vpop.xlane.xlu0 %5286
  %v5288 = vsub.f32 %v5284, %v5287
  %v5289 = vmul.f32 %v5288, 1.442695
  %v5290 = vpow.pop %v5289
  %v5291 = vsel %vm367, %v5290, 0.0
  %5292 = vadd.xlane.f32.xlu0 %v5291
  %v5293 = vpop.xlane.xlu0 %5292
  %v5294 = vrcp.pop %v5293
  %v5295 = vmul.f32 %v5290, %v5294
  %5296 = vrot.lane.b32.xlu0 %v4969, 40
  %v5297 = vpop.permute.xlu0 %5296
  %v5300 = vsel %vm367, %v5295, 0
  %5302 = vmatpush.msra.mxu0 0.0
  %5303 = vmatpush.msra.mxu0 0.0
  %5304 = vmatpush.msra.mxu0 0.0
  %5305 = vmatpush.msra.mxu0 0.0
  %5306 = vmatpush.msra.mxu0 0.0
  %5307 = vmatpush.msra.mxu0 0.0
  %5308 = vmatpush.msra.mxu0 0.0
  %5309 = vmatpush.msra.mxu0 0.0
  %5310 = vmatpush.msra.mxu0 0.0
  %5311 = vmatpush.msra.mxu0 0.0
  %5312 = vmatpush.msra.mxu0 0.0
  %5313 = vmatpush.msra.mxu0 0.0
  %5314 = vmatpush.msra.mxu0 0.0
  %5315 = vmatpush.msra.mxu0 0.0
  %5316 = vmatpush.msra.mxu0 0.0
  %5317 = vmatpush.msra.mxu0 %v5297
  %5318 = vmatmul.f32.gmra.mxu0 %v5300
  %v5319 = vpop.f32.mrf.mxu0
  %v5320 = vadd.f32 0.0, %v5319
  %5321 = vdwg.mxu0
  %5323 = vrot.lane.b32.xlu0 %v5188, 8
  %v5324 = vpop.permute.xlu0 %5323
  %5327 = vrot.lane.b32.xlu0 %v5254, 16
  %v5328 = vpop.permute.xlu0 %5327
  %5331 = vrot.lane.b32.xlu0 %v5320, 24
  %v5332 = vpop.permute.xlu0 %5331
  %v5334 = vsel %vm367, %v5122, %v5324
  %v5335 = vsel %vm642, %v5334, %v5328
  %v5336 = vsel %vm644, %v5335, %v5332
  %5338 = vrot.lane.b32.xlu0 %v5057, 96
  %v5339 = vpop.permute.xlu0 %5338
  %v5341 = vsel %vm367, %v5010, 0
  %v5343 = vsel %vm367, %v5339, 0
  %5345 = vmatpush.xpose.msra.mxu0 0.0
  %5346 = vmatpush.xpose.msra.mxu0 0.0
  %5347 = vmatpush.xpose.msra.mxu0 0.0
  %5348 = vmatpush.xpose.msra.mxu0 0.0
  %5349 = vmatpush.xpose.msra.mxu0 0.0
  %5350 = vmatpush.xpose.msra.mxu0 0.0
  %5351 = vmatpush.xpose.msra.mxu0 0.0
  %5352 = vmatpush.xpose.msra.mxu0 0.0
  %5353 = vmatpush.xpose.msra.mxu0 0.0
  %5354 = vmatpush.xpose.msra.mxu0 0.0
  %5355 = vmatpush.xpose.msra.mxu0 0.0
  %5356 = vmatpush.xpose.msra.mxu0 0.0
  %5357 = vmatpush.xpose.msra.mxu0 0.0
  %5358 = vmatpush.xpose.msra.mxu0 0.0
  %5359 = vmatpush.xpose.msra.mxu0 0.0
  %5360 = vmatpush.xpose.msra.mxu0 %v5343
  %5361 = vmatmul.f32.gmra.mxu0 %v5341
  %v5362 = vpop.f32.mrf.mxu0
  %v5363 = vadd.f32 0.0, %v5362
  %5364 = vdwg.mxu0
  %v5365 = vsel %vm173, %v5363, -1e+30
  %v5366 = vsel %vm367, %v5365, -inf
  %5367 = vmax.xlane.f32.xlu0 %v5366
  %v5368 = vpop.xlane.xlu0 %5367
  %v5369 = vsub.f32 %v5365, %v5368
  %v5370 = vmul.f32 %v5369, 1.442695
  %v5371 = vpow.pop %v5370
  %v5372 = vsel %vm367, %v5371, 0.0
  %5373 = vadd.xlane.f32.xlu0 %v5372
  %v5374 = vpop.xlane.xlu0 %5373
  %v5375 = vrcp.pop %v5374
  %v5376 = vmul.f32 %v5371, %v5375
  %5377 = vrot.lane.b32.xlu0 %v4972, 64
  %v5378 = vpop.permute.xlu0 %5377
  %v5381 = vsel %vm367, %v5376, 0
  %5383 = vmatpush.msra.mxu0 0.0
  %5384 = vmatpush.msra.mxu0 0.0
  %5385 = vmatpush.msra.mxu0 0.0
  %5386 = vmatpush.msra.mxu0 0.0
  %5387 = vmatpush.msra.mxu0 0.0
  %5388 = vmatpush.msra.mxu0 0.0
  %5389 = vmatpush.msra.mxu0 0.0
  %5390 = vmatpush.msra.mxu0 0.0
  %5391 = vmatpush.msra.mxu0 0.0
  %5392 = vmatpush.msra.mxu0 0.0
  %5393 = vmatpush.msra.mxu0 0.0
  %5394 = vmatpush.msra.mxu0 0.0
  %5395 = vmatpush.msra.mxu0 0.0
  %5396 = vmatpush.msra.mxu0 0.0
  %5397 = vmatpush.msra.mxu0 0.0
  %5398 = vmatpush.msra.mxu0 %v5378
  %5399 = vmatmul.f32.gmra.mxu0 %v5381
  %v5400 = vpop.f32.mrf.mxu0
  %v5401 = vadd.f32 0.0, %v5400
  %5402 = vdwg.mxu0
  %5403 = vrot.lane.b32.xlu0 %v5010, 120
  %v5404 = vpop.permute.xlu0 %5403
  %5405 = vrot.lane.b32.xlu0 %v5057, 88
  %v5406 = vpop.permute.xlu0 %5405
  %v5407 = vsel %vm367, %v5404, 0
  %v5409 = vsel %vm367, %v5406, 0
  %5411 = vmatpush.xpose.msra.mxu0 0.0
  %5412 = vmatpush.xpose.msra.mxu0 0.0
  %5413 = vmatpush.xpose.msra.mxu0 0.0
  %5414 = vmatpush.xpose.msra.mxu0 0.0
  %5415 = vmatpush.xpose.msra.mxu0 0.0
  %5416 = vmatpush.xpose.msra.mxu0 0.0
  %5417 = vmatpush.xpose.msra.mxu0 0.0
  %5418 = vmatpush.xpose.msra.mxu0 0.0
  %5419 = vmatpush.xpose.msra.mxu0 0.0
  %5420 = vmatpush.xpose.msra.mxu0 0.0
  %5421 = vmatpush.xpose.msra.mxu0 0.0
  %5422 = vmatpush.xpose.msra.mxu0 0.0
  %5423 = vmatpush.xpose.msra.mxu0 0.0
  %5424 = vmatpush.xpose.msra.mxu0 0.0
  %5425 = vmatpush.xpose.msra.mxu0 0.0
  %5426 = vmatpush.xpose.msra.mxu0 %v5409
  %5427 = vmatmul.f32.gmra.mxu0 %v5407
  %v5428 = vpop.f32.mrf.mxu0
  %v5429 = vadd.f32 0.0, %v5428
  %5430 = vdwg.mxu0
  %v5431 = vsel %vm173, %v5429, -1e+30
  %v5432 = vsel %vm367, %v5431, -inf
  %5433 = vmax.xlane.f32.xlu0 %v5432
  %v5434 = vpop.xlane.xlu0 %5433
  %v5435 = vsub.f32 %v5431, %v5434
  %v5436 = vmul.f32 %v5435, 1.442695
  %v5437 = vpow.pop %v5436
  %v5438 = vsel %vm367, %v5437, 0.0
  %5439 = vadd.xlane.f32.xlu0 %v5438
  %v5440 = vpop.xlane.xlu0 %5439
  %v5441 = vrcp.pop %v5440
  %v5442 = vmul.f32 %v5437, %v5441
  %5443 = vrot.lane.b32.xlu0 %v4972, 56
  %v5444 = vpop.permute.xlu0 %5443
  %v5447 = vsel %vm367, %v5442, 0
  %5449 = vmatpush.msra.mxu0 0.0
  %5450 = vmatpush.msra.mxu0 0.0
  %5451 = vmatpush.msra.mxu0 0.0
  %5452 = vmatpush.msra.mxu0 0.0
  %5453 = vmatpush.msra.mxu0 0.0
  %5454 = vmatpush.msra.mxu0 0.0
  %5455 = vmatpush.msra.mxu0 0.0
  %5456 = vmatpush.msra.mxu0 0.0
  %5457 = vmatpush.msra.mxu0 0.0
  %5458 = vmatpush.msra.mxu0 0.0
  %5459 = vmatpush.msra.mxu0 0.0
  %5460 = vmatpush.msra.mxu0 0.0
  %5461 = vmatpush.msra.mxu0 0.0
  %5462 = vmatpush.msra.mxu0 0.0
  %5463 = vmatpush.msra.mxu0 0.0
  %5464 = vmatpush.msra.mxu0 %v5444
  %5465 = vmatmul.f32.gmra.mxu0 %v5447
  %v5466 = vpop.f32.mrf.mxu0
  %v5467 = vadd.f32 0.0, %v5466
  %5468 = vdwg.mxu0
  %5469 = vrot.lane.b32.xlu0 %v5010, 112
  %v5470 = vpop.permute.xlu0 %5469
  %5471 = vrot.lane.b32.xlu0 %v5057, 80
  %v5472 = vpop.permute.xlu0 %5471
  %v5473 = vsel %vm367, %v5470, 0
  %v5475 = vsel %vm367, %v5472, 0
  %5477 = vmatpush.xpose.msra.mxu0 0.0
  %5478 = vmatpush.xpose.msra.mxu0 0.0
  %5479 = vmatpush.xpose.msra.mxu0 0.0
  %5480 = vmatpush.xpose.msra.mxu0 0.0
  %5481 = vmatpush.xpose.msra.mxu0 0.0
  %5482 = vmatpush.xpose.msra.mxu0 0.0
  %5483 = vmatpush.xpose.msra.mxu0 0.0
  %5484 = vmatpush.xpose.msra.mxu0 0.0
  %5485 = vmatpush.xpose.msra.mxu0 0.0
  %5486 = vmatpush.xpose.msra.mxu0 0.0
  %5487 = vmatpush.xpose.msra.mxu0 0.0
  %5488 = vmatpush.xpose.msra.mxu0 0.0
  %5489 = vmatpush.xpose.msra.mxu0 0.0
  %5490 = vmatpush.xpose.msra.mxu0 0.0
  %5491 = vmatpush.xpose.msra.mxu0 0.0
  %5492 = vmatpush.xpose.msra.mxu0 %v5475
  %5493 = vmatmul.f32.gmra.mxu0 %v5473
  %v5494 = vpop.f32.mrf.mxu0
  %v5495 = vadd.f32 0.0, %v5494
  %5496 = vdwg.mxu0
  %v5497 = vsel %vm173, %v5495, -1e+30
  %v5498 = vsel %vm367, %v5497, -inf
  %5499 = vmax.xlane.f32.xlu0 %v5498
  %v5500 = vpop.xlane.xlu0 %5499
  %v5501 = vsub.f32 %v5497, %v5500
  %v5502 = vmul.f32 %v5501, 1.442695
  %v5503 = vpow.pop %v5502
  %v5504 = vsel %vm367, %v5503, 0.0
  %5505 = vadd.xlane.f32.xlu0 %v5504
  %v5506 = vpop.xlane.xlu0 %5505
  %v5507 = vrcp.pop %v5506
  %v5508 = vmul.f32 %v5503, %v5507
  %5509 = vrot.lane.b32.xlu0 %v4972, 48
  %v5510 = vpop.permute.xlu0 %5509
  %v5513 = vsel %vm367, %v5508, 0
  %5515 = vmatpush.msra.mxu0 0.0
  %5516 = vmatpush.msra.mxu0 0.0
  %5517 = vmatpush.msra.mxu0 0.0
  %5518 = vmatpush.msra.mxu0 0.0
  %5519 = vmatpush.msra.mxu0 0.0
  %5520 = vmatpush.msra.mxu0 0.0
  %5521 = vmatpush.msra.mxu0 0.0
  %5522 = vmatpush.msra.mxu0 0.0
  %5523 = vmatpush.msra.mxu0 0.0
  %5524 = vmatpush.msra.mxu0 0.0
  %5525 = vmatpush.msra.mxu0 0.0
  %5526 = vmatpush.msra.mxu0 0.0
  %5527 = vmatpush.msra.mxu0 0.0
  %5528 = vmatpush.msra.mxu0 0.0
  %5529 = vmatpush.msra.mxu0 0.0
  %5530 = vmatpush.msra.mxu0 %v5510
  %5531 = vmatmul.f32.gmra.mxu0 %v5513
  %v5532 = vpop.f32.mrf.mxu0
  %v5533 = vadd.f32 0.0, %v5532
  %5534 = vdwg.mxu0
  %5535 = vrot.lane.b32.xlu0 %v5010, 104
  %v5536 = vpop.permute.xlu0 %5535
  %5537 = vrot.lane.b32.xlu0 %v5057, 72
  %v5538 = vpop.permute.xlu0 %5537
  %v5539 = vsel %vm367, %v5536, 0
  %v5541 = vsel %vm367, %v5538, 0
  %5543 = vmatpush.xpose.msra.mxu0 0.0
  %5544 = vmatpush.xpose.msra.mxu0 0.0
  %5545 = vmatpush.xpose.msra.mxu0 0.0
  %5546 = vmatpush.xpose.msra.mxu0 0.0
  %5547 = vmatpush.xpose.msra.mxu0 0.0
  %5548 = vmatpush.xpose.msra.mxu0 0.0
  %5549 = vmatpush.xpose.msra.mxu0 0.0
  %5550 = vmatpush.xpose.msra.mxu0 0.0
  %5551 = vmatpush.xpose.msra.mxu0 0.0
  %5552 = vmatpush.xpose.msra.mxu0 0.0
  %5553 = vmatpush.xpose.msra.mxu0 0.0
  %5554 = vmatpush.xpose.msra.mxu0 0.0
  %5555 = vmatpush.xpose.msra.mxu0 0.0
  %5556 = vmatpush.xpose.msra.mxu0 0.0
  %5557 = vmatpush.xpose.msra.mxu0 0.0
  %5558 = vmatpush.xpose.msra.mxu0 %v5541
  %5559 = vmatmul.f32.gmra.mxu0 %v5539
  %v5560 = vpop.f32.mrf.mxu0
  %v5561 = vadd.f32 0.0, %v5560
  %5562 = vdwg.mxu0
  %v5563 = vsel %vm173, %v5561, -1e+30
  %v5564 = vsel %vm367, %v5563, -inf
  %5565 = vmax.xlane.f32.xlu0 %v5564
  %v5566 = vpop.xlane.xlu0 %5565
  %v5567 = vsub.f32 %v5563, %v5566
  %v5568 = vmul.f32 %v5567, 1.442695
  %v5569 = vpow.pop %v5568
  %v5570 = vsel %vm367, %v5569, 0.0
  %5571 = vadd.xlane.f32.xlu0 %v5570
  %v5572 = vpop.xlane.xlu0 %5571
  %v5573 = vrcp.pop %v5572
  %v5574 = vmul.f32 %v5569, %v5573
  %5575 = vrot.lane.b32.xlu0 %v4972, 40
  %v5576 = vpop.permute.xlu0 %5575
  %v5579 = vsel %vm367, %v5574, 0
  %5581 = vmatpush.msra.mxu0 0.0
  %5582 = vmatpush.msra.mxu0 0.0
  %5583 = vmatpush.msra.mxu0 0.0
  %5584 = vmatpush.msra.mxu0 0.0
  %5585 = vmatpush.msra.mxu0 0.0
  %5586 = vmatpush.msra.mxu0 0.0
  %5587 = vmatpush.msra.mxu0 0.0
  %5588 = vmatpush.msra.mxu0 0.0
  %5589 = vmatpush.msra.mxu0 0.0
  %5590 = vmatpush.msra.mxu0 0.0
  %5591 = vmatpush.msra.mxu0 0.0
  %5592 = vmatpush.msra.mxu0 0.0
  %5593 = vmatpush.msra.mxu0 0.0
  %5594 = vmatpush.msra.mxu0 0.0
  %5595 = vmatpush.msra.mxu0 0.0
  %5596 = vmatpush.msra.mxu0 %v5576
  %5597 = vmatmul.f32.gmra.mxu0 %v5579
  %v5598 = vpop.f32.mrf.mxu0
  %v5599 = vadd.f32 0.0, %v5598
  %5600 = vdwg.mxu0
  %5602 = vrot.lane.b32.xlu0 %v5467, 8
  %v5603 = vpop.permute.xlu0 %5602
  %5606 = vrot.lane.b32.xlu0 %v5533, 16
  %v5607 = vpop.permute.xlu0 %5606
  %5610 = vrot.lane.b32.xlu0 %v5599, 24
  %v5611 = vpop.permute.xlu0 %5610
  %v5613 = vsel %vm367, %v5401, %v5603
  %v5614 = vsel %vm642, %v5613, %v5607
  %v5615 = vsel %vm644, %v5614, %v5611
  %v5617 = vsel %vm198, %v5336, 0
  %v5620 = vsel %vm198, %v5615, 0
  %5622 = vmatpush.msra.mxu0 0.0
  %5623 = vmatpush.msra.mxu0 0.0
  %5624 = vmatpush.msra.mxu0 0.0
  %5625 = vmatpush.msra.mxu0 0.0
  %5626 = vmatpush.msra.mxu0 0.0
  %5627 = vmatpush.msra.mxu0 0.0
  %5628 = vmatpush.msra.mxu0 0.0
  %5629 = vmatpush.msra.mxu0 0.0
  %5630 = vmatpush.msra.mxu0 0.0
  %5631 = vmatpush.msra.mxu0 0.0
  %5632 = vmatpush.msra.mxu0 0.0
  %5633 = vmatpush.msra.mxu0 0.0
  %5634 = vmatpush.msra.mxu0 %v4887
  %5635 = vmatpush.msra.mxu0 %v4886
  %5636 = vmatpush.msra.mxu0 %v4885
  %5637 = vmatpush.msra.mxu0 %v4884
  %5638 = vmatmul.f32.gmra.mxu0 %v5617
  %v5639 = vpop.f32.mrf.mxu0
  %v5640 = vadd.f32 0.0, %v5639
  %5641 = vmatmul.f32.gmra.mxu0 %v5620
  %v5642 = vpop.f32.mrf.mxu0
  %v5643 = vadd.f32 0.0, %v5642
  %5644 = vdwg.mxu0
  %v5645 = vadd.f32 %v4876, %v5640
  %v5646 = vadd.f32 %v4877, %v5643
  %v5647 = vmul.f32 %v5645, %v5645
  %v5648 = vmul.f32 %v5646, %v5646
  %v5649 = vsel %vm198, %v5647, 0.0
  %5650 = vadd.xlane.f32.xlu0 %v5649
  %v5651 = vpop.xlane.xlu0 %5650
  %v5652 = vsel %vm198, %v5648, 0.0
  %5653 = vadd.xlane.f32.xlu0 %v5652
  %v5654 = vpop.xlane.xlu0 %5653
  %v5655 = vmul.f32 %v5651, %v211
  %v5656 = vmul.f32 %v5654, %v211
  %v5657 = vadd.f32 %v5655, 1e-06
  %v5658 = vadd.f32 %v5656, 1e-06
  %v5659 = vrsqrt.pop %v5657
  %v5660 = vmul.f32 %v5659, %v5657
  %v5661 = vmul.f32 %v5660, %v5659
  %v5662 = vmul.f32 0.5, %v5661
  %v5663 = vsub.f32 1.5, %v5662
  %v5664 = vmul.f32 %v5659, %v5663
  %vm5665 = vweird.f32 %v5657
  %vm5666 = vweird.f32 %v5659
  %vm5667 = vmor %vm5665, %vm5666
  %v5668 = vsel %vm5667, %v5659, %v5664
  %v5669 = vrsqrt.pop %v5658
  %v5670 = vmul.f32 %v5669, %v5658
  %v5671 = vmul.f32 %v5670, %v5669
  %v5672 = vmul.f32 0.5, %v5671
  %v5673 = vsub.f32 1.5, %v5672
  %v5674 = vmul.f32 %v5669, %v5673
  %vm5675 = vweird.f32 %v5658
  %vm5676 = vweird.f32 %v5669
  %vm5677 = vmor %vm5675, %vm5676
  %v5678 = vsel %vm5677, %v5669, %v5674
  %v5679 = vmul.f32 %v5645, %v5668
  %v5680 = vmul.f32 %v5646, %v5678
  %v5682 = vperm.slane %v4905, 0
  %v5684 = vmul.f32 %v5679, %v5682
  %v5685 = vmul.f32 %v5680, %v5682
  %v5687 = vsel %vm198, %v5684, 0
  %v5690 = vsel %vm198, %v5685, 0
  %5692 = vmatpush.msra.mxu0 0.0
  %5693 = vmatpush.msra.mxu0 0.0
  %5694 = vmatpush.msra.mxu0 0.0
  %5695 = vmatpush.msra.mxu0 0.0
  %5696 = vmatpush.msra.mxu0 0.0
  %5697 = vmatpush.msra.mxu0 0.0
  %5698 = vmatpush.msra.mxu0 0.0
  %5699 = vmatpush.msra.mxu0 0.0
  %5700 = vmatpush.msra.mxu0 0.0
  %5701 = vmatpush.msra.mxu0 0.0
  %5702 = vmatpush.msra.mxu0 0.0
  %5703 = vmatpush.msra.mxu0 0.0
  %5704 = vmatpush.msra.mxu0 %v4892
  %5705 = vmatpush.msra.mxu0 %v4891
  %5706 = vmatpush.msra.mxu0 %v4890
  %5707 = vmatpush.msra.mxu0 %v4889
  %5708 = vmatmul.f32.gmra.mxu0 %v5687
  %v5709 = vpop.f32.mrf.mxu0
  %v5710 = vadd.f32 0.0, %v5709
  %5711 = vmatmul.f32.gmra.mxu0 %v5690
  %v5712 = vpop.f32.mrf.mxu0
  %v5713 = vadd.f32 0.0, %v5712
  %5714 = vdwg.mxu0
  %v5715 = vxor.u32 %v5710, 2147483648
  %v5716 = vxor.u32 %v5713, 2147483648
  %v5717 = vmul.f32 %v5715, 1.442695
  %v5718 = vpow.pop %v5717
  %v5719 = vmul.f32 %v5716, 1.442695
  %v5720 = vpow.pop %v5719
  %v5721 = vadd.f32 %v5718, 1.0
  %v5722 = vadd.f32 %v5720, 1.0
  %v5723 = vrcp.pop %v5721
  %v5724 = vmul.f32 %v5721, %v5723
  %v5725 = vsub.f32 1.0, %v5724
  %v5726 = vmul.f32 %v5723, %v5725
  %v5727 = vadd.f32 %v5723, %v5726
  %vm5728 = vweird.f32 %v5721
  %vm5729 = vweird.f32 %v5723
  %vm5730 = vmor %vm5728, %vm5729
  %v5731 = vsel %vm5730, %v5723, %v5727
  %v5732 = vand.u32 2147483647, %v5721
  %vm5733 = vcmp.eq.f32.partialorder %v5732, 8.507059e+37
  %v5734 = vand.u32 %v5721, 2147483648
  %v5735 = vor.u32 1.1754944e-38, %v5734
  %v5736 = vsel %vm5733, %v5735, %v5731
  %v5737 = vmul.f32 1.0, %v5736
  %v5738 = vrcp.pop %v5722
  %v5739 = vmul.f32 %v5722, %v5738
  %v5740 = vsub.f32 1.0, %v5739
  %v5741 = vmul.f32 %v5738, %v5740
  %v5742 = vadd.f32 %v5738, %v5741
  %vm5743 = vweird.f32 %v5722
  %vm5744 = vweird.f32 %v5738
  %vm5745 = vmor %vm5743, %vm5744
  %v5746 = vsel %vm5745, %v5738, %v5742
  %v5747 = vand.u32 2147483647, %v5722
  %vm5748 = vcmp.eq.f32.partialorder %v5747, 8.507059e+37
  %v5749 = vand.u32 %v5722, 2147483648
  %v5750 = vor.u32 1.1754944e-38, %v5749
  %v5751 = vsel %vm5748, %v5750, %v5746
  %v5752 = vmul.f32 1.0, %v5751
  %v5753 = vmul.f32 %v5710, %v5737
  %v5754 = vmul.f32 %v5713, %v5752
  %5757 = vrot.lane.b32.xlu0 %v5710, 64
  %v5758 = vpop.permute.xlu0 %5757
  %5759 = vrot.lane.b32.xlu0 %v5713, 64
  %v5760 = vpop.permute.xlu0 %5759
  %v5763 = vmul.f32 %v5753, %v5758
  %v5764 = vmul.f32 %v5754, %v5760
  %v5766 = vsel %vm1074, %v5763, 0
  %v5769 = vsel %vm1074, %v5764, 0
  %5771 = vmatpush.msra.mxu0 0.0
  %5772 = vmatpush.msra.mxu0 0.0
  %5773 = vmatpush.msra.mxu0 0.0
  %5774 = vmatpush.msra.mxu0 0.0
  %5775 = vmatpush.msra.mxu0 0.0
  %5776 = vmatpush.msra.mxu0 0.0
  %5777 = vmatpush.msra.mxu0 0.0
  %5778 = vmatpush.msra.mxu0 0.0
  %5779 = vmatpush.msra.mxu0 %v4901
  %5780 = vmatpush.msra.mxu0 %v4900
  %5781 = vmatpush.msra.mxu0 %v4899
  %5782 = vmatpush.msra.mxu0 %v4898
  %5783 = vmatpush.msra.mxu0 %v4897
  %5784 = vmatpush.msra.mxu0 %v4896
  %5785 = vmatpush.msra.mxu0 %v4895
  %5786 = vmatpush.msra.mxu0 %v4894
  %5787 = vmatmul.f32.gmra.mxu0 %v5766
  %v5788 = vpop.f32.mrf.mxu0
  %v5789 = vadd.f32 0.0, %v5788
  %5790 = vmatmul.f32.gmra.mxu0 %v5769
  %v5791 = vpop.f32.mrf.mxu0
  %v5792 = vadd.f32 0.0, %v5791
  %5793 = vdwg.mxu0
  %v5794 = vadd.f32 %v5645, %v5789
  %v5795 = vadd.f32 %v5646, %v5792
  %s5796 = scalar_lea.vmem %s14, 1
  %v5797 = vld [vmem:[%s5796] sm:$0x1]
  %v5798 = vmul.f32 %v5794, %v5794
  %v5799 = vmul.f32 %v5795, %v5795
  %v5800 = vsel %vm198, %v5798, 0.0
  %5801 = vadd.xlane.f32.xlu0 %v5800
  %v5802 = vpop.xlane.xlu0 %5801
  %v5803 = vsel %vm198, %v5799, 0.0
  %5804 = vadd.xlane.f32.xlu0 %v5803
  %v5805 = vpop.xlane.xlu0 %5804
  %v5806 = vmul.f32 %v5802, %v211
  %v5807 = vmul.f32 %v5805, %v211
  %v5808 = vadd.f32 %v5806, 1e-06
  %v5809 = vadd.f32 %v5807, 1e-06
  %v5810 = vrsqrt.pop %v5808
  %v5811 = vmul.f32 %v5810, %v5808
  %v5812 = vmul.f32 %v5811, %v5810
  %v5813 = vmul.f32 0.5, %v5812
  %v5814 = vsub.f32 1.5, %v5813
  %v5815 = vmul.f32 %v5810, %v5814
  %vm5816 = vweird.f32 %v5808
  %vm5817 = vweird.f32 %v5810
  %vm5818 = vmor %vm5816, %vm5817
  %v5819 = vsel %vm5818, %v5810, %v5815
  %v5820 = vrsqrt.pop %v5809
  %v5821 = vmul.f32 %v5820, %v5809
  %v5822 = vmul.f32 %v5821, %v5820
  %v5823 = vmul.f32 0.5, %v5822
  %v5824 = vsub.f32 1.5, %v5823
  %v5825 = vmul.f32 %v5820, %v5824
  %vm5826 = vweird.f32 %v5809
  %vm5827 = vweird.f32 %v5820
  %vm5828 = vmor %vm5826, %vm5827
  %v5829 = vsel %vm5828, %v5820, %v5825
  %v5830 = vmul.f32 %v5794, %v5819
  %v5831 = vmul.f32 %v5795, %v5829
  %v5833 = vperm.slane %v5797, 0
  %v5835 = vmul.f32 %v5830, %v5833
  %v5836 = vmul.f32 %v5831, %v5833
  %v5837 = vmul.f32 %v5835, %v5835
  %v5838 = vmul.f32 %v5836, %v5836
  %v5839 = vsel %vm198, %v5837, 0.0
  %5840 = vadd.xlane.f32.xlu0 %v5839
  %v5841 = vpop.xlane.xlu0 %5840
  %v5842 = vsel %vm198, %v5838, 0.0
  %5843 = vadd.xlane.f32.xlu0 %v5842
  %v5844 = vpop.xlane.xlu0 %5843
  %v5845 = vmul.f32 %v5841, %v211
  %v5846 = vmul.f32 %v5844, %v211
  %v5847 = vadd.f32 %v5845, 1e-06
  %v5848 = vadd.f32 %v5846, 1e-06
  %v5849 = vrsqrt.pop %v5847
  %v5850 = vmul.f32 %v5849, %v5847
  %v5851 = vmul.f32 %v5850, %v5849
  %v5852 = vmul.f32 0.5, %v5851
  %v5853 = vsub.f32 1.5, %v5852
  %v5854 = vmul.f32 %v5849, %v5853
  %vm5855 = vweird.f32 %v5847
  %vm5856 = vweird.f32 %v5849
  %vm5857 = vmor %vm5855, %vm5856
  %v5858 = vsel %vm5857, %v5849, %v5854
  %v5859 = vrsqrt.pop %v5848
  %v5860 = vmul.f32 %v5859, %v5848
  %v5861 = vmul.f32 %v5860, %v5859
  %v5862 = vmul.f32 0.5, %v5861
  %v5863 = vsub.f32 1.5, %v5862
  %v5864 = vmul.f32 %v5859, %v5863
  %vm5865 = vweird.f32 %v5848
  %vm5866 = vweird.f32 %v5859
  %vm5867 = vmor %vm5865, %vm5866
  %v5868 = vsel %vm5867, %v5859, %v5864
  %v5869 = vmul.f32 %v5835, %v5858
  %v5870 = vmul.f32 %v5836, %v5868
  %v5871 = vmul.f32 %v5869, %v5833
  %v5872 = vmul.f32 %v5870, %v5833
  %s5873 = scalar_lea.vmem %s15, 64
  %v5874 = vld [vmem:[%s5873] sm:$0xff]
  %v5875 = vld [vmem:[%s5873 + $0x8] sm:$0xff]
  %v5876 = vld [vmem:[%s5873 + $0x10] sm:$0xff]
  %v5877 = vld [vmem:[%s5873 + $0x18] sm:$0xff]
  %v5878 = vld [vmem:[%s5873 + $0x20] sm:$0xff]
  %v5879 = vld [vmem:[%s5873 + $0x28] sm:$0xff]
  %v5880 = vld [vmem:[%s5873 + $0x30] sm:$0xff]
  %v5881 = vld [vmem:[%s5873 + $0x38] sm:$0xff]
  %v5883 = vsel %vm198, %v5871, 0
  %v5886 = vsel %vm198, %v5872, 0
  %5888 = vmatpush.msra.mxu0 0.0
  %5889 = vmatpush.msra.mxu0 0.0
  %5890 = vmatpush.msra.mxu0 0.0
  %5891 = vmatpush.msra.mxu0 0.0
  %5892 = vmatpush.msra.mxu0 0.0
  %5893 = vmatpush.msra.mxu0 0.0
  %5894 = vmatpush.msra.mxu0 0.0
  %5895 = vmatpush.msra.mxu0 0.0
  %5896 = vmatpush.msra.mxu0 0.0
  %5897 = vmatpush.msra.mxu0 0.0
  %5898 = vmatpush.msra.mxu0 0.0
  %5899 = vmatpush.msra.mxu0 0.0
  %5900 = vmatpush.msra.mxu0 %v5880
  %5901 = vmatpush.msra.mxu0 %v5878
  %5902 = vmatpush.msra.mxu0 %v5876
  %5903 = vmatpush.msra.mxu0 %v5874
  %5904 = vmatmul.f32.gmra.mxu0 %v5883
  %v5905 = vpop.f32.mrf.mxu0
  %v5906 = vadd.f32 0.0, %v5905
  %5907 = vmatmul.f32.gmra.mxu0 %v5886
  %v5908 = vpop.f32.mrf.mxu0
  %v5909 = vadd.f32 0.0, %v5908
  %5910 = vdwg.mxu0
  %5911 = vmatpush.msra.mxu0 0.0
  %5912 = vmatpush.msra.mxu0 0.0
  %5913 = vmatpush.msra.mxu0 0.0
  %5914 = vmatpush.msra.mxu0 0.0
  %5915 = vmatpush.msra.mxu0 0.0
  %5916 = vmatpush.msra.mxu0 0.0
  %5917 = vmatpush.msra.mxu0 0.0
  %5918 = vmatpush.msra.mxu0 0.0
  %5919 = vmatpush.msra.mxu0 0.0
  %5920 = vmatpush.msra.mxu0 0.0
  %5921 = vmatpush.msra.mxu0 0.0
  %5922 = vmatpush.msra.mxu0 0.0
  %5923 = vmatpush.msra.mxu0 %v5881
  %5924 = vmatpush.msra.mxu0 %v5879
  %5925 = vmatpush.msra.mxu0 %v5877
  %5926 = vmatpush.msra.mxu0 %v5875
  %5927 = vmatmul.f32.gmra.mxu0 %v5883
  %v5928 = vpop.f32.mrf.mxu0
  %v5929 = vadd.f32 0.0, %v5928
  %5930 = vmatmul.f32.gmra.mxu0 %v5886
  %v5931 = vpop.f32.mrf.mxu0
  %v5932 = vadd.f32 0.0, %v5931
  %5933 = vdwg.mxu0
  %s5934 = scalar_lea.vmem %s19, 32
  %5935 = vst [vmem:[%s5934] sm:$0xff] %v5906
  %5936 = vst [vmem:[%s5934 + $0x8] sm:$0xff] %v5929
  %5937 = vst [vmem:[%s5934 + $0x10] sm:$0xff] %v5909
  %5938 = vst [vmem:[%s5934 + $0x18] sm:$0xff] %v5932
  // Predicated region
  $region78: #{treenet_forward.1} parent=0 // pred_check
    _
  $region79: #{treenet_forward.1} parent=0 // pred_check_branch
    %5940 = sbr.rel (0) target = $region81
  $region80: #{treenet_forward.1} parent=0 // pred_region
    _
  $region81: #{treenet_forward.1} parent=0 // pred_fallthru
    _
  // Predicated region
  $region82: #{treenet_forward.1} parent=0 // pred_check
    _
  $region83: #{treenet_forward.1} parent=0 // pred_check_branch
    %5942 = sbr.rel (0) target = $region85
  $region84: #{treenet_forward.1} parent=0 // pred_region
    _
  $region85: #{treenet_forward.1} parent=0 // pred_fallthru
    _

</llo_original>
